<compile_context>
chip_gen: v7x
topology: tpu7x:2x2x1
jax: 0.10.0
libtpu: 0.0.40
codegen_flags: <defaults>
</compile_context>

<pallas_src>
import functools

import jax
import jax.numpy as jnp
from jax import lax
from jax.experimental import pallas as pl
from jax.experimental.pallas import tpu as pltpu

BN_EPS = 1e-5
NEG_SLOPE = 0.2


@functools.lru_cache(maxsize=1)
def _vmem_limit_bytes():
    cap = 128 * 1024 * 1024
    try:
        info = pltpu.get_tpu_info()
        cap = int(getattr(info, "vmem_capacity_bytes", cap))
    except Exception:
        pass
    # Leave pipeline headroom: 96 MiB on 128-MiB parts (v5e/v6e), 48 MiB on v7x.
    return int(min(cap * 3 // 4, 96 * 1024 * 1024))


def _pick_row_tile(h, w, target_elems, min_rows=1):
    """Largest divisor of h (>= min_rows) whose row tile has <= target elems."""
    divs = [d for d in range(1, h + 1) if h % d == 0 and d >= min_rows]
    if not divs:
        return h
    fitting = [d for d in divs if d * w <= target_elems]
    return max(fitting) if fitting else min(divs)


# ------------------------------ Pallas kernels --------------------------------
def _conv_kernel(x_ref, scale_ref, shift_ref, w_ref,
                 y_ref, stats_ref, xpad_ref,
                 *, kh, kw, h, w, th, nt, apply_act):
    """One output row tile of a 'same' conv, with optional fused input BN+LReLU.

    x_ref    : (h, w, cin)         full image of batch element b (resident block)
    scale_ref: (1, cin) f32        hoisted BN scale of previous stage (if apply_act)
    shift_ref: (1, cin) f32        hoisted BN shift of previous stage (if apply_act)
    w_ref    : (kh*kw, cin, cout)  conv weights (compute dtype)
    y_ref    : (th, w, cout)       conv output row tile (intermediate dtype)
    stats_ref: (2, cout) f32       per-tile [sum, sum_sq] of the f32 conv output
    xpad_ref : (th+kh-1, w+kw-1, cin)  per-tile activated + zero-padded window
    """
    ph, pw = kh // 2, kw // 2
    cin = x_ref.shape[-1]
    cout = y_ref.shape[-1]
    t = pl.program_id(1)
    r0 = pl.multiple_of(t * th, th)          # first output row of this tile

    def activate(rows):
        v = rows.astype(jnp.float32)
        if apply_act:                        # fused previous-stage BN + LeakyReLU
            z = v * scale_ref[0, :] + shift_ref[0, :]
            v = jnp.where(z > 0, z, NEG_SLOPE * z)
        return v.astype(xpad_ref.dtype)

    # Build this tile's zero-padded ('same') input window in VMEM scratch.
    xpad_ref[...] = jnp.zeros(xpad_ref.shape, xpad_ref.dtype)
    xpad_ref[ph:ph + th, pw:pw + w, :] = activate(x_ref[pl.ds(r0, th), :, :])

    @pl.when(t > 0)
    def _top_halo():
        xpad_ref[0:ph, pw:pw + w, :] = activate(x_ref[pl.ds(r0 - ph, ph), :, :])

    @pl.when(t < nt - 1)
    def _bottom_halo():
        xpad_ref[ph + th:ph + th + ph, pw:pw + w, :] = activate(
            x_ref[pl.ds(r0 + th, ph), :, :])

    # 'same' conv as kh*kw shifted-tap matmuls accumulated in f32 (no im2col slab).
    acc = jnp.zeros((th * w, cout), jnp.float32)
    for i in range(kh):
        for j in range(kw):
            tap = xpad_ref[i:i + th, j:j + w, :].reshape(th * w, cin)
            acc = acc + jnp.dot(tap, w_ref[i * kw + j],
                                preferred_element_type=jnp.float32)

    y_ref[...] = acc.reshape(th, w, cout).astype(y_ref.dtype)
    # Per-tile BN partials (reduced globally outside the grid -> exact batch stats).
    stats_ref[0:1, :] = jnp.sum(acc, axis=0, keepdims=True)
    stats_ref[1:2, :] = jnp.sum(acc * acc, axis=0, keepdims=True)


def _bn_lrelu_kernel(y_ref, scale_ref, shift_ref, o_ref):
    """Fused per-channel affine (hoisted BN) + LeakyReLU(0.2)."""
    z = y_ref[...].astype(jnp.float32) * scale_ref[0, :] + shift_ref[0, :]
    o_ref[...] = jnp.where(z > 0, z, NEG_SLOPE * z).astype(o_ref.dtype)


# --------------------------- pallas_call wrappers ------------------------------
def _conv_stage(x, w_hwio, scale_prev, shift_prev, *, apply_act, compute_dtype,
                out_dtype):
    n, h, w, cin = x.shape
    kh, kw, _, cout = w_hwio.shape
    assert kh % 2 == 1 and kw % 2 == 1, "only odd 'same' kernels supported"
    ph = kh // 2
    th = _pick_row_tile(h, w, target_elems=2048, min_rows=max(ph, 1))
    nt = h // th
    wk = w_hwio.reshape(kh * kw, cin, cout).astype(compute_dtype)

    kernel = functools.partial(_conv_kernel, kh=kh, kw=kw, h=h, w=w,
                               th=th, nt=nt, apply_act=apply_act)

    in_bytes = x.size * x.dtype.itemsize
    out_bytes = n * h * w * cout * jnp.dtype(out_dtype).itemsize
    cost = pl.CostEstimate(
        flops=2 * n * h * w * kh * kw * cin * cout,
        transcendentals=0,
        bytes_accessed=in_bytes + wk.size * wk.dtype.itemsize + out_bytes
        + n * nt * 2 * cout * 4)

    y, stats = pl.pallas_call(
        kernel,
        out_shape=(jax.ShapeDtypeStruct((n, h, w, cout), out_dtype),
                   jax.ShapeDtypeStruct((n, nt, 2, cout), jnp.float32)),
        grid=(n, nt),
        in_specs=[
            pl.BlockSpec((None, h, w, cin), lambda b, t: (b, 0, 0, 0)),
            pl.BlockSpec((1, cin), lambda b, t: (0, 0)),
            pl.BlockSpec((1, cin), lambda b, t: (0, 0)),
            pl.BlockSpec((kh * kw, cin, cout), lambda b, t: (0, 0, 0)),
        ],
        out_specs=(
            pl.BlockSpec((None, th, w, cout), lambda b, t: (b, t, 0, 0)),
            pl.BlockSpec((None, None, 2, cout), lambda b, t: (b, t, 0, 0)),
        ),
        scratch_shapes=[
            pltpu.VMEM((th + kh - 1, w + kw - 1, cin), compute_dtype)],
        compiler_params=pltpu.CompilerParams(
            dimension_semantics=("parallel", "parallel"),
            vmem_limit_bytes=_vmem_limit_bytes()),
        cost_estimate=cost,
    )(x, scale_prev, shift_prev, wk)
    return y, stats


def _bn_lrelu_stage(y, scale, shift, out_dtype=jnp.float32):
    n, h, w, c = y.shape
    th = _pick_row_tile(h, w, target_elems=4096)
    nt = h // th
    cost = pl.CostEstimate(
        flops=4 * n * h * w * c,
        transcendentals=0,
        bytes_accessed=y.size * y.dtype.itemsize
        + n * h * w * c * jnp.dtype(out_dtype).itemsize)
    return pl.pallas_call(
        _bn_lrelu_kernel,
        out_shape=jax.ShapeDtypeStruct((n, h, w, c), out_dtype),
        grid=(n, nt),
        in_specs=[
            pl.BlockSpec((None, th, w, c), lambda b, t: (b, t, 0, 0)),
            pl.BlockSpec((1, c), lambda b, t: (0, 0)),
            pl.BlockSpec((1, c), lambda b, t: (0, 0)),
        ],
        out_specs=pl.BlockSpec((None, th, w, c), lambda b, t: (b, t, 0, 0)),
        compiler_params=pltpu.CompilerParams(
            dimension_semantics=("parallel", "parallel"),
            vmem_limit_bytes=_vmem_limit_bytes()),
        cost_estimate=cost,
    )(y, scale, shift)


def _bn_scale_shift(stats, gamma, beta, count):
    """Global (N,H,W) batch stats -> hoisted per-channel scale/shift (f32)."""
    total = jnp.sum(stats, axis=(0, 1))                     # (2, c)
    mean = total[0] / count
    var = jnp.maximum(total[1] / count - mean * mean, 0.0)  # biased (training mode)
    scale = gamma * lax.rsqrt(var + BN_EPS)
    shift = beta - mean * scale
    return scale.reshape(1, -1), shift.reshape(1, -1)


# --------------------------- parameters / forward ------------------------------
def init_double_conv_params(key, in_channels, out_channels, kernel=(3, 3)):
    """Xavier-uniform conv weights (as in the PyTorch module), default BN params."""
    mid_channels = out_channels
    kh, kw = kernel
    k1, k2 = jax.random.split(key)

    def xavier(k, cin, cout):
        fan_in = cin * kh * kw
        fan_out = cout * kh * kw
        bound = (6.0 / (fan_in + fan_out)) ** 0.5
        return jax.random.uniform(k, (kh, kw, cin, cout), jnp.float32,
                                  minval=-bound, maxval=bound)

    return {
        "w1": xavier(k1, in_channels, mid_channels),
        "g1": jnp.ones((mid_channels,), jnp.float32),
        "b1": jnp.zeros((mid_channels,), jnp.float32),
        "w2": xavier(k2, mid_channels, out_channels),
        "g2": jnp.ones((out_channels,), jnp.float32),
        "b2": jnp.zeros((out_channels,), jnp.float32),
    }


@functools.partial(jax.jit, static_argnames=("compute_dtype",))
def double_conv_forward(x_nchw, params, compute_dtype=jnp.bfloat16):
    """NCHW in / NCHW out (PyTorch convention); NHWC inside the kernels."""
    x = jnp.transpose(x_nchw, (0, 2, 3, 1))                 # NHWC
    n, h, w, cin = x.shape
    cnt = jnp.float32(n * h * w)
    inter_dtype = compute_dtype      # f32 path keeps f32 intermediates (exactness)

    dummy = jnp.zeros((1, cin), jnp.float32)
    # Stage 1: conv only (its BN+LReLU is fused into stage 2's input load).
    y1, st1 = _conv_stage(x, params["w1"], dummy, dummy,
                          apply_act=False, compute_dtype=compute_dtype,
                          out_dtype=inter_dtype)
    sc1, sh1 = _bn_scale_shift(st1, params["g1"], params["b1"], cnt)

    # Stage 2: fused (BN1-apply + LeakyReLU) -> conv2 (+ BN2 partial stats).
    y2, st2 = _conv_stage(y1, params["w2"], sc1, sh1,
                          apply_act=True, compute_dtype=compute_dtype,
                          out_dtype=inter_dtype)
    sc2, sh2 = _bn_scale_shift(st2, params["g2"], params["b2"], cnt)

    # Final BN2-apply + LeakyReLU (lane-dense elementwise pass).
    out = _bn_lrelu_stage(y2, sc2, sh2, out_dtype=jnp.float32)
    return jnp.transpose(out, (0, 3, 1, 2))


# ------------------------- pure-JAX reference (for checking) -------------------
def _ref_stage(x_nhwc, wgt, gamma, beta):
    y = lax.conv_general_dilated(
        x_nhwc, wgt, window_strides=(1, 1), padding="SAME",
        dimension_numbers=("NHWC", "HWIO", "NHWC"))
    mean = jnp.mean(y, axis=(0, 1, 2), keepdims=True)
    var = jnp.mean((y - mean) ** 2, axis=(0, 1, 2), keepdims=True)
    y = (y - mean) * lax.rsqrt(var + BN_EPS) * gamma + beta
    return jnp.where(y > 0, y, NEG_SLOPE * y)


def _ref_forward(x_nchw, params):
    x = jnp.transpose(x_nchw, (0, 2, 3, 1))
    y = _ref_stage(x, params["w1"], params["g1"], params["b1"])
    y = _ref_stage(y, params["w2"], params["g2"], params["b2"])
    return jnp.transpose(y, (0, 3, 1, 2))


if __name__ == "__main__":
    key = jax.random.PRNGKey(0)
    kx, kp = jax.random.split(key)

    N, Cin, H, W = 2, 4, 16, 16
    Cout = 8
    x = jax.random.normal(kx, (N, Cin, H, W), jnp.float32)
    params = init_double_conv_params(kp, Cin, Cout, kernel=(3, 3))

    ref = _ref_forward(x, params)

    # f32 compute path: exact-semantics check against the f32 reference.
    out = jax.block_until_ready(
        double_conv_forward(x, params, compute_dtype=jnp.float32))
    assert out.shape == (N, Cout, H, W), out.shape
    assert jnp.allclose(out, ref, atol=1e-4, rtol=1e-4), \
        float(jnp.max(jnp.abs(out - ref)))

    # Default bf16 MXU fast path (all generations): looser tolerance vs f32 ref.
    out_bf16 = jax.block_until_ready(double_conv_forward(x, params))
    assert out_bf16.shape == (N, Cout, H, W), out_bf16.shape
    assert jnp.allclose(out_bf16, ref, atol=2e-1, rtol=2e-1), \
        float(jnp.max(jnp.abs(out_bf16 - ref)))

    print("KERNEL_OK")
</pallas_src>

<mosaic_0001>
module attributes {stable_mosaic.version = 11 : i64} {
  func.func @_conv_kernel(%arg0: i32, %arg1: i32, %arg2: memref<1x16x16x4xf32, #tpu.memory_space<vmem>>, %arg3: memref<1x4xf32, #tpu.memory_space<vmem>>, %arg4: memref<1x4xf32, #tpu.memory_space<vmem>>, %arg5: memref<9x4x8xf32, #tpu.memory_space<vmem>>, %arg6: memref<1x16x16x8xf32, #tpu.memory_space<vmem>>, %arg7: memref<1x1x2x8xf32, #tpu.memory_space<vmem>>, %arg8: memref<18x18x4xf32, #tpu.memory_space<vmem>>) attributes {dimension_semantics = [#tpu.dimension_semantics<parallel>, #tpu.dimension_semantics<parallel>], iteration_bounds = array<i64: 2, 1>, scalar_prefetch = 0 : i64, scratch_operands = 1 : i64, tpu.core_type = #tpu.core_type<tc>, window_params = [{transform_indices = @transform_0, window_bounds = array<i64: 1, 16, 16, 4>}, {pipeline_mode = #tpu.pipeline_mode<synchronous>, transform_indices = @transform_1, window_bounds = array<i64: 1, 4>}, {pipeline_mode = #tpu.pipeline_mode<synchronous>, transform_indices = @transform_2, window_bounds = array<i64: 1, 4>}, {pipeline_mode = #tpu.pipeline_mode<synchronous>, transform_indices = @transform_3, window_bounds = array<i64: 9, 4, 8>}, {transform_indices = @transform_4, window_bounds = array<i64: 1, 16, 16, 8>}, {transform_indices = @transform_5, window_bounds = array<i64: 1, 1, 2, 8>}]} {
    %c16_i32 = arith.constant 16 : i32
    %0 = arith.muli %arg1, %c16_i32 : i32
    %1 = tpu.assume_multiple %0, 16 : i32
    %cst = arith.constant 0.000000e+00 : f32
    %2 = vector.broadcast %cst : f32 to vector<18x18x4xf32>
    %c0 = arith.constant 0 : index
    %c0_0 = arith.constant 0 : index
    %c0_1 = arith.constant 0 : index
    %3 = vector.load %arg8[%c0, %c0_0, %c0_1] : memref<18x18x4xf32, #tpu.memory_space<vmem>>, vector<18x18x4xf32>
    tpu.vector_store %arg8[%c0, %c0_0, %c0_1], %2 {strides = array<i32>} : memref<18x18x4xf32, #tpu.memory_space<vmem>>, vector<18x18x4xf32>,
    %c0_2 = arith.constant 0 : index
    %4 = arith.index_cast %1 : i32 to index
    %c0_3 = arith.constant 0 : index
    %c0_4 = arith.constant 0 : index
    %5 = vector.load %arg2[%c0_2, %4, %c0_3, %c0_4] : memref<1x16x16x4xf32, #tpu.memory_space<vmem>>, vector<1x16x16x4xf32>
    %6 = vector.shape_cast %5 : vector<1x16x16x4xf32> to vector<16x16x4xf32>
    %c1 = arith.constant 1 : index
    %c1_5 = arith.constant 1 : index
    %c0_6 = arith.constant 0 : index
    %7 = vector.load %arg8[%c1, %c1_5, %c0_6] : memref<18x18x4xf32, #tpu.memory_space<vmem>>, vector<16x16x4xf32>
    tpu.vector_store %arg8[%c1, %c1_5, %c0_6], %6 {strides = array<i32>} : memref<18x18x4xf32, #tpu.memory_space<vmem>>, vector<16x16x4xf32>,
    %c0_i32 = arith.constant 0 : i32
    %8 = arith.cmpi sgt, %arg1, %c0_i32 : i32
    %9 = arith.extui %8 : i1 to i32
    %c0_i32_7 = arith.constant 0 : i32
    %10 = arith.cmpi ne, %9, %c0_i32_7 : i32
    scf.if %10 {
      %c1_i32 = arith.constant 1 : i32
      %84 = arith.subi %1, %c1_i32 : i32
      %c0_81 = arith.constant 0 : index
      %85 = arith.index_cast %84 : i32 to index
      %c0_82 = arith.constant 0 : index
      %c0_83 = arith.constant 0 : index
      %86 = vector.load %arg2[%c0_81, %85, %c0_82, %c0_83] : memref<1x16x16x4xf32, #tpu.memory_space<vmem>>, vector<1x1x16x4xf32>
      %87 = vector.shape_cast %86 : vector<1x1x16x4xf32> to vector<1x16x4xf32>
      %c0_84 = arith.constant 0 : index
      %c1_85 = arith.constant 1 : index
      %c0_86 = arith.constant 0 : index
      %88 = vector.load %arg8[%c0_84, %c1_85, %c0_86] : memref<18x18x4xf32, #tpu.memory_space<vmem>>, vector<1x16x4xf32>
      tpu.vector_store %arg8[%c0_84, %c1_85, %c0_86], %87 {strides = array<i32>} : memref<18x18x4xf32, #tpu.memory_space<vmem>>, vector<1x16x4xf32>,
    } else {
    }
    %c0_i32_8 = arith.constant 0 : i32
    %11 = arith.cmpi slt, %arg1, %c0_i32_8 : i32
    %12 = arith.extui %11 : i1 to i32
    %c0_i32_9 = arith.constant 0 : i32
    %13 = arith.cmpi ne, %12, %c0_i32_9 : i32
    scf.if %13 {
      %c16_i32_81 = arith.constant 16 : i32
      %84 = arith.addi %1, %c16_i32_81 : i32
      %c0_82 = arith.constant 0 : index
      %85 = arith.index_cast %84 : i32 to index
      %c0_83 = arith.constant 0 : index
      %c0_84 = arith.constant 0 : index
      %86 = vector.load %arg2[%c0_82, %85, %c0_83, %c0_84] : memref<1x16x16x4xf32, #tpu.memory_space<vmem>>, vector<1x1x16x4xf32>
      %87 = vector.shape_cast %86 : vector<1x1x16x4xf32> to vector<1x16x4xf32>
      %c17 = arith.constant 17 : index
      %c1_85 = arith.constant 1 : index
      %c0_86 = arith.constant 0 : index
      %88 = vector.load %arg8[%c17, %c1_85, %c0_86] : memref<18x18x4xf32, #tpu.memory_space<vmem>>, vector<1x16x4xf32>
      tpu.vector_store %arg8[%c17, %c1_85, %c0_86], %87 {strides = array<i32>} : memref<18x18x4xf32, #tpu.memory_space<vmem>>, vector<1x16x4xf32>,
    } else {
    }
    %cst_10 = arith.constant 0.000000e+00 : f32
    %14 = vector.broadcast %cst_10 : f32 to vector<256x8xf32>
    %c0_11 = arith.constant 0 : index
    %c0_12 = arith.constant 0 : index
    %c0_13 = arith.constant 0 : index
    %15 = vector.load %arg8[%c0_11, %c0_12, %c0_13] : memref<18x18x4xf32, #tpu.memory_space<vmem>>, vector<16x16x4xf32>
    %16 = vector.shape_cast %15 : vector<16x16x4xf32> to vector<256x4xf32>
    %c0_14 = arith.constant 0 : index
    %c0_15 = arith.constant 0 : index
    %c0_16 = arith.constant 0 : index
    %17 = vector.load %arg5[%c0_14, %c0_15, %c0_16] : memref<9x4x8xf32, #tpu.memory_space<vmem>>, vector<1x4x8xf32>
    %18 = vector.shape_cast %17 : vector<1x4x8xf32> to vector<4x8xf32>
    %cst_17 = arith.constant dense<0.000000e+00> : vector<256x8xf32>
    %19 = tpu.matmul %16, %18, %cst_17 {dimension_numbers = #tpu.dot_dimension_numbers<[1], [0], [0], [1], [0, 0, 1, 1], [], []>} : vector<256x4xf32>, vector<4x8xf32>, vector<256x8xf32> -> vector<256x8xf32>
    %20 = arith.addf %14, %19 : vector<256x8xf32>
    %c0_18 = arith.constant 0 : index
    %c1_19 = arith.constant 1 : index
    %c0_20 = arith.constant 0 : index
    %21 = vector.load %arg8[%c0_18, %c1_19, %c0_20] : memref<18x18x4xf32, #tpu.memory_space<vmem>>, vector<16x16x4xf32>
    %22 = vector.shape_cast %21 : vector<16x16x4xf32> to vector<256x4xf32>
    %c1_21 = arith.constant 1 : index
    %c0_22 = arith.constant 0 : index
    %c0_23 = arith.constant 0 : index
    %23 = vector.load %arg5[%c1_21, %c0_22, %c0_23] : memref<9x4x8xf32, #tpu.memory_space<vmem>>, vector<1x4x8xf32>
    %24 = vector.shape_cast %23 : vector<1x4x8xf32> to vector<4x8xf32>
    %cst_24 = arith.constant dense<0.000000e+00> : vector<256x8xf32>
    %25 = tpu.matmul %22, %24, %cst_24 {dimension_numbers = #tpu.dot_dimension_numbers<[1], [0], [0], [1], [0, 0, 1, 1], [], []>} : vector<256x4xf32>, vector<4x8xf32>, vector<256x8xf32> -> vector<256x8xf32>
    %26 = arith.addf %20, %25 : vector<256x8xf32>
    %c0_25 = arith.constant 0 : index
    %c2 = arith.constant 2 : index
    %c0_26 = arith.constant 0 : index
    %27 = vector.load %arg8[%c0_25, %c2, %c0_26] : memref<18x18x4xf32, #tpu.memory_space<vmem>>, vector<16x16x4xf32>
    %28 = vector.shape_cast %27 : vector<16x16x4xf32> to vector<256x4xf32>
    %c2_27 = arith.constant 2 : index
    %c0_28 = arith.constant 0 : index
    %c0_29 = arith.constant 0 : index
    %29 = vector.load %arg5[%c2_27, %c0_28, %c0_29] : memref<9x4x8xf32, #tpu.memory_space<vmem>>, vector<1x4x8xf32>
    %30 = vector.shape_cast %29 : vector<1x4x8xf32> to vector<4x8xf32>
    %cst_30 = arith.constant dense<0.000000e+00> : vector<256x8xf32>
    %31 = tpu.matmul %28, %30, %cst_30 {dimension_numbers = #tpu.dot_dimension_numbers<[1], [0], [0], [1], [0, 0, 1, 1], [], []>} : vector<256x4xf32>, vector<4x8xf32>, vector<256x8xf32> -> vector<256x8xf32>
    %32 = arith.addf %26, %31 : vector<256x8xf32>
    %c1_31 = arith.constant 1 : index
    %c0_32 = arith.constant 0 : index
    %c0_33 = arith.constant 0 : index
    %33 = vector.load %arg8[%c1_31, %c0_32, %c0_33] : memref<18x18x4xf32, #tpu.memory_space<vmem>>, vector<16x16x4xf32>
    %34 = vector.shape_cast %33 : vector<16x16x4xf32> to vector<256x4xf32>
    %c3 = arith.constant 3 : index
    %c0_34 = arith.constant 0 : index
    %c0_35 = arith.constant 0 : index
    %35 = vector.load %arg5[%c3, %c0_34, %c0_35] : memref<9x4x8xf32, #tpu.memory_space<vmem>>, vector<1x4x8xf32>
    %36 = vector.shape_cast %35 : vector<1x4x8xf32> to vector<4x8xf32>
    %cst_36 = arith.constant dense<0.000000e+00> : vector<256x8xf32>
    %37 = tpu.matmul %34, %36, %cst_36 {dimension_numbers = #tpu.dot_dimension_numbers<[1], [0], [0], [1], [0, 0, 1, 1], [], []>} : vector<256x4xf32>, vector<4x8xf32>, vector<256x8xf32> -> vector<256x8xf32>
    %38 = arith.addf %32, %37 : vector<256x8xf32>
    %c1_37 = arith.constant 1 : index
    %c1_38 = arith.constant 1 : index
    %c0_39 = arith.constant 0 : index
    %39 = vector.load %arg8[%c1_37, %c1_38, %c0_39] : memref<18x18x4xf32, #tpu.memory_space<vmem>>, vector<16x16x4xf32>
    %40 = vector.shape_cast %39 : vector<16x16x4xf32> to vector<256x4xf32>
    %c4 = arith.constant 4 : index
    %c0_40 = arith.constant 0 : index
    %c0_41 = arith.constant 0 : index
    %41 = vector.load %arg5[%c4, %c0_40, %c0_41] : memref<9x4x8xf32, #tpu.memory_space<vmem>>, vector<1x4x8xf32>
    %42 = vector.shape_cast %41 : vector<1x4x8xf32> to vector<4x8xf32>
    %cst_42 = arith.constant dense<0.000000e+00> : vector<256x8xf32>
    %43 = tpu.matmul %40, %42, %cst_42 {dimension_numbers = #tpu.dot_dimension_numbers<[1], [0], [0], [1], [0, 0, 1, 1], [], []>} : vector<256x4xf32>, vector<4x8xf32>, vector<256x8xf32> -> vector<256x8xf32>
    %44 = arith.addf %38, %43 : vector<256x8xf32>
    %c1_43 = arith.constant 1 : index
    %c2_44 = arith.constant 2 : index
    %c0_45 = arith.constant 0 : index
    %45 = vector.load %arg8[%c1_43, %c2_44, %c0_45] : memref<18x18x4xf32, #tpu.memory_space<vmem>>, vector<16x16x4xf32>
    %46 = vector.shape_cast %45 : vector<16x16x4xf32> to vector<256x4xf32>
    %c5 = arith.constant 5 : index
    %c0_46 = arith.constant 0 : index
    %c0_47 = arith.constant 0 : index
    %47 = vector.load %arg5[%c5, %c0_46, %c0_47] : memref<9x4x8xf32, #tpu.memory_space<vmem>>, vector<1x4x8xf32>
    %48 = vector.shape_cast %47 : vector<1x4x8xf32> to vector<4x8xf32>
    %cst_48 = arith.constant dense<0.000000e+00> : vector<256x8xf32>
    %49 = tpu.matmul %46, %48, %cst_48 {dimension_numbers = #tpu.dot_dimension_numbers<[1], [0], [0], [1], [0, 0, 1, 1], [], []>} : vector<256x4xf32>, vector<4x8xf32>, vector<256x8xf32> -> vector<256x8xf32>
    %50 = arith.addf %44, %49 : vector<256x8xf32>
    %c2_49 = arith.constant 2 : index
    %c0_50 = arith.constant 0 : index
    %c0_51 = arith.constant 0 : index
    %51 = vector.load %arg8[%c2_49, %c0_50, %c0_51] : memref<18x18x4xf32, #tpu.memory_space<vmem>>, vector<16x16x4xf32>
    %52 = vector.shape_cast %51 : vector<16x16x4xf32> to vector<256x4xf32>
    %c6 = arith.constant 6 : index
    %c0_52 = arith.constant 0 : index
    %c0_53 = arith.constant 0 : index
    %53 = vector.load %arg5[%c6, %c0_52, %c0_53] : memref<9x4x8xf32, #tpu.memory_space<vmem>>, vector<1x4x8xf32>
    %54 = vector.shape_cast %53 : vector<1x4x8xf32> to vector<4x8xf32>
    %cst_54 = arith.constant dense<0.000000e+00> : vector<256x8xf32>
    %55 = tpu.matmul %52, %54, %cst_54 {dimension_numbers = #tpu.dot_dimension_numbers<[1], [0], [0], [1], [0, 0, 1, 1], [], []>} : vector<256x4xf32>, vector<4x8xf32>, vector<256x8xf32> -> vector<256x8xf32>
    %56 = arith.addf %50, %55 : vector<256x8xf32>
    %c2_55 = arith.constant 2 : index
    %c1_56 = arith.constant 1 : index
    %c0_57 = arith.constant 0 : index
    %57 = vector.load %arg8[%c2_55, %c1_56, %c0_57] : memref<18x18x4xf32, #tpu.memory_space<vmem>>, vector<16x16x4xf32>
    %58 = vector.shape_cast %57 : vector<16x16x4xf32> to vector<256x4xf32>
    %c7 = arith.constant 7 : index
    %c0_58 = arith.constant 0 : index
    %c0_59 = arith.constant 0 : index
    %59 = vector.load %arg5[%c7, %c0_58, %c0_59] : memref<9x4x8xf32, #tpu.memory_space<vmem>>, vector<1x4x8xf32>
    %60 = vector.shape_cast %59 : vector<1x4x8xf32> to vector<4x8xf32>
    %cst_60 = arith.constant dense<0.000000e+00> : vector<256x8xf32>
    %61 = tpu.matmul %58, %60, %cst_60 {dimension_numbers = #tpu.dot_dimension_numbers<[1], [0], [0], [1], [0, 0, 1, 1], [], []>} : vector<256x4xf32>, vector<4x8xf32>, vector<256x8xf32> -> vector<256x8xf32>
    %62 = arith.addf %56, %61 : vector<256x8xf32>
    %c2_61 = arith.constant 2 : index
    %c2_62 = arith.constant 2 : index
    %c0_63 = arith.constant 0 : index
    %63 = vector.load %arg8[%c2_61, %c2_62, %c0_63] : memref<18x18x4xf32, #tpu.memory_space<vmem>>, vector<16x16x4xf32>
    %64 = vector.shape_cast %63 : vector<16x16x4xf32> to vector<256x4xf32>
    %c8 = arith.constant 8 : index
    %c0_64 = arith.constant 0 : index
    %c0_65 = arith.constant 0 : index
    %65 = vector.load %arg5[%c8, %c0_64, %c0_65] : memref<9x4x8xf32, #tpu.memory_space<vmem>>, vector<1x4x8xf32>
    %66 = vector.shape_cast %65 : vector<1x4x8xf32> to vector<4x8xf32>
    %cst_66 = arith.constant dense<0.000000e+00> : vector<256x8xf32>
    %67 = tpu.matmul %64, %66, %cst_66 {dimension_numbers = #tpu.dot_dimension_numbers<[1], [0], [0], [1], [0, 0, 1, 1], [], []>} : vector<256x4xf32>, vector<4x8xf32>, vector<256x8xf32> -> vector<256x8xf32>
    %68 = arith.addf %62, %67 : vector<256x8xf32>
    %69 = vector.shape_cast %68 : vector<256x8xf32> to vector<16x16x8xf32>
    %c0_67 = arith.constant 0 : index
    %c0_68 = arith.constant 0 : index
    %c0_69 = arith.constant 0 : index
    %c0_70 = arith.constant 0 : index
    %70 = vector.load %arg6[%c0_67, %c0_68, %c0_69, %c0_70] : memref<1x16x16x8xf32, #tpu.memory_space<vmem>>, vector<1x16x16x8xf32>
    %71 = vector.shape_cast %70 : vector<1x16x16x8xf32> to vector<16x16x8xf32>
    %72 = vector.shape_cast %69 : vector<16x16x8xf32> to vector<1x16x16x8xf32>
    tpu.vector_store %arg6[%c0_67, %c0_68, %c0_69, %c0_70], %72 {strides = array<i32>} : memref<1x16x16x8xf32, #tpu.memory_space<vmem>>, vector<1x16x16x8xf32>,
    %cst_71 = arith.constant dense<0.000000e+00> : vector<8xf32>
    %73 = vector.multi_reduction <add>, %68, %cst_71 [0] : vector<256x8xf32> to vector<8xf32>
    %74 = vector.shape_cast %73 : vector<8xf32> to vector<1x8xf32>
    %c0_72 = arith.constant 0 : index
    %c0_73 = arith.constant 0 : index
    %c0_74 = arith.constant 0 : index
    %c0_75 = arith.constant 0 : index
    %75 = vector.load %arg7[%c0_72, %c0_73, %c0_74, %c0_75] : memref<1x1x2x8xf32, #tpu.memory_space<vmem>>, vector<1x1x1x8xf32>
    %76 = vector.shape_cast %75 : vector<1x1x1x8xf32> to vector<1x8xf32>
    %77 = vector.shape_cast %74 : vector<1x8xf32> to vector<1x1x1x8xf32>
    tpu.vector_store %arg7[%c0_72, %c0_73, %c0_74, %c0_75], %77 {strides = array<i32>} : memref<1x1x2x8xf32, #tpu.memory_space<vmem>>, vector<1x1x1x8xf32>,
    %78 = arith.mulf %68, %68 : vector<256x8xf32>
    %cst_76 = arith.constant dense<0.000000e+00> : vector<8xf32>
    %79 = vector.multi_reduction <add>, %78, %cst_76 [0] : vector<256x8xf32> to vector<8xf32>
    %80 = vector.shape_cast %79 : vector<8xf32> to vector<1x8xf32>
    %c0_77 = arith.constant 0 : index
    %c0_78 = arith.constant 0 : index
    %c1_79 = arith.constant 1 : index
    %c0_80 = arith.constant 0 : index
    %81 = vector.load %arg7[%c0_77, %c0_78, %c1_79, %c0_80] : memref<1x1x2x8xf32, #tpu.memory_space<vmem>>, vector<1x1x1x8xf32>
    %82 = vector.shape_cast %81 : vector<1x1x1x8xf32> to vector<1x8xf32>
    %83 = vector.shape_cast %80 : vector<1x8xf32> to vector<1x1x1x8xf32>
    tpu.vector_store %arg7[%c0_77, %c0_78, %c1_79, %c0_80], %83 {strides = array<i32>} : memref<1x1x2x8xf32, #tpu.memory_space<vmem>>, vector<1x1x1x8xf32>,
    return
  }
  func.func @transform_0(%arg0: i32, %arg1: i32) -> (i32, i32, i32, i32) {
    %c0_i32 = arith.constant 0 : i32
    %c0_i32_0 = arith.constant 0 : i32
    %c0_i32_1 = arith.constant 0 : i32
    %c0_i32_2 = arith.constant 0 : i32
    return %arg0, %c0_i32, %c0_i32_0, %c0_i32_1 : i32, i32, i32, i32
  }
  func.func @transform_1(%arg0: i32, %arg1: i32) -> (i32, i32) {
    %c0_i32 = arith.constant 0 : i32
    %c0_i32_0 = arith.constant 0 : i32
    %c0_i32_1 = arith.constant 0 : i32
    return %c0_i32, %c0_i32_0 : i32, i32
  }
  func.func @transform_2(%arg0: i32, %arg1: i32) -> (i32, i32) {
    %c0_i32 = arith.constant 0 : i32
    %c0_i32_0 = arith.constant 0 : i32
    %c0_i32_1 = arith.constant 0 : i32
    return %c0_i32, %c0_i32_0 : i32, i32
  }
  func.func @transform_3(%arg0: i32, %arg1: i32) -> (i32, i32, i32) {
    %c0_i32 = arith.constant 0 : i32
    %c0_i32_0 = arith.constant 0 : i32
    %c0_i32_1 = arith.constant 0 : i32
    %c0_i32_2 = arith.constant 0 : i32
    return %c0_i32, %c0_i32_0, %c0_i32_1 : i32, i32, i32
  }
  func.func @transform_4(%arg0: i32, %arg1: i32) -> (i32, i32, i32, i32) {
    %c0_i32 = arith.constant 0 : i32
    %c0_i32_0 = arith.constant 0 : i32
    %c0_i32_1 = arith.constant 0 : i32
    return %arg0, %arg1, %c0_i32, %c0_i32_0 : i32, i32, i32, i32
  }
  func.func @transform_5(%arg0: i32, %arg1: i32) -> (i32, i32, i32, i32) {
    %c0_i32 = arith.constant 0 : i32
    %c0_i32_0 = arith.constant 0 : i32
    %c0_i32_1 = arith.constant 0 : i32
    return %arg0, %arg1, %c0_i32, %c0_i32_0 : i32, i32, i32, i32
  }
}

module attributes {stable_mosaic.version = 11 : i64} {
  func.func @_bn_lrelu_kernel(%arg0: i32, %arg1: i32, %arg2: memref<1x16x16x8xf32, #tpu.memory_space<vmem>>, %arg3: memref<1x8xf32, #tpu.memory_space<vmem>>, %arg4: memref<1x8xf32, #tpu.memory_space<vmem>>, %arg5: memref<1x16x16x8xf32, #tpu.memory_space<vmem>>) attributes {dimension_semantics = [#tpu.dimension_semantics<parallel>, #tpu.dimension_semantics<parallel>], iteration_bounds = array<i64: 2, 1>, scalar_prefetch = 0 : i64, scratch_operands = 0 : i64, tpu.core_type = #tpu.core_type<tc>, window_params = [{transform_indices = @transform_0, window_bounds = array<i64: 1, 16, 16, 8>}, {pipeline_mode = #tpu.pipeline_mode<synchronous>, transform_indices = @transform_1, window_bounds = array<i64: 1, 8>}, {pipeline_mode = #tpu.pipeline_mode<synchronous>, transform_indices = @transform_2, window_bounds = array<i64: 1, 8>}, {transform_indices = @transform_3, window_bounds = array<i64: 1, 16, 16, 8>}]} {
    %c0 = arith.constant 0 : index
    %c0_0 = arith.constant 0 : index
    %c0_1 = arith.constant 0 : index
    %c0_2 = arith.constant 0 : index
    %0 = vector.load %arg2[%c0, %c0_0, %c0_1, %c0_2] : memref<1x16x16x8xf32, #tpu.memory_space<vmem>>, vector<1x16x16x8xf32>
    %1 = vector.shape_cast %0 : vector<1x16x16x8xf32> to vector<16x16x8xf32>
    %c0_3 = arith.constant 0 : index
    %c0_4 = arith.constant 0 : index
    %2 = vector.load %arg3[%c0_3, %c0_4] : memref<1x8xf32, #tpu.memory_space<vmem>>, vector<1x8xf32>
    %3 = vector.shape_cast %2 : vector<1x8xf32> to vector<8xf32>
    %4 = vector.shape_cast %3 : vector<8xf32> to vector<1x1x8xf32>
    %5 = vector.broadcast %4 : vector<1x1x8xf32> to vector<16x16x8xf32>
    %6 = arith.mulf %1, %5 : vector<16x16x8xf32>
    %c0_5 = arith.constant 0 : index
    %c0_6 = arith.constant 0 : index
    %7 = vector.load %arg4[%c0_5, %c0_6] : memref<1x8xf32, #tpu.memory_space<vmem>>, vector<1x8xf32>
    %8 = vector.shape_cast %7 : vector<1x8xf32> to vector<8xf32>
    %9 = vector.shape_cast %8 : vector<8xf32> to vector<1x1x8xf32>
    %10 = vector.broadcast %9 : vector<1x1x8xf32> to vector<16x16x8xf32>
    %11 = arith.addf %6, %10 : vector<16x16x8xf32>
    %cst = arith.constant 0.000000e+00 : f32
    %12 = vector.broadcast %cst : f32 to vector<16x16x8xf32>
    %13 = arith.cmpf ogt, %11, %12 : vector<16x16x8xf32>
    %cst_7 = arith.constant 2.000000e-01 : f32
    %14 = vector.broadcast %cst_7 : f32 to vector<16x16x8xf32>
    %15 = arith.mulf %14, %11 : vector<16x16x8xf32>
    %16 = arith.select %13, %11, %15 : vector<16x16x8xi1>, vector<16x16x8xf32>
    %c0_8 = arith.constant 0 : index
    %c0_9 = arith.constant 0 : index
    %c0_10 = arith.constant 0 : index
    %c0_11 = arith.constant 0 : index
    %17 = vector.load %arg5[%c0_8, %c0_9, %c0_10, %c0_11] : memref<1x16x16x8xf32, #tpu.memory_space<vmem>>, vector<1x16x16x8xf32>
    %18 = vector.shape_cast %17 : vector<1x16x16x8xf32> to vector<16x16x8xf32>
    %19 = vector.shape_cast %16 : vector<16x16x8xf32> to vector<1x16x16x8xf32>
    tpu.vector_store %arg5[%c0_8, %c0_9, %c0_10, %c0_11], %19 {strides = array<i32>} : memref<1x16x16x8xf32, #tpu.memory_space<vmem>>, vector<1x16x16x8xf32>,
    return
  }
  func.func @transform_0(%arg0: i32, %arg1: i32) -> (i32, i32, i32, i32) {
    %c0_i32 = arith.constant 0 : i32
    %c0_i32_0 = arith.constant 0 : i32
    %c0_i32_1 = arith.constant 0 : i32
    return %arg0, %arg1, %c0_i32, %c0_i32_0 : i32, i32, i32, i32
  }
  func.func @transform_1(%arg0: i32, %arg1: i32) -> (i32, i32) {
    %c0_i32 = arith.constant 0 : i32
    %c0_i32_0 = arith.constant 0 : i32
    %c0_i32_1 = arith.constant 0 : i32
    return %c0_i32, %c0_i32_0 : i32, i32
  }
  func.func @transform_2(%arg0: i32, %arg1: i32) -> (i32, i32) {
    %c0_i32 = arith.constant 0 : i32
    %c0_i32_0 = arith.constant 0 : i32
    %c0_i32_1 = arith.constant 0 : i32
    return %c0_i32, %c0_i32_0 : i32, i32
  }
  func.func @transform_3(%arg0: i32, %arg1: i32) -> (i32, i32, i32, i32) {
    %c0_i32 = arith.constant 0 : i32
    %c0_i32_0 = arith.constant 0 : i32
    %c0_i32_1 = arith.constant 0 : i32
    return %arg0, %arg1, %c0_i32, %c0_i32_0 : i32, i32, i32, i32
  }
}

module attributes {stable_mosaic.version = 11 : i64} {
  func.func @_conv_kernel(%arg0: i32, %arg1: i32, %arg2: memref<1x16x16x8xf32, #tpu.memory_space<vmem>>, %arg3: memref<1x8xf32, #tpu.memory_space<vmem>>, %arg4: memref<1x8xf32, #tpu.memory_space<vmem>>, %arg5: memref<9x8x8xf32, #tpu.memory_space<vmem>>, %arg6: memref<1x16x16x8xf32, #tpu.memory_space<vmem>>, %arg7: memref<1x1x2x8xf32, #tpu.memory_space<vmem>>, %arg8: memref<18x18x8xf32, #tpu.memory_space<vmem>>) attributes {dimension_semantics = [#tpu.dimension_semantics<parallel>, #tpu.dimension_semantics<parallel>], iteration_bounds = array<i64: 2, 1>, scalar_prefetch = 0 : i64, scratch_operands = 1 : i64, tpu.core_type = #tpu.core_type<tc>, window_params = [{transform_indices = @transform_0, window_bounds = array<i64: 1, 16, 16, 8>}, {pipeline_mode = #tpu.pipeline_mode<synchronous>, transform_indices = @transform_1, window_bounds = array<i64: 1, 8>}, {pipeline_mode = #tpu.pipeline_mode<synchronous>, transform_indices = @transform_2, window_bounds = array<i64: 1, 8>}, {pipeline_mode = #tpu.pipeline_mode<synchronous>, transform_indices = @transform_3, window_bounds = array<i64: 9, 8, 8>}, {transform_indices = @transform_4, window_bounds = array<i64: 1, 16, 16, 8>}, {transform_indices = @transform_5, window_bounds = array<i64: 1, 1, 2, 8>}]} {
    %c16_i32 = arith.constant 16 : i32
    %0 = arith.muli %arg1, %c16_i32 : i32
    %1 = tpu.assume_multiple %0, 16 : i32
    %cst = arith.constant 0.000000e+00 : f32
    %2 = vector.broadcast %cst : f32 to vector<18x18x8xf32>
    %c0 = arith.constant 0 : index
    %c0_0 = arith.constant 0 : index
    %c0_1 = arith.constant 0 : index
    %3 = vector.load %arg8[%c0, %c0_0, %c0_1] : memref<18x18x8xf32, #tpu.memory_space<vmem>>, vector<18x18x8xf32>
    tpu.vector_store %arg8[%c0, %c0_0, %c0_1], %2 {strides = array<i32>} : memref<18x18x8xf32, #tpu.memory_space<vmem>>, vector<18x18x8xf32>,
    %c0_2 = arith.constant 0 : index
    %4 = arith.index_cast %1 : i32 to index
    %c0_3 = arith.constant 0 : index
    %c0_4 = arith.constant 0 : index
    %5 = vector.load %arg2[%c0_2, %4, %c0_3, %c0_4] : memref<1x16x16x8xf32, #tpu.memory_space<vmem>>, vector<1x16x16x8xf32>
    %6 = vector.shape_cast %5 : vector<1x16x16x8xf32> to vector<16x16x8xf32>
    %c0_5 = arith.constant 0 : index
    %c0_6 = arith.constant 0 : index
    %7 = vector.load %arg3[%c0_5, %c0_6] : memref<1x8xf32, #tpu.memory_space<vmem>>, vector<1x8xf32>
    %8 = vector.shape_cast %7 : vector<1x8xf32> to vector<8xf32>
    %9 = vector.shape_cast %8 : vector<8xf32> to vector<1x1x8xf32>
    %10 = vector.broadcast %9 : vector<1x1x8xf32> to vector<16x16x8xf32>
    %11 = arith.mulf %6, %10 : vector<16x16x8xf32>
    %c0_7 = arith.constant 0 : index
    %c0_8 = arith.constant 0 : index
    %12 = vector.load %arg4[%c0_7, %c0_8] : memref<1x8xf32, #tpu.memory_space<vmem>>, vector<1x8xf32>
    %13 = vector.shape_cast %12 : vector<1x8xf32> to vector<8xf32>
    %14 = vector.shape_cast %13 : vector<8xf32> to vector<1x1x8xf32>
    %15 = vector.broadcast %14 : vector<1x1x8xf32> to vector<16x16x8xf32>
    %16 = arith.addf %11, %15 : vector<16x16x8xf32>
    %cst_9 = arith.constant 0.000000e+00 : f32
    %17 = vector.broadcast %cst_9 : f32 to vector<16x16x8xf32>
    %18 = arith.cmpf ogt, %16, %17 : vector<16x16x8xf32>
    %cst_10 = arith.constant 2.000000e-01 : f32
    %19 = vector.broadcast %cst_10 : f32 to vector<16x16x8xf32>
    %20 = arith.mulf %19, %16 : vector<16x16x8xf32>
    %21 = arith.select %18, %16, %20 : vector<16x16x8xi1>, vector<16x16x8xf32>
    %c1 = arith.constant 1 : index
    %c1_11 = arith.constant 1 : index
    %c0_12 = arith.constant 0 : index
    %22 = vector.load %arg8[%c1, %c1_11, %c0_12] : memref<18x18x8xf32, #tpu.memory_space<vmem>>, vector<16x16x8xf32>
    tpu.vector_store %arg8[%c1, %c1_11, %c0_12], %21 {strides = array<i32>} : memref<18x18x8xf32, #tpu.memory_space<vmem>>, vector<16x16x8xf32>,
    %c0_i32 = arith.constant 0 : i32
    %23 = arith.cmpi sgt, %arg1, %c0_i32 : i32
    %24 = arith.extui %23 : i1 to i32
    %c0_i32_13 = arith.constant 0 : i32
    %25 = arith.cmpi ne, %24, %c0_i32_13 : i32
    scf.if %25 {
      %c1_i32 = arith.constant 1 : i32
      %99 = arith.subi %1, %c1_i32 : i32
      %c0_87 = arith.constant 0 : index
      %100 = arith.index_cast %99 : i32 to index
      %c0_88 = arith.constant 0 : index
      %c0_89 = arith.constant 0 : index
      %101 = vector.load %arg2[%c0_87, %100, %c0_88, %c0_89] : memref<1x16x16x8xf32, #tpu.memory_space<vmem>>, vector<1x1x16x8xf32>
      %102 = vector.shape_cast %101 : vector<1x1x16x8xf32> to vector<1x16x8xf32>
      %c0_90 = arith.constant 0 : index
      %c0_91 = arith.constant 0 : index
      %103 = vector.load %arg3[%c0_90, %c0_91] : memref<1x8xf32, #tpu.memory_space<vmem>>, vector<1x8xf32>
      %104 = vector.shape_cast %103 : vector<1x8xf32> to vector<8xf32>
      %105 = vector.shape_cast %104 : vector<8xf32> to vector<1x1x8xf32>
      %106 = vector.broadcast %105 : vector<1x1x8xf32> to vector<1x16x8xf32>
      %107 = arith.mulf %102, %106 : vector<1x16x8xf32>
      %c0_92 = arith.constant 0 : index
      %c0_93 = arith.constant 0 : index
      %108 = vector.load %arg4[%c0_92, %c0_93] : memref<1x8xf32, #tpu.memory_space<vmem>>, vector<1x8xf32>
      %109 = vector.shape_cast %108 : vector<1x8xf32> to vector<8xf32>
      %110 = vector.shape_cast %109 : vector<8xf32> to vector<1x1x8xf32>
      %111 = vector.broadcast %110 : vector<1x1x8xf32> to vector<1x16x8xf32>
      %112 = arith.addf %107, %111 : vector<1x16x8xf32>
      %cst_94 = arith.constant 0.000000e+00 : f32
      %113 = vector.broadcast %cst_94 : f32 to vector<1x16x8xf32>
      %114 = arith.cmpf ogt, %112, %113 : vector<1x16x8xf32>
      %cst_95 = arith.constant 2.000000e-01 : f32
      %115 = vector.broadcast %cst_95 : f32 to vector<1x16x8xf32>
      %116 = arith.mulf %115, %112 : vector<1x16x8xf32>
      %117 = arith.select %114, %112, %116 : vector<1x16x8xi1>, vector<1x16x8xf32>
      %c0_96 = arith.constant 0 : index
      %c1_97 = arith.constant 1 : index
      %c0_98 = arith.constant 0 : index
      %118 = vector.load %arg8[%c0_96, %c1_97, %c0_98] : memref<18x18x8xf32, #tpu.memory_space<vmem>>, vector<1x16x8xf32>
      tpu.vector_store %arg8[%c0_96, %c1_97, %c0_98], %117 {strides = array<i32>} : memref<18x18x8xf32, #tpu.memory_space<vmem>>, vector<1x16x8xf32>,
    } else {
    }
    %c0_i32_14 = arith.constant 0 : i32
    %26 = arith.cmpi slt, %arg1, %c0_i32_14 : i32
    %27 = arith.extui %26 : i1 to i32
    %c0_i32_15 = arith.constant 0 : i32
    %28 = arith.cmpi ne, %27, %c0_i32_15 : i32
    scf.if %28 {
      %c16_i32_87 = arith.constant 16 : i32
      %99 = arith.addi %1, %c16_i32_87 : i32
      %c0_88 = arith.constant 0 : index
      %100 = arith.index_cast %99 : i32 to index
      %c0_89 = arith.constant 0 : index
      %c0_90 = arith.constant 0 : index
      %101 = vector.load %arg2[%c0_88, %100, %c0_89, %c0_90] : memref<1x16x16x8xf32, #tpu.memory_space<vmem>>, vector<1x1x16x8xf32>
      %102 = vector.shape_cast %101 : vector<1x1x16x8xf32> to vector<1x16x8xf32>
      %c0_91 = arith.constant 0 : index
      %c0_92 = arith.constant 0 : index
      %103 = vector.load %arg3[%c0_91, %c0_92] : memref<1x8xf32, #tpu.memory_space<vmem>>, vector<1x8xf32>
      %104 = vector.shape_cast %103 : vector<1x8xf32> to vector<8xf32>
      %105 = vector.shape_cast %104 : vector<8xf32> to vector<1x1x8xf32>
      %106 = vector.broadcast %105 : vector<1x1x8xf32> to vector<1x16x8xf32>
      %107 = arith.mulf %102, %106 : vector<1x16x8xf32>
      %c0_93 = arith.constant 0 : index
      %c0_94 = arith.constant 0 : index
      %108 = vector.load %arg4[%c0_93, %c0_94] : memref<1x8xf32, #tpu.memory_space<vmem>>, vector<1x8xf32>
      %109 = vector.shape_cast %108 : vector<1x8xf32> to vector<8xf32>
      %110 = vector.shape_cast %109 : vector<8xf32> to vector<1x1x8xf32>
      %111 = vector.broadcast %110 : vector<1x1x8xf32> to vector<1x16x8xf32>
      %112 = arith.addf %107, %111 : vector<1x16x8xf32>
      %cst_95 = arith.constant 0.000000e+00 : f32
      %113 = vector.broadcast %cst_95 : f32 to vector<1x16x8xf32>
      %114 = arith.cmpf ogt, %112, %113 : vector<1x16x8xf32>
      %cst_96 = arith.constant 2.000000e-01 : f32
      %115 = vector.broadcast %cst_96 : f32 to vector<1x16x8xf32>
      %116 = arith.mulf %115, %112 : vector<1x16x8xf32>
      %117 = arith.select %114, %112, %116 : vector<1x16x8xi1>, vector<1x16x8xf32>
      %c17 = arith.constant 17 : index
      %c1_97 = arith.constant 1 : index
      %c0_98 = arith.constant 0 : index
      %118 = vector.load %arg8[%c17, %c1_97, %c0_98] : memref<18x18x8xf32, #tpu.memory_space<vmem>>, vector<1x16x8xf32>
      tpu.vector_store %arg8[%c17, %c1_97, %c0_98], %117 {strides = array<i32>} : memref<18x18x8xf32, #tpu.memory_space<vmem>>, vector<1x16x8xf32>,
    } else {
    }
    %cst_16 = arith.constant 0.000000e+00 : f32
    %29 = vector.broadcast %cst_16 : f32 to vector<256x8xf32>
    %c0_17 = arith.constant 0 : index
    %c0_18 = arith.constant 0 : index
    %c0_19 = arith.constant 0 : index
    %30 = vector.load %arg8[%c0_17, %c0_18, %c0_19] : memref<18x18x8xf32, #tpu.memory_space<vmem>>, vector<16x16x8xf32>
    %31 = vector.shape_cast %30 : vector<16x16x8xf32> to vector<256x8xf32>
    %c0_20 = arith.constant 0 : index
    %c0_21 = arith.constant 0 : index
    %c0_22 = arith.constant 0 : index
    %32 = vector.load %arg5[%c0_20, %c0_21, %c0_22] : memref<9x8x8xf32, #tpu.memory_space<vmem>>, vector<1x8x8xf32>
    %33 = vector.shape_cast %32 : vector<1x8x8xf32> to vector<8x8xf32>
    %cst_23 = arith.constant dense<0.000000e+00> : vector<256x8xf32>
    %34 = tpu.matmul %31, %33, %cst_23 {dimension_numbers = #tpu.dot_dimension_numbers<[1], [0], [0], [1], [0, 0, 1, 1], [], []>} : vector<256x8xf32>, vector<8x8xf32>, vector<256x8xf32> -> vector<256x8xf32>
    %35 = arith.addf %29, %34 : vector<256x8xf32>
    %c0_24 = arith.constant 0 : index
    %c1_25 = arith.constant 1 : index
    %c0_26 = arith.constant 0 : index
    %36 = vector.load %arg8[%c0_24, %c1_25, %c0_26] : memref<18x18x8xf32, #tpu.memory_space<vmem>>, vector<16x16x8xf32>
    %37 = vector.shape_cast %36 : vector<16x16x8xf32> to vector<256x8xf32>
    %c1_27 = arith.constant 1 : index
    %c0_28 = arith.constant 0 : index
    %c0_29 = arith.constant 0 : index
    %38 = vector.load %arg5[%c1_27, %c0_28, %c0_29] : memref<9x8x8xf32, #tpu.memory_space<vmem>>, vector<1x8x8xf32>
    %39 = vector.shape_cast %38 : vector<1x8x8xf32> to vector<8x8xf32>
    %cst_30 = arith.constant dense<0.000000e+00> : vector<256x8xf32>
    %40 = tpu.matmul %37, %39, %cst_30 {dimension_numbers = #tpu.dot_dimension_numbers<[1], [0], [0], [1], [0, 0, 1, 1], [], []>} : vector<256x8xf32>, vector<8x8xf32>, vector<256x8xf32> -> vector<256x8xf32>
    %41 = arith.addf %35, %40 : vector<256x8xf32>
    %c0_31 = arith.constant 0 : index
    %c2 = arith.constant 2 : index
    %c0_32 = arith.constant 0 : index
    %42 = vector.load %arg8[%c0_31, %c2, %c0_32] : memref<18x18x8xf32, #tpu.memory_space<vmem>>, vector<16x16x8xf32>
    %43 = vector.shape_cast %42 : vector<16x16x8xf32> to vector<256x8xf32>
    %c2_33 = arith.constant 2 : index
    %c0_34 = arith.constant 0 : index
    %c0_35 = arith.constant 0 : index
    %44 = vector.load %arg5[%c2_33, %c0_34, %c0_35] : memref<9x8x8xf32, #tpu.memory_space<vmem>>, vector<1x8x8xf32>
    %45 = vector.shape_cast %44 : vector<1x8x8xf32> to vector<8x8xf32>
    %cst_36 = arith.constant dense<0.000000e+00> : vector<256x8xf32>
    %46 = tpu.matmul %43, %45, %cst_36 {dimension_numbers = #tpu.dot_dimension_numbers<[1], [0], [0], [1], [0, 0, 1, 1], [], []>} : vector<256x8xf32>, vector<8x8xf32>, vector<256x8xf32> -> vector<256x8xf32>
    %47 = arith.addf %41, %46 : vector<256x8xf32>
    %c1_37 = arith.constant 1 : index
    %c0_38 = arith.constant 0 : index
    %c0_39 = arith.constant 0 : index
    %48 = vector.load %arg8[%c1_37, %c0_38, %c0_39] : memref<18x18x8xf32, #tpu.memory_space<vmem>>, vector<16x16x8xf32>
    %49 = vector.shape_cast %48 : vector<16x16x8xf32> to vector<256x8xf32>
    %c3 = arith.constant 3 : index
    %c0_40 = arith.constant 0 : index
    %c0_41 = arith.constant 0 : index
    %50 = vector.load %arg5[%c3, %c0_40, %c0_41] : memref<9x8x8xf32, #tpu.memory_space<vmem>>, vector<1x8x8xf32>
    %51 = vector.shape_cast %50 : vector<1x8x8xf32> to vector<8x8xf32>
    %cst_42 = arith.constant dense<0.000000e+00> : vector<256x8xf32>
    %52 = tpu.matmul %49, %51, %cst_42 {dimension_numbers = #tpu.dot_dimension_numbers<[1], [0], [0], [1], [0, 0, 1, 1], [], []>} : vector<256x8xf32>, vector<8x8xf32>, vector<256x8xf32> -> vector<256x8xf32>
    %53 = arith.addf %47, %52 : vector<256x8xf32>
    %c1_43 = arith.constant 1 : index
    %c1_44 = arith.constant 1 : index
    %c0_45 = arith.constant 0 : index
    %54 = vector.load %arg8[%c1_43, %c1_44, %c0_45] : memref<18x18x8xf32, #tpu.memory_space<vmem>>, vector<16x16x8xf32>
    %55 = vector.shape_cast %54 : vector<16x16x8xf32> to vector<256x8xf32>
    %c4 = arith.constant 4 : index
    %c0_46 = arith.constant 0 : index
    %c0_47 = arith.constant 0 : index
    %56 = vector.load %arg5[%c4, %c0_46, %c0_47] : memref<9x8x8xf32, #tpu.memory_space<vmem>>, vector<1x8x8xf32>
    %57 = vector.shape_cast %56 : vector<1x8x8xf32> to vector<8x8xf32>
    %cst_48 = arith.constant dense<0.000000e+00> : vector<256x8xf32>
    %58 = tpu.matmul %55, %57, %cst_48 {dimension_numbers = #tpu.dot_dimension_numbers<[1], [0], [0], [1], [0, 0, 1, 1], [], []>} : vector<256x8xf32>, vector<8x8xf32>, vector<256x8xf32> -> vector<256x8xf32>
    %59 = arith.addf %53, %58 : vector<256x8xf32>
    %c1_49 = arith.constant 1 : index
    %c2_50 = arith.constant 2 : index
    %c0_51 = arith.constant 0 : index
    %60 = vector.load %arg8[%c1_49, %c2_50, %c0_51] : memref<18x18x8xf32, #tpu.memory_space<vmem>>, vector<16x16x8xf32>
    %61 = vector.shape_cast %60 : vector<16x16x8xf32> to vector<256x8xf32>
    %c5 = arith.constant 5 : index
    %c0_52 = arith.constant 0 : index
    %c0_53 = arith.constant 0 : index
    %62 = vector.load %arg5[%c5, %c0_52, %c0_53] : memref<9x8x8xf32, #tpu.memory_space<vmem>>, vector<1x8x8xf32>
    %63 = vector.shape_cast %62 : vector<1x8x8xf32> to vector<8x8xf32>
    %cst_54 = arith.constant dense<0.000000e+00> : vector<256x8xf32>
    %64 = tpu.matmul %61, %63, %cst_54 {dimension_numbers = #tpu.dot_dimension_numbers<[1], [0], [0], [1], [0, 0, 1, 1], [], []>} : vector<256x8xf32>, vector<8x8xf32>, vector<256x8xf32> -> vector<256x8xf32>
    %65 = arith.addf %59, %64 : vector<256x8xf32>
    %c2_55 = arith.constant 2 : index
    %c0_56 = arith.constant 0 : index
    %c0_57 = arith.constant 0 : index
    %66 = vector.load %arg8[%c2_55, %c0_56, %c0_57] : memref<18x18x8xf32, #tpu.memory_space<vmem>>, vector<16x16x8xf32>
    %67 = vector.shape_cast %66 : vector<16x16x8xf32> to vector<256x8xf32>
    %c6 = arith.constant 6 : index
    %c0_58 = arith.constant 0 : index
    %c0_59 = arith.constant 0 : index
    %68 = vector.load %arg5[%c6, %c0_58, %c0_59] : memref<9x8x8xf32, #tpu.memory_space<vmem>>, vector<1x8x8xf32>
    %69 = vector.shape_cast %68 : vector<1x8x8xf32> to vector<8x8xf32>
    %cst_60 = arith.constant dense<0.000000e+00> : vector<256x8xf32>
    %70 = tpu.matmul %67, %69, %cst_60 {dimension_numbers = #tpu.dot_dimension_numbers<[1], [0], [0], [1], [0, 0, 1, 1], [], []>} : vector<256x8xf32>, vector<8x8xf32>, vector<256x8xf32> -> vector<256x8xf32>
    %71 = arith.addf %65, %70 : vector<256x8xf32>
    %c2_61 = arith.constant 2 : index
    %c1_62 = arith.constant 1 : index
    %c0_63 = arith.constant 0 : index
    %72 = vector.load %arg8[%c2_61, %c1_62, %c0_63] : memref<18x18x8xf32, #tpu.memory_space<vmem>>, vector<16x16x8xf32>
    %73 = vector.shape_cast %72 : vector<16x16x8xf32> to vector<256x8xf32>
    %c7 = arith.constant 7 : index
    %c0_64 = arith.constant 0 : index
    %c0_65 = arith.constant 0 : index
    %74 = vector.load %arg5[%c7, %c0_64, %c0_65] : memref<9x8x8xf32, #tpu.memory_space<vmem>>, vector<1x8x8xf32>
    %75 = vector.shape_cast %74 : vector<1x8x8xf32> to vector<8x8xf32>
    %cst_66 = arith.constant dense<0.000000e+00> : vector<256x8xf32>
    %76 = tpu.matmul %73, %75, %cst_66 {dimension_numbers = #tpu.dot_dimension_numbers<[1], [0], [0], [1], [0, 0, 1, 1], [], []>} : vector<256x8xf32>, vector<8x8xf32>, vector<256x8xf32> -> vector<256x8xf32>
    %77 = arith.addf %71, %76 : vector<256x8xf32>
    %c2_67 = arith.constant 2 : index
    %c2_68 = arith.constant 2 : index
    %c0_69 = arith.constant 0 : index
    %78 = vector.load %arg8[%c2_67, %c2_68, %c0_69] : memref<18x18x8xf32, #tpu.memory_space<vmem>>, vector<16x16x8xf32>
    %79 = vector.shape_cast %78 : vector<16x16x8xf32> to vector<256x8xf32>
    %c8 = arith.constant 8 : index
    %c0_70 = arith.constant 0 : index
    %c0_71 = arith.constant 0 : index
    %80 = vector.load %arg5[%c8, %c0_70, %c0_71] : memref<9x8x8xf32, #tpu.memory_space<vmem>>, vector<1x8x8xf32>
    %81 = vector.shape_cast %80 : vector<1x8x8xf32> to vector<8x8xf32>
    %cst_72 = arith.constant dense<0.000000e+00> : vector<256x8xf32>
    %82 = tpu.matmul %79, %81, %cst_72 {dimension_numbers = #tpu.dot_dimension_numbers<[1], [0], [0], [1], [0, 0, 1, 1], [], []>} : vector<256x8xf32>, vector<8x8xf32>, vector<256x8xf32> -> vector<256x8xf32>
    %83 = arith.addf %77, %82 : vector<256x8xf32>
    %84 = vector.shape_cast %83 : vector<256x8xf32> to vector<16x16x8xf32>
    %c0_73 = arith.constant 0 : index
    %c0_74 = arith.constant 0 : index
    %c0_75 = arith.constant 0 : index
    %c0_76 = arith.constant 0 : index
    %85 = vector.load %arg6[%c0_73, %c0_74, %c0_75, %c0_76] : memref<1x16x16x8xf32, #tpu.memory_space<vmem>>, vector<1x16x16x8xf32>
    %86 = vector.shape_cast %85 : vector<1x16x16x8xf32> to vector<16x16x8xf32>
    %87 = vector.shape_cast %84 : vector<16x16x8xf32> to vector<1x16x16x8xf32>
    tpu.vector_store %arg6[%c0_73, %c0_74, %c0_75, %c0_76], %87 {strides = array<i32>} : memref<1x16x16x8xf32, #tpu.memory_space<vmem>>, vector<1x16x16x8xf32>,
    %cst_77 = arith.constant dense<0.000000e+00> : vector<8xf32>
    %88 = vector.multi_reduction <add>, %83, %cst_77 [0] : vector<256x8xf32> to vector<8xf32>
    %89 = vector.shape_cast %88 : vector<8xf32> to vector<1x8xf32>
    %c0_78 = arith.constant 0 : index
    %c0_79 = arith.constant 0 : index
    %c0_80 = arith.constant 0 : index
    %c0_81 = arith.constant 0 : index
    %90 = vector.load %arg7[%c0_78, %c0_79, %c0_80, %c0_81] : memref<1x1x2x8xf32, #tpu.memory_space<vmem>>, vector<1x1x1x8xf32>
    %91 = vector.shape_cast %90 : vector<1x1x1x8xf32> to vector<1x8xf32>
    %92 = vector.shape_cast %89 : vector<1x8xf32> to vector<1x1x1x8xf32>
    tpu.vector_store %arg7[%c0_78, %c0_79, %c0_80, %c0_81], %92 {strides = array<i32>} : memref<1x1x2x8xf32, #tpu.memory_space<vmem>>, vector<1x1x1x8xf32>,
    %93 = arith.mulf %83, %83 : vector<256x8xf32>
    %cst_82 = arith.constant dense<0.000000e+00> : vector<8xf32>
    %94 = vector.multi_reduction <add>, %93, %cst_82 [0] : vector<256x8xf32> to vector<8xf32>
    %95 = vector.shape_cast %94 : vector<8xf32> to vector<1x8xf32>
    %c0_83 = arith.constant 0 : index
    %c0_84 = arith.constant 0 : index
    %c1_85 = arith.constant 1 : index
    %c0_86 = arith.constant 0 : index
    %96 = vector.load %arg7[%c0_83, %c0_84, %c1_85, %c0_86] : memref<1x1x2x8xf32, #tpu.memory_space<vmem>>, vector<1x1x1x8xf32>
    %97 = vector.shape_cast %96 : vector<1x1x1x8xf32> to vector<1x8xf32>
    %98 = vector.shape_cast %95 : vector<1x8xf32> to vector<1x1x1x8xf32>
    tpu.vector_store %arg7[%c0_83, %c0_84, %c1_85, %c0_86], %98 {strides = array<i32>} : memref<1x1x2x8xf32, #tpu.memory_space<vmem>>, vector<1x1x1x8xf32>,
    return
  }
  func.func @transform_0(%arg0: i32, %arg1: i32) -> (i32, i32, i32, i32) {
    %c0_i32 = arith.constant 0 : i32
    %c0_i32_0 = arith.constant 0 : i32
    %c0_i32_1 = arith.constant 0 : i32
    %c0_i32_2 = arith.constant 0 : i32
    return %arg0, %c0_i32, %c0_i32_0, %c0_i32_1 : i32, i32, i32, i32
  }
  func.func @transform_1(%arg0: i32, %arg1: i32) -> (i32, i32) {
    %c0_i32 = arith.constant 0 : i32
    %c0_i32_0 = arith.constant 0 : i32
    %c0_i32_1 = arith.constant 0 : i32
    return %c0_i32, %c0_i32_0 : i32, i32
  }
  func.func @transform_2(%arg0: i32, %arg1: i32) -> (i32, i32) {
    %c0_i32 = arith.constant 0 : i32
    %c0_i32_0 = arith.constant 0 : i32
    %c0_i32_1 = arith.constant 0 : i32
    return %c0_i32, %c0_i32_0 : i32, i32
  }
  func.func @transform_3(%arg0: i32, %arg1: i32) -> (i32, i32, i32) {
    %c0_i32 = arith.constant 0 : i32
    %c0_i32_0 = arith.constant 0 : i32
    %c0_i32_1 = arith.constant 0 : i32
    %c0_i32_2 = arith.constant 0 : i32
    return %c0_i32, %c0_i32_0, %c0_i32_1 : i32, i32, i32
  }
  func.func @transform_4(%arg0: i32, %arg1: i32) -> (i32, i32, i32, i32) {
    %c0_i32 = arith.constant 0 : i32
    %c0_i32_0 = arith.constant 0 : i32
    %c0_i32_1 = arith.constant 0 : i32
    return %arg0, %arg1, %c0_i32, %c0_i32_0 : i32, i32, i32, i32
  }
  func.func @transform_5(%arg0: i32, %arg1: i32) -> (i32, i32, i32, i32) {
    %c0_i32 = arith.constant 0 : i32
    %c0_i32_0 = arith.constant 0 : i32
    %c0_i32_1 = arith.constant 0 : i32
    return %arg0, %arg1, %c0_i32, %c0_i32_0 : i32, i32, i32, i32
  }
}

</mosaic_0001>

<llo_original>
// kernel: double_conv_forward.5
$region0: #{double_conv_forward.5}
  #allocation0 [shape = 'u32[]', space=smem, size = 0x4, offset = 0x4, fixed_abs, tag = 'smem constant byte address 0x4 - core index']
  #allocation1 [shape = 'u32[144,128]{1,0:T(1,128)}', space=vmem, size = 0x12000, scoped, tag = 'internal scratch']
  %s0 = inlined_call_operand.hbm [shape: f32[2,16,16,8], index: 0, kind: input, shape index: {}]
  %s1 = inlined_call_operand.hbm [shape: f32[1,8], index: 1, kind: input, shape index: {}]
  %s2 = inlined_call_operand.hbm [shape: f32[1,8], index: 2, kind: input, shape index: {}]
  %s3 = inlined_call_operand.hbm [shape: f32[2,16,16,8], index: 3, kind: output, shape index: {}]
  %s4 = sld [smem:[#allocation0]]
  $region57: #{double_conv_forward.5} parent=0
    _
  %s6 = ssub.s32 1, %s4
  %s7 = scalar_select 0, %s6, %s4
  $region1: #{double_conv_forward.5} parent=0
    #allocation2 [shape = 'u8[262144]{0}', space=vmem, size = 0x40000, scoped, tag = 'input window, operand 0']
    #allocation3 [shape = 's32[2]{0}', space=sflag, size = 0x8, scoped, tag = 'scoped memory for double_conv_forward.5']
    #allocation4 [shape = 's32[2]{0}', space=sflag, size = 0x8, scoped, tag = 'scoped memory for double_conv_forward.5']
    #allocation5 [shape = 'u8[512]{0}', space=vmem, size = 0x400, scoped, tag = 'input window, operand 1, single buffered']
    #allocation6 [shape = 's32[1]{0}', space=sflag, size = 0x4, scoped, tag = 'scoped memory for double_conv_forward.5']
    #allocation7 [shape = 'u8[512]{0}', space=vmem, size = 0x400, scoped, tag = 'input window, operand 2, single buffered']
    #allocation8 [shape = 'u8[262144]{0}', space=vmem, size = 0x40000, scoped, tag = 'output window, operand 0']
    %8 = vsyncpa [#allocation3], 0
    %s9 = scalar_lea.sflag [#allocation3], 1
    %10 = vsyncpa %s9, 0
    %11 = vsyncpa [#allocation6], 0
    %12 = vsyncpa [#allocation4], 0
    %s13 = scalar_lea.sflag [#allocation4], 1
    %14 = vsyncpa %s13, 0
    loop: start=0, step=1, limit=4
    $region2: #{double_conv_forward.5} parent=1 // loop_pre_header
      _
    $region3: #{double_conv_forward.5} parent=1 // loop_header
      %s16 = sphi 0, %s20
      %p17 = scmp.ge.s32.totalorder %s16, 4
      %s23 = sphi 0, %s35
      %s24 = sphi 0, %s31
      %s25 = sphi 0, %s23
      %s26 = sphi 0, %s24
      %s27 = sphi 0, %s25
      %s28 = sphi 0, %s26
      %s40 = sphi 0, %s42
      %s43 = sphi 0, %s40
      %s44 = sphi 0, %s43
      %s60 = sphi 0, %s44
      %s64 = sphi 0, %s64
      %s66 = sphi 0, %s64
      %s67 = sphi 0, %s66
      %s81 = sphi 0, %s67
      %s85 = sphi 0, %s85
      %s87 = sphi 0, %s85
      %s88 = sphi 0, %s87
      %s102 = sphi 0, %s88
      %s110 = sphi 0, %s112
      %s113 = sphi 0, %s110
      %s114 = sphi 0, %s113
      %s130 = sphi 0, %s114
    $region4: #{double_conv_forward.5} parent=1 // loop_header_branch
      %19 = sbr.rel (%p17) target = $region8
    $region5: #{double_conv_forward.5} parent=1 // loop_body
      %s21 = ssub.s32 %s16, 1
      %s22 = ssub.s32 %s16, 2
      %s29 = sadd.s32 1, %s24
      %p30 = scmp.ge.s32.totalorder %s29, 1
      %s31 = scalar_select %p30, 0, %s29
      %s32 = sadd.s32 1, %s23
      %s33 = scalar_select %p30, %s32, %s23
      %p34 = scmp.ge.s32.totalorder %s33, 2
      %s35 = scalar_select %p34, 0, %s33
      %s36 = ssub.s32 %s23, %s35
      %s37 = ssub.s32 %s24, %s31
      %s38 = sor.u32 %s36, %s37
      %p39 = scmp.eq.s32.totalorder %s38, 0
      %s41 = sadd.s32 %s40, 1
      %s42 = scalar_select %p39, %s40, %s41
      %p45 = pneg %p39
      %p46 = scmp.eq.s32.totalorder %s16, 1
      %p47 = por %p45, %p46
      %p48 = scmp.ne.s32.totalorder %s40, %s43
      %p49 = scmp.eq.s32.totalorder %s16, 0
      %p50 = por %p48, %p49
      %p51 = scmp.ne.s32.totalorder %s40, %s43
      %p52 = scmp.eq.s32.totalorder %s21, 1
      %p53 = por %p51, %p52
      %p54 = scmp.ne.s32.totalorder %s43, %s44
      %p55 = scmp.eq.s32.totalorder %s21, 0
      %p56 = por %p54, %p55
      %p57 = scmp.ne.s32.totalorder %s43, %s44
      %p58 = scmp.eq.s32.totalorder %s22, 1
      %p59 = por %p57, %p58
      %p61 = scmp.ne.s32.totalorder %s44, %s60
      %p62 = scmp.eq.s32.totalorder %s22, 0
      %p63 = por %p61, %p62
      %s65 = sadd.s32 %s64, 1
      %p68 = scmp.eq.s32.totalorder %s16, 1
      %p69 = scmp.ne.s32.totalorder %s64, %s66
      %p70 = scmp.eq.s32.totalorder %s16, 0
      %p71 = por %p69, %p70
      %p72 = scmp.ne.s32.totalorder %s64, %s66
      %p73 = scmp.eq.s32.totalorder %s21, 1
      %p74 = por %p72, %p73
      %p75 = scmp.ne.s32.totalorder %s66, %s67
      %p76 = scmp.eq.s32.totalorder %s21, 0
      %p77 = por %p75, %p76
      %p78 = scmp.ne.s32.totalorder %s66, %s67
      %p79 = scmp.eq.s32.totalorder %s22, 1
      %p80 = por %p78, %p79
      %p82 = scmp.ne.s32.totalorder %s67, %s81
      %p83 = scmp.eq.s32.totalorder %s22, 0
      %p84 = por %p82, %p83
      %s86 = sadd.s32 %s85, 1
      %p89 = scmp.eq.s32.totalorder %s16, 1
      %p90 = scmp.ne.s32.totalorder %s85, %s87
      %p91 = scmp.eq.s32.totalorder %s16, 0
      %p92 = por %p90, %p91
      %p93 = scmp.ne.s32.totalorder %s85, %s87
      %p94 = scmp.eq.s32.totalorder %s21, 1
      %p95 = por %p93, %p94
      %p96 = scmp.ne.s32.totalorder %s87, %s88
      %p97 = scmp.eq.s32.totalorder %s21, 0
      %p98 = por %p96, %p97
      %p99 = scmp.ne.s32.totalorder %s87, %s88
      %p100 = scmp.eq.s32.totalorder %s22, 1
      %p101 = por %p99, %p100
      %p103 = scmp.ne.s32.totalorder %s88, %s102
      %p104 = scmp.eq.s32.totalorder %s22, 0
      %p105 = por %p103, %p104
      %s106 = ssub.s32 %s23, %s35
      %s107 = ssub.s32 %s24, %s31
      %s108 = sor.u32 %s106, %s107
      %p109 = scmp.eq.s32.totalorder %s108, 0
      %s111 = sadd.s32 %s110, 1
      %s112 = scalar_select %p109, %s110, %s111
      %p115 = pneg %p109
      %p116 = scmp.eq.s32.totalorder %s16, 1
      %p117 = por %p115, %p116
      %p118 = scmp.ne.s32.totalorder %s110, %s113
      %p119 = scmp.eq.s32.totalorder %s16, 0
      %p120 = por %p118, %p119
      %p121 = scmp.ne.s32.totalorder %s110, %s113
      %p122 = scmp.eq.s32.totalorder %s21, 1
      %p123 = por %p121, %p122
      %p124 = scmp.ne.s32.totalorder %s113, %s114
      %p125 = scmp.eq.s32.totalorder %s21, 0
      %p126 = por %p124, %p125
      %p127 = scmp.ne.s32.totalorder %s113, %s114
      %p128 = scmp.eq.s32.totalorder %s22, 1
      %p129 = por %p127, %p128
      %p131 = scmp.ne.s32.totalorder %s114, %s130
      %p132 = scmp.eq.s32.totalorder %s22, 0
      %p133 = por %p131, %p132
      %p134 = scmp.le.s32.totalorder 1, %s16
      %p135 = scmp.lt.s32.totalorder %s16, 3
      %p136 = pnand %p134, %p135
      %p137 = pneg %p136
      // Predicated region
      $region9: #{double_conv_forward.5} parent=5 // pred_check
        _
      $region10: #{double_conv_forward.5} parent=5 // pred_check_branch
        %139 = sbr.rel (%p136) target = $region12
      $region11: #{double_conv_forward.5} parent=5 // pred_region
        %s140 = ssub.s32 %s16, 1
        // Predicated region
        $region13: #{double_conv_forward.5} parent=11 // pred_check
          %p141 = pneg %p77
        $region14: #{double_conv_forward.5} parent=11 // pred_check_branch
          %143 = sbr.rel (%p141) target = $region16
        $region15: #{double_conv_forward.5} parent=11 // pred_region
          %s145 = ssub.s32 16, 16
          %146 = vsyncadd [#allocation6], %s145
          %s148 = sshll.u32 [#allocation5], 4
          %s149 = int_to_ptr.vmem [resolvable:$true] %s148
          %151 = dma.hbm_to_vmem [thread:$0]  %s1, 16, %s149, [#allocation6]
        $region16: #{double_conv_forward.5} parent=11 // pred_fallthru
          _
        // Predicated region
        $region17: #{double_conv_forward.5} parent=11 // pred_check
          %p152 = pneg %p98
        $region18: #{double_conv_forward.5} parent=11 // pred_check_branch
          %154 = sbr.rel (%p152) target = $region20
        $region19: #{double_conv_forward.5} parent=11 // pred_region
          %s156 = ssub.s32 16, 16
          %157 = vsyncadd [#allocation6], %s156
          %s159 = sshll.u32 [#allocation7], 4
          %s160 = int_to_ptr.vmem [resolvable:$true] %s159
          %162 = dma.hbm_to_vmem [thread:$0]  %s2, 16, %s160, [#allocation6]
        $region20: #{double_conv_forward.5} parent=11 // pred_fallthru
          _
      $region12: #{double_conv_forward.5} parent=5 // pred_fallthru
        _
      %p163 = scmp.lt.s32.totalorder %s16, 2
      // Predicated region
      $region21: #{double_conv_forward.5} parent=5 // pred_check
        %p164 = pneg %p163
      $region22: #{double_conv_forward.5} parent=5 // pred_check_branch
        %166 = sbr.rel (%p164) target = $region24
      $region23: #{double_conv_forward.5} parent=5 // pred_region
        // Predicated region
        $region25: #{double_conv_forward.5} parent=23 // pred_check
          %p167 = pneg %p50
        $region26: #{double_conv_forward.5} parent=23 // pred_check_branch
          %169 = sbr.rel (%p167) target = $region28
        $region27: #{double_conv_forward.5} parent=23 // pred_region
          %s170 = sand.u32 %s40, 1
          %s171 = scalar_lea.sflag [#allocation3], %s170
          %s172 = sand.u32 %s40, 1
          %s173 = smul.addr %s172, 256
          %s174 = scalar_lea.vmem [#allocation2], %s173
          %s175 = smul.u32 16, %s24
          %s177 = ssub.s32 4096, 4096
          %178 = vsyncadd %s171, %s177
          %s179 = smul.addr %s175, 2
          %s180 = smul.addr %s23, 32
          %s181 = sadd.s32 %s179, %s180
          %s182 = smul.addr %s181, 128
          %s183 = scalar_lea.hbm %s0, %s182
          %s184 = sshll.u32 %s174, 4
          %s185 = int_to_ptr.vmem [resolvable:$true] %s184
          %190 = dma.hbm_to_vmem [thread:$0]  %s183, 4096, %s185, %s171, 128, 128, 8
        $region28: #{double_conv_forward.5} parent=23 // pred_fallthru
          _
      $region24: #{double_conv_forward.5} parent=5 // pred_fallthru
        _
      %p191 = scmp.le.s32.totalorder 1, %s16
      %p192 = scmp.lt.s32.totalorder %s16, 3
      %p193 = pnand %p191, %p192
      %p194 = pneg %p193
      // Predicated region
      $region29: #{double_conv_forward.5} parent=5 // pred_check
        _
      $region30: #{double_conv_forward.5} parent=5 // pred_check_branch
        %196 = sbr.rel (%p193) target = $region32
      $region31: #{double_conv_forward.5} parent=5 // pred_region
        %s197 = ssub.s32 %s16, 1
        %s198 = sand.u32 %s43, 1
        %s199 = scalar_lea.sflag [#allocation3], %s198
        %s200 = sand.u32 %s43, 1
        %s201 = smul.addr %s200, 256
        %s202 = scalar_lea.vmem [#allocation2], %s201
        // Predicated region
        $region33: #{double_conv_forward.5} parent=31 // pred_check
          %p203 = pneg %p56
        $region34: #{double_conv_forward.5} parent=31 // pred_check_branch
          %205 = sbr.rel (%p203) target = $region36
        $region35: #{double_conv_forward.5} parent=31 // pred_region
          %206 = dma.done %s199, 4096
        $region36: #{double_conv_forward.5} parent=31 // pred_fallthru
          _
        // Predicated region
        $region37: #{double_conv_forward.5} parent=31 // pred_check
          %p207 = pneg %p77
        $region38: #{double_conv_forward.5} parent=31 // pred_check_branch
          %209 = sbr.rel (%p207) target = $region40
        $region39: #{double_conv_forward.5} parent=31 // pred_region
          %210 = dma.done [#allocation6], 16
        $region40: #{double_conv_forward.5} parent=31 // pred_fallthru
          _
        // Predicated region
        $region41: #{double_conv_forward.5} parent=31 // pred_check
          %p211 = pneg %p98
        $region42: #{double_conv_forward.5} parent=31 // pred_check_branch
          %213 = sbr.rel (%p211) target = $region44
        $region43: #{double_conv_forward.5} parent=31 // pred_region
          %214 = dma.done [#allocation6], 16
        $region44: #{double_conv_forward.5} parent=31 // pred_fallthru
          _
        %s215 = sand.u32 %s43, 1
        %s216 = scalar_lea.sflag [#allocation3], %s215
        %s217 = sand.u32 %s43, 1
        %s218 = smul.addr %s217, 256
        %s219 = scalar_lea.vmem [#allocation2], %s218
        %p220 = pneg %p56
        %p221 = pneg %p53
        %p222 = pneg %p77
        %p223 = pneg %p74
        %p224 = pneg %p98
        %p225 = pneg %p95
        %p226 = pneg %p126
        %p227 = pneg %p123
        %s228 = sand.u32 %s113, 1
        %s229 = scalar_lea.sflag [#allocation4], %s228
        %s230 = sand.u32 %s113, 1
        %s231 = smul.addr %s230, 256
        %s232 = scalar_lea.vmem [#allocation8], %s231
        %s233 = smul.u32 16, %s26
        %s234 = smul.u32 16, %s26
        %v235 = vld [vmem:[%s202] sm:$0xff]
        %v236 = vld [vmem:[%s202 + $0x8] sm:$0xff]
        %v237 = vld [vmem:[%s202 + $0x10] sm:$0xff]
        %v238 = vld [vmem:[%s202 + $0x18] sm:$0xff]
        %v239 = vld [vmem:[%s202 + $0x20] sm:$0xff]
        %v240 = vld [vmem:[%s202 + $0x28] sm:$0xff]
        %v241 = vld [vmem:[%s202 + $0x30] sm:$0xff]
        %v242 = vld [vmem:[%s202 + $0x38] sm:$0xff]
        %v243 = vld [vmem:[%s202 + $0x40] sm:$0xff]
        %v244 = vld [vmem:[%s202 + $0x48] sm:$0xff]
        %v245 = vld [vmem:[%s202 + $0x50] sm:$0xff]
        %v246 = vld [vmem:[%s202 + $0x58] sm:$0xff]
        %v247 = vld [vmem:[%s202 + $0x60] sm:$0xff]
        %v248 = vld [vmem:[%s202 + $0x68] sm:$0xff]
        %v249 = vld [vmem:[%s202 + $0x70] sm:$0xff]
        %v250 = vld [vmem:[%s202 + $0x78] sm:$0xff]
        %v251 = vld [vmem:[%s202 + $0x80] sm:$0xff]
        %v252 = vld [vmem:[%s202 + $0x88] sm:$0xff]
        %v253 = vld [vmem:[%s202 + $0x90] sm:$0xff]
        %v254 = vld [vmem:[%s202 + $0x98] sm:$0xff]
        %v255 = vld [vmem:[%s202 + $0xa0] sm:$0xff]
        %v256 = vld [vmem:[%s202 + $0xa8] sm:$0xff]
        %v257 = vld [vmem:[%s202 + $0xb0] sm:$0xff]
        %v258 = vld [vmem:[%s202 + $0xb8] sm:$0xff]
        %v259 = vld [vmem:[%s202 + $0xc0] sm:$0xff]
        %v260 = vld [vmem:[%s202 + $0xc8] sm:$0xff]
        %v261 = vld [vmem:[%s202 + $0xd0] sm:$0xff]
        %v262 = vld [vmem:[%s202 + $0xd8] sm:$0xff]
        %v263 = vld [vmem:[%s202 + $0xe0] sm:$0xff]
        %v264 = vld [vmem:[%s202 + $0xe8] sm:$0xff]
        %v265 = vld [vmem:[%s202 + $0xf0] sm:$0xff]
        %v266 = vld [vmem:[%s202 + $0xf8] sm:$0xff]
        %v267 = vld [vmem:[#allocation5] sm:$0x1]
        %v269 = vlaneseq
        %v270 = vshrl.u32 %v269, 7
        %v271 = vsub.s32 0, %v270
        %v272 = vrot.slane %v267, %v271
        %v274 = vmul.f32 %v235, %v272
        %v275 = vmul.f32 %v236, %v272
        %v276 = vmul.f32 %v237, %v272
        %v277 = vmul.f32 %v238, %v272
        %v278 = vmul.f32 %v239, %v272
        %v279 = vmul.f32 %v240, %v272
        %v280 = vmul.f32 %v241, %v272
        %v281 = vmul.f32 %v242, %v272
        %v282 = vmul.f32 %v243, %v272
        %v283 = vmul.f32 %v244, %v272
        %v284 = vmul.f32 %v245, %v272
        %v285 = vmul.f32 %v246, %v272
        %v286 = vmul.f32 %v247, %v272
        %v287 = vmul.f32 %v248, %v272
        %v288 = vmul.f32 %v249, %v272
        %v289 = vmul.f32 %v250, %v272
        %v290 = vmul.f32 %v251, %v272
        %v291 = vmul.f32 %v252, %v272
        %v292 = vmul.f32 %v253, %v272
        %v293 = vmul.f32 %v254, %v272
        %v294 = vmul.f32 %v255, %v272
        %v295 = vmul.f32 %v256, %v272
        %v296 = vmul.f32 %v257, %v272
        %v297 = vmul.f32 %v258, %v272
        %v298 = vmul.f32 %v259, %v272
        %v299 = vmul.f32 %v260, %v272
        %v300 = vmul.f32 %v261, %v272
        %v301 = vmul.f32 %v262, %v272
        %v302 = vmul.f32 %v263, %v272
        %v303 = vmul.f32 %v264, %v272
        %v304 = vmul.f32 %v265, %v272
        %v305 = vmul.f32 %v266, %v272
        %v306 = vld [vmem:[#allocation7] sm:$0x1]
        %v308 = vlaneseq
        %v309 = vshrl.u32 %v308, 7
        %v310 = vsub.s32 0, %v309
        %v311 = vrot.slane %v306, %v310
        %v313 = vadd.f32 %v274, %v311
        %v314 = vadd.f32 %v275, %v311
        %v315 = vadd.f32 %v276, %v311
        %v316 = vadd.f32 %v277, %v311
        %v317 = vadd.f32 %v278, %v311
        %v318 = vadd.f32 %v279, %v311
        %v319 = vadd.f32 %v280, %v311
        %v320 = vadd.f32 %v281, %v311
        %v321 = vadd.f32 %v282, %v311
        %v322 = vadd.f32 %v283, %v311
        %v323 = vadd.f32 %v284, %v311
        %v324 = vadd.f32 %v285, %v311
        %v325 = vadd.f32 %v286, %v311
        %v326 = vadd.f32 %v287, %v311
        %v327 = vadd.f32 %v288, %v311
        %v328 = vadd.f32 %v289, %v311
        %v329 = vadd.f32 %v290, %v311
        %v330 = vadd.f32 %v291, %v311
        %v331 = vadd.f32 %v292, %v311
        %v332 = vadd.f32 %v293, %v311
        %v333 = vadd.f32 %v294, %v311
        %v334 = vadd.f32 %v295, %v311
        %v335 = vadd.f32 %v296, %v311
        %v336 = vadd.f32 %v297, %v311
        %v337 = vadd.f32 %v298, %v311
        %v338 = vadd.f32 %v299, %v311
        %v339 = vadd.f32 %v300, %v311
        %v340 = vadd.f32 %v301, %v311
        %v341 = vadd.f32 %v302, %v311
        %v342 = vadd.f32 %v303, %v311
        %v343 = vadd.f32 %v304, %v311
        %v344 = vadd.f32 %v305, %v311
        %vm345 = vcmp.gt.f32.partialorder %v313, 0.0
        %vm346 = vcmp.gt.f32.partialorder %v314, 0.0
        %vm347 = vcmp.gt.f32.partialorder %v315, 0.0
        %vm348 = vcmp.gt.f32.partialorder %v316, 0.0
        %vm349 = vcmp.gt.f32.partialorder %v317, 0.0
        %vm350 = vcmp.gt.f32.partialorder %v318, 0.0
        %vm351 = vcmp.gt.f32.partialorder %v319, 0.0
        %vm352 = vcmp.gt.f32.partialorder %v320, 0.0
        %vm353 = vcmp.gt.f32.partialorder %v321, 0.0
        %vm354 = vcmp.gt.f32.partialorder %v322, 0.0
        %vm355 = vcmp.gt.f32.partialorder %v323, 0.0
        %vm356 = vcmp.gt.f32.partialorder %v324, 0.0
        %vm357 = vcmp.gt.f32.partialorder %v325, 0.0
        %vm358 = vcmp.gt.f32.partialorder %v326, 0.0
        %vm359 = vcmp.gt.f32.partialorder %v327, 0.0
        %vm360 = vcmp.gt.f32.partialorder %v328, 0.0
        %vm361 = vcmp.gt.f32.partialorder %v329, 0.0
        %vm362 = vcmp.gt.f32.partialorder %v330, 0.0
        %vm363 = vcmp.gt.f32.partialorder %v331, 0.0
        %vm364 = vcmp.gt.f32.partialorder %v332, 0.0
        %vm365 = vcmp.gt.f32.partialorder %v333, 0.0
        %vm366 = vcmp.gt.f32.partialorder %v334, 0.0
        %vm367 = vcmp.gt.f32.partialorder %v335, 0.0
        %vm368 = vcmp.gt.f32.partialorder %v336, 0.0
        %vm369 = vcmp.gt.f32.partialorder %v337, 0.0
        %vm370 = vcmp.gt.f32.partialorder %v338, 0.0
        %vm371 = vcmp.gt.f32.partialorder %v339, 0.0
        %vm372 = vcmp.gt.f32.partialorder %v340, 0.0
        %vm373 = vcmp.gt.f32.partialorder %v341, 0.0
        %vm374 = vcmp.gt.f32.partialorder %v342, 0.0
        %vm375 = vcmp.gt.f32.partialorder %v343, 0.0
        %vm376 = vcmp.gt.f32.partialorder %v344, 0.0
        %v377 = vmul.f32 %v313, 0.2
        %v378 = vmul.f32 %v314, 0.2
        %v379 = vmul.f32 %v315, 0.2
        %v380 = vmul.f32 %v316, 0.2
        %v381 = vmul.f32 %v317, 0.2
        %v382 = vmul.f32 %v318, 0.2
        %v383 = vmul.f32 %v319, 0.2
        %v384 = vmul.f32 %v320, 0.2
        %v385 = vmul.f32 %v321, 0.2
        %v386 = vmul.f32 %v322, 0.2
        %v387 = vmul.f32 %v323, 0.2
        %v388 = vmul.f32 %v324, 0.2
        %v389 = vmul.f32 %v325, 0.2
        %v390 = vmul.f32 %v326, 0.2
        %v391 = vmul.f32 %v327, 0.2
        %v392 = vmul.f32 %v328, 0.2
        %v393 = vmul.f32 %v329, 0.2
        %v394 = vmul.f32 %v330, 0.2
        %v395 = vmul.f32 %v331, 0.2
        %v396 = vmul.f32 %v332, 0.2
        %v397 = vmul.f32 %v333, 0.2
        %v398 = vmul.f32 %v334, 0.2
        %v399 = vmul.f32 %v335, 0.2
        %v400 = vmul.f32 %v336, 0.2
        %v401 = vmul.f32 %v337, 0.2
        %v402 = vmul.f32 %v338, 0.2
        %v403 = vmul.f32 %v339, 0.2
        %v404 = vmul.f32 %v340, 0.2
        %v405 = vmul.f32 %v341, 0.2
        %v406 = vmul.f32 %v342, 0.2
        %v407 = vmul.f32 %v343, 0.2
        %v408 = vmul.f32 %v344, 0.2
        %v409 = vsel %vm345, %v313, %v377
        %v410 = vsel %vm346, %v314, %v378
        %v411 = vsel %vm347, %v315, %v379
        %v412 = vsel %vm348, %v316, %v380
        %v413 = vsel %vm349, %v317, %v381
        %v414 = vsel %vm350, %v318, %v382
        %v415 = vsel %vm351, %v319, %v383
        %v416 = vsel %vm352, %v320, %v384
        %v417 = vsel %vm353, %v321, %v385
        %v418 = vsel %vm354, %v322, %v386
        %v419 = vsel %vm355, %v323, %v387
        %v420 = vsel %vm356, %v324, %v388
        %v421 = vsel %vm357, %v325, %v389
        %v422 = vsel %vm358, %v326, %v390
        %v423 = vsel %vm359, %v327, %v391
        %v424 = vsel %vm360, %v328, %v392
        %v425 = vsel %vm361, %v329, %v393
        %v426 = vsel %vm362, %v330, %v394
        %v427 = vsel %vm363, %v331, %v395
        %v428 = vsel %vm364, %v332, %v396
        %v429 = vsel %vm365, %v333, %v397
        %v430 = vsel %vm366, %v334, %v398
        %v431 = vsel %vm367, %v335, %v399
        %v432 = vsel %vm368, %v336, %v400
        %v433 = vsel %vm369, %v337, %v401
        %v434 = vsel %vm370, %v338, %v402
        %v435 = vsel %vm371, %v339, %v403
        %v436 = vsel %vm372, %v340, %v404
        %v437 = vsel %vm373, %v341, %v405
        %v438 = vsel %vm374, %v342, %v406
        %v439 = vsel %vm375, %v343, %v407
        %v440 = vsel %vm376, %v344, %v408
        %vm441 = vcmask 64512
        %442 = vst.msk [vmem:[%s232] sm:$0xff] %vm441, %v409
        %443 = vst.msk [vmem:[%s232 + $0x8] sm:$0xff] %vm441, %v410
        %444 = vst.msk [vmem:[%s232 + $0x10] sm:$0xff] %vm441, %v411
        %445 = vst.msk [vmem:[%s232 + $0x18] sm:$0xff] %vm441, %v412
        %446 = vst.msk [vmem:[%s232 + $0x20] sm:$0xff] %vm441, %v413
        %447 = vst.msk [vmem:[%s232 + $0x28] sm:$0xff] %vm441, %v414
        %448 = vst.msk [vmem:[%s232 + $0x30] sm:$0xff] %vm441, %v415
        %449 = vst.msk [vmem:[%s232 + $0x38] sm:$0xff] %vm441, %v416
        %450 = vst.msk [vmem:[%s232 + $0x40] sm:$0xff] %vm441, %v417
        %451 = vst.msk [vmem:[%s232 + $0x48] sm:$0xff] %vm441, %v418
        %452 = vst.msk [vmem:[%s232 + $0x50] sm:$0xff] %vm441, %v419
        %453 = vst.msk [vmem:[%s232 + $0x58] sm:$0xff] %vm441, %v420
        %454 = vst.msk [vmem:[%s232 + $0x60] sm:$0xff] %vm441, %v421
        %455 = vst.msk [vmem:[%s232 + $0x68] sm:$0xff] %vm441, %v422
        %456 = vst.msk [vmem:[%s232 + $0x70] sm:$0xff] %vm441, %v423
        %457 = vst.msk [vmem:[%s232 + $0x78] sm:$0xff] %vm441, %v424
        %458 = vst.msk [vmem:[%s232 + $0x80] sm:$0xff] %vm441, %v425
        %459 = vst.msk [vmem:[%s232 + $0x88] sm:$0xff] %vm441, %v426
        %460 = vst.msk [vmem:[%s232 + $0x90] sm:$0xff] %vm441, %v427
        %461 = vst.msk [vmem:[%s232 + $0x98] sm:$0xff] %vm441, %v428
        %462 = vst.msk [vmem:[%s232 + $0xa0] sm:$0xff] %vm441, %v429
        %463 = vst.msk [vmem:[%s232 + $0xa8] sm:$0xff] %vm441, %v430
        %464 = vst.msk [vmem:[%s232 + $0xb0] sm:$0xff] %vm441, %v431
        %465 = vst.msk [vmem:[%s232 + $0xb8] sm:$0xff] %vm441, %v432
        %466 = vst.msk [vmem:[%s232 + $0xc0] sm:$0xff] %vm441, %v433
        %467 = vst.msk [vmem:[%s232 + $0xc8] sm:$0xff] %vm441, %v434
        %468 = vst.msk [vmem:[%s232 + $0xd0] sm:$0xff] %vm441, %v435
        %469 = vst.msk [vmem:[%s232 + $0xd8] sm:$0xff] %vm441, %v436
        %470 = vst.msk [vmem:[%s232 + $0xe0] sm:$0xff] %vm441, %v437
        %471 = vst.msk [vmem:[%s232 + $0xe8] sm:$0xff] %vm441, %v438
        %472 = vst.msk [vmem:[%s232 + $0xf0] sm:$0xff] %vm441, %v439
        %473 = vst.msk [vmem:[%s232 + $0xf8] sm:$0xff] %vm441, %v440
        %s474 = sand.u32 %s113, 1
        %s475 = scalar_lea.sflag [#allocation4], %s474
        %s476 = sand.u32 %s113, 1
        %s477 = smul.addr %s476, 256
        %s478 = scalar_lea.vmem [#allocation8], %s477
        // Predicated region
        $region45: #{double_conv_forward.5} parent=31 // pred_check
          %p479 = pneg %p123
        $region46: #{double_conv_forward.5} parent=31 // pred_check_branch
          %481 = sbr.rel (%p479) target = $region48
        $region47: #{double_conv_forward.5} parent=31 // pred_region
          %s482 = smul.u32 16, %s26
          %s484 = ssub.s32 4096, 4096
          %485 = vsyncadd %s475, %s484
          %s486 = smul.addr %s482, 2
          %s487 = smul.addr %s25, 32
          %s488 = sadd.s32 %s486, %s487
          %s489 = smul.addr %s488, 128
          %s490 = scalar_lea.hbm %s3, %s489
          %s491 = sshll.u32 %s478, 4
          %s492 = int_to_ptr.vmem [resolvable:$true] %s491
          %497 = dma.vmem_to_hbm [thread:$0]  %s492, 4096, %s490, %s475, 128, 128, 8
        $region48: #{double_conv_forward.5} parent=31 // pred_fallthru
          _
      $region32: #{double_conv_forward.5} parent=5 // pred_fallthru
        _
      %p498 = scmp.le.s32.totalorder 2, %s16
      // Predicated region
      $region49: #{double_conv_forward.5} parent=5 // pred_check
        %p499 = pneg %p498
      $region50: #{double_conv_forward.5} parent=5 // pred_check_branch
        %501 = sbr.rel (%p499) target = $region52
      $region51: #{double_conv_forward.5} parent=5 // pred_region
        %s502 = ssub.s32 %s16, 2
        // Predicated region
        $region53: #{double_conv_forward.5} parent=51 // pred_check
          %p503 = pneg %p129
        $region54: #{double_conv_forward.5} parent=51 // pred_check_branch
          %505 = sbr.rel (%p503) target = $region56
        $region55: #{double_conv_forward.5} parent=51 // pred_region
          %s506 = sand.u32 %s114, 1
          %s507 = scalar_lea.sflag [#allocation4], %s506
          %s508 = sand.u32 %s114, 1
          %s509 = smul.addr %s508, 256
          %s510 = scalar_lea.vmem [#allocation8], %s509
          %511 = dma.done %s507, 4096
        $region56: #{double_conv_forward.5} parent=51 // pred_fallthru
          _
      $region52: #{double_conv_forward.5} parent=5 // pred_fallthru
        _
    $region6: #{double_conv_forward.5} parent=1 // loop_footer
      %s20 = sadd.s32 1, %s16
    $region7: #{double_conv_forward.5} parent=1 // loop_footer_branch
      %15 = sbr.rel target = $region3
    $region8: #{double_conv_forward.5} parent=1 // loop_exit
      _
    %512 = vsyncpa [#allocation3], 1
    %s513 = scalar_lea.sflag [#allocation3], 1
    %514 = vsyncpa %s513, 1
    %515 = vsyncpa [#allocation6], 1
    %516 = vsyncpa [#allocation4], 1
    %s517 = scalar_lea.sflag [#allocation4], 1
    %518 = vsyncpa %s517, 1

// kernel: double_conv_forward.3
$region0: #{double_conv_forward.3}
  #allocation0 [shape = 'u32[]', space=smem, size = 0x4, offset = 0x4, fixed_abs, tag = 'smem constant byte address 0x4 - core index']
  #allocation1 [shape = 'u32[144,128]{1,0:T(1,128)}', space=vmem, size = 0x12000, scoped, tag = 'internal scratch']
  #allocation2 [shape = 'f32[18,18,4]{2,1,0:T(8,128)}', space=vmem, size = 0x36000, scoped, tag = 'scratch operand']
  %s0 = inlined_call_operand.hbm [shape: f32[2,16,16,4], index: 0, kind: input, shape index: {}]
  %s1 = inlined_call_operand.hbm [shape: f32[1,4], index: 1, kind: input, shape index: {}, may-alias: {1,2}]
  %s2 = inlined_call_operand.hbm [shape: f32[1,4], index: 2, kind: input, shape index: {}, may-alias: {1,2}]
  %s3 = inlined_call_operand.hbm [shape: f32[9,4,8], index: 3, kind: input, shape index: {}]
  %s4 = inlined_call_operand.hbm [shape: f32[2,16,16,8], index: 4, kind: output, shape index: {0}]
  %s5 = inlined_call_operand.hbm [shape: f32[2,1,2,8], index: 5, kind: output, shape index: {1}]
  %6 = xla_tuple %s4, %s5
  %s7 = sld [smem:[#allocation0]]
  $region81: #{double_conv_forward.3} parent=0
    _
  %s9 = ssub.s32 1, %s7
  %s10 = scalar_select 0, %s9, %s7
  $region1: #{double_conv_forward.3} parent=0
    #allocation3 [shape = 'u8[262144]{0}', space=vmem, size = 0x40000, scoped, tag = 'input window, operand 0']
    #allocation4 [shape = 's32[2]{0}', space=sflag, size = 0x8, scoped, tag = 'scoped memory for double_conv_forward.3']
    #allocation5 [shape = 's32[2]{0}', space=sflag, size = 0x8, scoped, tag = 'scoped memory for double_conv_forward.3']
    #allocation6 [shape = 'u8[512]{0}', space=vmem, size = 0x400, scoped, tag = 'input window, operand 1, single buffered']
    #allocation7 [shape = 's32[1]{0}', space=sflag, size = 0x4, scoped, tag = 'scoped memory for double_conv_forward.3']
    #allocation8 [shape = 'u8[512]{0}', space=vmem, size = 0x400, scoped, tag = 'input window, operand 2, single buffered']
    #allocation9 [shape = 'u8[18432]{0}', space=vmem, size = 0x4800, scoped, tag = 'input window, operand 3, single buffered']
    #allocation10 [shape = 's32[1]{0}', space=sflag, size = 0x4, scoped, tag = 'scoped memory for double_conv_forward.3']
    #allocation11 [shape = 'u8[262144]{0}', space=vmem, size = 0x40000, scoped, tag = 'output window, operand 0']
    #allocation12 [shape = 'u8[2048]{0}', space=vmem, size = 0x800, scoped, tag = 'output window, operand 1']
    #allocation13 [shape = 's32[2]{0}', space=sflag, size = 0x8, scoped, tag = 'scoped memory for double_conv_forward.3']
    %11 = vsyncpa [#allocation4], 0
    %s12 = scalar_lea.sflag [#allocation4], 1
    %13 = vsyncpa %s12, 0
    %14 = vsyncpa [#allocation7], 0
    %15 = vsyncpa [#allocation10], 0
    %16 = vsyncpa [#allocation5], 0
    %s17 = scalar_lea.sflag [#allocation5], 1
    %18 = vsyncpa %s17, 0
    %19 = vsyncpa [#allocation13], 0
    %s20 = scalar_lea.sflag [#allocation13], 1
    %21 = vsyncpa %s20, 0
    loop: start=0, step=1, limit=4
    $region2: #{double_conv_forward.3} parent=1 // loop_pre_header
      _
    $region3: #{double_conv_forward.3} parent=1 // loop_header
      %s23 = sphi 0, %s27
      %p24 = scmp.ge.s32.totalorder %s23, 4
      %s30 = sphi 0, %s42
      %s31 = sphi 0, %s38
      %s32 = sphi 0, %s30
      %s33 = sphi 0, %s31
      %s34 = sphi 0, %s32
      %s35 = sphi 0, %s33
      %s45 = sphi 0, %s47
      %s48 = sphi 0, %s45
      %s49 = sphi 0, %s48
      %s65 = sphi 0, %s49
      %s69 = sphi 0, %s69
      %s71 = sphi 0, %s69
      %s72 = sphi 0, %s71
      %s86 = sphi 0, %s72
      %s90 = sphi 0, %s90
      %s92 = sphi 0, %s90
      %s93 = sphi 0, %s92
      %s107 = sphi 0, %s93
      %s111 = sphi 0, %s111
      %s113 = sphi 0, %s111
      %s114 = sphi 0, %s113
      %s128 = sphi 0, %s114
      %s136 = sphi 0, %s138
      %s139 = sphi 0, %s136
      %s140 = sphi 0, %s139
      %s156 = sphi 0, %s140
      %s164 = sphi 0, %s166
      %s167 = sphi 0, %s164
      %s168 = sphi 0, %s167
      %s184 = sphi 0, %s168
    $region4: #{double_conv_forward.3} parent=1 // loop_header_branch
      %26 = sbr.rel (%p24) target = $region8
    $region5: #{double_conv_forward.3} parent=1 // loop_body
      %s28 = ssub.s32 %s23, 1
      %s29 = ssub.s32 %s23, 2
      %s36 = sadd.s32 1, %s31
      %p37 = scmp.ge.s32.totalorder %s36, 1
      %s38 = scalar_select %p37, 0, %s36
      %s39 = sadd.s32 1, %s30
      %s40 = scalar_select %p37, %s39, %s30
      %p41 = scmp.ge.s32.totalorder %s40, 2
      %s42 = scalar_select %p41, 0, %s40
      %s43 = ssub.s32 %s30, %s42
      %p44 = scmp.eq.s32.totalorder %s43, 0
      %s46 = sadd.s32 %s45, 1
      %s47 = scalar_select %p44, %s45, %s46
      %p50 = pneg %p44
      %p51 = scmp.eq.s32.totalorder %s23, 1
      %p52 = por %p50, %p51
      %p53 = scmp.ne.s32.totalorder %s45, %s48
      %p54 = scmp.eq.s32.totalorder %s23, 0
      %p55 = por %p53, %p54
      %p56 = scmp.ne.s32.totalorder %s45, %s48
      %p57 = scmp.eq.s32.totalorder %s28, 1
      %p58 = por %p56, %p57
      %p59 = scmp.ne.s32.totalorder %s48, %s49
      %p60 = scmp.eq.s32.totalorder %s28, 0
      %p61 = por %p59, %p60
      %p62 = scmp.ne.s32.totalorder %s48, %s49
      %p63 = scmp.eq.s32.totalorder %s29, 1
      %p64 = por %p62, %p63
      %p66 = scmp.ne.s32.totalorder %s49, %s65
      %p67 = scmp.eq.s32.totalorder %s29, 0
      %p68 = por %p66, %p67
      %s70 = sadd.s32 %s69, 1
      %p73 = scmp.eq.s32.totalorder %s23, 1
      %p74 = scmp.ne.s32.totalorder %s69, %s71
      %p75 = scmp.eq.s32.totalorder %s23, 0
      %p76 = por %p74, %p75
      %p77 = scmp.ne.s32.totalorder %s69, %s71
      %p78 = scmp.eq.s32.totalorder %s28, 1
      %p79 = por %p77, %p78
      %p80 = scmp.ne.s32.totalorder %s71, %s72
      %p81 = scmp.eq.s32.totalorder %s28, 0
      %p82 = por %p80, %p81
      %p83 = scmp.ne.s32.totalorder %s71, %s72
      %p84 = scmp.eq.s32.totalorder %s29, 1
      %p85 = por %p83, %p84
      %p87 = scmp.ne.s32.totalorder %s72, %s86
      %p88 = scmp.eq.s32.totalorder %s29, 0
      %p89 = por %p87, %p88
      %s91 = sadd.s32 %s90, 1
      %p94 = scmp.eq.s32.totalorder %s23, 1
      %p95 = scmp.ne.s32.totalorder %s90, %s92
      %p96 = scmp.eq.s32.totalorder %s23, 0
      %p97 = por %p95, %p96
      %p98 = scmp.ne.s32.totalorder %s90, %s92
      %p99 = scmp.eq.s32.totalorder %s28, 1
      %p100 = por %p98, %p99
      %p101 = scmp.ne.s32.totalorder %s92, %s93
      %p102 = scmp.eq.s32.totalorder %s28, 0
      %p103 = por %p101, %p102
      %p104 = scmp.ne.s32.totalorder %s92, %s93
      %p105 = scmp.eq.s32.totalorder %s29, 1
      %p106 = por %p104, %p105
      %p108 = scmp.ne.s32.totalorder %s93, %s107
      %p109 = scmp.eq.s32.totalorder %s29, 0
      %p110 = por %p108, %p109
      %s112 = sadd.s32 %s111, 1
      %p115 = scmp.eq.s32.totalorder %s23, 1
      %p116 = scmp.ne.s32.totalorder %s111, %s113
      %p117 = scmp.eq.s32.totalorder %s23, 0
      %p118 = por %p116, %p117
      %p119 = scmp.ne.s32.totalorder %s111, %s113
      %p120 = scmp.eq.s32.totalorder %s28, 1
      %p121 = por %p119, %p120
      %p122 = scmp.ne.s32.totalorder %s113, %s114
      %p123 = scmp.eq.s32.totalorder %s28, 0
      %p124 = por %p122, %p123
      %p125 = scmp.ne.s32.totalorder %s113, %s114
      %p126 = scmp.eq.s32.totalorder %s29, 1
      %p127 = por %p125, %p126
      %p129 = scmp.ne.s32.totalorder %s114, %s128
      %p130 = scmp.eq.s32.totalorder %s29, 0
      %p131 = por %p129, %p130
      %s132 = ssub.s32 %s30, %s42
      %s133 = ssub.s32 %s31, %s38
      %s134 = sor.u32 %s132, %s133
      %p135 = scmp.eq.s32.totalorder %s134, 0
      %s137 = sadd.s32 %s136, 1
      %s138 = scalar_select %p135, %s136, %s137
      %p141 = pneg %p135
      %p142 = scmp.eq.s32.totalorder %s23, 1
      %p143 = por %p141, %p142
      %p144 = scmp.ne.s32.totalorder %s136, %s139
      %p145 = scmp.eq.s32.totalorder %s23, 0
      %p146 = por %p144, %p145
      %p147 = scmp.ne.s32.totalorder %s136, %s139
      %p148 = scmp.eq.s32.totalorder %s28, 1
      %p149 = por %p147, %p148
      %p150 = scmp.ne.s32.totalorder %s139, %s140
      %p151 = scmp.eq.s32.totalorder %s28, 0
      %p152 = por %p150, %p151
      %p153 = scmp.ne.s32.totalorder %s139, %s140
      %p154 = scmp.eq.s32.totalorder %s29, 1
      %p155 = por %p153, %p154
      %p157 = scmp.ne.s32.totalorder %s140, %s156
      %p158 = scmp.eq.s32.totalorder %s29, 0
      %p159 = por %p157, %p158
      %s160 = ssub.s32 %s30, %s42
      %s161 = ssub.s32 %s31, %s38
      %s162 = sor.u32 %s160, %s161
      %p163 = scmp.eq.s32.totalorder %s162, 0
      %s165 = sadd.s32 %s164, 1
      %s166 = scalar_select %p163, %s164, %s165
      %p169 = pneg %p163
      %p170 = scmp.eq.s32.totalorder %s23, 1
      %p171 = por %p169, %p170
      %p172 = scmp.ne.s32.totalorder %s164, %s167
      %p173 = scmp.eq.s32.totalorder %s23, 0
      %p174 = por %p172, %p173
      %p175 = scmp.ne.s32.totalorder %s164, %s167
      %p176 = scmp.eq.s32.totalorder %s28, 1
      %p177 = por %p175, %p176
      %p178 = scmp.ne.s32.totalorder %s167, %s168
      %p179 = scmp.eq.s32.totalorder %s28, 0
      %p180 = por %p178, %p179
      %p181 = scmp.ne.s32.totalorder %s167, %s168
      %p182 = scmp.eq.s32.totalorder %s29, 1
      %p183 = por %p181, %p182
      %p185 = scmp.ne.s32.totalorder %s168, %s184
      %p186 = scmp.eq.s32.totalorder %s29, 0
      %p187 = por %p185, %p186
      %p188 = scmp.le.s32.totalorder 1, %s23
      %p189 = scmp.lt.s32.totalorder %s23, 3
      %p190 = pnand %p188, %p189
      %p191 = pneg %p190
      // Predicated region
      $region9: #{double_conv_forward.3} parent=5 // pred_check
        _
      $region10: #{double_conv_forward.3} parent=5 // pred_check_branch
        %193 = sbr.rel (%p190) target = $region12
      $region11: #{double_conv_forward.3} parent=5 // pred_region
        %s194 = ssub.s32 %s23, 1
        // Predicated region
        $region13: #{double_conv_forward.3} parent=11 // pred_check
          %p195 = pneg %p82
        $region14: #{double_conv_forward.3} parent=11 // pred_check_branch
          %197 = sbr.rel (%p195) target = $region16
        $region15: #{double_conv_forward.3} parent=11 // pred_region
          %s199 = ssub.s32 16, 16
          %200 = vsyncadd [#allocation7], %s199
          %s202 = sshll.u32 [#allocation6], 4
          %s203 = int_to_ptr.vmem [resolvable:$true] %s202
          %205 = dma.hbm_to_vmem [thread:$0]  %s1, 16, %s203, [#allocation7]
        $region16: #{double_conv_forward.3} parent=11 // pred_fallthru
          _
        // Predicated region
        $region17: #{double_conv_forward.3} parent=11 // pred_check
          %p206 = pneg %p103
        $region18: #{double_conv_forward.3} parent=11 // pred_check_branch
          %208 = sbr.rel (%p206) target = $region20
        $region19: #{double_conv_forward.3} parent=11 // pred_region
          %s210 = ssub.s32 16, 16
          %211 = vsyncadd [#allocation7], %s210
          %s213 = sshll.u32 [#allocation8], 4
          %s214 = int_to_ptr.vmem [resolvable:$true] %s213
          %216 = dma.hbm_to_vmem [thread:$0]  %s2, 16, %s214, [#allocation7]
        $region20: #{double_conv_forward.3} parent=11 // pred_fallthru
          _
        // Predicated region
        $region21: #{double_conv_forward.3} parent=11 // pred_check
          %p217 = pneg %p124
        $region22: #{double_conv_forward.3} parent=11 // pred_check_branch
          %219 = sbr.rel (%p217) target = $region24
        $region23: #{double_conv_forward.3} parent=11 // pred_region
          %s221 = ssub.s32 576, 576
          %222 = vsyncadd [#allocation10], %s221
          %s223 = sshll.u32 [#allocation9], 4
          %s224 = int_to_ptr.vmem [resolvable:$true] %s223
          %229 = dma.hbm_to_vmem [thread:$0]  %s3, 576, %s224, [#allocation10], 64, 64, 4
        $region24: #{double_conv_forward.3} parent=11 // pred_fallthru
          _
      $region12: #{double_conv_forward.3} parent=5 // pred_fallthru
        _
      %p230 = scmp.lt.s32.totalorder %s23, 2
      // Predicated region
      $region25: #{double_conv_forward.3} parent=5 // pred_check
        %p231 = pneg %p230
      $region26: #{double_conv_forward.3} parent=5 // pred_check_branch
        %233 = sbr.rel (%p231) target = $region28
      $region27: #{double_conv_forward.3} parent=5 // pred_region
        // Predicated region
        $region29: #{double_conv_forward.3} parent=27 // pred_check
          %p234 = pneg %p55
        $region30: #{double_conv_forward.3} parent=27 // pred_check_branch
          %236 = sbr.rel (%p234) target = $region32
        $region31: #{double_conv_forward.3} parent=27 // pred_region
          %s237 = sand.u32 %s45, 1
          %s238 = scalar_lea.sflag [#allocation4], %s237
          %s239 = sand.u32 %s45, 1
          %s240 = smul.addr %s239, 256
          %s241 = scalar_lea.vmem [#allocation3], %s240
          %s243 = ssub.s32 4096, 4096
          %244 = vsyncadd %s238, %s243
          %s245 = smul.addr %s30, 32
          %s246 = smul.addr %s245, 128
          %s247 = scalar_lea.hbm %s0, %s246
          %s248 = sshll.u32 %s241, 4
          %s249 = int_to_ptr.vmem [resolvable:$true] %s248
          %254 = dma.hbm_to_vmem [thread:$0]  %s247, 4096, %s249, %s238, 128, 128, 8
        $region32: #{double_conv_forward.3} parent=27 // pred_fallthru
          _
      $region28: #{double_conv_forward.3} parent=5 // pred_fallthru
        _
      %p255 = scmp.le.s32.totalorder 1, %s23
      %p256 = scmp.lt.s32.totalorder %s23, 3
      %p257 = pnand %p255, %p256
      %p258 = pneg %p257
      // Predicated region
      $region33: #{double_conv_forward.3} parent=5 // pred_check
        _
      $region34: #{double_conv_forward.3} parent=5 // pred_check_branch
        %260 = sbr.rel (%p257) target = $region36
      $region35: #{double_conv_forward.3} parent=5 // pred_region
        %s261 = ssub.s32 %s23, 1
        %s262 = sand.u32 %s48, 1
        %s263 = scalar_lea.sflag [#allocation4], %s262
        %s264 = sand.u32 %s48, 1
        %s265 = smul.addr %s264, 256
        %s266 = scalar_lea.vmem [#allocation3], %s265
        // Predicated region
        $region37: #{double_conv_forward.3} parent=35 // pred_check
          %p267 = pneg %p61
        $region38: #{double_conv_forward.3} parent=35 // pred_check_branch
          %269 = sbr.rel (%p267) target = $region40
        $region39: #{double_conv_forward.3} parent=35 // pred_region
          %270 = dma.done %s263, 4096
        $region40: #{double_conv_forward.3} parent=35 // pred_fallthru
          _
        // Predicated region
        $region41: #{double_conv_forward.3} parent=35 // pred_check
          %p271 = pneg %p82
        $region42: #{double_conv_forward.3} parent=35 // pred_check_branch
          %273 = sbr.rel (%p271) target = $region44
        $region43: #{double_conv_forward.3} parent=35 // pred_region
          %274 = dma.done [#allocation7], 16
        $region44: #{double_conv_forward.3} parent=35 // pred_fallthru
          _
        // Predicated region
        $region45: #{double_conv_forward.3} parent=35 // pred_check
          %p275 = pneg %p103
        $region46: #{double_conv_forward.3} parent=35 // pred_check_branch
          %277 = sbr.rel (%p275) target = $region48
        $region47: #{double_conv_forward.3} parent=35 // pred_region
          %278 = dma.done [#allocation7], 16
        $region48: #{double_conv_forward.3} parent=35 // pred_fallthru
          _
        // Predicated region
        $region49: #{double_conv_forward.3} parent=35 // pred_check
          %p279 = pneg %p124
        $region50: #{double_conv_forward.3} parent=35 // pred_check_branch
          %281 = sbr.rel (%p279) target = $region52
        $region51: #{double_conv_forward.3} parent=35 // pred_region
          %282 = dma.done [#allocation10], 576
        $region52: #{double_conv_forward.3} parent=35 // pred_fallthru
          _
        %s283 = sand.u32 %s48, 1
        %s284 = scalar_lea.sflag [#allocation4], %s283
        %s285 = sand.u32 %s48, 1
        %s286 = smul.addr %s285, 256
        %s287 = scalar_lea.vmem [#allocation3], %s286
        %p288 = pneg %p61
        %p289 = pneg %p58
        %p290 = pneg %p82
        %p291 = pneg %p79
        %p292 = pneg %p103
        %p293 = pneg %p100
        %p294 = pneg %p124
        %p295 = pneg %p121
        %p296 = pneg %p152
        %p297 = pneg %p149
        %s298 = sand.u32 %s139, 1
        %s299 = scalar_lea.sflag [#allocation5], %s298
        %s300 = sand.u32 %s139, 1
        %s301 = smul.addr %s300, 256
        %s302 = scalar_lea.vmem [#allocation11], %s301
        %p303 = pneg %p180
        %p304 = pneg %p177
        %s305 = sand.u32 %s167, 1
        %s306 = scalar_lea.sflag [#allocation13], %s305
        %s307 = sand.u32 %s167, 1
        %s308 = smul.addr %s307, 2
        %s309 = scalar_lea.vmem [#allocation12], %s308
        %s310 = smul.u32 16, %s33
        %s311 = smul.u32 %s33, 16
        %vm312 = vcmask 31744
        %313 = vst.msk [vmem:[#allocation2] sm:$0xff] %vm312, 0.0
        %314 = vst.msk [vmem:[#allocation2 + $0x8] sm:$0xff] %vm312, 0.0
        %vm315 = vcmask 25600
        %316 = vst.msk [vmem:[#allocation2 + $0x10] sm:$0x3] %vm315, 0.0
        %317 = vst.msk [vmem:[#allocation2 + $0x18] sm:$0xff] %vm312, 0.0
        %318 = vst.msk [vmem:[#allocation2 + $0x20] sm:$0xff] %vm312, 0.0
        %319 = vst.msk [vmem:[#allocation2 + $0x28] sm:$0x3] %vm315, 0.0
        %320 = vst.msk [vmem:[#allocation2 + $0x30] sm:$0xff] %vm312, 0.0
        %321 = vst.msk [vmem:[#allocation2 + $0x38] sm:$0xff] %vm312, 0.0
        %322 = vst.msk [vmem:[#allocation2 + $0x40] sm:$0x3] %vm315, 0.0
        %323 = vst.msk [vmem:[#allocation2 + $0x48] sm:$0xff] %vm312, 0.0
        %324 = vst.msk [vmem:[#allocation2 + $0x50] sm:$0xff] %vm312, 0.0
        %325 = vst.msk [vmem:[#allocation2 + $0x58] sm:$0x3] %vm315, 0.0
        %326 = vst.msk [vmem:[#allocation2 + $0x60] sm:$0xff] %vm312, 0.0
        %327 = vst.msk [vmem:[#allocation2 + $0x68] sm:$0xff] %vm312, 0.0
        %328 = vst.msk [vmem:[#allocation2 + $0x70] sm:$0x3] %vm315, 0.0
        %329 = vst.msk [vmem:[#allocation2 + $0x78] sm:$0xff] %vm312, 0.0
        %330 = vst.msk [vmem:[#allocation2 + $0x80] sm:$0xff] %vm312, 0.0
        %331 = vst.msk [vmem:[#allocation2 + $0x88] sm:$0x3] %vm315, 0.0
        %332 = vst.msk [vmem:[#allocation2 + $0x90] sm:$0xff] %vm312, 0.0
        %333 = vst.msk [vmem:[#allocation2 + $0x98] sm:$0xff] %vm312, 0.0
        %334 = vst.msk [vmem:[#allocation2 + $0xa0] sm:$0x3] %vm315, 0.0
        %335 = vst.msk [vmem:[#allocation2 + $0xa8] sm:$0xff] %vm312, 0.0
        %336 = vst.msk [vmem:[#allocation2 + $0xb0] sm:$0xff] %vm312, 0.0
        %337 = vst.msk [vmem:[#allocation2 + $0xb8] sm:$0x3] %vm315, 0.0
        %338 = vst.msk [vmem:[#allocation2 + $0xc0] sm:$0xff] %vm312, 0.0
        %339 = vst.msk [vmem:[#allocation2 + $0xc8] sm:$0xff] %vm312, 0.0
        %340 = vst.msk [vmem:[#allocation2 + $0xd0] sm:$0x3] %vm315, 0.0
        %341 = vst.msk [vmem:[#allocation2 + $0xd8] sm:$0xff] %vm312, 0.0
        %342 = vst.msk [vmem:[#allocation2 + $0xe0] sm:$0xff] %vm312, 0.0
        %343 = vst.msk [vmem:[#allocation2 + $0xe8] sm:$0x3] %vm315, 0.0
        %344 = vst.msk [vmem:[#allocation2 + $0xf0] sm:$0xff] %vm312, 0.0
        %345 = vst.msk [vmem:[#allocation2 + $0xf8] sm:$0xff] %vm312, 0.0
        %346 = vst.msk [vmem:[#allocation2 + $0x100] sm:$0x3] %vm315, 0.0
        %347 = vst.msk [vmem:[#allocation2 + $0x108] sm:$0xff] %vm312, 0.0
        %348 = vst.msk [vmem:[#allocation2 + $0x110] sm:$0xff] %vm312, 0.0
        %349 = vst.msk [vmem:[#allocation2 + $0x118] sm:$0x3] %vm315, 0.0
        %350 = vst.msk [vmem:[#allocation2 + $0x120] sm:$0xff] %vm312, 0.0
        %351 = vst.msk [vmem:[#allocation2 + $0x128] sm:$0xff] %vm312, 0.0
        %352 = vst.msk [vmem:[#allocation2 + $0x130] sm:$0x3] %vm315, 0.0
        %353 = vst.msk [vmem:[#allocation2 + $0x138] sm:$0xff] %vm312, 0.0
        %354 = vst.msk [vmem:[#allocation2 + $0x140] sm:$0xff] %vm312, 0.0
        %355 = vst.msk [vmem:[#allocation2 + $0x148] sm:$0x3] %vm315, 0.0
        %356 = vst.msk [vmem:[#allocation2 + $0x150] sm:$0xff] %vm312, 0.0
        %357 = vst.msk [vmem:[#allocation2 + $0x158] sm:$0xff] %vm312, 0.0
        %358 = vst.msk [vmem:[#allocation2 + $0x160] sm:$0x3] %vm315, 0.0
        %359 = vst.msk [vmem:[#allocation2 + $0x168] sm:$0xff] %vm312, 0.0
        %360 = vst.msk [vmem:[#allocation2 + $0x170] sm:$0xff] %vm312, 0.0
        %361 = vst.msk [vmem:[#allocation2 + $0x178] sm:$0x3] %vm315, 0.0
        %362 = vst.msk [vmem:[#allocation2 + $0x180] sm:$0xff] %vm312, 0.0
        %363 = vst.msk [vmem:[#allocation2 + $0x188] sm:$0xff] %vm312, 0.0
        %364 = vst.msk [vmem:[#allocation2 + $0x190] sm:$0x3] %vm315, 0.0
        %365 = vst.msk [vmem:[#allocation2 + $0x198] sm:$0xff] %vm312, 0.0
        %366 = vst.msk [vmem:[#allocation2 + $0x1a0] sm:$0xff] %vm312, 0.0
        %367 = vst.msk [vmem:[#allocation2 + $0x1a8] sm:$0x3] %vm315, 0.0
        %s368 = smul.u32 %s311, 16
        %s369 = scalar_lea.vmem %s266, %s368 [#allocation3]
        %v370 = vld [vmem:[%s369] sm:$0xff]
        %v371 = vld [vmem:[%s369 + $0x8] sm:$0xff]
        %v372 = vld [vmem:[%s369 + $0x10] sm:$0xff]
        %v373 = vld [vmem:[%s369 + $0x18] sm:$0xff]
        %v374 = vld [vmem:[%s369 + $0x20] sm:$0xff]
        %v375 = vld [vmem:[%s369 + $0x28] sm:$0xff]
        %v376 = vld [vmem:[%s369 + $0x30] sm:$0xff]
        %v377 = vld [vmem:[%s369 + $0x38] sm:$0xff]
        %v378 = vld [vmem:[%s369 + $0x40] sm:$0xff]
        %v379 = vld [vmem:[%s369 + $0x48] sm:$0xff]
        %v380 = vld [vmem:[%s369 + $0x50] sm:$0xff]
        %v381 = vld [vmem:[%s369 + $0x58] sm:$0xff]
        %v382 = vld [vmem:[%s369 + $0x60] sm:$0xff]
        %v383 = vld [vmem:[%s369 + $0x68] sm:$0xff]
        %v384 = vld [vmem:[%s369 + $0x70] sm:$0xff]
        %v385 = vld [vmem:[%s369 + $0x78] sm:$0xff]
        %v386 = vld [vmem:[%s369 + $0x80] sm:$0xff]
        %v387 = vld [vmem:[%s369 + $0x88] sm:$0xff]
        %v388 = vld [vmem:[%s369 + $0x90] sm:$0xff]
        %v389 = vld [vmem:[%s369 + $0x98] sm:$0xff]
        %v390 = vld [vmem:[%s369 + $0xa0] sm:$0xff]
        %v391 = vld [vmem:[%s369 + $0xa8] sm:$0xff]
        %v392 = vld [vmem:[%s369 + $0xb0] sm:$0xff]
        %v393 = vld [vmem:[%s369 + $0xb8] sm:$0xff]
        %v394 = vld [vmem:[%s369 + $0xc0] sm:$0xff]
        %v395 = vld [vmem:[%s369 + $0xc8] sm:$0xff]
        %v396 = vld [vmem:[%s369 + $0xd0] sm:$0xff]
        %v397 = vld [vmem:[%s369 + $0xd8] sm:$0xff]
        %v398 = vld [vmem:[%s369 + $0xe0] sm:$0xff]
        %v399 = vld [vmem:[%s369 + $0xe8] sm:$0xff]
        %v400 = vld [vmem:[%s369 + $0xf0] sm:$0xff]
        %v401 = vld [vmem:[%s369 + $0xf8] sm:$0xff]
        %s402 = scalar_lea.vmem [#allocation2], 24
        %403 = vst.msk [vmem:[%s402 + $0x1] sm:$0xff] %vm312, %v370
        %404 = vst.msk [vmem:[%s402 + $0x9] sm:$0xff] %vm312, %v371
        %405 = vst.msk [vmem:[%s402 + $0x19] sm:$0xff] %vm312, %v372
        %406 = vst.msk [vmem:[%s402 + $0x21] sm:$0xff] %vm312, %v373
        %407 = vst.msk [vmem:[%s402 + $0x31] sm:$0xff] %vm312, %v374
        %408 = vst.msk [vmem:[%s402 + $0x39] sm:$0xff] %vm312, %v375
        %409 = vst.msk [vmem:[%s402 + $0x49] sm:$0xff] %vm312, %v376
        %410 = vst.msk [vmem:[%s402 + $0x51] sm:$0xff] %vm312, %v377
        %411 = vst.msk [vmem:[%s402 + $0x61] sm:$0xff] %vm312, %v378
        %412 = vst.msk [vmem:[%s402 + $0x69] sm:$0xff] %vm312, %v379
        %413 = vst.msk [vmem:[%s402 + $0x79] sm:$0xff] %vm312, %v380
        %414 = vst.msk [vmem:[%s402 + $0x81] sm:$0xff] %vm312, %v381
        %415 = vst.msk [vmem:[%s402 + $0x91] sm:$0xff] %vm312, %v382
        %416 = vst.msk [vmem:[%s402 + $0x99] sm:$0xff] %vm312, %v383
        %417 = vst.msk [vmem:[%s402 + $0xa9] sm:$0xff] %vm312, %v384
        %418 = vst.msk [vmem:[%s402 + $0xb1] sm:$0xff] %vm312, %v385
        %419 = vst.msk [vmem:[%s402 + $0xc1] sm:$0xff] %vm312, %v386
        %420 = vst.msk [vmem:[%s402 + $0xc9] sm:$0xff] %vm312, %v387
        %421 = vst.msk [vmem:[%s402 + $0xd9] sm:$0xff] %vm312, %v388
        %422 = vst.msk [vmem:[%s402 + $0xe1] sm:$0xff] %vm312, %v389
        %423 = vst.msk [vmem:[%s402 + $0xf1] sm:$0xff] %vm312, %v390
        %424 = vst.msk [vmem:[%s402 + $0xf9] sm:$0xff] %vm312, %v391
        %425 = vst.msk [vmem:[%s402 + $0x109] sm:$0xff] %vm312, %v392
        %426 = vst.msk [vmem:[%s402 + $0x111] sm:$0xff] %vm312, %v393
        %427 = vst.msk [vmem:[%s402 + $0x121] sm:$0xff] %vm312, %v394
        %428 = vst.msk [vmem:[%s402 + $0x129] sm:$0xff] %vm312, %v395
        %429 = vst.msk [vmem:[%s402 + $0x139] sm:$0xff] %vm312, %v396
        %430 = vst.msk [vmem:[%s402 + $0x141] sm:$0xff] %vm312, %v397
        %431 = vst.msk [vmem:[%s402 + $0x151] sm:$0xff] %vm312, %v398
        %432 = vst.msk [vmem:[%s402 + $0x159] sm:$0xff] %vm312, %v399
        %433 = vst.msk [vmem:[%s402 + $0x169] sm:$0xff] %vm312, %v400
        %434 = vst.msk [vmem:[%s402 + $0x171] sm:$0xff] %vm312, %v401
        %p435 = scmp.gt.s32.totalorder %s33, 0
        // Predicated region
        $region53: #{double_conv_forward.3} parent=35 // pred_check
          %p436 = pneg %p435
        $region54: #{double_conv_forward.3} parent=35 // pred_check_branch
          %438 = sbr.rel (%p436) target = $region56
        $region55: #{double_conv_forward.3} parent=35 // pred_region
          %s439 = ssub.s32 %s311, 1
          %s440 = smul.u32 %s439, 16
          %s441 = scalar_lea.vmem %s266, %s440 [#allocation3]
          %v442 = vld [vmem:[%s441] sm:$0xff]
          %v443 = vld [vmem:[%s441 + $0x8] sm:$0xff]
          %444 = vst.msk [vmem:[#allocation2 + $0x1] sm:$0xff] %vm312, %v442
          %445 = vst.msk [vmem:[#allocation2 + $0x9] sm:$0xff] %vm312, %v443
        $region56: #{double_conv_forward.3} parent=35 // pred_fallthru
          _
        %p446 = scmp.lt.s32.totalorder %s33, 0
        // Predicated region
        $region57: #{double_conv_forward.3} parent=35 // pred_check
          %p447 = pneg %p446
        $region58: #{double_conv_forward.3} parent=35 // pred_check_branch
          %449 = sbr.rel (%p447) target = $region60
        $region59: #{double_conv_forward.3} parent=35 // pred_region
          %s450 = sadd.s32 %s311, 16
          %s451 = smul.u32 %s450, 16
          %s452 = scalar_lea.vmem %s266, %s451 [#allocation3]
          %v453 = vld [vmem:[%s452] sm:$0xff]
          %v454 = vld [vmem:[%s452 + $0x8] sm:$0xff]
          %s455 = scalar_lea.vmem [#allocation2], 408
          %456 = vst.msk [vmem:[%s455 + $0x1] sm:$0xff] %vm312, %v453
          %457 = vst.msk [vmem:[%s455 + $0x9] sm:$0xff] %vm312, %v454
        $region60: #{double_conv_forward.3} parent=35 // pred_fallthru
          _
        %v458 = vld [vmem:[#allocation2] sm:$0xff]
        %v459 = vld [vmem:[#allocation2 + $0x8] sm:$0xff]
        %v460 = vld [vmem:[#allocation2 + $0x18] sm:$0xff]
        %v461 = vld [vmem:[#allocation2 + $0x20] sm:$0xff]
        %v462 = vld [vmem:[#allocation2 + $0x30] sm:$0xff]
        %v463 = vld [vmem:[#allocation2 + $0x38] sm:$0xff]
        %v464 = vld [vmem:[#allocation2 + $0x48] sm:$0xff]
        %v465 = vld [vmem:[#allocation2 + $0x50] sm:$0xff]
        %v466 = vld [vmem:[#allocation2 + $0x60] sm:$0xff]
        %v467 = vld [vmem:[#allocation2 + $0x68] sm:$0xff]
        %v468 = vld [vmem:[#allocation2 + $0x78] sm:$0xff]
        %v469 = vld [vmem:[#allocation2 + $0x80] sm:$0xff]
        %v470 = vld [vmem:[#allocation2 + $0x90] sm:$0xff]
        %v471 = vld [vmem:[#allocation2 + $0x98] sm:$0xff]
        %v472 = vld [vmem:[#allocation2 + $0xa8] sm:$0xff]
        %v473 = vld [vmem:[#allocation2 + $0xb0] sm:$0xff]
        %v474 = vld [vmem:[#allocation2 + $0xc0] sm:$0xff]
        %v475 = vld [vmem:[#allocation2 + $0xc8] sm:$0xff]
        %v476 = vld [vmem:[#allocation2 + $0xd8] sm:$0xff]
        %v477 = vld [vmem:[#allocation2 + $0xe0] sm:$0xff]
        %v478 = vld [vmem:[#allocation2 + $0xf0] sm:$0xff]
        %v479 = vld [vmem:[#allocation2 + $0xf8] sm:$0xff]
        %v480 = vld [vmem:[#allocation2 + $0x108] sm:$0xff]
        %v481 = vld [vmem:[#allocation2 + $0x110] sm:$0xff]
        %v482 = vld [vmem:[#allocation2 + $0x120] sm:$0xff]
        %v483 = vld [vmem:[#allocation2 + $0x128] sm:$0xff]
        %v484 = vld [vmem:[#allocation2 + $0x138] sm:$0xff]
        %v485 = vld [vmem:[#allocation2 + $0x140] sm:$0xff]
        %v486 = vld [vmem:[#allocation2 + $0x150] sm:$0xff]
        %v487 = vld [vmem:[#allocation2 + $0x158] sm:$0xff]
        %v488 = vld [vmem:[#allocation2 + $0x168] sm:$0xff]
        %v489 = vld [vmem:[#allocation2 + $0x170] sm:$0xff]
        %v490 = vld [vmem:[#allocation9] sm:$0xf]
        %v491 = vld [vmem:[#allocation2 + $0x1] sm:$0xff]
        %v492 = vld [vmem:[#allocation2 + $0x9] sm:$0xff]
        %v493 = vld [vmem:[#allocation2 + $0x19] sm:$0xff]
        %v494 = vld [vmem:[#allocation2 + $0x21] sm:$0xff]
        %v495 = vld [vmem:[#allocation2 + $0x31] sm:$0xff]
        %v496 = vld [vmem:[#allocation2 + $0x39] sm:$0xff]
        %v497 = vld [vmem:[#allocation2 + $0x49] sm:$0xff]
        %v498 = vld [vmem:[#allocation2 + $0x51] sm:$0xff]
        %v499 = vld [vmem:[#allocation2 + $0x61] sm:$0xff]
        %v500 = vld [vmem:[#allocation2 + $0x69] sm:$0xff]
        %v501 = vld [vmem:[#allocation2 + $0x79] sm:$0xff]
        %v502 = vld [vmem:[#allocation2 + $0x81] sm:$0xff]
        %v503 = vld [vmem:[#allocation2 + $0x91] sm:$0xff]
        %v504 = vld [vmem:[#allocation2 + $0x99] sm:$0xff]
        %v505 = vld [vmem:[#allocation2 + $0xa9] sm:$0xff]
        %v506 = vld [vmem:[#allocation2 + $0xb1] sm:$0xff]
        %v507 = vld [vmem:[#allocation2 + $0xc1] sm:$0xff]
        %v508 = vld [vmem:[#allocation2 + $0xc9] sm:$0xff]
        %v509 = vld [vmem:[#allocation2 + $0xd9] sm:$0xff]
        %v510 = vld [vmem:[#allocation2 + $0xe1] sm:$0xff]
        %v511 = vld [vmem:[#allocation2 + $0xf1] sm:$0xff]
        %v512 = vld [vmem:[#allocation2 + $0xf9] sm:$0xff]
        %v513 = vld [vmem:[#allocation2 + $0x109] sm:$0xff]
        %v514 = vld [vmem:[#allocation2 + $0x111] sm:$0xff]
        %v515 = vld [vmem:[#allocation2 + $0x121] sm:$0xff]
        %v516 = vld [vmem:[#allocation2 + $0x129] sm:$0xff]
        %v517 = vld [vmem:[#allocation2 + $0x139] sm:$0xff]
        %v518 = vld [vmem:[#allocation2 + $0x141] sm:$0xff]
        %v519 = vld [vmem:[#allocation2 + $0x151] sm:$0xff]
        %v520 = vld [vmem:[#allocation2 + $0x159] sm:$0xff]
        %v521 = vld [vmem:[#allocation2 + $0x169] sm:$0xff]
        %v522 = vld [vmem:[#allocation2 + $0x171] sm:$0xff]
        %s523 = scalar_lea.vmem [#allocation9], 4
        %v524 = vld [vmem:[%s523] sm:$0xf]
        %v526 = vsel %vm312, %v491, 0
        %v529 = vsel %vm312, %v492, 0
        %v532 = vsel %vm312, %v493, 0
        %v535 = vsel %vm312, %v494, 0
        %v538 = vsel %vm312, %v495, 0
        %v541 = vsel %vm312, %v496, 0
        %v544 = vsel %vm312, %v497, 0
        %v547 = vsel %vm312, %v498, 0
        %v550 = vsel %vm312, %v499, 0
        %v553 = vsel %vm312, %v500, 0
        %v556 = vsel %vm312, %v501, 0
        %v559 = vsel %vm312, %v502, 0
        %v562 = vsel %vm312, %v503, 0
        %v565 = vsel %vm312, %v504, 0
        %v568 = vsel %vm312, %v505, 0
        %v571 = vsel %vm312, %v506, 0
        %v574 = vsel %vm312, %v507, 0
        %v577 = vsel %vm312, %v508, 0
        %v580 = vsel %vm312, %v509, 0
        %v583 = vsel %vm312, %v510, 0
        %v586 = vsel %vm312, %v511, 0
        %v589 = vsel %vm312, %v512, 0
        %v592 = vsel %vm312, %v513, 0
        %v595 = vsel %vm312, %v514, 0
        %v598 = vsel %vm312, %v515, 0
        %v601 = vsel %vm312, %v516, 0
        %v604 = vsel %vm312, %v517, 0
        %v607 = vsel %vm312, %v518, 0
        %v610 = vsel %vm312, %v519, 0
        %v613 = vsel %vm312, %v520, 0
        %v616 = vsel %vm312, %v521, 0
        %v619 = vsel %vm312, %v522, 0
        %vm621 = vcmask 1043456
        %v623 = vsel %vm621, %v524, 0
        %625 = vmatprep.subr.mxu0 0.0
        %626 = vmatpush1.msra.mxu0 %v623
        %627 = vmatprep.subr.mxu0 0.0
        %628 = vmatpush1.msra.mxu0 0.0
        %629 = vmatprep.subr.mxu0 0.0
        %630 = vmatpush1.msra.mxu0 0.0
        %631 = vmatprep.subr.mxu0 0.0
        %632 = vmatpush1.msra.mxu0 0.0
        %633 = vmatprep.subr.mxu0 0.0
        %634 = vmatpush1.msra.mxu0 0.0
        %635 = vmatprep.subr.mxu0 0.0
        %636 = vmatpush1.msra.mxu0 0.0
        %637 = vmatprep.subr.mxu0 0.0
        %638 = vmatpush1.msra.mxu0 0.0
        %639 = vmatprep.subr.mxu0 0.0
        %640 = vmatpush1.msra.mxu0 0.0
        %641 = vmatprep.subr.mxu0 0.0
        %642 = vmatpush1.msra.mxu0 0.0
        %643 = vmatprep.subr.mxu0 0.0
        %644 = vmatpush1.msra.mxu0 0.0
        %645 = vmatprep.subr.mxu0 0.0
        %646 = vmatpush1.msra.mxu0 0.0
        %647 = vmatprep.subr.mxu0 0.0
        %648 = vmatpush1.msra.mxu0 0.0
        %649 = vmatprep.subr.mxu0 0.0
        %650 = vmatpush1.msra.mxu0 0.0
        %651 = vmatprep.subr.mxu0 0.0
        %652 = vmatpush1.msra.mxu0 0.0
        %653 = vmatprep.subr.mxu0 0.0
        %654 = vmatpush1.msra.mxu0 0.0
        %655 = vmatprep.subr.mxu0 0.0
        %656 = vmatpush1.msra.mxu0 0.0
        %657 = vmatprep.subr.mxu0 0.0
        %658 = vmatpush1.msra.mxu0 0.0
        %659 = vmatprep.subr.mxu0 0.0
        %660 = vmatpush1.msra.mxu0 0.0
        %661 = vmatprep.subr.mxu0 0.0
        %662 = vmatpush1.msra.mxu0 0.0
        %663 = vmatprep.subr.mxu0 0.0
        %664 = vmatpush1.msra.mxu0 0.0
        %665 = vmatprep.subr.mxu0 0.0
        %666 = vmatpush1.msra.mxu0 0.0
        %667 = vmatprep.subr.mxu0 0.0
        %668 = vmatpush1.msra.mxu0 0.0
        %669 = vmatprep.subr.mxu0 0.0
        %670 = vmatpush1.msra.mxu0 0.0
        %671 = vmatprep.subr.mxu0 0.0
        %672 = vmatpush1.msra.mxu0 0.0
        %673 = vmatprep.subr.mxu0 0.0
        %674 = vmatpush1.msra.mxu0 0.0
        %675 = vmatprep.subr.mxu0 0.0
        %676 = vmatpush1.msra.mxu0 0.0
        %677 = vmatprep.subr.mxu0 0.0
        %678 = vmatpush1.msra.mxu0 0.0
        %679 = vmatprep.subr.mxu0 0.0
        %680 = vmatpush1.msra.mxu0 0.0
        %681 = vmatprep.subr.mxu0 0.0
        %682 = vmatpush1.msra.mxu0 0.0
        %683 = vmatprep.subr.mxu0 0.0
        %684 = vmatpush1.msra.mxu0 0.0
        %685 = vmatprep.subr.mxu0 0.0
        %686 = vmatpush1.msra.mxu0 0.0
        %687 = vmatprep.subr.mxu0 0.0
        %688 = vmatpush1.msra.mxu0 0.0
        %689 = vmatprep.mubr.f32.mxu0 0.0
        %690 = vmatmul.mubr.f32.gmra.mrb[0].mxu0 %v526
        %v691 = vpop.f32.mrb[0].mxu0
        %v692 = vadd.f32 0.0, %v691
        %v693 = vpop.f32.mrb[0].mxu0
        %694 = vmatprep.mubr.f32.mxu0 0.0
        %695 = vmatmul.mubr.f32.gmra.mrb[0].mxu0 %v529
        %v696 = vpop.f32.mrb[0].mxu0
        %v697 = vadd.f32 0.0, %v696
        %v698 = vpop.f32.mrb[0].mxu0
        %699 = vmatprep.mubr.f32.mxu0 0.0
        %700 = vmatmul.mubr.f32.gmra.mrb[0].mxu0 %v532
        %v701 = vpop.f32.mrb[0].mxu0
        %v702 = vadd.f32 0.0, %v701
        %v703 = vpop.f32.mrb[0].mxu0
        %704 = vmatprep.mubr.f32.mxu0 0.0
        %705 = vmatmul.mubr.f32.gmra.mrb[0].mxu0 %v535
        %v706 = vpop.f32.mrb[0].mxu0
        %v707 = vadd.f32 0.0, %v706
        %v708 = vpop.f32.mrb[0].mxu0
        %709 = vmatprep.mubr.f32.mxu0 0.0
        %710 = vmatmul.mubr.f32.gmra.mrb[0].mxu0 %v538
        %v711 = vpop.f32.mrb[0].mxu0
        %v712 = vadd.f32 0.0, %v711
        %v713 = vpop.f32.mrb[0].mxu0
        %714 = vmatprep.mubr.f32.mxu0 0.0
        %715 = vmatmul.mubr.f32.gmra.mrb[0].mxu0 %v541
        %v716 = vpop.f32.mrb[0].mxu0
        %v717 = vadd.f32 0.0, %v716
        %v718 = vpop.f32.mrb[0].mxu0
        %719 = vmatprep.mubr.f32.mxu0 0.0
        %720 = vmatmul.mubr.f32.gmra.mrb[0].mxu0 %v544
        %v721 = vpop.f32.mrb[0].mxu0
        %v722 = vadd.f32 0.0, %v721
        %v723 = vpop.f32.mrb[0].mxu0
        %724 = vmatprep.mubr.f32.mxu0 0.0
        %725 = vmatmul.mubr.f32.gmra.mrb[0].mxu0 %v547
        %v726 = vpop.f32.mrb[0].mxu0
        %v727 = vadd.f32 0.0, %v726
        %v728 = vpop.f32.mrb[0].mxu0
        %729 = vmatprep.mubr.f32.mxu0 0.0
        %730 = vmatmul.mubr.f32.gmra.mrb[0].mxu0 %v550
        %v731 = vpop.f32.mrb[0].mxu0
        %v732 = vadd.f32 0.0, %v731
        %v733 = vpop.f32.mrb[0].mxu0
        %734 = vmatprep.mubr.f32.mxu0 0.0
        %735 = vmatmul.mubr.f32.gmra.mrb[0].mxu0 %v553
        %v736 = vpop.f32.mrb[0].mxu0
        %v737 = vadd.f32 0.0, %v736
        %v738 = vpop.f32.mrb[0].mxu0
        %739 = vmatprep.mubr.f32.mxu0 0.0
        %740 = vmatmul.mubr.f32.gmra.mrb[0].mxu0 %v556
        %v741 = vpop.f32.mrb[0].mxu0
        %v742 = vadd.f32 0.0, %v741
        %v743 = vpop.f32.mrb[0].mxu0
        %744 = vmatprep.mubr.f32.mxu0 0.0
        %745 = vmatmul.mubr.f32.gmra.mrb[0].mxu0 %v559
        %v746 = vpop.f32.mrb[0].mxu0
        %v747 = vadd.f32 0.0, %v746
        %v748 = vpop.f32.mrb[0].mxu0
        %749 = vmatprep.mubr.f32.mxu0 0.0
        %750 = vmatmul.mubr.f32.gmra.mrb[0].mxu0 %v562
        %v751 = vpop.f32.mrb[0].mxu0
        %v752 = vadd.f32 0.0, %v751
        %v753 = vpop.f32.mrb[0].mxu0
        %754 = vmatprep.mubr.f32.mxu0 0.0
        %755 = vmatmul.mubr.f32.gmra.mrb[0].mxu0 %v565
        %v756 = vpop.f32.mrb[0].mxu0
        %v757 = vadd.f32 0.0, %v756
        %v758 = vpop.f32.mrb[0].mxu0
        %759 = vmatprep.mubr.f32.mxu0 0.0
        %760 = vmatmul.mubr.f32.gmra.mrb[0].mxu0 %v568
        %v761 = vpop.f32.mrb[0].mxu0
        %v762 = vadd.f32 0.0, %v761
        %v763 = vpop.f32.mrb[0].mxu0
        %764 = vmatprep.mubr.f32.mxu0 0.0
        %765 = vmatmul.mubr.f32.gmra.mrb[0].mxu0 %v571
        %v766 = vpop.f32.mrb[0].mxu0
        %v767 = vadd.f32 0.0, %v766
        %v768 = vpop.f32.mrb[0].mxu0
        %769 = vmatprep.mubr.f32.mxu0 0.0
        %770 = vmatmul.mubr.f32.gmra.mrb[0].mxu0 %v574
        %v771 = vpop.f32.mrb[0].mxu0
        %v772 = vadd.f32 0.0, %v771
        %v773 = vpop.f32.mrb[0].mxu0
        %774 = vmatprep.mubr.f32.mxu0 0.0
        %775 = vmatmul.mubr.f32.gmra.mrb[0].mxu0 %v577
        %v776 = vpop.f32.mrb[0].mxu0
        %v777 = vadd.f32 0.0, %v776
        %v778 = vpop.f32.mrb[0].mxu0
        %779 = vmatprep.mubr.f32.mxu0 0.0
        %780 = vmatmul.mubr.f32.gmra.mrb[0].mxu0 %v580
        %v781 = vpop.f32.mrb[0].mxu0
        %v782 = vadd.f32 0.0, %v781
        %v783 = vpop.f32.mrb[0].mxu0
        %784 = vmatprep.mubr.f32.mxu0 0.0
        %785 = vmatmul.mubr.f32.gmra.mrb[0].mxu0 %v583
        %v786 = vpop.f32.mrb[0].mxu0
        %v787 = vadd.f32 0.0, %v786
        %v788 = vpop.f32.mrb[0].mxu0
        %789 = vmatprep.mubr.f32.mxu0 0.0
        %790 = vmatmul.mubr.f32.gmra.mrb[0].mxu0 %v586
        %v791 = vpop.f32.mrb[0].mxu0
        %v792 = vadd.f32 0.0, %v791
        %v793 = vpop.f32.mrb[0].mxu0
        %794 = vmatprep.mubr.f32.mxu0 0.0
        %795 = vmatmul.mubr.f32.gmra.mrb[0].mxu0 %v589
        %v796 = vpop.f32.mrb[0].mxu0
        %v797 = vadd.f32 0.0, %v796
        %v798 = vpop.f32.mrb[0].mxu0
        %799 = vmatprep.mubr.f32.mxu0 0.0
        %800 = vmatmul.mubr.f32.gmra.mrb[0].mxu0 %v592
        %v801 = vpop.f32.mrb[0].mxu0
        %v802 = vadd.f32 0.0, %v801
        %v803 = vpop.f32.mrb[0].mxu0
        %804 = vmatprep.mubr.f32.mxu0 0.0
        %805 = vmatmul.mubr.f32.gmra.mrb[0].mxu0 %v595
        %v806 = vpop.f32.mrb[0].mxu0
        %v807 = vadd.f32 0.0, %v806
        %v808 = vpop.f32.mrb[0].mxu0
        %809 = vmatprep.mubr.f32.mxu0 0.0
        %810 = vmatmul.mubr.f32.gmra.mrb[0].mxu0 %v598
        %v811 = vpop.f32.mrb[0].mxu0
        %v812 = vadd.f32 0.0, %v811
        %v813 = vpop.f32.mrb[0].mxu0
        %814 = vmatprep.mubr.f32.mxu0 0.0
        %815 = vmatmul.mubr.f32.gmra.mrb[0].mxu0 %v601
        %v816 = vpop.f32.mrb[0].mxu0
        %v817 = vadd.f32 0.0, %v816
        %v818 = vpop.f32.mrb[0].mxu0
        %819 = vmatprep.mubr.f32.mxu0 0.0
        %820 = vmatmul.mubr.f32.gmra.mrb[0].mxu0 %v604
        %v821 = vpop.f32.mrb[0].mxu0
        %v822 = vadd.f32 0.0, %v821
        %v823 = vpop.f32.mrb[0].mxu0
        %824 = vmatprep.mubr.f32.mxu0 0.0
        %825 = vmatmul.mubr.f32.gmra.mrb[0].mxu0 %v607
        %v826 = vpop.f32.mrb[0].mxu0
        %v827 = vadd.f32 0.0, %v826
        %v828 = vpop.f32.mrb[0].mxu0
        %829 = vmatprep.mubr.f32.mxu0 0.0
        %830 = vmatmul.mubr.f32.gmra.mrb[0].mxu0 %v610
        %v831 = vpop.f32.mrb[0].mxu0
        %v832 = vadd.f32 0.0, %v831
        %v833 = vpop.f32.mrb[0].mxu0
        %834 = vmatprep.mubr.f32.mxu0 0.0
        %835 = vmatmul.mubr.f32.gmra.mrb[0].mxu0 %v613
        %v836 = vpop.f32.mrb[0].mxu0
        %v837 = vadd.f32 0.0, %v836
        %v838 = vpop.f32.mrb[0].mxu0
        %839 = vmatprep.mubr.f32.mxu0 0.0
        %840 = vmatmul.mubr.f32.gmra.mrb[0].mxu0 %v616
        %v841 = vpop.f32.mrb[0].mxu0
        %v842 = vadd.f32 0.0, %v841
        %v843 = vpop.f32.mrb[0].mxu0
        %844 = vmatprep.mubr.f32.mxu0 0.0
        %845 = vmatmul.mubr.f32.gmra.mrb[0].mxu0 %v619
        %v846 = vpop.f32.mrb[0].mxu0
        %v847 = vadd.f32 0.0, %v846
        %v848 = vpop.f32.mrb[0].mxu0
        %849 = vdwg.mxu0
        %v851 = vsel %vm312, %v458, 0
        %v854 = vsel %vm312, %v459, 0
        %v857 = vsel %vm312, %v460, 0
        %v860 = vsel %vm312, %v461, 0
        %v863 = vsel %vm312, %v462, 0
        %v866 = vsel %vm312, %v463, 0
        %v869 = vsel %vm312, %v464, 0
        %v872 = vsel %vm312, %v465, 0
        %v875 = vsel %vm312, %v466, 0
        %v878 = vsel %vm312, %v467, 0
        %v881 = vsel %vm312, %v468, 0
        %v884 = vsel %vm312, %v469, 0
        %v887 = vsel %vm312, %v470, 0
        %v890 = vsel %vm312, %v471, 0
        %v893 = vsel %vm312, %v472, 0
        %v896 = vsel %vm312, %v473, 0
        %v899 = vsel %vm312, %v474, 0
        %v902 = vsel %vm312, %v475, 0
        %v905 = vsel %vm312, %v476, 0
        %v908 = vsel %vm312, %v477, 0
        %v911 = vsel %vm312, %v478, 0
        %v914 = vsel %vm312, %v479, 0
        %v917 = vsel %vm312, %v480, 0
        %v920 = vsel %vm312, %v481, 0
        %v923 = vsel %vm312, %v482, 0
        %v926 = vsel %vm312, %v483, 0
        %v929 = vsel %vm312, %v484, 0
        %v932 = vsel %vm312, %v485, 0
        %v935 = vsel %vm312, %v486, 0
        %v938 = vsel %vm312, %v487, 0
        %v941 = vsel %vm312, %v488, 0
        %v944 = vsel %vm312, %v489, 0
        %v947 = vsel %vm621, %v490, 0
        %949 = vmatprep.subr.mxu0 0.0
        %950 = vmatpush1.msra.mxu0 %v947
        %951 = vmatprep.subr.mxu0 0.0
        %952 = vmatpush1.msra.mxu0 0.0
        %953 = vmatprep.subr.mxu0 0.0
        %954 = vmatpush1.msra.mxu0 0.0
        %955 = vmatprep.subr.mxu0 0.0
        %956 = vmatpush1.msra.mxu0 0.0
        %957 = vmatprep.subr.mxu0 0.0
        %958 = vmatpush1.msra.mxu0 0.0
        %959 = vmatprep.subr.mxu0 0.0
        %960 = vmatpush1.msra.mxu0 0.0
        %961 = vmatprep.subr.mxu0 0.0
        %962 = vmatpush1.msra.mxu0 0.0
        %963 = vmatprep.subr.mxu0 0.0
        %964 = vmatpush1.msra.mxu0 0.0
        %965 = vmatprep.subr.mxu0 0.0
        %966 = vmatpush1.msra.mxu0 0.0
        %967 = vmatprep.subr.mxu0 0.0
        %968 = vmatpush1.msra.mxu0 0.0
        %969 = vmatprep.subr.mxu0 0.0
        %970 = vmatpush1.msra.mxu0 0.0
        %971 = vmatprep.subr.mxu0 0.0
        %972 = vmatpush1.msra.mxu0 0.0
        %973 = vmatprep.subr.mxu0 0.0
        %974 = vmatpush1.msra.mxu0 0.0
        %975 = vmatprep.subr.mxu0 0.0
        %976 = vmatpush1.msra.mxu0 0.0
        %977 = vmatprep.subr.mxu0 0.0
        %978 = vmatpush1.msra.mxu0 0.0
        %979 = vmatprep.subr.mxu0 0.0
        %980 = vmatpush1.msra.mxu0 0.0
        %981 = vmatprep.subr.mxu0 0.0
        %982 = vmatpush1.msra.mxu0 0.0
        %983 = vmatprep.subr.mxu0 0.0
        %984 = vmatpush1.msra.mxu0 0.0
        %985 = vmatprep.subr.mxu0 0.0
        %986 = vmatpush1.msra.mxu0 0.0
        %987 = vmatprep.subr.mxu0 0.0
        %988 = vmatpush1.msra.mxu0 0.0
        %989 = vmatprep.subr.mxu0 0.0
        %990 = vmatpush1.msra.mxu0 0.0
        %991 = vmatprep.subr.mxu0 0.0
        %992 = vmatpush1.msra.mxu0 0.0
        %993 = vmatprep.subr.mxu0 0.0
        %994 = vmatpush1.msra.mxu0 0.0
        %995 = vmatprep.subr.mxu0 0.0
        %996 = vmatpush1.msra.mxu0 0.0
        %997 = vmatprep.subr.mxu0 0.0
        %998 = vmatpush1.msra.mxu0 0.0
        %999 = vmatprep.subr.mxu0 0.0
        %1000 = vmatpush1.msra.mxu0 0.0
        %1001 = vmatprep.subr.mxu0 0.0
        %1002 = vmatpush1.msra.mxu0 0.0
        %1003 = vmatprep.subr.mxu0 0.0
        %1004 = vmatpush1.msra.mxu0 0.0
        %1005 = vmatprep.subr.mxu0 0.0
        %1006 = vmatpush1.msra.mxu0 0.0
        %1007 = vmatprep.subr.mxu0 0.0
        %1008 = vmatpush1.msra.mxu0 0.0
        %1009 = vmatprep.subr.mxu0 0.0
        %1010 = vmatpush1.msra.mxu0 0.0
        %1011 = vmatprep.subr.mxu0 0.0
        %1012 = vmatpush1.msra.mxu0 0.0
        %1013 = vmatprep.mubr.f32.mxu0 0.0
        %1014 = vmatmul.mubr.f32.gmra.mrb[0].mxu0 %v851
        %v1015 = vpop.f32.mrb[0].mxu0
        %v1016 = vadd.f32 %v692, %v1015
        %v1017 = vpop.f32.mrb[0].mxu0
        %1018 = vmatprep.mubr.f32.mxu0 0.0
        %1019 = vmatmul.mubr.f32.gmra.mrb[0].mxu0 %v854
        %v1020 = vpop.f32.mrb[0].mxu0
        %v1021 = vadd.f32 %v697, %v1020
        %v1022 = vpop.f32.mrb[0].mxu0
        %1023 = vmatprep.mubr.f32.mxu0 0.0
        %1024 = vmatmul.mubr.f32.gmra.mrb[0].mxu0 %v857
        %v1025 = vpop.f32.mrb[0].mxu0
        %v1026 = vadd.f32 %v702, %v1025
        %v1027 = vpop.f32.mrb[0].mxu0
        %1028 = vmatprep.mubr.f32.mxu0 0.0
        %1029 = vmatmul.mubr.f32.gmra.mrb[0].mxu0 %v860
        %v1030 = vpop.f32.mrb[0].mxu0
        %v1031 = vadd.f32 %v707, %v1030
        %v1032 = vpop.f32.mrb[0].mxu0
        %1033 = vmatprep.mubr.f32.mxu0 0.0
        %1034 = vmatmul.mubr.f32.gmra.mrb[0].mxu0 %v863
        %v1035 = vpop.f32.mrb[0].mxu0
        %v1036 = vadd.f32 %v712, %v1035
        %v1037 = vpop.f32.mrb[0].mxu0
        %1038 = vmatprep.mubr.f32.mxu0 0.0
        %1039 = vmatmul.mubr.f32.gmra.mrb[0].mxu0 %v866
        %v1040 = vpop.f32.mrb[0].mxu0
        %v1041 = vadd.f32 %v717, %v1040
        %v1042 = vpop.f32.mrb[0].mxu0
        %1043 = vmatprep.mubr.f32.mxu0 0.0
        %1044 = vmatmul.mubr.f32.gmra.mrb[0].mxu0 %v869
        %v1045 = vpop.f32.mrb[0].mxu0
        %v1046 = vadd.f32 %v722, %v1045
        %v1047 = vpop.f32.mrb[0].mxu0
        %1048 = vmatprep.mubr.f32.mxu0 0.0
        %1049 = vmatmul.mubr.f32.gmra.mrb[0].mxu0 %v872
        %v1050 = vpop.f32.mrb[0].mxu0
        %v1051 = vadd.f32 %v727, %v1050
        %v1052 = vpop.f32.mrb[0].mxu0
        %1053 = vmatprep.mubr.f32.mxu0 0.0
        %1054 = vmatmul.mubr.f32.gmra.mrb[0].mxu0 %v875
        %v1055 = vpop.f32.mrb[0].mxu0
        %v1056 = vadd.f32 %v732, %v1055
        %v1057 = vpop.f32.mrb[0].mxu0
        %1058 = vmatprep.mubr.f32.mxu0 0.0
        %1059 = vmatmul.mubr.f32.gmra.mrb[0].mxu0 %v878
        %v1060 = vpop.f32.mrb[0].mxu0
        %v1061 = vadd.f32 %v737, %v1060
        %v1062 = vpop.f32.mrb[0].mxu0
        %1063 = vmatprep.mubr.f32.mxu0 0.0
        %1064 = vmatmul.mubr.f32.gmra.mrb[0].mxu0 %v881
        %v1065 = vpop.f32.mrb[0].mxu0
        %v1066 = vadd.f32 %v742, %v1065
        %v1067 = vpop.f32.mrb[0].mxu0
        %1068 = vmatprep.mubr.f32.mxu0 0.0
        %1069 = vmatmul.mubr.f32.gmra.mrb[0].mxu0 %v884
        %v1070 = vpop.f32.mrb[0].mxu0
        %v1071 = vadd.f32 %v747, %v1070
        %v1072 = vpop.f32.mrb[0].mxu0
        %1073 = vmatprep.mubr.f32.mxu0 0.0
        %1074 = vmatmul.mubr.f32.gmra.mrb[0].mxu0 %v887
        %v1075 = vpop.f32.mrb[0].mxu0
        %v1076 = vadd.f32 %v752, %v1075
        %v1077 = vpop.f32.mrb[0].mxu0
        %1078 = vmatprep.mubr.f32.mxu0 0.0
        %1079 = vmatmul.mubr.f32.gmra.mrb[0].mxu0 %v890
        %v1080 = vpop.f32.mrb[0].mxu0
        %v1081 = vadd.f32 %v757, %v1080
        %v1082 = vpop.f32.mrb[0].mxu0
        %1083 = vmatprep.mubr.f32.mxu0 0.0
        %1084 = vmatmul.mubr.f32.gmra.mrb[0].mxu0 %v893
        %v1085 = vpop.f32.mrb[0].mxu0
        %v1086 = vadd.f32 %v762, %v1085
        %v1087 = vpop.f32.mrb[0].mxu0
        %1088 = vmatprep.mubr.f32.mxu0 0.0
        %1089 = vmatmul.mubr.f32.gmra.mrb[0].mxu0 %v896
        %v1090 = vpop.f32.mrb[0].mxu0
        %v1091 = vadd.f32 %v767, %v1090
        %v1092 = vpop.f32.mrb[0].mxu0
        %1093 = vmatprep.mubr.f32.mxu0 0.0
        %1094 = vmatmul.mubr.f32.gmra.mrb[0].mxu0 %v899
        %v1095 = vpop.f32.mrb[0].mxu0
        %v1096 = vadd.f32 %v772, %v1095
        %v1097 = vpop.f32.mrb[0].mxu0
        %1098 = vmatprep.mubr.f32.mxu0 0.0
        %1099 = vmatmul.mubr.f32.gmra.mrb[0].mxu0 %v902
        %v1100 = vpop.f32.mrb[0].mxu0
        %v1101 = vadd.f32 %v777, %v1100
        %v1102 = vpop.f32.mrb[0].mxu0
        %1103 = vmatprep.mubr.f32.mxu0 0.0
        %1104 = vmatmul.mubr.f32.gmra.mrb[0].mxu0 %v905
        %v1105 = vpop.f32.mrb[0].mxu0
        %v1106 = vadd.f32 %v782, %v1105
        %v1107 = vpop.f32.mrb[0].mxu0
        %1108 = vmatprep.mubr.f32.mxu0 0.0
        %1109 = vmatmul.mubr.f32.gmra.mrb[0].mxu0 %v908
        %v1110 = vpop.f32.mrb[0].mxu0
        %v1111 = vadd.f32 %v787, %v1110
        %v1112 = vpop.f32.mrb[0].mxu0
        %1113 = vmatprep.mubr.f32.mxu0 0.0
        %1114 = vmatmul.mubr.f32.gmra.mrb[0].mxu0 %v911
        %v1115 = vpop.f32.mrb[0].mxu0
        %v1116 = vadd.f32 %v792, %v1115
        %v1117 = vpop.f32.mrb[0].mxu0
        %1118 = vmatprep.mubr.f32.mxu0 0.0
        %1119 = vmatmul.mubr.f32.gmra.mrb[0].mxu0 %v914
        %v1120 = vpop.f32.mrb[0].mxu0
        %v1121 = vadd.f32 %v797, %v1120
        %v1122 = vpop.f32.mrb[0].mxu0
        %1123 = vmatprep.mubr.f32.mxu0 0.0
        %1124 = vmatmul.mubr.f32.gmra.mrb[0].mxu0 %v917
        %v1125 = vpop.f32.mrb[0].mxu0
        %v1126 = vadd.f32 %v802, %v1125
        %v1127 = vpop.f32.mrb[0].mxu0
        %1128 = vmatprep.mubr.f32.mxu0 0.0
        %1129 = vmatmul.mubr.f32.gmra.mrb[0].mxu0 %v920
        %v1130 = vpop.f32.mrb[0].mxu0
        %v1131 = vadd.f32 %v807, %v1130
        %v1132 = vpop.f32.mrb[0].mxu0
        %1133 = vmatprep.mubr.f32.mxu0 0.0
        %1134 = vmatmul.mubr.f32.gmra.mrb[0].mxu0 %v923
        %v1135 = vpop.f32.mrb[0].mxu0
        %v1136 = vadd.f32 %v812, %v1135
        %v1137 = vpop.f32.mrb[0].mxu0
        %1138 = vmatprep.mubr.f32.mxu0 0.0
        %1139 = vmatmul.mubr.f32.gmra.mrb[0].mxu0 %v926
        %v1140 = vpop.f32.mrb[0].mxu0
        %v1141 = vadd.f32 %v817, %v1140
        %v1142 = vpop.f32.mrb[0].mxu0
        %1143 = vmatprep.mubr.f32.mxu0 0.0
        %1144 = vmatmul.mubr.f32.gmra.mrb[0].mxu0 %v929
        %v1145 = vpop.f32.mrb[0].mxu0
        %v1146 = vadd.f32 %v822, %v1145
        %v1147 = vpop.f32.mrb[0].mxu0
        %1148 = vmatprep.mubr.f32.mxu0 0.0
        %1149 = vmatmul.mubr.f32.gmra.mrb[0].mxu0 %v932
        %v1150 = vpop.f32.mrb[0].mxu0
        %v1151 = vadd.f32 %v827, %v1150
        %v1152 = vpop.f32.mrb[0].mxu0
        %1153 = vmatprep.mubr.f32.mxu0 0.0
        %1154 = vmatmul.mubr.f32.gmra.mrb[0].mxu0 %v935
        %v1155 = vpop.f32.mrb[0].mxu0
        %v1156 = vadd.f32 %v832, %v1155
        %v1157 = vpop.f32.mrb[0].mxu0
        %1158 = vmatprep.mubr.f32.mxu0 0.0
        %1159 = vmatmul.mubr.f32.gmra.mrb[0].mxu0 %v938
        %v1160 = vpop.f32.mrb[0].mxu0
        %v1161 = vadd.f32 %v837, %v1160
        %v1162 = vpop.f32.mrb[0].mxu0
        %1163 = vmatprep.mubr.f32.mxu0 0.0
        %1164 = vmatmul.mubr.f32.gmra.mrb[0].mxu0 %v941
        %v1165 = vpop.f32.mrb[0].mxu0
        %v1166 = vadd.f32 %v842, %v1165
        %v1167 = vpop.f32.mrb[0].mxu0
        %1168 = vmatprep.mubr.f32.mxu0 0.0
        %1169 = vmatmul.mubr.f32.gmra.mrb[0].mxu0 %v944
        %v1170 = vpop.f32.mrb[0].mxu0
        %v1171 = vadd.f32 %v847, %v1170
        %v1172 = vpop.f32.mrb[0].mxu0
        %1173 = vdwg.mxu0
        %v1174 = vld [vmem:[#allocation2 + $0x2] sm:$0xff]
        %v1175 = vld [vmem:[#allocation2 + $0xa] sm:$0xff]
        %v1176 = vld [vmem:[#allocation2 + $0x1a] sm:$0xff]
        %v1177 = vld [vmem:[#allocation2 + $0x22] sm:$0xff]
        %v1178 = vld [vmem:[#allocation2 + $0x32] sm:$0xff]
        %v1179 = vld [vmem:[#allocation2 + $0x3a] sm:$0xff]
        %v1180 = vld [vmem:[#allocation2 + $0x4a] sm:$0xff]
        %v1181 = vld [vmem:[#allocation2 + $0x52] sm:$0xff]
        %v1182 = vld [vmem:[#allocation2 + $0x62] sm:$0xff]
        %v1183 = vld [vmem:[#allocation2 + $0x6a] sm:$0xff]
        %v1184 = vld [vmem:[#allocation2 + $0x7a] sm:$0xff]
        %v1185 = vld [vmem:[#allocation2 + $0x82] sm:$0xff]
        %v1186 = vld [vmem:[#allocation2 + $0x92] sm:$0xff]
        %v1187 = vld [vmem:[#allocation2 + $0x9a] sm:$0xff]
        %v1188 = vld [vmem:[#allocation2 + $0xaa] sm:$0xff]
        %v1189 = vld [vmem:[#allocation2 + $0xb2] sm:$0xff]
        %v1190 = vld [vmem:[#allocation2 + $0xc2] sm:$0xff]
        %v1191 = vld [vmem:[#allocation2 + $0xca] sm:$0xff]
        %v1192 = vld [vmem:[#allocation2 + $0xda] sm:$0xff]
        %v1193 = vld [vmem:[#allocation2 + $0xe2] sm:$0xff]
        %v1194 = vld [vmem:[#allocation2 + $0xf2] sm:$0xff]
        %v1195 = vld [vmem:[#allocation2 + $0xfa] sm:$0xff]
        %v1196 = vld [vmem:[#allocation2 + $0x10a] sm:$0xff]
        %v1197 = vld [vmem:[#allocation2 + $0x112] sm:$0xff]
        %v1198 = vld [vmem:[#allocation2 + $0x122] sm:$0xff]
        %v1199 = vld [vmem:[#allocation2 + $0x12a] sm:$0xff]
        %v1200 = vld [vmem:[#allocation2 + $0x13a] sm:$0xff]
        %v1201 = vld [vmem:[#allocation2 + $0x142] sm:$0xff]
        %v1202 = vld [vmem:[#allocation2 + $0x152] sm:$0xff]
        %v1203 = vld [vmem:[#allocation2 + $0x15a] sm:$0xff]
        %v1204 = vld [vmem:[#allocation2 + $0x16a] sm:$0xff]
        %v1205 = vld [vmem:[#allocation2 + $0x172] sm:$0xff]
        %s1206 = scalar_lea.vmem [#allocation9], 8
        %v1207 = vld [vmem:[%s1206] sm:$0xf]
        %v1209 = vsel %vm312, %v1174, 0
        %v1212 = vsel %vm312, %v1175, 0
        %v1215 = vsel %vm312, %v1176, 0
        %v1218 = vsel %vm312, %v1177, 0
        %v1221 = vsel %vm312, %v1178, 0
        %v1224 = vsel %vm312, %v1179, 0
        %v1227 = vsel %vm312, %v1180, 0
        %v1230 = vsel %vm312, %v1181, 0
        %v1233 = vsel %vm312, %v1182, 0
        %v1236 = vsel %vm312, %v1183, 0
        %v1239 = vsel %vm312, %v1184, 0
        %v1242 = vsel %vm312, %v1185, 0
        %v1245 = vsel %vm312, %v1186, 0
        %v1248 = vsel %vm312, %v1187, 0
        %v1251 = vsel %vm312, %v1188, 0
        %v1254 = vsel %vm312, %v1189, 0
        %v1257 = vsel %vm312, %v1190, 0
        %v1260 = vsel %vm312, %v1191, 0
        %v1263 = vsel %vm312, %v1192, 0
        %v1266 = vsel %vm312, %v1193, 0
        %v1269 = vsel %vm312, %v1194, 0
        %v1272 = vsel %vm312, %v1195, 0
        %v1275 = vsel %vm312, %v1196, 0
        %v1278 = vsel %vm312, %v1197, 0
        %v1281 = vsel %vm312, %v1198, 0
        %v1284 = vsel %vm312, %v1199, 0
        %v1287 = vsel %vm312, %v1200, 0
        %v1290 = vsel %vm312, %v1201, 0
        %v1293 = vsel %vm312, %v1202, 0
        %v1296 = vsel %vm312, %v1203, 0
        %v1299 = vsel %vm312, %v1204, 0
        %v1302 = vsel %vm312, %v1205, 0
        %v1305 = vsel %vm621, %v1207, 0
        %1307 = vmatprep.subr.mxu0 0.0
        %1308 = vmatpush1.msra.mxu0 %v1305
        %1309 = vmatprep.subr.mxu0 0.0
        %1310 = vmatpush1.msra.mxu0 0.0
        %1311 = vmatprep.subr.mxu0 0.0
        %1312 = vmatpush1.msra.mxu0 0.0
        %1313 = vmatprep.subr.mxu0 0.0
        %1314 = vmatpush1.msra.mxu0 0.0
        %1315 = vmatprep.subr.mxu0 0.0
        %1316 = vmatpush1.msra.mxu0 0.0
        %1317 = vmatprep.subr.mxu0 0.0
        %1318 = vmatpush1.msra.mxu0 0.0
        %1319 = vmatprep.subr.mxu0 0.0
        %1320 = vmatpush1.msra.mxu0 0.0
        %1321 = vmatprep.subr.mxu0 0.0
        %1322 = vmatpush1.msra.mxu0 0.0
        %1323 = vmatprep.subr.mxu0 0.0
        %1324 = vmatpush1.msra.mxu0 0.0
        %1325 = vmatprep.subr.mxu0 0.0
        %1326 = vmatpush1.msra.mxu0 0.0
        %1327 = vmatprep.subr.mxu0 0.0
        %1328 = vmatpush1.msra.mxu0 0.0
        %1329 = vmatprep.subr.mxu0 0.0
        %1330 = vmatpush1.msra.mxu0 0.0
        %1331 = vmatprep.subr.mxu0 0.0
        %1332 = vmatpush1.msra.mxu0 0.0
        %1333 = vmatprep.subr.mxu0 0.0
        %1334 = vmatpush1.msra.mxu0 0.0
        %1335 = vmatprep.subr.mxu0 0.0
        %1336 = vmatpush1.msra.mxu0 0.0
        %1337 = vmatprep.subr.mxu0 0.0
        %1338 = vmatpush1.msra.mxu0 0.0
        %1339 = vmatprep.subr.mxu0 0.0
        %1340 = vmatpush1.msra.mxu0 0.0
        %1341 = vmatprep.subr.mxu0 0.0
        %1342 = vmatpush1.msra.mxu0 0.0
        %1343 = vmatprep.subr.mxu0 0.0
        %1344 = vmatpush1.msra.mxu0 0.0
        %1345 = vmatprep.subr.mxu0 0.0
        %1346 = vmatpush1.msra.mxu0 0.0
        %1347 = vmatprep.subr.mxu0 0.0
        %1348 = vmatpush1.msra.mxu0 0.0
        %1349 = vmatprep.subr.mxu0 0.0
        %1350 = vmatpush1.msra.mxu0 0.0
        %1351 = vmatprep.subr.mxu0 0.0
        %1352 = vmatpush1.msra.mxu0 0.0
        %1353 = vmatprep.subr.mxu0 0.0
        %1354 = vmatpush1.msra.mxu0 0.0
        %1355 = vmatprep.subr.mxu0 0.0
        %1356 = vmatpush1.msra.mxu0 0.0
        %1357 = vmatprep.subr.mxu0 0.0
        %1358 = vmatpush1.msra.mxu0 0.0
        %1359 = vmatprep.subr.mxu0 0.0
        %1360 = vmatpush1.msra.mxu0 0.0
        %1361 = vmatprep.subr.mxu0 0.0
        %1362 = vmatpush1.msra.mxu0 0.0
        %1363 = vmatprep.subr.mxu0 0.0
        %1364 = vmatpush1.msra.mxu0 0.0
        %1365 = vmatprep.subr.mxu0 0.0
        %1366 = vmatpush1.msra.mxu0 0.0
        %1367 = vmatprep.subr.mxu0 0.0
        %1368 = vmatpush1.msra.mxu0 0.0
        %1369 = vmatprep.subr.mxu0 0.0
        %1370 = vmatpush1.msra.mxu0 0.0
        %1371 = vmatprep.mubr.f32.mxu0 0.0
        %1372 = vmatmul.mubr.f32.gmra.mrb[0].mxu0 %v1209
        %v1373 = vpop.f32.mrb[0].mxu0
        %v1374 = vadd.f32 0.0, %v1373
        %v1375 = vpop.f32.mrb[0].mxu0
        %1376 = vmatprep.mubr.f32.mxu0 0.0
        %1377 = vmatmul.mubr.f32.gmra.mrb[0].mxu0 %v1212
        %v1378 = vpop.f32.mrb[0].mxu0
        %v1379 = vadd.f32 0.0, %v1378
        %v1380 = vpop.f32.mrb[0].mxu0
        %1381 = vmatprep.mubr.f32.mxu0 0.0
        %1382 = vmatmul.mubr.f32.gmra.mrb[0].mxu0 %v1215
        %v1383 = vpop.f32.mrb[0].mxu0
        %v1384 = vadd.f32 0.0, %v1383
        %v1385 = vpop.f32.mrb[0].mxu0
        %1386 = vmatprep.mubr.f32.mxu0 0.0
        %1387 = vmatmul.mubr.f32.gmra.mrb[0].mxu0 %v1218
        %v1388 = vpop.f32.mrb[0].mxu0
        %v1389 = vadd.f32 0.0, %v1388
        %v1390 = vpop.f32.mrb[0].mxu0
        %1391 = vmatprep.mubr.f32.mxu0 0.0
        %1392 = vmatmul.mubr.f32.gmra.mrb[0].mxu0 %v1221
        %v1393 = vpop.f32.mrb[0].mxu0
        %v1394 = vadd.f32 0.0, %v1393
        %v1395 = vpop.f32.mrb[0].mxu0
        %1396 = vmatprep.mubr.f32.mxu0 0.0
        %1397 = vmatmul.mubr.f32.gmra.mrb[0].mxu0 %v1224
        %v1398 = vpop.f32.mrb[0].mxu0
        %v1399 = vadd.f32 0.0, %v1398
        %v1400 = vpop.f32.mrb[0].mxu0
        %1401 = vmatprep.mubr.f32.mxu0 0.0
        %1402 = vmatmul.mubr.f32.gmra.mrb[0].mxu0 %v1227
        %v1403 = vpop.f32.mrb[0].mxu0
        %v1404 = vadd.f32 0.0, %v1403
        %v1405 = vpop.f32.mrb[0].mxu0
        %1406 = vmatprep.mubr.f32.mxu0 0.0
        %1407 = vmatmul.mubr.f32.gmra.mrb[0].mxu0 %v1230
        %v1408 = vpop.f32.mrb[0].mxu0
        %v1409 = vadd.f32 0.0, %v1408
        %v1410 = vpop.f32.mrb[0].mxu0
        %1411 = vmatprep.mubr.f32.mxu0 0.0
        %1412 = vmatmul.mubr.f32.gmra.mrb[0].mxu0 %v1233
        %v1413 = vpop.f32.mrb[0].mxu0
        %v1414 = vadd.f32 0.0, %v1413
        %v1415 = vpop.f32.mrb[0].mxu0
        %1416 = vmatprep.mubr.f32.mxu0 0.0
        %1417 = vmatmul.mubr.f32.gmra.mrb[0].mxu0 %v1236
        %v1418 = vpop.f32.mrb[0].mxu0
        %v1419 = vadd.f32 0.0, %v1418
        %v1420 = vpop.f32.mrb[0].mxu0
        %1421 = vmatprep.mubr.f32.mxu0 0.0
        %1422 = vmatmul.mubr.f32.gmra.mrb[0].mxu0 %v1239
        %v1423 = vpop.f32.mrb[0].mxu0
        %v1424 = vadd.f32 0.0, %v1423
        %v1425 = vpop.f32.mrb[0].mxu0
        %1426 = vmatprep.mubr.f32.mxu0 0.0
        %1427 = vmatmul.mubr.f32.gmra.mrb[0].mxu0 %v1242
        %v1428 = vpop.f32.mrb[0].mxu0
        %v1429 = vadd.f32 0.0, %v1428
        %v1430 = vpop.f32.mrb[0].mxu0
        %1431 = vmatprep.mubr.f32.mxu0 0.0
        %1432 = vmatmul.mubr.f32.gmra.mrb[0].mxu0 %v1245
        %v1433 = vpop.f32.mrb[0].mxu0
        %v1434 = vadd.f32 0.0, %v1433
        %v1435 = vpop.f32.mrb[0].mxu0
        %1436 = vmatprep.mubr.f32.mxu0 0.0
        %1437 = vmatmul.mubr.f32.gmra.mrb[0].mxu0 %v1248
        %v1438 = vpop.f32.mrb[0].mxu0
        %v1439 = vadd.f32 0.0, %v1438
        %v1440 = vpop.f32.mrb[0].mxu0
        %1441 = vmatprep.mubr.f32.mxu0 0.0
        %1442 = vmatmul.mubr.f32.gmra.mrb[0].mxu0 %v1251
        %v1443 = vpop.f32.mrb[0].mxu0
        %v1444 = vadd.f32 0.0, %v1443
        %v1445 = vpop.f32.mrb[0].mxu0
        %1446 = vmatprep.mubr.f32.mxu0 0.0
        %1447 = vmatmul.mubr.f32.gmra.mrb[0].mxu0 %v1254
        %v1448 = vpop.f32.mrb[0].mxu0
        %v1449 = vadd.f32 0.0, %v1448
        %v1450 = vpop.f32.mrb[0].mxu0
        %1451 = vmatprep.mubr.f32.mxu0 0.0
        %1452 = vmatmul.mubr.f32.gmra.mrb[0].mxu0 %v1257
        %v1453 = vpop.f32.mrb[0].mxu0
        %v1454 = vadd.f32 0.0, %v1453
        %v1455 = vpop.f32.mrb[0].mxu0
        %1456 = vmatprep.mubr.f32.mxu0 0.0
        %1457 = vmatmul.mubr.f32.gmra.mrb[0].mxu0 %v1260
        %v1458 = vpop.f32.mrb[0].mxu0
        %v1459 = vadd.f32 0.0, %v1458
        %v1460 = vpop.f32.mrb[0].mxu0
        %1461 = vmatprep.mubr.f32.mxu0 0.0
        %1462 = vmatmul.mubr.f32.gmra.mrb[0].mxu0 %v1263
        %v1463 = vpop.f32.mrb[0].mxu0
        %v1464 = vadd.f32 0.0, %v1463
        %v1465 = vpop.f32.mrb[0].mxu0
        %1466 = vmatprep.mubr.f32.mxu0 0.0
        %1467 = vmatmul.mubr.f32.gmra.mrb[0].mxu0 %v1266
        %v1468 = vpop.f32.mrb[0].mxu0
        %v1469 = vadd.f32 0.0, %v1468
        %v1470 = vpop.f32.mrb[0].mxu0
        %1471 = vmatprep.mubr.f32.mxu0 0.0
        %1472 = vmatmul.mubr.f32.gmra.mrb[0].mxu0 %v1269
        %v1473 = vpop.f32.mrb[0].mxu0
        %v1474 = vadd.f32 0.0, %v1473
        %v1475 = vpop.f32.mrb[0].mxu0
        %1476 = vmatprep.mubr.f32.mxu0 0.0
        %1477 = vmatmul.mubr.f32.gmra.mrb[0].mxu0 %v1272
        %v1478 = vpop.f32.mrb[0].mxu0
        %v1479 = vadd.f32 0.0, %v1478
        %v1480 = vpop.f32.mrb[0].mxu0
        %1481 = vmatprep.mubr.f32.mxu0 0.0
        %1482 = vmatmul.mubr.f32.gmra.mrb[0].mxu0 %v1275
        %v1483 = vpop.f32.mrb[0].mxu0
        %v1484 = vadd.f32 0.0, %v1483
        %v1485 = vpop.f32.mrb[0].mxu0
        %1486 = vmatprep.mubr.f32.mxu0 0.0
        %1487 = vmatmul.mubr.f32.gmra.mrb[0].mxu0 %v1278
        %v1488 = vpop.f32.mrb[0].mxu0
        %v1489 = vadd.f32 0.0, %v1488
        %v1490 = vpop.f32.mrb[0].mxu0
        %1491 = vmatprep.mubr.f32.mxu0 0.0
        %1492 = vmatmul.mubr.f32.gmra.mrb[0].mxu0 %v1281
        %v1493 = vpop.f32.mrb[0].mxu0
        %v1494 = vadd.f32 0.0, %v1493
        %v1495 = vpop.f32.mrb[0].mxu0
        %1496 = vmatprep.mubr.f32.mxu0 0.0
        %1497 = vmatmul.mubr.f32.gmra.mrb[0].mxu0 %v1284
        %v1498 = vpop.f32.mrb[0].mxu0
        %v1499 = vadd.f32 0.0, %v1498
        %v1500 = vpop.f32.mrb[0].mxu0
        %1501 = vmatprep.mubr.f32.mxu0 0.0
        %1502 = vmatmul.mubr.f32.gmra.mrb[0].mxu0 %v1287
        %v1503 = vpop.f32.mrb[0].mxu0
        %v1504 = vadd.f32 0.0, %v1503
        %v1505 = vpop.f32.mrb[0].mxu0
        %1506 = vmatprep.mubr.f32.mxu0 0.0
        %1507 = vmatmul.mubr.f32.gmra.mrb[0].mxu0 %v1290
        %v1508 = vpop.f32.mrb[0].mxu0
        %v1509 = vadd.f32 0.0, %v1508
        %v1510 = vpop.f32.mrb[0].mxu0
        %1511 = vmatprep.mubr.f32.mxu0 0.0
        %1512 = vmatmul.mubr.f32.gmra.mrb[0].mxu0 %v1293
        %v1513 = vpop.f32.mrb[0].mxu0
        %v1514 = vadd.f32 0.0, %v1513
        %v1515 = vpop.f32.mrb[0].mxu0
        %1516 = vmatprep.mubr.f32.mxu0 0.0
        %1517 = vmatmul.mubr.f32.gmra.mrb[0].mxu0 %v1296
        %v1518 = vpop.f32.mrb[0].mxu0
        %v1519 = vadd.f32 0.0, %v1518
        %v1520 = vpop.f32.mrb[0].mxu0
        %1521 = vmatprep.mubr.f32.mxu0 0.0
        %1522 = vmatmul.mubr.f32.gmra.mrb[0].mxu0 %v1299
        %v1523 = vpop.f32.mrb[0].mxu0
        %v1524 = vadd.f32 0.0, %v1523
        %v1525 = vpop.f32.mrb[0].mxu0
        %1526 = vmatprep.mubr.f32.mxu0 0.0
        %1527 = vmatmul.mubr.f32.gmra.mrb[0].mxu0 %v1302
        %v1528 = vpop.f32.mrb[0].mxu0
        %v1529 = vadd.f32 0.0, %v1528
        %v1530 = vpop.f32.mrb[0].mxu0
        %1531 = vdwg.mxu0
        %v1532 = vadd.f32 %v1016, %v1374
        %v1533 = vadd.f32 %v1021, %v1379
        %v1534 = vadd.f32 %v1026, %v1384
        %v1535 = vadd.f32 %v1031, %v1389
        %v1536 = vadd.f32 %v1036, %v1394
        %v1537 = vadd.f32 %v1041, %v1399
        %v1538 = vadd.f32 %v1046, %v1404
        %v1539 = vadd.f32 %v1051, %v1409
        %v1540 = vadd.f32 %v1056, %v1414
        %v1541 = vadd.f32 %v1061, %v1419
        %v1542 = vadd.f32 %v1066, %v1424
        %v1543 = vadd.f32 %v1071, %v1429
        %v1544 = vadd.f32 %v1076, %v1434
        %v1545 = vadd.f32 %v1081, %v1439
        %v1546 = vadd.f32 %v1086, %v1444
        %v1547 = vadd.f32 %v1091, %v1449
        %v1548 = vadd.f32 %v1096, %v1454
        %v1549 = vadd.f32 %v1101, %v1459
        %v1550 = vadd.f32 %v1106, %v1464
        %v1551 = vadd.f32 %v1111, %v1469
        %v1552 = vadd.f32 %v1116, %v1474
        %v1553 = vadd.f32 %v1121, %v1479
        %v1554 = vadd.f32 %v1126, %v1484
        %v1555 = vadd.f32 %v1131, %v1489
        %v1556 = vadd.f32 %v1136, %v1494
        %v1557 = vadd.f32 %v1141, %v1499
        %v1558 = vadd.f32 %v1146, %v1504
        %v1559 = vadd.f32 %v1151, %v1509
        %v1560 = vadd.f32 %v1156, %v1514
        %v1561 = vadd.f32 %v1161, %v1519
        %v1562 = vadd.f32 %v1166, %v1524
        %v1563 = vadd.f32 %v1171, %v1529
        %v1564 = vld [vmem:[%s402] sm:$0xff]
        %v1565 = vld [vmem:[%s402 + $0x8] sm:$0xff]
        %v1566 = vld [vmem:[%s402 + $0x18] sm:$0xff]
        %v1567 = vld [vmem:[%s402 + $0x20] sm:$0xff]
        %v1568 = vld [vmem:[%s402 + $0x30] sm:$0xff]
        %v1569 = vld [vmem:[%s402 + $0x38] sm:$0xff]
        %v1570 = vld [vmem:[%s402 + $0x48] sm:$0xff]
        %v1571 = vld [vmem:[%s402 + $0x50] sm:$0xff]
        %v1572 = vld [vmem:[%s402 + $0x60] sm:$0xff]
        %v1573 = vld [vmem:[%s402 + $0x68] sm:$0xff]
        %v1574 = vld [vmem:[%s402 + $0x78] sm:$0xff]
        %v1575 = vld [vmem:[%s402 + $0x80] sm:$0xff]
        %v1576 = vld [vmem:[%s402 + $0x90] sm:$0xff]
        %v1577 = vld [vmem:[%s402 + $0x98] sm:$0xff]
        %v1578 = vld [vmem:[%s402 + $0xa8] sm:$0xff]
        %v1579 = vld [vmem:[%s402 + $0xb0] sm:$0xff]
        %v1580 = vld [vmem:[%s402 + $0xc0] sm:$0xff]
        %v1581 = vld [vmem:[%s402 + $0xc8] sm:$0xff]
        %v1582 = vld [vmem:[%s402 + $0xd8] sm:$0xff]
        %v1583 = vld [vmem:[%s402 + $0xe0] sm:$0xff]
        %v1584 = vld [vmem:[%s402 + $0xf0] sm:$0xff]
        %v1585 = vld [vmem:[%s402 + $0xf8] sm:$0xff]
        %v1586 = vld [vmem:[%s402 + $0x108] sm:$0xff]
        %v1587 = vld [vmem:[%s402 + $0x110] sm:$0xff]
        %v1588 = vld [vmem:[%s402 + $0x120] sm:$0xff]
        %v1589 = vld [vmem:[%s402 + $0x128] sm:$0xff]
        %v1590 = vld [vmem:[%s402 + $0x138] sm:$0xff]
        %v1591 = vld [vmem:[%s402 + $0x140] sm:$0xff]
        %v1592 = vld [vmem:[%s402 + $0x150] sm:$0xff]
        %v1593 = vld [vmem:[%s402 + $0x158] sm:$0xff]
        %v1594 = vld [vmem:[%s402 + $0x168] sm:$0xff]
        %v1595 = vld [vmem:[%s402 + $0x170] sm:$0xff]
        %s1596 = scalar_lea.vmem [#allocation9], 12
        %v1597 = vld [vmem:[%s1596] sm:$0xf]
        %v1599 = vsel %vm312, %v1564, 0
        %v1602 = vsel %vm312, %v1565, 0
        %v1605 = vsel %vm312, %v1566, 0
        %v1608 = vsel %vm312, %v1567, 0
        %v1611 = vsel %vm312, %v1568, 0
        %v1614 = vsel %vm312, %v1569, 0
        %v1617 = vsel %vm312, %v1570, 0
        %v1620 = vsel %vm312, %v1571, 0
        %v1623 = vsel %vm312, %v1572, 0
        %v1626 = vsel %vm312, %v1573, 0
        %v1629 = vsel %vm312, %v1574, 0
        %v1632 = vsel %vm312, %v1575, 0
        %v1635 = vsel %vm312, %v1576, 0
        %v1638 = vsel %vm312, %v1577, 0
        %v1641 = vsel %vm312, %v1578, 0
        %v1644 = vsel %vm312, %v1579, 0
        %v1647 = vsel %vm312, %v1580, 0
        %v1650 = vsel %vm312, %v1581, 0
        %v1653 = vsel %vm312, %v1582, 0
        %v1656 = vsel %vm312, %v1583, 0
        %v1659 = vsel %vm312, %v1584, 0
        %v1662 = vsel %vm312, %v1585, 0
        %v1665 = vsel %vm312, %v1586, 0
        %v1668 = vsel %vm312, %v1587, 0
        %v1671 = vsel %vm312, %v1588, 0
        %v1674 = vsel %vm312, %v1589, 0
        %v1677 = vsel %vm312, %v1590, 0
        %v1680 = vsel %vm312, %v1591, 0
        %v1683 = vsel %vm312, %v1592, 0
        %v1686 = vsel %vm312, %v1593, 0
        %v1689 = vsel %vm312, %v1594, 0
        %v1692 = vsel %vm312, %v1595, 0
        %v1695 = vsel %vm621, %v1597, 0
        %1697 = vmatprep.subr.mxu0 0.0
        %1698 = vmatpush1.msra.mxu0 %v1695
        %1699 = vmatprep.subr.mxu0 0.0
        %1700 = vmatpush1.msra.mxu0 0.0
        %1701 = vmatprep.subr.mxu0 0.0
        %1702 = vmatpush1.msra.mxu0 0.0
        %1703 = vmatprep.subr.mxu0 0.0
        %1704 = vmatpush1.msra.mxu0 0.0
        %1705 = vmatprep.subr.mxu0 0.0
        %1706 = vmatpush1.msra.mxu0 0.0
        %1707 = vmatprep.subr.mxu0 0.0
        %1708 = vmatpush1.msra.mxu0 0.0
        %1709 = vmatprep.subr.mxu0 0.0
        %1710 = vmatpush1.msra.mxu0 0.0
        %1711 = vmatprep.subr.mxu0 0.0
        %1712 = vmatpush1.msra.mxu0 0.0
        %1713 = vmatprep.subr.mxu0 0.0
        %1714 = vmatpush1.msra.mxu0 0.0
        %1715 = vmatprep.subr.mxu0 0.0
        %1716 = vmatpush1.msra.mxu0 0.0
        %1717 = vmatprep.subr.mxu0 0.0
        %1718 = vmatpush1.msra.mxu0 0.0
        %1719 = vmatprep.subr.mxu0 0.0
        %1720 = vmatpush1.msra.mxu0 0.0
        %1721 = vmatprep.subr.mxu0 0.0
        %1722 = vmatpush1.msra.mxu0 0.0
        %1723 = vmatprep.subr.mxu0 0.0
        %1724 = vmatpush1.msra.mxu0 0.0
        %1725 = vmatprep.subr.mxu0 0.0
        %1726 = vmatpush1.msra.mxu0 0.0
        %1727 = vmatprep.subr.mxu0 0.0
        %1728 = vmatpush1.msra.mxu0 0.0
        %1729 = vmatprep.subr.mxu0 0.0
        %1730 = vmatpush1.msra.mxu0 0.0
        %1731 = vmatprep.subr.mxu0 0.0
        %1732 = vmatpush1.msra.mxu0 0.0
        %1733 = vmatprep.subr.mxu0 0.0
        %1734 = vmatpush1.msra.mxu0 0.0
        %1735 = vmatprep.subr.mxu0 0.0
        %1736 = vmatpush1.msra.mxu0 0.0
        %1737 = vmatprep.subr.mxu0 0.0
        %1738 = vmatpush1.msra.mxu0 0.0
        %1739 = vmatprep.subr.mxu0 0.0
        %1740 = vmatpush1.msra.mxu0 0.0
        %1741 = vmatprep.subr.mxu0 0.0
        %1742 = vmatpush1.msra.mxu0 0.0
        %1743 = vmatprep.subr.mxu0 0.0
        %1744 = vmatpush1.msra.mxu0 0.0
        %1745 = vmatprep.subr.mxu0 0.0
        %1746 = vmatpush1.msra.mxu0 0.0
        %1747 = vmatprep.subr.mxu0 0.0
        %1748 = vmatpush1.msra.mxu0 0.0
        %1749 = vmatprep.subr.mxu0 0.0
        %1750 = vmatpush1.msra.mxu0 0.0
        %1751 = vmatprep.subr.mxu0 0.0
        %1752 = vmatpush1.msra.mxu0 0.0
        %1753 = vmatprep.subr.mxu0 0.0
        %1754 = vmatpush1.msra.mxu0 0.0
        %1755 = vmatprep.subr.mxu0 0.0
        %1756 = vmatpush1.msra.mxu0 0.0
        %1757 = vmatprep.subr.mxu0 0.0
        %1758 = vmatpush1.msra.mxu0 0.0
        %1759 = vmatprep.subr.mxu0 0.0
        %1760 = vmatpush1.msra.mxu0 0.0
        %1761 = vmatprep.mubr.f32.mxu0 0.0
        %1762 = vmatmul.mubr.f32.gmra.mrb[0].mxu0 %v1599
        %v1763 = vpop.f32.mrb[0].mxu0
        %v1764 = vadd.f32 0.0, %v1763
        %v1765 = vpop.f32.mrb[0].mxu0
        %1766 = vmatprep.mubr.f32.mxu0 0.0
        %1767 = vmatmul.mubr.f32.gmra.mrb[0].mxu0 %v1602
        %v1768 = vpop.f32.mrb[0].mxu0
        %v1769 = vadd.f32 0.0, %v1768
        %v1770 = vpop.f32.mrb[0].mxu0
        %1771 = vmatprep.mubr.f32.mxu0 0.0
        %1772 = vmatmul.mubr.f32.gmra.mrb[0].mxu0 %v1605
        %v1773 = vpop.f32.mrb[0].mxu0
        %v1774 = vadd.f32 0.0, %v1773
        %v1775 = vpop.f32.mrb[0].mxu0
        %1776 = vmatprep.mubr.f32.mxu0 0.0
        %1777 = vmatmul.mubr.f32.gmra.mrb[0].mxu0 %v1608
        %v1778 = vpop.f32.mrb[0].mxu0
        %v1779 = vadd.f32 0.0, %v1778
        %v1780 = vpop.f32.mrb[0].mxu0
        %1781 = vmatprep.mubr.f32.mxu0 0.0
        %1782 = vmatmul.mubr.f32.gmra.mrb[0].mxu0 %v1611
        %v1783 = vpop.f32.mrb[0].mxu0
        %v1784 = vadd.f32 0.0, %v1783
        %v1785 = vpop.f32.mrb[0].mxu0
        %1786 = vmatprep.mubr.f32.mxu0 0.0
        %1787 = vmatmul.mubr.f32.gmra.mrb[0].mxu0 %v1614
        %v1788 = vpop.f32.mrb[0].mxu0
        %v1789 = vadd.f32 0.0, %v1788
        %v1790 = vpop.f32.mrb[0].mxu0
        %1791 = vmatprep.mubr.f32.mxu0 0.0
        %1792 = vmatmul.mubr.f32.gmra.mrb[0].mxu0 %v1617
        %v1793 = vpop.f32.mrb[0].mxu0
        %v1794 = vadd.f32 0.0, %v1793
        %v1795 = vpop.f32.mrb[0].mxu0
        %1796 = vmatprep.mubr.f32.mxu0 0.0
        %1797 = vmatmul.mubr.f32.gmra.mrb[0].mxu0 %v1620
        %v1798 = vpop.f32.mrb[0].mxu0
        %v1799 = vadd.f32 0.0, %v1798
        %v1800 = vpop.f32.mrb[0].mxu0
        %1801 = vmatprep.mubr.f32.mxu0 0.0
        %1802 = vmatmul.mubr.f32.gmra.mrb[0].mxu0 %v1623
        %v1803 = vpop.f32.mrb[0].mxu0
        %v1804 = vadd.f32 0.0, %v1803
        %v1805 = vpop.f32.mrb[0].mxu0
        %1806 = vmatprep.mubr.f32.mxu0 0.0
        %1807 = vmatmul.mubr.f32.gmra.mrb[0].mxu0 %v1626
        %v1808 = vpop.f32.mrb[0].mxu0
        %v1809 = vadd.f32 0.0, %v1808
        %v1810 = vpop.f32.mrb[0].mxu0
        %1811 = vmatprep.mubr.f32.mxu0 0.0
        %1812 = vmatmul.mubr.f32.gmra.mrb[0].mxu0 %v1629
        %v1813 = vpop.f32.mrb[0].mxu0
        %v1814 = vadd.f32 0.0, %v1813
        %v1815 = vpop.f32.mrb[0].mxu0
        %1816 = vmatprep.mubr.f32.mxu0 0.0
        %1817 = vmatmul.mubr.f32.gmra.mrb[0].mxu0 %v1632
        %v1818 = vpop.f32.mrb[0].mxu0
        %v1819 = vadd.f32 0.0, %v1818
        %v1820 = vpop.f32.mrb[0].mxu0
        %1821 = vmatprep.mubr.f32.mxu0 0.0
        %1822 = vmatmul.mubr.f32.gmra.mrb[0].mxu0 %v1635
        %v1823 = vpop.f32.mrb[0].mxu0
        %v1824 = vadd.f32 0.0, %v1823
        %v1825 = vpop.f32.mrb[0].mxu0
        %1826 = vmatprep.mubr.f32.mxu0 0.0
        %1827 = vmatmul.mubr.f32.gmra.mrb[0].mxu0 %v1638
        %v1828 = vpop.f32.mrb[0].mxu0
        %v1829 = vadd.f32 0.0, %v1828
        %v1830 = vpop.f32.mrb[0].mxu0
        %1831 = vmatprep.mubr.f32.mxu0 0.0
        %1832 = vmatmul.mubr.f32.gmra.mrb[0].mxu0 %v1641
        %v1833 = vpop.f32.mrb[0].mxu0
        %v1834 = vadd.f32 0.0, %v1833
        %v1835 = vpop.f32.mrb[0].mxu0
        %1836 = vmatprep.mubr.f32.mxu0 0.0
        %1837 = vmatmul.mubr.f32.gmra.mrb[0].mxu0 %v1644
        %v1838 = vpop.f32.mrb[0].mxu0
        %v1839 = vadd.f32 0.0, %v1838
        %v1840 = vpop.f32.mrb[0].mxu0
        %1841 = vmatprep.mubr.f32.mxu0 0.0
        %1842 = vmatmul.mubr.f32.gmra.mrb[0].mxu0 %v1647
        %v1843 = vpop.f32.mrb[0].mxu0
        %v1844 = vadd.f32 0.0, %v1843
        %v1845 = vpop.f32.mrb[0].mxu0
        %1846 = vmatprep.mubr.f32.mxu0 0.0
        %1847 = vmatmul.mubr.f32.gmra.mrb[0].mxu0 %v1650
        %v1848 = vpop.f32.mrb[0].mxu0
        %v1849 = vadd.f32 0.0, %v1848
        %v1850 = vpop.f32.mrb[0].mxu0
        %1851 = vmatprep.mubr.f32.mxu0 0.0
        %1852 = vmatmul.mubr.f32.gmra.mrb[0].mxu0 %v1653
        %v1853 = vpop.f32.mrb[0].mxu0
        %v1854 = vadd.f32 0.0, %v1853
        %v1855 = vpop.f32.mrb[0].mxu0
        %1856 = vmatprep.mubr.f32.mxu0 0.0
        %1857 = vmatmul.mubr.f32.gmra.mrb[0].mxu0 %v1656
        %v1858 = vpop.f32.mrb[0].mxu0
        %v1859 = vadd.f32 0.0, %v1858
        %v1860 = vpop.f32.mrb[0].mxu0
        %1861 = vmatprep.mubr.f32.mxu0 0.0
        %1862 = vmatmul.mubr.f32.gmra.mrb[0].mxu0 %v1659
        %v1863 = vpop.f32.mrb[0].mxu0
        %v1864 = vadd.f32 0.0, %v1863
        %v1865 = vpop.f32.mrb[0].mxu0
        %1866 = vmatprep.mubr.f32.mxu0 0.0
        %1867 = vmatmul.mubr.f32.gmra.mrb[0].mxu0 %v1662
        %v1868 = vpop.f32.mrb[0].mxu0
        %v1869 = vadd.f32 0.0, %v1868
        %v1870 = vpop.f32.mrb[0].mxu0
        %1871 = vmatprep.mubr.f32.mxu0 0.0
        %1872 = vmatmul.mubr.f32.gmra.mrb[0].mxu0 %v1665
        %v1873 = vpop.f32.mrb[0].mxu0
        %v1874 = vadd.f32 0.0, %v1873
        %v1875 = vpop.f32.mrb[0].mxu0
        %1876 = vmatprep.mubr.f32.mxu0 0.0
        %1877 = vmatmul.mubr.f32.gmra.mrb[0].mxu0 %v1668
        %v1878 = vpop.f32.mrb[0].mxu0
        %v1879 = vadd.f32 0.0, %v1878
        %v1880 = vpop.f32.mrb[0].mxu0
        %1881 = vmatprep.mubr.f32.mxu0 0.0
        %1882 = vmatmul.mubr.f32.gmra.mrb[0].mxu0 %v1671
        %v1883 = vpop.f32.mrb[0].mxu0
        %v1884 = vadd.f32 0.0, %v1883
        %v1885 = vpop.f32.mrb[0].mxu0
        %1886 = vmatprep.mubr.f32.mxu0 0.0
        %1887 = vmatmul.mubr.f32.gmra.mrb[0].mxu0 %v1674
        %v1888 = vpop.f32.mrb[0].mxu0
        %v1889 = vadd.f32 0.0, %v1888
        %v1890 = vpop.f32.mrb[0].mxu0
        %1891 = vmatprep.mubr.f32.mxu0 0.0
        %1892 = vmatmul.mubr.f32.gmra.mrb[0].mxu0 %v1677
        %v1893 = vpop.f32.mrb[0].mxu0
        %v1894 = vadd.f32 0.0, %v1893
        %v1895 = vpop.f32.mrb[0].mxu0
        %1896 = vmatprep.mubr.f32.mxu0 0.0
        %1897 = vmatmul.mubr.f32.gmra.mrb[0].mxu0 %v1680
        %v1898 = vpop.f32.mrb[0].mxu0
        %v1899 = vadd.f32 0.0, %v1898
        %v1900 = vpop.f32.mrb[0].mxu0
        %1901 = vmatprep.mubr.f32.mxu0 0.0
        %1902 = vmatmul.mubr.f32.gmra.mrb[0].mxu0 %v1683
        %v1903 = vpop.f32.mrb[0].mxu0
        %v1904 = vadd.f32 0.0, %v1903
        %v1905 = vpop.f32.mrb[0].mxu0
        %1906 = vmatprep.mubr.f32.mxu0 0.0
        %1907 = vmatmul.mubr.f32.gmra.mrb[0].mxu0 %v1686
        %v1908 = vpop.f32.mrb[0].mxu0
        %v1909 = vadd.f32 0.0, %v1908
        %v1910 = vpop.f32.mrb[0].mxu0
        %1911 = vmatprep.mubr.f32.mxu0 0.0
        %1912 = vmatmul.mubr.f32.gmra.mrb[0].mxu0 %v1689
        %v1913 = vpop.f32.mrb[0].mxu0
        %v1914 = vadd.f32 0.0, %v1913
        %v1915 = vpop.f32.mrb[0].mxu0
        %1916 = vmatprep.mubr.f32.mxu0 0.0
        %1917 = vmatmul.mubr.f32.gmra.mrb[0].mxu0 %v1692
        %v1918 = vpop.f32.mrb[0].mxu0
        %v1919 = vadd.f32 0.0, %v1918
        %v1920 = vpop.f32.mrb[0].mxu0
        %1921 = vdwg.mxu0
        %v1922 = vadd.f32 %v1532, %v1764
        %v1923 = vadd.f32 %v1533, %v1769
        %v1924 = vadd.f32 %v1534, %v1774
        %v1925 = vadd.f32 %v1535, %v1779
        %v1926 = vadd.f32 %v1536, %v1784
        %v1927 = vadd.f32 %v1537, %v1789
        %v1928 = vadd.f32 %v1538, %v1794
        %v1929 = vadd.f32 %v1539, %v1799
        %v1930 = vadd.f32 %v1540, %v1804
        %v1931 = vadd.f32 %v1541, %v1809
        %v1932 = vadd.f32 %v1542, %v1814
        %v1933 = vadd.f32 %v1543, %v1819
        %v1934 = vadd.f32 %v1544, %v1824
        %v1935 = vadd.f32 %v1545, %v1829
        %v1936 = vadd.f32 %v1546, %v1834
        %v1937 = vadd.f32 %v1547, %v1839
        %v1938 = vadd.f32 %v1548, %v1844
        %v1939 = vadd.f32 %v1549, %v1849
        %v1940 = vadd.f32 %v1550, %v1854
        %v1941 = vadd.f32 %v1551, %v1859
        %v1942 = vadd.f32 %v1552, %v1864
        %v1943 = vadd.f32 %v1553, %v1869
        %v1944 = vadd.f32 %v1554, %v1874
        %v1945 = vadd.f32 %v1555, %v1879
        %v1946 = vadd.f32 %v1556, %v1884
        %v1947 = vadd.f32 %v1557, %v1889
        %v1948 = vadd.f32 %v1558, %v1894
        %v1949 = vadd.f32 %v1559, %v1899
        %v1950 = vadd.f32 %v1560, %v1904
        %v1951 = vadd.f32 %v1561, %v1909
        %v1952 = vadd.f32 %v1562, %v1914
        %v1953 = vadd.f32 %v1563, %v1919
        %v1954 = vld [vmem:[%s402 + $0x1] sm:$0xff]
        %v1955 = vld [vmem:[%s402 + $0x9] sm:$0xff]
        %v1956 = vld [vmem:[%s402 + $0x19] sm:$0xff]
        %v1957 = vld [vmem:[%s402 + $0x21] sm:$0xff]
        %v1958 = vld [vmem:[%s402 + $0x31] sm:$0xff]
        %v1959 = vld [vmem:[%s402 + $0x39] sm:$0xff]
        %v1960 = vld [vmem:[%s402 + $0x49] sm:$0xff]
        %v1961 = vld [vmem:[%s402 + $0x51] sm:$0xff]
        %v1962 = vld [vmem:[%s402 + $0x61] sm:$0xff]
        %v1963 = vld [vmem:[%s402 + $0x69] sm:$0xff]
        %v1964 = vld [vmem:[%s402 + $0x79] sm:$0xff]
        %v1965 = vld [vmem:[%s402 + $0x81] sm:$0xff]
        %v1966 = vld [vmem:[%s402 + $0x91] sm:$0xff]
        %v1967 = vld [vmem:[%s402 + $0x99] sm:$0xff]
        %v1968 = vld [vmem:[%s402 + $0xa9] sm:$0xff]
        %v1969 = vld [vmem:[%s402 + $0xb1] sm:$0xff]
        %v1970 = vld [vmem:[%s402 + $0xc1] sm:$0xff]
        %v1971 = vld [vmem:[%s402 + $0xc9] sm:$0xff]
        %v1972 = vld [vmem:[%s402 + $0xd9] sm:$0xff]
        %v1973 = vld [vmem:[%s402 + $0xe1] sm:$0xff]
        %v1974 = vld [vmem:[%s402 + $0xf1] sm:$0xff]
        %v1975 = vld [vmem:[%s402 + $0xf9] sm:$0xff]
        %v1976 = vld [vmem:[%s402 + $0x109] sm:$0xff]
        %v1977 = vld [vmem:[%s402 + $0x111] sm:$0xff]
        %v1978 = vld [vmem:[%s402 + $0x121] sm:$0xff]
        %v1979 = vld [vmem:[%s402 + $0x129] sm:$0xff]
        %v1980 = vld [vmem:[%s402 + $0x139] sm:$0xff]
        %v1981 = vld [vmem:[%s402 + $0x141] sm:$0xff]
        %v1982 = vld [vmem:[%s402 + $0x151] sm:$0xff]
        %v1983 = vld [vmem:[%s402 + $0x159] sm:$0xff]
        %v1984 = vld [vmem:[%s402 + $0x169] sm:$0xff]
        %v1985 = vld [vmem:[%s402 + $0x171] sm:$0xff]
        %s1986 = scalar_lea.vmem [#allocation9], 16
        %v1987 = vld [vmem:[%s1986] sm:$0xf]
        %v1989 = vsel %vm312, %v1954, 0
        %v1992 = vsel %vm312, %v1955, 0
        %v1995 = vsel %vm312, %v1956, 0
        %v1998 = vsel %vm312, %v1957, 0
        %v2001 = vsel %vm312, %v1958, 0
        %v2004 = vsel %vm312, %v1959, 0
        %v2007 = vsel %vm312, %v1960, 0
        %v2010 = vsel %vm312, %v1961, 0
        %v2013 = vsel %vm312, %v1962, 0
        %v2016 = vsel %vm312, %v1963, 0
        %v2019 = vsel %vm312, %v1964, 0
        %v2022 = vsel %vm312, %v1965, 0
        %v2025 = vsel %vm312, %v1966, 0
        %v2028 = vsel %vm312, %v1967, 0
        %v2031 = vsel %vm312, %v1968, 0
        %v2034 = vsel %vm312, %v1969, 0
        %v2037 = vsel %vm312, %v1970, 0
        %v2040 = vsel %vm312, %v1971, 0
        %v2043 = vsel %vm312, %v1972, 0
        %v2046 = vsel %vm312, %v1973, 0
        %v2049 = vsel %vm312, %v1974, 0
        %v2052 = vsel %vm312, %v1975, 0
        %v2055 = vsel %vm312, %v1976, 0
        %v2058 = vsel %vm312, %v1977, 0
        %v2061 = vsel %vm312, %v1978, 0
        %v2064 = vsel %vm312, %v1979, 0
        %v2067 = vsel %vm312, %v1980, 0
        %v2070 = vsel %vm312, %v1981, 0
        %v2073 = vsel %vm312, %v1982, 0
        %v2076 = vsel %vm312, %v1983, 0
        %v2079 = vsel %vm312, %v1984, 0
        %v2082 = vsel %vm312, %v1985, 0
        %v2085 = vsel %vm621, %v1987, 0
        %2087 = vmatprep.subr.mxu0 0.0
        %2088 = vmatpush1.msra.mxu0 %v2085
        %2089 = vmatprep.subr.mxu0 0.0
        %2090 = vmatpush1.msra.mxu0 0.0
        %2091 = vmatprep.subr.mxu0 0.0
        %2092 = vmatpush1.msra.mxu0 0.0
        %2093 = vmatprep.subr.mxu0 0.0
        %2094 = vmatpush1.msra.mxu0 0.0
        %2095 = vmatprep.subr.mxu0 0.0
        %2096 = vmatpush1.msra.mxu0 0.0
        %2097 = vmatprep.subr.mxu0 0.0
        %2098 = vmatpush1.msra.mxu0 0.0
        %2099 = vmatprep.subr.mxu0 0.0
        %2100 = vmatpush1.msra.mxu0 0.0
        %2101 = vmatprep.subr.mxu0 0.0
        %2102 = vmatpush1.msra.mxu0 0.0
        %2103 = vmatprep.subr.mxu0 0.0
        %2104 = vmatpush1.msra.mxu0 0.0
        %2105 = vmatprep.subr.mxu0 0.0
        %2106 = vmatpush1.msra.mxu0 0.0
        %2107 = vmatprep.subr.mxu0 0.0
        %2108 = vmatpush1.msra.mxu0 0.0
        %2109 = vmatprep.subr.mxu0 0.0
        %2110 = vmatpush1.msra.mxu0 0.0
        %2111 = vmatprep.subr.mxu0 0.0
        %2112 = vmatpush1.msra.mxu0 0.0
        %2113 = vmatprep.subr.mxu0 0.0
        %2114 = vmatpush1.msra.mxu0 0.0
        %2115 = vmatprep.subr.mxu0 0.0
        %2116 = vmatpush1.msra.mxu0 0.0
        %2117 = vmatprep.subr.mxu0 0.0
        %2118 = vmatpush1.msra.mxu0 0.0
        %2119 = vmatprep.subr.mxu0 0.0
        %2120 = vmatpush1.msra.mxu0 0.0
        %2121 = vmatprep.subr.mxu0 0.0
        %2122 = vmatpush1.msra.mxu0 0.0
        %2123 = vmatprep.subr.mxu0 0.0
        %2124 = vmatpush1.msra.mxu0 0.0
        %2125 = vmatprep.subr.mxu0 0.0
        %2126 = vmatpush1.msra.mxu0 0.0
        %2127 = vmatprep.subr.mxu0 0.0
        %2128 = vmatpush1.msra.mxu0 0.0
        %2129 = vmatprep.subr.mxu0 0.0
        %2130 = vmatpush1.msra.mxu0 0.0
        %2131 = vmatprep.subr.mxu0 0.0
        %2132 = vmatpush1.msra.mxu0 0.0
        %2133 = vmatprep.subr.mxu0 0.0
        %2134 = vmatpush1.msra.mxu0 0.0
        %2135 = vmatprep.subr.mxu0 0.0
        %2136 = vmatpush1.msra.mxu0 0.0
        %2137 = vmatprep.subr.mxu0 0.0
        %2138 = vmatpush1.msra.mxu0 0.0
        %2139 = vmatprep.subr.mxu0 0.0
        %2140 = vmatpush1.msra.mxu0 0.0
        %2141 = vmatprep.subr.mxu0 0.0
        %2142 = vmatpush1.msra.mxu0 0.0
        %2143 = vmatprep.subr.mxu0 0.0
        %2144 = vmatpush1.msra.mxu0 0.0
        %2145 = vmatprep.subr.mxu0 0.0
        %2146 = vmatpush1.msra.mxu0 0.0
        %2147 = vmatprep.subr.mxu0 0.0
        %2148 = vmatpush1.msra.mxu0 0.0
        %2149 = vmatprep.subr.mxu0 0.0
        %2150 = vmatpush1.msra.mxu0 0.0
        %2151 = vmatprep.mubr.f32.mxu0 0.0
        %2152 = vmatmul.mubr.f32.gmra.mrb[0].mxu0 %v1989
        %v2153 = vpop.f32.mrb[0].mxu0
        %v2154 = vadd.f32 0.0, %v2153
        %v2155 = vpop.f32.mrb[0].mxu0
        %2156 = vmatprep.mubr.f32.mxu0 0.0
        %2157 = vmatmul.mubr.f32.gmra.mrb[0].mxu0 %v1992
        %v2158 = vpop.f32.mrb[0].mxu0
        %v2159 = vadd.f32 0.0, %v2158
        %v2160 = vpop.f32.mrb[0].mxu0
        %2161 = vmatprep.mubr.f32.mxu0 0.0
        %2162 = vmatmul.mubr.f32.gmra.mrb[0].mxu0 %v1995
        %v2163 = vpop.f32.mrb[0].mxu0
        %v2164 = vadd.f32 0.0, %v2163
        %v2165 = vpop.f32.mrb[0].mxu0
        %2166 = vmatprep.mubr.f32.mxu0 0.0
        %2167 = vmatmul.mubr.f32.gmra.mrb[0].mxu0 %v1998
        %v2168 = vpop.f32.mrb[0].mxu0
        %v2169 = vadd.f32 0.0, %v2168
        %v2170 = vpop.f32.mrb[0].mxu0
        %2171 = vmatprep.mubr.f32.mxu0 0.0
        %2172 = vmatmul.mubr.f32.gmra.mrb[0].mxu0 %v2001
        %v2173 = vpop.f32.mrb[0].mxu0
        %v2174 = vadd.f32 0.0, %v2173
        %v2175 = vpop.f32.mrb[0].mxu0
        %2176 = vmatprep.mubr.f32.mxu0 0.0
        %2177 = vmatmul.mubr.f32.gmra.mrb[0].mxu0 %v2004
        %v2178 = vpop.f32.mrb[0].mxu0
        %v2179 = vadd.f32 0.0, %v2178
        %v2180 = vpop.f32.mrb[0].mxu0
        %2181 = vmatprep.mubr.f32.mxu0 0.0
        %2182 = vmatmul.mubr.f32.gmra.mrb[0].mxu0 %v2007
        %v2183 = vpop.f32.mrb[0].mxu0
        %v2184 = vadd.f32 0.0, %v2183
        %v2185 = vpop.f32.mrb[0].mxu0
        %2186 = vmatprep.mubr.f32.mxu0 0.0
        %2187 = vmatmul.mubr.f32.gmra.mrb[0].mxu0 %v2010
        %v2188 = vpop.f32.mrb[0].mxu0
        %v2189 = vadd.f32 0.0, %v2188
        %v2190 = vpop.f32.mrb[0].mxu0
        %2191 = vmatprep.mubr.f32.mxu0 0.0
        %2192 = vmatmul.mubr.f32.gmra.mrb[0].mxu0 %v2013
        %v2193 = vpop.f32.mrb[0].mxu0
        %v2194 = vadd.f32 0.0, %v2193
        %v2195 = vpop.f32.mrb[0].mxu0
        %2196 = vmatprep.mubr.f32.mxu0 0.0
        %2197 = vmatmul.mubr.f32.gmra.mrb[0].mxu0 %v2016
        %v2198 = vpop.f32.mrb[0].mxu0
        %v2199 = vadd.f32 0.0, %v2198
        %v2200 = vpop.f32.mrb[0].mxu0
        %2201 = vmatprep.mubr.f32.mxu0 0.0
        %2202 = vmatmul.mubr.f32.gmra.mrb[0].mxu0 %v2019
        %v2203 = vpop.f32.mrb[0].mxu0
        %v2204 = vadd.f32 0.0, %v2203
        %v2205 = vpop.f32.mrb[0].mxu0
        %2206 = vmatprep.mubr.f32.mxu0 0.0
        %2207 = vmatmul.mubr.f32.gmra.mrb[0].mxu0 %v2022
        %v2208 = vpop.f32.mrb[0].mxu0
        %v2209 = vadd.f32 0.0, %v2208
        %v2210 = vpop.f32.mrb[0].mxu0
        %2211 = vmatprep.mubr.f32.mxu0 0.0
        %2212 = vmatmul.mubr.f32.gmra.mrb[0].mxu0 %v2025
        %v2213 = vpop.f32.mrb[0].mxu0
        %v2214 = vadd.f32 0.0, %v2213
        %v2215 = vpop.f32.mrb[0].mxu0
        %2216 = vmatprep.mubr.f32.mxu0 0.0
        %2217 = vmatmul.mubr.f32.gmra.mrb[0].mxu0 %v2028
        %v2218 = vpop.f32.mrb[0].mxu0
        %v2219 = vadd.f32 0.0, %v2218
        %v2220 = vpop.f32.mrb[0].mxu0
        %2221 = vmatprep.mubr.f32.mxu0 0.0
        %2222 = vmatmul.mubr.f32.gmra.mrb[0].mxu0 %v2031
        %v2223 = vpop.f32.mrb[0].mxu0
        %v2224 = vadd.f32 0.0, %v2223
        %v2225 = vpop.f32.mrb[0].mxu0
        %2226 = vmatprep.mubr.f32.mxu0 0.0
        %2227 = vmatmul.mubr.f32.gmra.mrb[0].mxu0 %v2034
        %v2228 = vpop.f32.mrb[0].mxu0
        %v2229 = vadd.f32 0.0, %v2228
        %v2230 = vpop.f32.mrb[0].mxu0
        %2231 = vmatprep.mubr.f32.mxu0 0.0
        %2232 = vmatmul.mubr.f32.gmra.mrb[0].mxu0 %v2037
        %v2233 = vpop.f32.mrb[0].mxu0
        %v2234 = vadd.f32 0.0, %v2233
        %v2235 = vpop.f32.mrb[0].mxu0
        %2236 = vmatprep.mubr.f32.mxu0 0.0
        %2237 = vmatmul.mubr.f32.gmra.mrb[0].mxu0 %v2040
        %v2238 = vpop.f32.mrb[0].mxu0
        %v2239 = vadd.f32 0.0, %v2238
        %v2240 = vpop.f32.mrb[0].mxu0
        %2241 = vmatprep.mubr.f32.mxu0 0.0
        %2242 = vmatmul.mubr.f32.gmra.mrb[0].mxu0 %v2043
        %v2243 = vpop.f32.mrb[0].mxu0
        %v2244 = vadd.f32 0.0, %v2243
        %v2245 = vpop.f32.mrb[0].mxu0
        %2246 = vmatprep.mubr.f32.mxu0 0.0
        %2247 = vmatmul.mubr.f32.gmra.mrb[0].mxu0 %v2046
        %v2248 = vpop.f32.mrb[0].mxu0
        %v2249 = vadd.f32 0.0, %v2248
        %v2250 = vpop.f32.mrb[0].mxu0
        %2251 = vmatprep.mubr.f32.mxu0 0.0
        %2252 = vmatmul.mubr.f32.gmra.mrb[0].mxu0 %v2049
        %v2253 = vpop.f32.mrb[0].mxu0
        %v2254 = vadd.f32 0.0, %v2253
        %v2255 = vpop.f32.mrb[0].mxu0
        %2256 = vmatprep.mubr.f32.mxu0 0.0
        %2257 = vmatmul.mubr.f32.gmra.mrb[0].mxu0 %v2052
        %v2258 = vpop.f32.mrb[0].mxu0
        %v2259 = vadd.f32 0.0, %v2258
        %v2260 = vpop.f32.mrb[0].mxu0
        %2261 = vmatprep.mubr.f32.mxu0 0.0
        %2262 = vmatmul.mubr.f32.gmra.mrb[0].mxu0 %v2055
        %v2263 = vpop.f32.mrb[0].mxu0
        %v2264 = vadd.f32 0.0, %v2263
        %v2265 = vpop.f32.mrb[0].mxu0
        %2266 = vmatprep.mubr.f32.mxu0 0.0
        %2267 = vmatmul.mubr.f32.gmra.mrb[0].mxu0 %v2058
        %v2268 = vpop.f32.mrb[0].mxu0
        %v2269 = vadd.f32 0.0, %v2268
        %v2270 = vpop.f32.mrb[0].mxu0
        %2271 = vmatprep.mubr.f32.mxu0 0.0
        %2272 = vmatmul.mubr.f32.gmra.mrb[0].mxu0 %v2061
        %v2273 = vpop.f32.mrb[0].mxu0
        %v2274 = vadd.f32 0.0, %v2273
        %v2275 = vpop.f32.mrb[0].mxu0
        %2276 = vmatprep.mubr.f32.mxu0 0.0
        %2277 = vmatmul.mubr.f32.gmra.mrb[0].mxu0 %v2064
        %v2278 = vpop.f32.mrb[0].mxu0
        %v2279 = vadd.f32 0.0, %v2278
        %v2280 = vpop.f32.mrb[0].mxu0
        %2281 = vmatprep.mubr.f32.mxu0 0.0
        %2282 = vmatmul.mubr.f32.gmra.mrb[0].mxu0 %v2067
        %v2283 = vpop.f32.mrb[0].mxu0
        %v2284 = vadd.f32 0.0, %v2283
        %v2285 = vpop.f32.mrb[0].mxu0
        %2286 = vmatprep.mubr.f32.mxu0 0.0
        %2287 = vmatmul.mubr.f32.gmra.mrb[0].mxu0 %v2070
        %v2288 = vpop.f32.mrb[0].mxu0
        %v2289 = vadd.f32 0.0, %v2288
        %v2290 = vpop.f32.mrb[0].mxu0
        %2291 = vmatprep.mubr.f32.mxu0 0.0
        %2292 = vmatmul.mubr.f32.gmra.mrb[0].mxu0 %v2073
        %v2293 = vpop.f32.mrb[0].mxu0
        %v2294 = vadd.f32 0.0, %v2293
        %v2295 = vpop.f32.mrb[0].mxu0
        %2296 = vmatprep.mubr.f32.mxu0 0.0
        %2297 = vmatmul.mubr.f32.gmra.mrb[0].mxu0 %v2076
        %v2298 = vpop.f32.mrb[0].mxu0
        %v2299 = vadd.f32 0.0, %v2298
        %v2300 = vpop.f32.mrb[0].mxu0
        %2301 = vmatprep.mubr.f32.mxu0 0.0
        %2302 = vmatmul.mubr.f32.gmra.mrb[0].mxu0 %v2079
        %v2303 = vpop.f32.mrb[0].mxu0
        %v2304 = vadd.f32 0.0, %v2303
        %v2305 = vpop.f32.mrb[0].mxu0
        %2306 = vmatprep.mubr.f32.mxu0 0.0
        %2307 = vmatmul.mubr.f32.gmra.mrb[0].mxu0 %v2082
        %v2308 = vpop.f32.mrb[0].mxu0
        %v2309 = vadd.f32 0.0, %v2308
        %v2310 = vpop.f32.mrb[0].mxu0
        %2311 = vdwg.mxu0
        %v2312 = vadd.f32 %v1922, %v2154
        %v2313 = vadd.f32 %v1923, %v2159
        %v2314 = vadd.f32 %v1924, %v2164
        %v2315 = vadd.f32 %v1925, %v2169
        %v2316 = vadd.f32 %v1926, %v2174
        %v2317 = vadd.f32 %v1927, %v2179
        %v2318 = vadd.f32 %v1928, %v2184
        %v2319 = vadd.f32 %v1929, %v2189
        %v2320 = vadd.f32 %v1930, %v2194
        %v2321 = vadd.f32 %v1931, %v2199
        %v2322 = vadd.f32 %v1932, %v2204
        %v2323 = vadd.f32 %v1933, %v2209
        %v2324 = vadd.f32 %v1934, %v2214
        %v2325 = vadd.f32 %v1935, %v2219
        %v2326 = vadd.f32 %v1936, %v2224
        %v2327 = vadd.f32 %v1937, %v2229
        %v2328 = vadd.f32 %v1938, %v2234
        %v2329 = vadd.f32 %v1939, %v2239
        %v2330 = vadd.f32 %v1940, %v2244
        %v2331 = vadd.f32 %v1941, %v2249
        %v2332 = vadd.f32 %v1942, %v2254
        %v2333 = vadd.f32 %v1943, %v2259
        %v2334 = vadd.f32 %v1944, %v2264
        %v2335 = vadd.f32 %v1945, %v2269
        %v2336 = vadd.f32 %v1946, %v2274
        %v2337 = vadd.f32 %v1947, %v2279
        %v2338 = vadd.f32 %v1948, %v2284
        %v2339 = vadd.f32 %v1949, %v2289
        %v2340 = vadd.f32 %v1950, %v2294
        %v2341 = vadd.f32 %v1951, %v2299
        %v2342 = vadd.f32 %v1952, %v2304
        %v2343 = vadd.f32 %v1953, %v2309
        %v2344 = vld [vmem:[%s402 + $0x2] sm:$0xff]
        %v2345 = vld [vmem:[%s402 + $0xa] sm:$0xff]
        %v2346 = vld [vmem:[%s402 + $0x1a] sm:$0xff]
        %v2347 = vld [vmem:[%s402 + $0x22] sm:$0xff]
        %v2348 = vld [vmem:[%s402 + $0x32] sm:$0xff]
        %v2349 = vld [vmem:[%s402 + $0x3a] sm:$0xff]
        %v2350 = vld [vmem:[%s402 + $0x4a] sm:$0xff]
        %v2351 = vld [vmem:[%s402 + $0x52] sm:$0xff]
        %v2352 = vld [vmem:[%s402 + $0x62] sm:$0xff]
        %v2353 = vld [vmem:[%s402 + $0x6a] sm:$0xff]
        %v2354 = vld [vmem:[%s402 + $0x7a] sm:$0xff]
        %v2355 = vld [vmem:[%s402 + $0x82] sm:$0xff]
        %v2356 = vld [vmem:[%s402 + $0x92] sm:$0xff]
        %v2357 = vld [vmem:[%s402 + $0x9a] sm:$0xff]
        %v2358 = vld [vmem:[%s402 + $0xaa] sm:$0xff]
        %v2359 = vld [vmem:[%s402 + $0xb2] sm:$0xff]
        %v2360 = vld [vmem:[%s402 + $0xc2] sm:$0xff]
        %v2361 = vld [vmem:[%s402 + $0xca] sm:$0xff]
        %v2362 = vld [vmem:[%s402 + $0xda] sm:$0xff]
        %v2363 = vld [vmem:[%s402 + $0xe2] sm:$0xff]
        %v2364 = vld [vmem:[%s402 + $0xf2] sm:$0xff]
        %v2365 = vld [vmem:[%s402 + $0xfa] sm:$0xff]
        %v2366 = vld [vmem:[%s402 + $0x10a] sm:$0xff]
        %v2367 = vld [vmem:[%s402 + $0x112] sm:$0xff]
        %v2368 = vld [vmem:[%s402 + $0x122] sm:$0xff]
        %v2369 = vld [vmem:[%s402 + $0x12a] sm:$0xff]
        %v2370 = vld [vmem:[%s402 + $0x13a] sm:$0xff]
        %v2371 = vld [vmem:[%s402 + $0x142] sm:$0xff]
        %v2372 = vld [vmem:[%s402 + $0x152] sm:$0xff]
        %v2373 = vld [vmem:[%s402 + $0x15a] sm:$0xff]
        %v2374 = vld [vmem:[%s402 + $0x16a] sm:$0xff]
        %v2375 = vld [vmem:[%s402 + $0x172] sm:$0xff]
        %s2376 = scalar_lea.vmem [#allocation9], 20
        %v2377 = vld [vmem:[%s2376] sm:$0xf]
        %v2379 = vsel %vm312, %v2344, 0
        %v2382 = vsel %vm312, %v2345, 0
        %v2385 = vsel %vm312, %v2346, 0
        %v2388 = vsel %vm312, %v2347, 0
        %v2391 = vsel %vm312, %v2348, 0
        %v2394 = vsel %vm312, %v2349, 0
        %v2397 = vsel %vm312, %v2350, 0
        %v2400 = vsel %vm312, %v2351, 0
        %v2403 = vsel %vm312, %v2352, 0
        %v2406 = vsel %vm312, %v2353, 0
        %v2409 = vsel %vm312, %v2354, 0
        %v2412 = vsel %vm312, %v2355, 0
        %v2415 = vsel %vm312, %v2356, 0
        %v2418 = vsel %vm312, %v2357, 0
        %v2421 = vsel %vm312, %v2358, 0
        %v2424 = vsel %vm312, %v2359, 0
        %v2427 = vsel %vm312, %v2360, 0
        %v2430 = vsel %vm312, %v2361, 0
        %v2433 = vsel %vm312, %v2362, 0
        %v2436 = vsel %vm312, %v2363, 0
        %v2439 = vsel %vm312, %v2364, 0
        %v2442 = vsel %vm312, %v2365, 0
        %v2445 = vsel %vm312, %v2366, 0
        %v2448 = vsel %vm312, %v2367, 0
        %v2451 = vsel %vm312, %v2368, 0
        %v2454 = vsel %vm312, %v2369, 0
        %v2457 = vsel %vm312, %v2370, 0
        %v2460 = vsel %vm312, %v2371, 0
        %v2463 = vsel %vm312, %v2372, 0
        %v2466 = vsel %vm312, %v2373, 0
        %v2469 = vsel %vm312, %v2374, 0
        %v2472 = vsel %vm312, %v2375, 0
        %v2475 = vsel %vm621, %v2377, 0
        %2477 = vmatprep.subr.mxu0 0.0
        %2478 = vmatpush1.msra.mxu0 %v2475
        %2479 = vmatprep.subr.mxu0 0.0
        %2480 = vmatpush1.msra.mxu0 0.0
        %2481 = vmatprep.subr.mxu0 0.0
        %2482 = vmatpush1.msra.mxu0 0.0
        %2483 = vmatprep.subr.mxu0 0.0
        %2484 = vmatpush1.msra.mxu0 0.0
        %2485 = vmatprep.subr.mxu0 0.0
        %2486 = vmatpush1.msra.mxu0 0.0
        %2487 = vmatprep.subr.mxu0 0.0
        %2488 = vmatpush1.msra.mxu0 0.0
        %2489 = vmatprep.subr.mxu0 0.0
        %2490 = vmatpush1.msra.mxu0 0.0
        %2491 = vmatprep.subr.mxu0 0.0
        %2492 = vmatpush1.msra.mxu0 0.0
        %2493 = vmatprep.subr.mxu0 0.0
        %2494 = vmatpush1.msra.mxu0 0.0
        %2495 = vmatprep.subr.mxu0 0.0
        %2496 = vmatpush1.msra.mxu0 0.0
        %2497 = vmatprep.subr.mxu0 0.0
        %2498 = vmatpush1.msra.mxu0 0.0
        %2499 = vmatprep.subr.mxu0 0.0
        %2500 = vmatpush1.msra.mxu0 0.0
        %2501 = vmatprep.subr.mxu0 0.0
        %2502 = vmatpush1.msra.mxu0 0.0
        %2503 = vmatprep.subr.mxu0 0.0
        %2504 = vmatpush1.msra.mxu0 0.0
        %2505 = vmatprep.subr.mxu0 0.0
        %2506 = vmatpush1.msra.mxu0 0.0
        %2507 = vmatprep.subr.mxu0 0.0
        %2508 = vmatpush1.msra.mxu0 0.0
        %2509 = vmatprep.subr.mxu0 0.0
        %2510 = vmatpush1.msra.mxu0 0.0
        %2511 = vmatprep.subr.mxu0 0.0
        %2512 = vmatpush1.msra.mxu0 0.0
        %2513 = vmatprep.subr.mxu0 0.0
        %2514 = vmatpush1.msra.mxu0 0.0
        %2515 = vmatprep.subr.mxu0 0.0
        %2516 = vmatpush1.msra.mxu0 0.0
        %2517 = vmatprep.subr.mxu0 0.0
        %2518 = vmatpush1.msra.mxu0 0.0
        %2519 = vmatprep.subr.mxu0 0.0
        %2520 = vmatpush1.msra.mxu0 0.0
        %2521 = vmatprep.subr.mxu0 0.0
        %2522 = vmatpush1.msra.mxu0 0.0
        %2523 = vmatprep.subr.mxu0 0.0
        %2524 = vmatpush1.msra.mxu0 0.0
        %2525 = vmatprep.subr.mxu0 0.0
        %2526 = vmatpush1.msra.mxu0 0.0
        %2527 = vmatprep.subr.mxu0 0.0
        %2528 = vmatpush1.msra.mxu0 0.0
        %2529 = vmatprep.subr.mxu0 0.0
        %2530 = vmatpush1.msra.mxu0 0.0
        %2531 = vmatprep.subr.mxu0 0.0
        %2532 = vmatpush1.msra.mxu0 0.0
        %2533 = vmatprep.subr.mxu0 0.0
        %2534 = vmatpush1.msra.mxu0 0.0
        %2535 = vmatprep.subr.mxu0 0.0
        %2536 = vmatpush1.msra.mxu0 0.0
        %2537 = vmatprep.subr.mxu0 0.0
        %2538 = vmatpush1.msra.mxu0 0.0
        %2539 = vmatprep.subr.mxu0 0.0
        %2540 = vmatpush1.msra.mxu0 0.0
        %2541 = vmatprep.mubr.f32.mxu0 0.0
        %2542 = vmatmul.mubr.f32.gmra.mrb[0].mxu0 %v2379
        %v2543 = vpop.f32.mrb[0].mxu0
        %v2544 = vadd.f32 0.0, %v2543
        %v2545 = vpop.f32.mrb[0].mxu0
        %2546 = vmatprep.mubr.f32.mxu0 0.0
        %2547 = vmatmul.mubr.f32.gmra.mrb[0].mxu0 %v2382
        %v2548 = vpop.f32.mrb[0].mxu0
        %v2549 = vadd.f32 0.0, %v2548
        %v2550 = vpop.f32.mrb[0].mxu0
        %2551 = vmatprep.mubr.f32.mxu0 0.0
        %2552 = vmatmul.mubr.f32.gmra.mrb[0].mxu0 %v2385
        %v2553 = vpop.f32.mrb[0].mxu0
        %v2554 = vadd.f32 0.0, %v2553
        %v2555 = vpop.f32.mrb[0].mxu0
        %2556 = vmatprep.mubr.f32.mxu0 0.0
        %2557 = vmatmul.mubr.f32.gmra.mrb[0].mxu0 %v2388
        %v2558 = vpop.f32.mrb[0].mxu0
        %v2559 = vadd.f32 0.0, %v2558
        %v2560 = vpop.f32.mrb[0].mxu0
        %2561 = vmatprep.mubr.f32.mxu0 0.0
        %2562 = vmatmul.mubr.f32.gmra.mrb[0].mxu0 %v2391
        %v2563 = vpop.f32.mrb[0].mxu0
        %v2564 = vadd.f32 0.0, %v2563
        %v2565 = vpop.f32.mrb[0].mxu0
        %2566 = vmatprep.mubr.f32.mxu0 0.0
        %2567 = vmatmul.mubr.f32.gmra.mrb[0].mxu0 %v2394
        %v2568 = vpop.f32.mrb[0].mxu0
        %v2569 = vadd.f32 0.0, %v2568
        %v2570 = vpop.f32.mrb[0].mxu0
        %2571 = vmatprep.mubr.f32.mxu0 0.0
        %2572 = vmatmul.mubr.f32.gmra.mrb[0].mxu0 %v2397
        %v2573 = vpop.f32.mrb[0].mxu0
        %v2574 = vadd.f32 0.0, %v2573
        %v2575 = vpop.f32.mrb[0].mxu0
        %2576 = vmatprep.mubr.f32.mxu0 0.0
        %2577 = vmatmul.mubr.f32.gmra.mrb[0].mxu0 %v2400
        %v2578 = vpop.f32.mrb[0].mxu0
        %v2579 = vadd.f32 0.0, %v2578
        %v2580 = vpop.f32.mrb[0].mxu0
        %2581 = vmatprep.mubr.f32.mxu0 0.0
        %2582 = vmatmul.mubr.f32.gmra.mrb[0].mxu0 %v2403
        %v2583 = vpop.f32.mrb[0].mxu0
        %v2584 = vadd.f32 0.0, %v2583
        %v2585 = vpop.f32.mrb[0].mxu0
        %2586 = vmatprep.mubr.f32.mxu0 0.0
        %2587 = vmatmul.mubr.f32.gmra.mrb[0].mxu0 %v2406
        %v2588 = vpop.f32.mrb[0].mxu0
        %v2589 = vadd.f32 0.0, %v2588
        %v2590 = vpop.f32.mrb[0].mxu0
        %2591 = vmatprep.mubr.f32.mxu0 0.0
        %2592 = vmatmul.mubr.f32.gmra.mrb[0].mxu0 %v2409
        %v2593 = vpop.f32.mrb[0].mxu0
        %v2594 = vadd.f32 0.0, %v2593
        %v2595 = vpop.f32.mrb[0].mxu0
        %2596 = vmatprep.mubr.f32.mxu0 0.0
        %2597 = vmatmul.mubr.f32.gmra.mrb[0].mxu0 %v2412
        %v2598 = vpop.f32.mrb[0].mxu0
        %v2599 = vadd.f32 0.0, %v2598
        %v2600 = vpop.f32.mrb[0].mxu0
        %2601 = vmatprep.mubr.f32.mxu0 0.0
        %2602 = vmatmul.mubr.f32.gmra.mrb[0].mxu0 %v2415
        %v2603 = vpop.f32.mrb[0].mxu0
        %v2604 = vadd.f32 0.0, %v2603
        %v2605 = vpop.f32.mrb[0].mxu0
        %2606 = vmatprep.mubr.f32.mxu0 0.0
        %2607 = vmatmul.mubr.f32.gmra.mrb[0].mxu0 %v2418
        %v2608 = vpop.f32.mrb[0].mxu0
        %v2609 = vadd.f32 0.0, %v2608
        %v2610 = vpop.f32.mrb[0].mxu0
        %2611 = vmatprep.mubr.f32.mxu0 0.0
        %2612 = vmatmul.mubr.f32.gmra.mrb[0].mxu0 %v2421
        %v2613 = vpop.f32.mrb[0].mxu0
        %v2614 = vadd.f32 0.0, %v2613
        %v2615 = vpop.f32.mrb[0].mxu0
        %2616 = vmatprep.mubr.f32.mxu0 0.0
        %2617 = vmatmul.mubr.f32.gmra.mrb[0].mxu0 %v2424
        %v2618 = vpop.f32.mrb[0].mxu0
        %v2619 = vadd.f32 0.0, %v2618
        %v2620 = vpop.f32.mrb[0].mxu0
        %2621 = vmatprep.mubr.f32.mxu0 0.0
        %2622 = vmatmul.mubr.f32.gmra.mrb[0].mxu0 %v2427
        %v2623 = vpop.f32.mrb[0].mxu0
        %v2624 = vadd.f32 0.0, %v2623
        %v2625 = vpop.f32.mrb[0].mxu0
        %2626 = vmatprep.mubr.f32.mxu0 0.0
        %2627 = vmatmul.mubr.f32.gmra.mrb[0].mxu0 %v2430
        %v2628 = vpop.f32.mrb[0].mxu0
        %v2629 = vadd.f32 0.0, %v2628
        %v2630 = vpop.f32.mrb[0].mxu0
        %2631 = vmatprep.mubr.f32.mxu0 0.0
        %2632 = vmatmul.mubr.f32.gmra.mrb[0].mxu0 %v2433
        %v2633 = vpop.f32.mrb[0].mxu0
        %v2634 = vadd.f32 0.0, %v2633
        %v2635 = vpop.f32.mrb[0].mxu0
        %2636 = vmatprep.mubr.f32.mxu0 0.0
        %2637 = vmatmul.mubr.f32.gmra.mrb[0].mxu0 %v2436
        %v2638 = vpop.f32.mrb[0].mxu0
        %v2639 = vadd.f32 0.0, %v2638
        %v2640 = vpop.f32.mrb[0].mxu0
        %2641 = vmatprep.mubr.f32.mxu0 0.0
        %2642 = vmatmul.mubr.f32.gmra.mrb[0].mxu0 %v2439
        %v2643 = vpop.f32.mrb[0].mxu0
        %v2644 = vadd.f32 0.0, %v2643
        %v2645 = vpop.f32.mrb[0].mxu0
        %2646 = vmatprep.mubr.f32.mxu0 0.0
        %2647 = vmatmul.mubr.f32.gmra.mrb[0].mxu0 %v2442
        %v2648 = vpop.f32.mrb[0].mxu0
        %v2649 = vadd.f32 0.0, %v2648
        %v2650 = vpop.f32.mrb[0].mxu0
        %2651 = vmatprep.mubr.f32.mxu0 0.0
        %2652 = vmatmul.mubr.f32.gmra.mrb[0].mxu0 %v2445
        %v2653 = vpop.f32.mrb[0].mxu0
        %v2654 = vadd.f32 0.0, %v2653
        %v2655 = vpop.f32.mrb[0].mxu0
        %2656 = vmatprep.mubr.f32.mxu0 0.0
        %2657 = vmatmul.mubr.f32.gmra.mrb[0].mxu0 %v2448
        %v2658 = vpop.f32.mrb[0].mxu0
        %v2659 = vadd.f32 0.0, %v2658
        %v2660 = vpop.f32.mrb[0].mxu0
        %2661 = vmatprep.mubr.f32.mxu0 0.0
        %2662 = vmatmul.mubr.f32.gmra.mrb[0].mxu0 %v2451
        %v2663 = vpop.f32.mrb[0].mxu0
        %v2664 = vadd.f32 0.0, %v2663
        %v2665 = vpop.f32.mrb[0].mxu0
        %2666 = vmatprep.mubr.f32.mxu0 0.0
        %2667 = vmatmul.mubr.f32.gmra.mrb[0].mxu0 %v2454
        %v2668 = vpop.f32.mrb[0].mxu0
        %v2669 = vadd.f32 0.0, %v2668
        %v2670 = vpop.f32.mrb[0].mxu0
        %2671 = vmatprep.mubr.f32.mxu0 0.0
        %2672 = vmatmul.mubr.f32.gmra.mrb[0].mxu0 %v2457
        %v2673 = vpop.f32.mrb[0].mxu0
        %v2674 = vadd.f32 0.0, %v2673
        %v2675 = vpop.f32.mrb[0].mxu0
        %2676 = vmatprep.mubr.f32.mxu0 0.0
        %2677 = vmatmul.mubr.f32.gmra.mrb[0].mxu0 %v2460
        %v2678 = vpop.f32.mrb[0].mxu0
        %v2679 = vadd.f32 0.0, %v2678
        %v2680 = vpop.f32.mrb[0].mxu0
        %2681 = vmatprep.mubr.f32.mxu0 0.0
        %2682 = vmatmul.mubr.f32.gmra.mrb[0].mxu0 %v2463
        %v2683 = vpop.f32.mrb[0].mxu0
        %v2684 = vadd.f32 0.0, %v2683
        %v2685 = vpop.f32.mrb[0].mxu0
        %2686 = vmatprep.mubr.f32.mxu0 0.0
        %2687 = vmatmul.mubr.f32.gmra.mrb[0].mxu0 %v2466
        %v2688 = vpop.f32.mrb[0].mxu0
        %v2689 = vadd.f32 0.0, %v2688
        %v2690 = vpop.f32.mrb[0].mxu0
        %2691 = vmatprep.mubr.f32.mxu0 0.0
        %2692 = vmatmul.mubr.f32.gmra.mrb[0].mxu0 %v2469
        %v2693 = vpop.f32.mrb[0].mxu0
        %v2694 = vadd.f32 0.0, %v2693
        %v2695 = vpop.f32.mrb[0].mxu0
        %2696 = vmatprep.mubr.f32.mxu0 0.0
        %2697 = vmatmul.mubr.f32.gmra.mrb[0].mxu0 %v2472
        %v2698 = vpop.f32.mrb[0].mxu0
        %v2699 = vadd.f32 0.0, %v2698
        %v2700 = vpop.f32.mrb[0].mxu0
        %2701 = vdwg.mxu0
        %v2702 = vadd.f32 %v2312, %v2544
        %v2703 = vadd.f32 %v2313, %v2549
        %v2704 = vadd.f32 %v2314, %v2554
        %v2705 = vadd.f32 %v2315, %v2559
        %v2706 = vadd.f32 %v2316, %v2564
        %v2707 = vadd.f32 %v2317, %v2569
        %v2708 = vadd.f32 %v2318, %v2574
        %v2709 = vadd.f32 %v2319, %v2579
        %v2710 = vadd.f32 %v2320, %v2584
        %v2711 = vadd.f32 %v2321, %v2589
        %v2712 = vadd.f32 %v2322, %v2594
        %v2713 = vadd.f32 %v2323, %v2599
        %v2714 = vadd.f32 %v2324, %v2604
        %v2715 = vadd.f32 %v2325, %v2609
        %v2716 = vadd.f32 %v2326, %v2614
        %v2717 = vadd.f32 %v2327, %v2619
        %v2718 = vadd.f32 %v2328, %v2624
        %v2719 = vadd.f32 %v2329, %v2629
        %v2720 = vadd.f32 %v2330, %v2634
        %v2721 = vadd.f32 %v2331, %v2639
        %v2722 = vadd.f32 %v2332, %v2644
        %v2723 = vadd.f32 %v2333, %v2649
        %v2724 = vadd.f32 %v2334, %v2654
        %v2725 = vadd.f32 %v2335, %v2659
        %v2726 = vadd.f32 %v2336, %v2664
        %v2727 = vadd.f32 %v2337, %v2669
        %v2728 = vadd.f32 %v2338, %v2674
        %v2729 = vadd.f32 %v2339, %v2679
        %v2730 = vadd.f32 %v2340, %v2684
        %v2731 = vadd.f32 %v2341, %v2689
        %v2732 = vadd.f32 %v2342, %v2694
        %v2733 = vadd.f32 %v2343, %v2699
        %s2734 = scalar_lea.vmem [#allocation2], 48
        %v2735 = vld [vmem:[%s2734] sm:$0xff]
        %v2736 = vld [vmem:[%s2734 + $0x8] sm:$0xff]
        %v2737 = vld [vmem:[%s2734 + $0x18] sm:$0xff]
        %v2738 = vld [vmem:[%s2734 + $0x20] sm:$0xff]
        %v2739 = vld [vmem:[%s2734 + $0x30] sm:$0xff]
        %v2740 = vld [vmem:[%s2734 + $0x38] sm:$0xff]
        %v2741 = vld [vmem:[%s2734 + $0x48] sm:$0xff]
        %v2742 = vld [vmem:[%s2734 + $0x50] sm:$0xff]
        %v2743 = vld [vmem:[%s2734 + $0x60] sm:$0xff]
        %v2744 = vld [vmem:[%s2734 + $0x68] sm:$0xff]
        %v2745 = vld [vmem:[%s2734 + $0x78] sm:$0xff]
        %v2746 = vld [vmem:[%s2734 + $0x80] sm:$0xff]
        %v2747 = vld [vmem:[%s2734 + $0x90] sm:$0xff]
        %v2748 = vld [vmem:[%s2734 + $0x98] sm:$0xff]
        %v2749 = vld [vmem:[%s2734 + $0xa8] sm:$0xff]
        %v2750 = vld [vmem:[%s2734 + $0xb0] sm:$0xff]
        %v2751 = vld [vmem:[%s2734 + $0xc0] sm:$0xff]
        %v2752 = vld [vmem:[%s2734 + $0xc8] sm:$0xff]
        %v2753 = vld [vmem:[%s2734 + $0xd8] sm:$0xff]
        %v2754 = vld [vmem:[%s2734 + $0xe0] sm:$0xff]
        %v2755 = vld [vmem:[%s2734 + $0xf0] sm:$0xff]
        %v2756 = vld [vmem:[%s2734 + $0xf8] sm:$0xff]
        %v2757 = vld [vmem:[%s2734 + $0x108] sm:$0xff]
        %v2758 = vld [vmem:[%s2734 + $0x110] sm:$0xff]
        %v2759 = vld [vmem:[%s2734 + $0x120] sm:$0xff]
        %v2760 = vld [vmem:[%s2734 + $0x128] sm:$0xff]
        %v2761 = vld [vmem:[%s2734 + $0x138] sm:$0xff]
        %v2762 = vld [vmem:[%s2734 + $0x140] sm:$0xff]
        %v2763 = vld [vmem:[%s2734 + $0x150] sm:$0xff]
        %v2764 = vld [vmem:[%s2734 + $0x158] sm:$0xff]
        %v2765 = vld [vmem:[%s2734 + $0x168] sm:$0xff]
        %v2766 = vld [vmem:[%s2734 + $0x170] sm:$0xff]
        %s2767 = scalar_lea.vmem [#allocation9], 24
        %v2768 = vld [vmem:[%s2767] sm:$0xf]
        %v2770 = vsel %vm312, %v2735, 0
        %v2773 = vsel %vm312, %v2736, 0
        %v2776 = vsel %vm312, %v2737, 0
        %v2779 = vsel %vm312, %v2738, 0
        %v2782 = vsel %vm312, %v2739, 0
        %v2785 = vsel %vm312, %v2740, 0
        %v2788 = vsel %vm312, %v2741, 0
        %v2791 = vsel %vm312, %v2742, 0
        %v2794 = vsel %vm312, %v2743, 0
        %v2797 = vsel %vm312, %v2744, 0
        %v2800 = vsel %vm312, %v2745, 0
        %v2803 = vsel %vm312, %v2746, 0
        %v2806 = vsel %vm312, %v2747, 0
        %v2809 = vsel %vm312, %v2748, 0
        %v2812 = vsel %vm312, %v2749, 0
        %v2815 = vsel %vm312, %v2750, 0
        %v2818 = vsel %vm312, %v2751, 0
        %v2821 = vsel %vm312, %v2752, 0
        %v2824 = vsel %vm312, %v2753, 0
        %v2827 = vsel %vm312, %v2754, 0
        %v2830 = vsel %vm312, %v2755, 0
        %v2833 = vsel %vm312, %v2756, 0
        %v2836 = vsel %vm312, %v2757, 0
        %v2839 = vsel %vm312, %v2758, 0
        %v2842 = vsel %vm312, %v2759, 0
        %v2845 = vsel %vm312, %v2760, 0
        %v2848 = vsel %vm312, %v2761, 0
        %v2851 = vsel %vm312, %v2762, 0
        %v2854 = vsel %vm312, %v2763, 0
        %v2857 = vsel %vm312, %v2764, 0
        %v2860 = vsel %vm312, %v2765, 0
        %v2863 = vsel %vm312, %v2766, 0
        %v2866 = vsel %vm621, %v2768, 0
        %2868 = vmatprep.subr.mxu0 0.0
        %2869 = vmatpush1.msra.mxu0 %v2866
        %2870 = vmatprep.subr.mxu0 0.0
        %2871 = vmatpush1.msra.mxu0 0.0
        %2872 = vmatprep.subr.mxu0 0.0
        %2873 = vmatpush1.msra.mxu0 0.0
        %2874 = vmatprep.subr.mxu0 0.0
        %2875 = vmatpush1.msra.mxu0 0.0
        %2876 = vmatprep.subr.mxu0 0.0
        %2877 = vmatpush1.msra.mxu0 0.0
        %2878 = vmatprep.subr.mxu0 0.0
        %2879 = vmatpush1.msra.mxu0 0.0
        %2880 = vmatprep.subr.mxu0 0.0
        %2881 = vmatpush1.msra.mxu0 0.0
        %2882 = vmatprep.subr.mxu0 0.0
        %2883 = vmatpush1.msra.mxu0 0.0
        %2884 = vmatprep.subr.mxu0 0.0
        %2885 = vmatpush1.msra.mxu0 0.0
        %2886 = vmatprep.subr.mxu0 0.0
        %2887 = vmatpush1.msra.mxu0 0.0
        %2888 = vmatprep.subr.mxu0 0.0
        %2889 = vmatpush1.msra.mxu0 0.0
        %2890 = vmatprep.subr.mxu0 0.0
        %2891 = vmatpush1.msra.mxu0 0.0
        %2892 = vmatprep.subr.mxu0 0.0
        %2893 = vmatpush1.msra.mxu0 0.0
        %2894 = vmatprep.subr.mxu0 0.0
        %2895 = vmatpush1.msra.mxu0 0.0
        %2896 = vmatprep.subr.mxu0 0.0
        %2897 = vmatpush1.msra.mxu0 0.0
        %2898 = vmatprep.subr.mxu0 0.0
        %2899 = vmatpush1.msra.mxu0 0.0
        %2900 = vmatprep.subr.mxu0 0.0
        %2901 = vmatpush1.msra.mxu0 0.0
        %2902 = vmatprep.subr.mxu0 0.0
        %2903 = vmatpush1.msra.mxu0 0.0
        %2904 = vmatprep.subr.mxu0 0.0
        %2905 = vmatpush1.msra.mxu0 0.0
        %2906 = vmatprep.subr.mxu0 0.0
        %2907 = vmatpush1.msra.mxu0 0.0
        %2908 = vmatprep.subr.mxu0 0.0
        %2909 = vmatpush1.msra.mxu0 0.0
        %2910 = vmatprep.subr.mxu0 0.0
        %2911 = vmatpush1.msra.mxu0 0.0
        %2912 = vmatprep.subr.mxu0 0.0
        %2913 = vmatpush1.msra.mxu0 0.0
        %2914 = vmatprep.subr.mxu0 0.0
        %2915 = vmatpush1.msra.mxu0 0.0
        %2916 = vmatprep.subr.mxu0 0.0
        %2917 = vmatpush1.msra.mxu0 0.0
        %2918 = vmatprep.subr.mxu0 0.0
        %2919 = vmatpush1.msra.mxu0 0.0
        %2920 = vmatprep.subr.mxu0 0.0
        %2921 = vmatpush1.msra.mxu0 0.0
        %2922 = vmatprep.subr.mxu0 0.0
        %2923 = vmatpush1.msra.mxu0 0.0
        %2924 = vmatprep.subr.mxu0 0.0
        %2925 = vmatpush1.msra.mxu0 0.0
        %2926 = vmatprep.subr.mxu0 0.0
        %2927 = vmatpush1.msra.mxu0 0.0
        %2928 = vmatprep.subr.mxu0 0.0
        %2929 = vmatpush1.msra.mxu0 0.0
        %2930 = vmatprep.subr.mxu0 0.0
        %2931 = vmatpush1.msra.mxu0 0.0
        %2932 = vmatprep.mubr.f32.mxu0 0.0
        %2933 = vmatmul.mubr.f32.gmra.mrb[0].mxu0 %v2770
        %v2934 = vpop.f32.mrb[0].mxu0
        %v2935 = vadd.f32 0.0, %v2934
        %v2936 = vpop.f32.mrb[0].mxu0
        %2937 = vmatprep.mubr.f32.mxu0 0.0
        %2938 = vmatmul.mubr.f32.gmra.mrb[0].mxu0 %v2773
        %v2939 = vpop.f32.mrb[0].mxu0
        %v2940 = vadd.f32 0.0, %v2939
        %v2941 = vpop.f32.mrb[0].mxu0
        %2942 = vmatprep.mubr.f32.mxu0 0.0
        %2943 = vmatmul.mubr.f32.gmra.mrb[0].mxu0 %v2776
        %v2944 = vpop.f32.mrb[0].mxu0
        %v2945 = vadd.f32 0.0, %v2944
        %v2946 = vpop.f32.mrb[0].mxu0
        %2947 = vmatprep.mubr.f32.mxu0 0.0
        %2948 = vmatmul.mubr.f32.gmra.mrb[0].mxu0 %v2779
        %v2949 = vpop.f32.mrb[0].mxu0
        %v2950 = vadd.f32 0.0, %v2949
        %v2951 = vpop.f32.mrb[0].mxu0
        %2952 = vmatprep.mubr.f32.mxu0 0.0
        %2953 = vmatmul.mubr.f32.gmra.mrb[0].mxu0 %v2782
        %v2954 = vpop.f32.mrb[0].mxu0
        %v2955 = vadd.f32 0.0, %v2954
        %v2956 = vpop.f32.mrb[0].mxu0
        %2957 = vmatprep.mubr.f32.mxu0 0.0
        %2958 = vmatmul.mubr.f32.gmra.mrb[0].mxu0 %v2785
        %v2959 = vpop.f32.mrb[0].mxu0
        %v2960 = vadd.f32 0.0, %v2959
        %v2961 = vpop.f32.mrb[0].mxu0
        %2962 = vmatprep.mubr.f32.mxu0 0.0
        %2963 = vmatmul.mubr.f32.gmra.mrb[0].mxu0 %v2788
        %v2964 = vpop.f32.mrb[0].mxu0
        %v2965 = vadd.f32 0.0, %v2964
        %v2966 = vpop.f32.mrb[0].mxu0
        %2967 = vmatprep.mubr.f32.mxu0 0.0
        %2968 = vmatmul.mubr.f32.gmra.mrb[0].mxu0 %v2791
        %v2969 = vpop.f32.mrb[0].mxu0
        %v2970 = vadd.f32 0.0, %v2969
        %v2971 = vpop.f32.mrb[0].mxu0
        %2972 = vmatprep.mubr.f32.mxu0 0.0
        %2973 = vmatmul.mubr.f32.gmra.mrb[0].mxu0 %v2794
        %v2974 = vpop.f32.mrb[0].mxu0
        %v2975 = vadd.f32 0.0, %v2974
        %v2976 = vpop.f32.mrb[0].mxu0
        %2977 = vmatprep.mubr.f32.mxu0 0.0
        %2978 = vmatmul.mubr.f32.gmra.mrb[0].mxu0 %v2797
        %v2979 = vpop.f32.mrb[0].mxu0
        %v2980 = vadd.f32 0.0, %v2979
        %v2981 = vpop.f32.mrb[0].mxu0
        %2982 = vmatprep.mubr.f32.mxu0 0.0
        %2983 = vmatmul.mubr.f32.gmra.mrb[0].mxu0 %v2800
        %v2984 = vpop.f32.mrb[0].mxu0
        %v2985 = vadd.f32 0.0, %v2984
        %v2986 = vpop.f32.mrb[0].mxu0
        %2987 = vmatprep.mubr.f32.mxu0 0.0
        %2988 = vmatmul.mubr.f32.gmra.mrb[0].mxu0 %v2803
        %v2989 = vpop.f32.mrb[0].mxu0
        %v2990 = vadd.f32 0.0, %v2989
        %v2991 = vpop.f32.mrb[0].mxu0
        %2992 = vmatprep.mubr.f32.mxu0 0.0
        %2993 = vmatmul.mubr.f32.gmra.mrb[0].mxu0 %v2806
        %v2994 = vpop.f32.mrb[0].mxu0
        %v2995 = vadd.f32 0.0, %v2994
        %v2996 = vpop.f32.mrb[0].mxu0
        %2997 = vmatprep.mubr.f32.mxu0 0.0
        %2998 = vmatmul.mubr.f32.gmra.mrb[0].mxu0 %v2809
        %v2999 = vpop.f32.mrb[0].mxu0
        %v3000 = vadd.f32 0.0, %v2999
        %v3001 = vpop.f32.mrb[0].mxu0
        %3002 = vmatprep.mubr.f32.mxu0 0.0
        %3003 = vmatmul.mubr.f32.gmra.mrb[0].mxu0 %v2812
        %v3004 = vpop.f32.mrb[0].mxu0
        %v3005 = vadd.f32 0.0, %v3004
        %v3006 = vpop.f32.mrb[0].mxu0
        %3007 = vmatprep.mubr.f32.mxu0 0.0
        %3008 = vmatmul.mubr.f32.gmra.mrb[0].mxu0 %v2815
        %v3009 = vpop.f32.mrb[0].mxu0
        %v3010 = vadd.f32 0.0, %v3009
        %v3011 = vpop.f32.mrb[0].mxu0
        %3012 = vmatprep.mubr.f32.mxu0 0.0
        %3013 = vmatmul.mubr.f32.gmra.mrb[0].mxu0 %v2818
        %v3014 = vpop.f32.mrb[0].mxu0
        %v3015 = vadd.f32 0.0, %v3014
        %v3016 = vpop.f32.mrb[0].mxu0
        %3017 = vmatprep.mubr.f32.mxu0 0.0
        %3018 = vmatmul.mubr.f32.gmra.mrb[0].mxu0 %v2821
        %v3019 = vpop.f32.mrb[0].mxu0
        %v3020 = vadd.f32 0.0, %v3019
        %v3021 = vpop.f32.mrb[0].mxu0
        %3022 = vmatprep.mubr.f32.mxu0 0.0
        %3023 = vmatmul.mubr.f32.gmra.mrb[0].mxu0 %v2824
        %v3024 = vpop.f32.mrb[0].mxu0
        %v3025 = vadd.f32 0.0, %v3024
        %v3026 = vpop.f32.mrb[0].mxu0
        %3027 = vmatprep.mubr.f32.mxu0 0.0
        %3028 = vmatmul.mubr.f32.gmra.mrb[0].mxu0 %v2827
        %v3029 = vpop.f32.mrb[0].mxu0
        %v3030 = vadd.f32 0.0, %v3029
        %v3031 = vpop.f32.mrb[0].mxu0
        %3032 = vmatprep.mubr.f32.mxu0 0.0
        %3033 = vmatmul.mubr.f32.gmra.mrb[0].mxu0 %v2830
        %v3034 = vpop.f32.mrb[0].mxu0
        %v3035 = vadd.f32 0.0, %v3034
        %v3036 = vpop.f32.mrb[0].mxu0
        %3037 = vmatprep.mubr.f32.mxu0 0.0
        %3038 = vmatmul.mubr.f32.gmra.mrb[0].mxu0 %v2833
        %v3039 = vpop.f32.mrb[0].mxu0
        %v3040 = vadd.f32 0.0, %v3039
        %v3041 = vpop.f32.mrb[0].mxu0
        %3042 = vmatprep.mubr.f32.mxu0 0.0
        %3043 = vmatmul.mubr.f32.gmra.mrb[0].mxu0 %v2836
        %v3044 = vpop.f32.mrb[0].mxu0
        %v3045 = vadd.f32 0.0, %v3044
        %v3046 = vpop.f32.mrb[0].mxu0
        %3047 = vmatprep.mubr.f32.mxu0 0.0
        %3048 = vmatmul.mubr.f32.gmra.mrb[0].mxu0 %v2839
        %v3049 = vpop.f32.mrb[0].mxu0
        %v3050 = vadd.f32 0.0, %v3049
        %v3051 = vpop.f32.mrb[0].mxu0
        %3052 = vmatprep.mubr.f32.mxu0 0.0
        %3053 = vmatmul.mubr.f32.gmra.mrb[0].mxu0 %v2842
        %v3054 = vpop.f32.mrb[0].mxu0
        %v3055 = vadd.f32 0.0, %v3054
        %v3056 = vpop.f32.mrb[0].mxu0
        %3057 = vmatprep.mubr.f32.mxu0 0.0
        %3058 = vmatmul.mubr.f32.gmra.mrb[0].mxu0 %v2845
        %v3059 = vpop.f32.mrb[0].mxu0
        %v3060 = vadd.f32 0.0, %v3059
        %v3061 = vpop.f32.mrb[0].mxu0
        %3062 = vmatprep.mubr.f32.mxu0 0.0
        %3063 = vmatmul.mubr.f32.gmra.mrb[0].mxu0 %v2848
        %v3064 = vpop.f32.mrb[0].mxu0
        %v3065 = vadd.f32 0.0, %v3064
        %v3066 = vpop.f32.mrb[0].mxu0
        %3067 = vmatprep.mubr.f32.mxu0 0.0
        %3068 = vmatmul.mubr.f32.gmra.mrb[0].mxu0 %v2851
        %v3069 = vpop.f32.mrb[0].mxu0
        %v3070 = vadd.f32 0.0, %v3069
        %v3071 = vpop.f32.mrb[0].mxu0
        %3072 = vmatprep.mubr.f32.mxu0 0.0
        %3073 = vmatmul.mubr.f32.gmra.mrb[0].mxu0 %v2854
        %v3074 = vpop.f32.mrb[0].mxu0
        %v3075 = vadd.f32 0.0, %v3074
        %v3076 = vpop.f32.mrb[0].mxu0
        %3077 = vmatprep.mubr.f32.mxu0 0.0
        %3078 = vmatmul.mubr.f32.gmra.mrb[0].mxu0 %v2857
        %v3079 = vpop.f32.mrb[0].mxu0
        %v3080 = vadd.f32 0.0, %v3079
        %v3081 = vpop.f32.mrb[0].mxu0
        %3082 = vmatprep.mubr.f32.mxu0 0.0
        %3083 = vmatmul.mubr.f32.gmra.mrb[0].mxu0 %v2860
        %v3084 = vpop.f32.mrb[0].mxu0
        %v3085 = vadd.f32 0.0, %v3084
        %v3086 = vpop.f32.mrb[0].mxu0
        %3087 = vmatprep.mubr.f32.mxu0 0.0
        %3088 = vmatmul.mubr.f32.gmra.mrb[0].mxu0 %v2863
        %v3089 = vpop.f32.mrb[0].mxu0
        %v3090 = vadd.f32 0.0, %v3089
        %v3091 = vpop.f32.mrb[0].mxu0
        %3092 = vdwg.mxu0
        %v3093 = vadd.f32 %v2702, %v2935
        %v3094 = vadd.f32 %v2703, %v2940
        %v3095 = vadd.f32 %v2704, %v2945
        %v3096 = vadd.f32 %v2705, %v2950
        %v3097 = vadd.f32 %v2706, %v2955
        %v3098 = vadd.f32 %v2707, %v2960
        %v3099 = vadd.f32 %v2708, %v2965
        %v3100 = vadd.f32 %v2709, %v2970
        %v3101 = vadd.f32 %v2710, %v2975
        %v3102 = vadd.f32 %v2711, %v2980
        %v3103 = vadd.f32 %v2712, %v2985
        %v3104 = vadd.f32 %v2713, %v2990
        %v3105 = vadd.f32 %v2714, %v2995
        %v3106 = vadd.f32 %v2715, %v3000
        %v3107 = vadd.f32 %v2716, %v3005
        %v3108 = vadd.f32 %v2717, %v3010
        %v3109 = vadd.f32 %v2718, %v3015
        %v3110 = vadd.f32 %v2719, %v3020
        %v3111 = vadd.f32 %v2720, %v3025
        %v3112 = vadd.f32 %v2721, %v3030
        %v3113 = vadd.f32 %v2722, %v3035
        %v3114 = vadd.f32 %v2723, %v3040
        %v3115 = vadd.f32 %v2724, %v3045
        %v3116 = vadd.f32 %v2725, %v3050
        %v3117 = vadd.f32 %v2726, %v3055
        %v3118 = vadd.f32 %v2727, %v3060
        %v3119 = vadd.f32 %v2728, %v3065
        %v3120 = vadd.f32 %v2729, %v3070
        %v3121 = vadd.f32 %v2730, %v3075
        %v3122 = vadd.f32 %v2731, %v3080
        %v3123 = vadd.f32 %v2732, %v3085
        %v3124 = vadd.f32 %v2733, %v3090
        %v3125 = vld [vmem:[%s2734 + $0x1] sm:$0xff]
        %v3126 = vld [vmem:[%s2734 + $0x9] sm:$0xff]
        %v3127 = vld [vmem:[%s2734 + $0x19] sm:$0xff]
        %v3128 = vld [vmem:[%s2734 + $0x21] sm:$0xff]
        %v3129 = vld [vmem:[%s2734 + $0x31] sm:$0xff]
        %v3130 = vld [vmem:[%s2734 + $0x39] sm:$0xff]
        %v3131 = vld [vmem:[%s2734 + $0x49] sm:$0xff]
        %v3132 = vld [vmem:[%s2734 + $0x51] sm:$0xff]
        %v3133 = vld [vmem:[%s2734 + $0x61] sm:$0xff]
        %v3134 = vld [vmem:[%s2734 + $0x69] sm:$0xff]
        %v3135 = vld [vmem:[%s2734 + $0x79] sm:$0xff]
        %v3136 = vld [vmem:[%s2734 + $0x81] sm:$0xff]
        %v3137 = vld [vmem:[%s2734 + $0x91] sm:$0xff]
        %v3138 = vld [vmem:[%s2734 + $0x99] sm:$0xff]
        %v3139 = vld [vmem:[%s2734 + $0xa9] sm:$0xff]
        %v3140 = vld [vmem:[%s2734 + $0xb1] sm:$0xff]
        %v3141 = vld [vmem:[%s2734 + $0xc1] sm:$0xff]
        %v3142 = vld [vmem:[%s2734 + $0xc9] sm:$0xff]
        %v3143 = vld [vmem:[%s2734 + $0xd9] sm:$0xff]
        %v3144 = vld [vmem:[%s2734 + $0xe1] sm:$0xff]
        %v3145 = vld [vmem:[%s2734 + $0xf1] sm:$0xff]
        %v3146 = vld [vmem:[%s2734 + $0xf9] sm:$0xff]
        %v3147 = vld [vmem:[%s2734 + $0x109] sm:$0xff]
        %v3148 = vld [vmem:[%s2734 + $0x111] sm:$0xff]
        %v3149 = vld [vmem:[%s2734 + $0x121] sm:$0xff]
        %v3150 = vld [vmem:[%s2734 + $0x129] sm:$0xff]
        %v3151 = vld [vmem:[%s2734 + $0x139] sm:$0xff]
        %v3152 = vld [vmem:[%s2734 + $0x141] sm:$0xff]
        %v3153 = vld [vmem:[%s2734 + $0x151] sm:$0xff]
        %v3154 = vld [vmem:[%s2734 + $0x159] sm:$0xff]
        %v3155 = vld [vmem:[%s2734 + $0x169] sm:$0xff]
        %v3156 = vld [vmem:[%s2734 + $0x171] sm:$0xff]
        %s3157 = scalar_lea.vmem [#allocation9], 28
        %v3158 = vld [vmem:[%s3157] sm:$0xf]
        %v3160 = vsel %vm312, %v3125, 0
        %v3163 = vsel %vm312, %v3126, 0
        %v3166 = vsel %vm312, %v3127, 0
        %v3169 = vsel %vm312, %v3128, 0
        %v3172 = vsel %vm312, %v3129, 0
        %v3175 = vsel %vm312, %v3130, 0
        %v3178 = vsel %vm312, %v3131, 0
        %v3181 = vsel %vm312, %v3132, 0
        %v3184 = vsel %vm312, %v3133, 0
        %v3187 = vsel %vm312, %v3134, 0
        %v3190 = vsel %vm312, %v3135, 0
        %v3193 = vsel %vm312, %v3136, 0
        %v3196 = vsel %vm312, %v3137, 0
        %v3199 = vsel %vm312, %v3138, 0
        %v3202 = vsel %vm312, %v3139, 0
        %v3205 = vsel %vm312, %v3140, 0
        %v3208 = vsel %vm312, %v3141, 0
        %v3211 = vsel %vm312, %v3142, 0
        %v3214 = vsel %vm312, %v3143, 0
        %v3217 = vsel %vm312, %v3144, 0
        %v3220 = vsel %vm312, %v3145, 0
        %v3223 = vsel %vm312, %v3146, 0
        %v3226 = vsel %vm312, %v3147, 0
        %v3229 = vsel %vm312, %v3148, 0
        %v3232 = vsel %vm312, %v3149, 0
        %v3235 = vsel %vm312, %v3150, 0
        %v3238 = vsel %vm312, %v3151, 0
        %v3241 = vsel %vm312, %v3152, 0
        %v3244 = vsel %vm312, %v3153, 0
        %v3247 = vsel %vm312, %v3154, 0
        %v3250 = vsel %vm312, %v3155, 0
        %v3253 = vsel %vm312, %v3156, 0
        %v3256 = vsel %vm621, %v3158, 0
        %3258 = vmatprep.subr.mxu0 0.0
        %3259 = vmatpush1.msra.mxu0 %v3256
        %3260 = vmatprep.subr.mxu0 0.0
        %3261 = vmatpush1.msra.mxu0 0.0
        %3262 = vmatprep.subr.mxu0 0.0
        %3263 = vmatpush1.msra.mxu0 0.0
        %3264 = vmatprep.subr.mxu0 0.0
        %3265 = vmatpush1.msra.mxu0 0.0
        %3266 = vmatprep.subr.mxu0 0.0
        %3267 = vmatpush1.msra.mxu0 0.0
        %3268 = vmatprep.subr.mxu0 0.0
        %3269 = vmatpush1.msra.mxu0 0.0
        %3270 = vmatprep.subr.mxu0 0.0
        %3271 = vmatpush1.msra.mxu0 0.0
        %3272 = vmatprep.subr.mxu0 0.0
        %3273 = vmatpush1.msra.mxu0 0.0
        %3274 = vmatprep.subr.mxu0 0.0
        %3275 = vmatpush1.msra.mxu0 0.0
        %3276 = vmatprep.subr.mxu0 0.0
        %3277 = vmatpush1.msra.mxu0 0.0
        %3278 = vmatprep.subr.mxu0 0.0
        %3279 = vmatpush1.msra.mxu0 0.0
        %3280 = vmatprep.subr.mxu0 0.0
        %3281 = vmatpush1.msra.mxu0 0.0
        %3282 = vmatprep.subr.mxu0 0.0
        %3283 = vmatpush1.msra.mxu0 0.0
        %3284 = vmatprep.subr.mxu0 0.0
        %3285 = vmatpush1.msra.mxu0 0.0
        %3286 = vmatprep.subr.mxu0 0.0
        %3287 = vmatpush1.msra.mxu0 0.0
        %3288 = vmatprep.subr.mxu0 0.0
        %3289 = vmatpush1.msra.mxu0 0.0
        %3290 = vmatprep.subr.mxu0 0.0
        %3291 = vmatpush1.msra.mxu0 0.0
        %3292 = vmatprep.subr.mxu0 0.0
        %3293 = vmatpush1.msra.mxu0 0.0
        %3294 = vmatprep.subr.mxu0 0.0
        %3295 = vmatpush1.msra.mxu0 0.0
        %3296 = vmatprep.subr.mxu0 0.0
        %3297 = vmatpush1.msra.mxu0 0.0
        %3298 = vmatprep.subr.mxu0 0.0
        %3299 = vmatpush1.msra.mxu0 0.0
        %3300 = vmatprep.subr.mxu0 0.0
        %3301 = vmatpush1.msra.mxu0 0.0
        %3302 = vmatprep.subr.mxu0 0.0
        %3303 = vmatpush1.msra.mxu0 0.0
        %3304 = vmatprep.subr.mxu0 0.0
        %3305 = vmatpush1.msra.mxu0 0.0
        %3306 = vmatprep.subr.mxu0 0.0
        %3307 = vmatpush1.msra.mxu0 0.0
        %3308 = vmatprep.subr.mxu0 0.0
        %3309 = vmatpush1.msra.mxu0 0.0
        %3310 = vmatprep.subr.mxu0 0.0
        %3311 = vmatpush1.msra.mxu0 0.0
        %3312 = vmatprep.subr.mxu0 0.0
        %3313 = vmatpush1.msra.mxu0 0.0
        %3314 = vmatprep.subr.mxu0 0.0
        %3315 = vmatpush1.msra.mxu0 0.0
        %3316 = vmatprep.subr.mxu0 0.0
        %3317 = vmatpush1.msra.mxu0 0.0
        %3318 = vmatprep.subr.mxu0 0.0
        %3319 = vmatpush1.msra.mxu0 0.0
        %3320 = vmatprep.subr.mxu0 0.0
        %3321 = vmatpush1.msra.mxu0 0.0
        %3322 = vmatprep.mubr.f32.mxu0 0.0
        %3323 = vmatmul.mubr.f32.gmra.mrb[0].mxu0 %v3160
        %v3324 = vpop.f32.mrb[0].mxu0
        %v3325 = vadd.f32 0.0, %v3324
        %v3326 = vpop.f32.mrb[0].mxu0
        %3327 = vmatprep.mubr.f32.mxu0 0.0
        %3328 = vmatmul.mubr.f32.gmra.mrb[0].mxu0 %v3163
        %v3329 = vpop.f32.mrb[0].mxu0
        %v3330 = vadd.f32 0.0, %v3329
        %v3331 = vpop.f32.mrb[0].mxu0
        %3332 = vmatprep.mubr.f32.mxu0 0.0
        %3333 = vmatmul.mubr.f32.gmra.mrb[0].mxu0 %v3166
        %v3334 = vpop.f32.mrb[0].mxu0
        %v3335 = vadd.f32 0.0, %v3334
        %v3336 = vpop.f32.mrb[0].mxu0
        %3337 = vmatprep.mubr.f32.mxu0 0.0
        %3338 = vmatmul.mubr.f32.gmra.mrb[0].mxu0 %v3169
        %v3339 = vpop.f32.mrb[0].mxu0
        %v3340 = vadd.f32 0.0, %v3339
        %v3341 = vpop.f32.mrb[0].mxu0
        %3342 = vmatprep.mubr.f32.mxu0 0.0
        %3343 = vmatmul.mubr.f32.gmra.mrb[0].mxu0 %v3172
        %v3344 = vpop.f32.mrb[0].mxu0
        %v3345 = vadd.f32 0.0, %v3344
        %v3346 = vpop.f32.mrb[0].mxu0
        %3347 = vmatprep.mubr.f32.mxu0 0.0
        %3348 = vmatmul.mubr.f32.gmra.mrb[0].mxu0 %v3175
        %v3349 = vpop.f32.mrb[0].mxu0
        %v3350 = vadd.f32 0.0, %v3349
        %v3351 = vpop.f32.mrb[0].mxu0
        %3352 = vmatprep.mubr.f32.mxu0 0.0
        %3353 = vmatmul.mubr.f32.gmra.mrb[0].mxu0 %v3178
        %v3354 = vpop.f32.mrb[0].mxu0
        %v3355 = vadd.f32 0.0, %v3354
        %v3356 = vpop.f32.mrb[0].mxu0
        %3357 = vmatprep.mubr.f32.mxu0 0.0
        %3358 = vmatmul.mubr.f32.gmra.mrb[0].mxu0 %v3181
        %v3359 = vpop.f32.mrb[0].mxu0
        %v3360 = vadd.f32 0.0, %v3359
        %v3361 = vpop.f32.mrb[0].mxu0
        %3362 = vmatprep.mubr.f32.mxu0 0.0
        %3363 = vmatmul.mubr.f32.gmra.mrb[0].mxu0 %v3184
        %v3364 = vpop.f32.mrb[0].mxu0
        %v3365 = vadd.f32 0.0, %v3364
        %v3366 = vpop.f32.mrb[0].mxu0
        %3367 = vmatprep.mubr.f32.mxu0 0.0
        %3368 = vmatmul.mubr.f32.gmra.mrb[0].mxu0 %v3187
        %v3369 = vpop.f32.mrb[0].mxu0
        %v3370 = vadd.f32 0.0, %v3369
        %v3371 = vpop.f32.mrb[0].mxu0
        %3372 = vmatprep.mubr.f32.mxu0 0.0
        %3373 = vmatmul.mubr.f32.gmra.mrb[0].mxu0 %v3190
        %v3374 = vpop.f32.mrb[0].mxu0
        %v3375 = vadd.f32 0.0, %v3374
        %v3376 = vpop.f32.mrb[0].mxu0
        %3377 = vmatprep.mubr.f32.mxu0 0.0
        %3378 = vmatmul.mubr.f32.gmra.mrb[0].mxu0 %v3193
        %v3379 = vpop.f32.mrb[0].mxu0
        %v3380 = vadd.f32 0.0, %v3379
        %v3381 = vpop.f32.mrb[0].mxu0
        %3382 = vmatprep.mubr.f32.mxu0 0.0
        %3383 = vmatmul.mubr.f32.gmra.mrb[0].mxu0 %v3196
        %v3384 = vpop.f32.mrb[0].mxu0
        %v3385 = vadd.f32 0.0, %v3384
        %v3386 = vpop.f32.mrb[0].mxu0
        %3387 = vmatprep.mubr.f32.mxu0 0.0
        %3388 = vmatmul.mubr.f32.gmra.mrb[0].mxu0 %v3199
        %v3389 = vpop.f32.mrb[0].mxu0
        %v3390 = vadd.f32 0.0, %v3389
        %v3391 = vpop.f32.mrb[0].mxu0
        %3392 = vmatprep.mubr.f32.mxu0 0.0
        %3393 = vmatmul.mubr.f32.gmra.mrb[0].mxu0 %v3202
        %v3394 = vpop.f32.mrb[0].mxu0
        %v3395 = vadd.f32 0.0, %v3394
        %v3396 = vpop.f32.mrb[0].mxu0
        %3397 = vmatprep.mubr.f32.mxu0 0.0
        %3398 = vmatmul.mubr.f32.gmra.mrb[0].mxu0 %v3205
        %v3399 = vpop.f32.mrb[0].mxu0
        %v3400 = vadd.f32 0.0, %v3399
        %v3401 = vpop.f32.mrb[0].mxu0
        %3402 = vmatprep.mubr.f32.mxu0 0.0
        %3403 = vmatmul.mubr.f32.gmra.mrb[0].mxu0 %v3208
        %v3404 = vpop.f32.mrb[0].mxu0
        %v3405 = vadd.f32 0.0, %v3404
        %v3406 = vpop.f32.mrb[0].mxu0
        %3407 = vmatprep.mubr.f32.mxu0 0.0
        %3408 = vmatmul.mubr.f32.gmra.mrb[0].mxu0 %v3211
        %v3409 = vpop.f32.mrb[0].mxu0
        %v3410 = vadd.f32 0.0, %v3409
        %v3411 = vpop.f32.mrb[0].mxu0
        %3412 = vmatprep.mubr.f32.mxu0 0.0
        %3413 = vmatmul.mubr.f32.gmra.mrb[0].mxu0 %v3214
        %v3414 = vpop.f32.mrb[0].mxu0
        %v3415 = vadd.f32 0.0, %v3414
        %v3416 = vpop.f32.mrb[0].mxu0
        %3417 = vmatprep.mubr.f32.mxu0 0.0
        %3418 = vmatmul.mubr.f32.gmra.mrb[0].mxu0 %v3217
        %v3419 = vpop.f32.mrb[0].mxu0
        %v3420 = vadd.f32 0.0, %v3419
        %v3421 = vpop.f32.mrb[0].mxu0
        %3422 = vmatprep.mubr.f32.mxu0 0.0
        %3423 = vmatmul.mubr.f32.gmra.mrb[0].mxu0 %v3220
        %v3424 = vpop.f32.mrb[0].mxu0
        %v3425 = vadd.f32 0.0, %v3424
        %v3426 = vpop.f32.mrb[0].mxu0
        %3427 = vmatprep.mubr.f32.mxu0 0.0
        %3428 = vmatmul.mubr.f32.gmra.mrb[0].mxu0 %v3223
        %v3429 = vpop.f32.mrb[0].mxu0
        %v3430 = vadd.f32 0.0, %v3429
        %v3431 = vpop.f32.mrb[0].mxu0
        %3432 = vmatprep.mubr.f32.mxu0 0.0
        %3433 = vmatmul.mubr.f32.gmra.mrb[0].mxu0 %v3226
        %v3434 = vpop.f32.mrb[0].mxu0
        %v3435 = vadd.f32 0.0, %v3434
        %v3436 = vpop.f32.mrb[0].mxu0
        %3437 = vmatprep.mubr.f32.mxu0 0.0
        %3438 = vmatmul.mubr.f32.gmra.mrb[0].mxu0 %v3229
        %v3439 = vpop.f32.mrb[0].mxu0
        %v3440 = vadd.f32 0.0, %v3439
        %v3441 = vpop.f32.mrb[0].mxu0
        %3442 = vmatprep.mubr.f32.mxu0 0.0
        %3443 = vmatmul.mubr.f32.gmra.mrb[0].mxu0 %v3232
        %v3444 = vpop.f32.mrb[0].mxu0
        %v3445 = vadd.f32 0.0, %v3444
        %v3446 = vpop.f32.mrb[0].mxu0
        %3447 = vmatprep.mubr.f32.mxu0 0.0
        %3448 = vmatmul.mubr.f32.gmra.mrb[0].mxu0 %v3235
        %v3449 = vpop.f32.mrb[0].mxu0
        %v3450 = vadd.f32 0.0, %v3449
        %v3451 = vpop.f32.mrb[0].mxu0
        %3452 = vmatprep.mubr.f32.mxu0 0.0
        %3453 = vmatmul.mubr.f32.gmra.mrb[0].mxu0 %v3238
        %v3454 = vpop.f32.mrb[0].mxu0
        %v3455 = vadd.f32 0.0, %v3454
        %v3456 = vpop.f32.mrb[0].mxu0
        %3457 = vmatprep.mubr.f32.mxu0 0.0
        %3458 = vmatmul.mubr.f32.gmra.mrb[0].mxu0 %v3241
        %v3459 = vpop.f32.mrb[0].mxu0
        %v3460 = vadd.f32 0.0, %v3459
        %v3461 = vpop.f32.mrb[0].mxu0
        %3462 = vmatprep.mubr.f32.mxu0 0.0
        %3463 = vmatmul.mubr.f32.gmra.mrb[0].mxu0 %v3244
        %v3464 = vpop.f32.mrb[0].mxu0
        %v3465 = vadd.f32 0.0, %v3464
        %v3466 = vpop.f32.mrb[0].mxu0
        %3467 = vmatprep.mubr.f32.mxu0 0.0
        %3468 = vmatmul.mubr.f32.gmra.mrb[0].mxu0 %v3247
        %v3469 = vpop.f32.mrb[0].mxu0
        %v3470 = vadd.f32 0.0, %v3469
        %v3471 = vpop.f32.mrb[0].mxu0
        %3472 = vmatprep.mubr.f32.mxu0 0.0
        %3473 = vmatmul.mubr.f32.gmra.mrb[0].mxu0 %v3250
        %v3474 = vpop.f32.mrb[0].mxu0
        %v3475 = vadd.f32 0.0, %v3474
        %v3476 = vpop.f32.mrb[0].mxu0
        %3477 = vmatprep.mubr.f32.mxu0 0.0
        %3478 = vmatmul.mubr.f32.gmra.mrb[0].mxu0 %v3253
        %v3479 = vpop.f32.mrb[0].mxu0
        %v3480 = vadd.f32 0.0, %v3479
        %v3481 = vpop.f32.mrb[0].mxu0
        %3482 = vdwg.mxu0
        %v3483 = vadd.f32 %v3093, %v3325
        %v3484 = vadd.f32 %v3094, %v3330
        %v3485 = vadd.f32 %v3095, %v3335
        %v3486 = vadd.f32 %v3096, %v3340
        %v3487 = vadd.f32 %v3097, %v3345
        %v3488 = vadd.f32 %v3098, %v3350
        %v3489 = vadd.f32 %v3099, %v3355
        %v3490 = vadd.f32 %v3100, %v3360
        %v3491 = vadd.f32 %v3101, %v3365
        %v3492 = vadd.f32 %v3102, %v3370
        %v3493 = vadd.f32 %v3103, %v3375
        %v3494 = vadd.f32 %v3104, %v3380
        %v3495 = vadd.f32 %v3105, %v3385
        %v3496 = vadd.f32 %v3106, %v3390
        %v3497 = vadd.f32 %v3107, %v3395
        %v3498 = vadd.f32 %v3108, %v3400
        %v3499 = vadd.f32 %v3109, %v3405
        %v3500 = vadd.f32 %v3110, %v3410
        %v3501 = vadd.f32 %v3111, %v3415
        %v3502 = vadd.f32 %v3112, %v3420
        %v3503 = vadd.f32 %v3113, %v3425
        %v3504 = vadd.f32 %v3114, %v3430
        %v3505 = vadd.f32 %v3115, %v3435
        %v3506 = vadd.f32 %v3116, %v3440
        %v3507 = vadd.f32 %v3117, %v3445
        %v3508 = vadd.f32 %v3118, %v3450
        %v3509 = vadd.f32 %v3119, %v3455
        %v3510 = vadd.f32 %v3120, %v3460
        %v3511 = vadd.f32 %v3121, %v3465
        %v3512 = vadd.f32 %v3122, %v3470
        %v3513 = vadd.f32 %v3123, %v3475
        %v3514 = vadd.f32 %v3124, %v3480
        %v3515 = vld [vmem:[%s2734 + $0x2] sm:$0xff]
        %v3516 = vld [vmem:[%s2734 + $0xa] sm:$0xff]
        %v3517 = vld [vmem:[%s2734 + $0x1a] sm:$0xff]
        %v3518 = vld [vmem:[%s2734 + $0x22] sm:$0xff]
        %v3519 = vld [vmem:[%s2734 + $0x32] sm:$0xff]
        %v3520 = vld [vmem:[%s2734 + $0x3a] sm:$0xff]
        %v3521 = vld [vmem:[%s2734 + $0x4a] sm:$0xff]
        %v3522 = vld [vmem:[%s2734 + $0x52] sm:$0xff]
        %v3523 = vld [vmem:[%s2734 + $0x62] sm:$0xff]
        %v3524 = vld [vmem:[%s2734 + $0x6a] sm:$0xff]
        %v3525 = vld [vmem:[%s2734 + $0x7a] sm:$0xff]
        %v3526 = vld [vmem:[%s2734 + $0x82] sm:$0xff]
        %v3527 = vld [vmem:[%s2734 + $0x92] sm:$0xff]
        %v3528 = vld [vmem:[%s2734 + $0x9a] sm:$0xff]
        %v3529 = vld [vmem:[%s2734 + $0xaa] sm:$0xff]
        %v3530 = vld [vmem:[%s2734 + $0xb2] sm:$0xff]
        %v3531 = vld [vmem:[%s2734 + $0xc2] sm:$0xff]
        %v3532 = vld [vmem:[%s2734 + $0xca] sm:$0xff]
        %v3533 = vld [vmem:[%s2734 + $0xda] sm:$0xff]
        %v3534 = vld [vmem:[%s2734 + $0xe2] sm:$0xff]
        %v3535 = vld [vmem:[%s2734 + $0xf2] sm:$0xff]
        %v3536 = vld [vmem:[%s2734 + $0xfa] sm:$0xff]
        %v3537 = vld [vmem:[%s2734 + $0x10a] sm:$0xff]
        %v3538 = vld [vmem:[%s2734 + $0x112] sm:$0xff]
        %v3539 = vld [vmem:[%s2734 + $0x122] sm:$0xff]
        %v3540 = vld [vmem:[%s2734 + $0x12a] sm:$0xff]
        %v3541 = vld [vmem:[%s2734 + $0x13a] sm:$0xff]
        %v3542 = vld [vmem:[%s2734 + $0x142] sm:$0xff]
        %v3543 = vld [vmem:[%s2734 + $0x152] sm:$0xff]
        %v3544 = vld [vmem:[%s2734 + $0x15a] sm:$0xff]
        %v3545 = vld [vmem:[%s2734 + $0x16a] sm:$0xff]
        %v3546 = vld [vmem:[%s2734 + $0x172] sm:$0xff]
        %s3547 = scalar_lea.vmem [#allocation9], 32
        %v3548 = vld [vmem:[%s3547] sm:$0xf]
        %v3550 = vsel %vm312, %v3515, 0
        %v3553 = vsel %vm312, %v3516, 0
        %v3556 = vsel %vm312, %v3517, 0
        %v3559 = vsel %vm312, %v3518, 0
        %v3562 = vsel %vm312, %v3519, 0
        %v3565 = vsel %vm312, %v3520, 0
        %v3568 = vsel %vm312, %v3521, 0
        %v3571 = vsel %vm312, %v3522, 0
        %v3574 = vsel %vm312, %v3523, 0
        %v3577 = vsel %vm312, %v3524, 0
        %v3580 = vsel %vm312, %v3525, 0
        %v3583 = vsel %vm312, %v3526, 0
        %v3586 = vsel %vm312, %v3527, 0
        %v3589 = vsel %vm312, %v3528, 0
        %v3592 = vsel %vm312, %v3529, 0
        %v3595 = vsel %vm312, %v3530, 0
        %v3598 = vsel %vm312, %v3531, 0
        %v3601 = vsel %vm312, %v3532, 0
        %v3604 = vsel %vm312, %v3533, 0
        %v3607 = vsel %vm312, %v3534, 0
        %v3610 = vsel %vm312, %v3535, 0
        %v3613 = vsel %vm312, %v3536, 0
        %v3616 = vsel %vm312, %v3537, 0
        %v3619 = vsel %vm312, %v3538, 0
        %v3622 = vsel %vm312, %v3539, 0
        %v3625 = vsel %vm312, %v3540, 0
        %v3628 = vsel %vm312, %v3541, 0
        %v3631 = vsel %vm312, %v3542, 0
        %v3634 = vsel %vm312, %v3543, 0
        %v3637 = vsel %vm312, %v3544, 0
        %v3640 = vsel %vm312, %v3545, 0
        %v3643 = vsel %vm312, %v3546, 0
        %v3646 = vsel %vm621, %v3548, 0
        %3648 = vmatprep.subr.mxu0 0.0
        %3649 = vmatpush1.msra.mxu0 %v3646
        %3650 = vmatprep.subr.mxu0 0.0
        %3651 = vmatpush1.msra.mxu0 0.0
        %3652 = vmatprep.subr.mxu0 0.0
        %3653 = vmatpush1.msra.mxu0 0.0
        %3654 = vmatprep.subr.mxu0 0.0
        %3655 = vmatpush1.msra.mxu0 0.0
        %3656 = vmatprep.subr.mxu0 0.0
        %3657 = vmatpush1.msra.mxu0 0.0
        %3658 = vmatprep.subr.mxu0 0.0
        %3659 = vmatpush1.msra.mxu0 0.0
        %3660 = vmatprep.subr.mxu0 0.0
        %3661 = vmatpush1.msra.mxu0 0.0
        %3662 = vmatprep.subr.mxu0 0.0
        %3663 = vmatpush1.msra.mxu0 0.0
        %3664 = vmatprep.subr.mxu0 0.0
        %3665 = vmatpush1.msra.mxu0 0.0
        %3666 = vmatprep.subr.mxu0 0.0
        %3667 = vmatpush1.msra.mxu0 0.0
        %3668 = vmatprep.subr.mxu0 0.0
        %3669 = vmatpush1.msra.mxu0 0.0
        %3670 = vmatprep.subr.mxu0 0.0
        %3671 = vmatpush1.msra.mxu0 0.0
        %3672 = vmatprep.subr.mxu0 0.0
        %3673 = vmatpush1.msra.mxu0 0.0
        %3674 = vmatprep.subr.mxu0 0.0
        %3675 = vmatpush1.msra.mxu0 0.0
        %3676 = vmatprep.subr.mxu0 0.0
        %3677 = vmatpush1.msra.mxu0 0.0
        %3678 = vmatprep.subr.mxu0 0.0
        %3679 = vmatpush1.msra.mxu0 0.0
        %3680 = vmatprep.subr.mxu0 0.0
        %3681 = vmatpush1.msra.mxu0 0.0
        %3682 = vmatprep.subr.mxu0 0.0
        %3683 = vmatpush1.msra.mxu0 0.0
        %3684 = vmatprep.subr.mxu0 0.0
        %3685 = vmatpush1.msra.mxu0 0.0
        %3686 = vmatprep.subr.mxu0 0.0
        %3687 = vmatpush1.msra.mxu0 0.0
        %3688 = vmatprep.subr.mxu0 0.0
        %3689 = vmatpush1.msra.mxu0 0.0
        %3690 = vmatprep.subr.mxu0 0.0
        %3691 = vmatpush1.msra.mxu0 0.0
        %3692 = vmatprep.subr.mxu0 0.0
        %3693 = vmatpush1.msra.mxu0 0.0
        %3694 = vmatprep.subr.mxu0 0.0
        %3695 = vmatpush1.msra.mxu0 0.0
        %3696 = vmatprep.subr.mxu0 0.0
        %3697 = vmatpush1.msra.mxu0 0.0
        %3698 = vmatprep.subr.mxu0 0.0
        %3699 = vmatpush1.msra.mxu0 0.0
        %3700 = vmatprep.subr.mxu0 0.0
        %3701 = vmatpush1.msra.mxu0 0.0
        %3702 = vmatprep.subr.mxu0 0.0
        %3703 = vmatpush1.msra.mxu0 0.0
        %3704 = vmatprep.subr.mxu0 0.0
        %3705 = vmatpush1.msra.mxu0 0.0
        %3706 = vmatprep.subr.mxu0 0.0
        %3707 = vmatpush1.msra.mxu0 0.0
        %3708 = vmatprep.subr.mxu0 0.0
        %3709 = vmatpush1.msra.mxu0 0.0
        %3710 = vmatprep.subr.mxu0 0.0
        %3711 = vmatpush1.msra.mxu0 0.0
        %3712 = vmatprep.mubr.f32.mxu0 0.0
        %3713 = vmatmul.mubr.f32.gmra.mrb[0].mxu0 %v3550
        %v3714 = vpop.f32.mrb[0].mxu0
        %v3715 = vadd.f32 0.0, %v3714
        %v3716 = vpop.f32.mrb[0].mxu0
        %3717 = vmatprep.mubr.f32.mxu0 0.0
        %3718 = vmatmul.mubr.f32.gmra.mrb[0].mxu0 %v3553
        %v3719 = vpop.f32.mrb[0].mxu0
        %v3720 = vadd.f32 0.0, %v3719
        %v3721 = vpop.f32.mrb[0].mxu0
        %3722 = vmatprep.mubr.f32.mxu0 0.0
        %3723 = vmatmul.mubr.f32.gmra.mrb[0].mxu0 %v3556
        %v3724 = vpop.f32.mrb[0].mxu0
        %v3725 = vadd.f32 0.0, %v3724
        %v3726 = vpop.f32.mrb[0].mxu0
        %3727 = vmatprep.mubr.f32.mxu0 0.0
        %3728 = vmatmul.mubr.f32.gmra.mrb[0].mxu0 %v3559
        %v3729 = vpop.f32.mrb[0].mxu0
        %v3730 = vadd.f32 0.0, %v3729
        %v3731 = vpop.f32.mrb[0].mxu0
        %3732 = vmatprep.mubr.f32.mxu0 0.0
        %3733 = vmatmul.mubr.f32.gmra.mrb[0].mxu0 %v3562
        %v3734 = vpop.f32.mrb[0].mxu0
        %v3735 = vadd.f32 0.0, %v3734
        %v3736 = vpop.f32.mrb[0].mxu0
        %3737 = vmatprep.mubr.f32.mxu0 0.0
        %3738 = vmatmul.mubr.f32.gmra.mrb[0].mxu0 %v3565
        %v3739 = vpop.f32.mrb[0].mxu0
        %v3740 = vadd.f32 0.0, %v3739
        %v3741 = vpop.f32.mrb[0].mxu0
        %3742 = vmatprep.mubr.f32.mxu0 0.0
        %3743 = vmatmul.mubr.f32.gmra.mrb[0].mxu0 %v3568
        %v3744 = vpop.f32.mrb[0].mxu0
        %v3745 = vadd.f32 0.0, %v3744
        %v3746 = vpop.f32.mrb[0].mxu0
        %3747 = vmatprep.mubr.f32.mxu0 0.0
        %3748 = vmatmul.mubr.f32.gmra.mrb[0].mxu0 %v3571
        %v3749 = vpop.f32.mrb[0].mxu0
        %v3750 = vadd.f32 0.0, %v3749
        %v3751 = vpop.f32.mrb[0].mxu0
        %3752 = vmatprep.mubr.f32.mxu0 0.0
        %3753 = vmatmul.mubr.f32.gmra.mrb[0].mxu0 %v3574
        %v3754 = vpop.f32.mrb[0].mxu0
        %v3755 = vadd.f32 0.0, %v3754
        %v3756 = vpop.f32.mrb[0].mxu0
        %3757 = vmatprep.mubr.f32.mxu0 0.0
        %3758 = vmatmul.mubr.f32.gmra.mrb[0].mxu0 %v3577
        %v3759 = vpop.f32.mrb[0].mxu0
        %v3760 = vadd.f32 0.0, %v3759
        %v3761 = vpop.f32.mrb[0].mxu0
        %3762 = vmatprep.mubr.f32.mxu0 0.0
        %3763 = vmatmul.mubr.f32.gmra.mrb[0].mxu0 %v3580
        %v3764 = vpop.f32.mrb[0].mxu0
        %v3765 = vadd.f32 0.0, %v3764
        %v3766 = vpop.f32.mrb[0].mxu0
        %3767 = vmatprep.mubr.f32.mxu0 0.0
        %3768 = vmatmul.mubr.f32.gmra.mrb[0].mxu0 %v3583
        %v3769 = vpop.f32.mrb[0].mxu0
        %v3770 = vadd.f32 0.0, %v3769
        %v3771 = vpop.f32.mrb[0].mxu0
        %3772 = vmatprep.mubr.f32.mxu0 0.0
        %3773 = vmatmul.mubr.f32.gmra.mrb[0].mxu0 %v3586
        %v3774 = vpop.f32.mrb[0].mxu0
        %v3775 = vadd.f32 0.0, %v3774
        %v3776 = vpop.f32.mrb[0].mxu0
        %3777 = vmatprep.mubr.f32.mxu0 0.0
        %3778 = vmatmul.mubr.f32.gmra.mrb[0].mxu0 %v3589
        %v3779 = vpop.f32.mrb[0].mxu0
        %v3780 = vadd.f32 0.0, %v3779
        %v3781 = vpop.f32.mrb[0].mxu0
        %3782 = vmatprep.mubr.f32.mxu0 0.0
        %3783 = vmatmul.mubr.f32.gmra.mrb[0].mxu0 %v3592
        %v3784 = vpop.f32.mrb[0].mxu0
        %v3785 = vadd.f32 0.0, %v3784
        %v3786 = vpop.f32.mrb[0].mxu0
        %3787 = vmatprep.mubr.f32.mxu0 0.0
        %3788 = vmatmul.mubr.f32.gmra.mrb[0].mxu0 %v3595
        %v3789 = vpop.f32.mrb[0].mxu0
        %v3790 = vadd.f32 0.0, %v3789
        %v3791 = vpop.f32.mrb[0].mxu0
        %3792 = vmatprep.mubr.f32.mxu0 0.0
        %3793 = vmatmul.mubr.f32.gmra.mrb[0].mxu0 %v3598
        %v3794 = vpop.f32.mrb[0].mxu0
        %v3795 = vadd.f32 0.0, %v3794
        %v3796 = vpop.f32.mrb[0].mxu0
        %3797 = vmatprep.mubr.f32.mxu0 0.0
        %3798 = vmatmul.mubr.f32.gmra.mrb[0].mxu0 %v3601
        %v3799 = vpop.f32.mrb[0].mxu0
        %v3800 = vadd.f32 0.0, %v3799
        %v3801 = vpop.f32.mrb[0].mxu0
        %3802 = vmatprep.mubr.f32.mxu0 0.0
        %3803 = vmatmul.mubr.f32.gmra.mrb[0].mxu0 %v3604
        %v3804 = vpop.f32.mrb[0].mxu0
        %v3805 = vadd.f32 0.0, %v3804
        %v3806 = vpop.f32.mrb[0].mxu0
        %3807 = vmatprep.mubr.f32.mxu0 0.0
        %3808 = vmatmul.mubr.f32.gmra.mrb[0].mxu0 %v3607
        %v3809 = vpop.f32.mrb[0].mxu0
        %v3810 = vadd.f32 0.0, %v3809
        %v3811 = vpop.f32.mrb[0].mxu0
        %3812 = vmatprep.mubr.f32.mxu0 0.0
        %3813 = vmatmul.mubr.f32.gmra.mrb[0].mxu0 %v3610
        %v3814 = vpop.f32.mrb[0].mxu0
        %v3815 = vadd.f32 0.0, %v3814
        %v3816 = vpop.f32.mrb[0].mxu0
        %3817 = vmatprep.mubr.f32.mxu0 0.0
        %3818 = vmatmul.mubr.f32.gmra.mrb[0].mxu0 %v3613
        %v3819 = vpop.f32.mrb[0].mxu0
        %v3820 = vadd.f32 0.0, %v3819
        %v3821 = vpop.f32.mrb[0].mxu0
        %3822 = vmatprep.mubr.f32.mxu0 0.0
        %3823 = vmatmul.mubr.f32.gmra.mrb[0].mxu0 %v3616
        %v3824 = vpop.f32.mrb[0].mxu0
        %v3825 = vadd.f32 0.0, %v3824
        %v3826 = vpop.f32.mrb[0].mxu0
        %3827 = vmatprep.mubr.f32.mxu0 0.0
        %3828 = vmatmul.mubr.f32.gmra.mrb[0].mxu0 %v3619
        %v3829 = vpop.f32.mrb[0].mxu0
        %v3830 = vadd.f32 0.0, %v3829
        %v3831 = vpop.f32.mrb[0].mxu0
        %3832 = vmatprep.mubr.f32.mxu0 0.0
        %3833 = vmatmul.mubr.f32.gmra.mrb[0].mxu0 %v3622
        %v3834 = vpop.f32.mrb[0].mxu0
        %v3835 = vadd.f32 0.0, %v3834
        %v3836 = vpop.f32.mrb[0].mxu0
        %3837 = vmatprep.mubr.f32.mxu0 0.0
        %3838 = vmatmul.mubr.f32.gmra.mrb[0].mxu0 %v3625
        %v3839 = vpop.f32.mrb[0].mxu0
        %v3840 = vadd.f32 0.0, %v3839
        %v3841 = vpop.f32.mrb[0].mxu0
        %3842 = vmatprep.mubr.f32.mxu0 0.0
        %3843 = vmatmul.mubr.f32.gmra.mrb[0].mxu0 %v3628
        %v3844 = vpop.f32.mrb[0].mxu0
        %v3845 = vadd.f32 0.0, %v3844
        %v3846 = vpop.f32.mrb[0].mxu0
        %3847 = vmatprep.mubr.f32.mxu0 0.0
        %3848 = vmatmul.mubr.f32.gmra.mrb[0].mxu0 %v3631
        %v3849 = vpop.f32.mrb[0].mxu0
        %v3850 = vadd.f32 0.0, %v3849
        %v3851 = vpop.f32.mrb[0].mxu0
        %3852 = vmatprep.mubr.f32.mxu0 0.0
        %3853 = vmatmul.mubr.f32.gmra.mrb[0].mxu0 %v3634
        %v3854 = vpop.f32.mrb[0].mxu0
        %v3855 = vadd.f32 0.0, %v3854
        %v3856 = vpop.f32.mrb[0].mxu0
        %3857 = vmatprep.mubr.f32.mxu0 0.0
        %3858 = vmatmul.mubr.f32.gmra.mrb[0].mxu0 %v3637
        %v3859 = vpop.f32.mrb[0].mxu0
        %v3860 = vadd.f32 0.0, %v3859
        %v3861 = vpop.f32.mrb[0].mxu0
        %3862 = vmatprep.mubr.f32.mxu0 0.0
        %3863 = vmatmul.mubr.f32.gmra.mrb[0].mxu0 %v3640
        %v3864 = vpop.f32.mrb[0].mxu0
        %v3865 = vadd.f32 0.0, %v3864
        %v3866 = vpop.f32.mrb[0].mxu0
        %3867 = vmatprep.mubr.f32.mxu0 0.0
        %3868 = vmatmul.mubr.f32.gmra.mrb[0].mxu0 %v3643
        %v3869 = vpop.f32.mrb[0].mxu0
        %v3870 = vadd.f32 0.0, %v3869
        %v3871 = vpop.f32.mrb[0].mxu0
        %3872 = vdwg.mxu0
        %v3873 = vadd.f32 %v3483, %v3715
        %v3874 = vadd.f32 %v3484, %v3720
        %v3875 = vadd.f32 %v3485, %v3725
        %v3876 = vadd.f32 %v3486, %v3730
        %v3877 = vadd.f32 %v3487, %v3735
        %v3878 = vadd.f32 %v3488, %v3740
        %v3879 = vadd.f32 %v3489, %v3745
        %v3880 = vadd.f32 %v3490, %v3750
        %v3881 = vadd.f32 %v3491, %v3755
        %v3882 = vadd.f32 %v3492, %v3760
        %v3883 = vadd.f32 %v3493, %v3765
        %v3884 = vadd.f32 %v3494, %v3770
        %v3885 = vadd.f32 %v3495, %v3775
        %v3886 = vadd.f32 %v3496, %v3780
        %v3887 = vadd.f32 %v3497, %v3785
        %v3888 = vadd.f32 %v3498, %v3790
        %v3889 = vadd.f32 %v3499, %v3795
        %v3890 = vadd.f32 %v3500, %v3800
        %v3891 = vadd.f32 %v3501, %v3805
        %v3892 = vadd.f32 %v3502, %v3810
        %v3893 = vadd.f32 %v3503, %v3815
        %v3894 = vadd.f32 %v3504, %v3820
        %v3895 = vadd.f32 %v3505, %v3825
        %v3896 = vadd.f32 %v3506, %v3830
        %v3897 = vadd.f32 %v3507, %v3835
        %v3898 = vadd.f32 %v3508, %v3840
        %v3899 = vadd.f32 %v3509, %v3845
        %v3900 = vadd.f32 %v3510, %v3850
        %v3901 = vadd.f32 %v3511, %v3855
        %v3902 = vadd.f32 %v3512, %v3860
        %v3903 = vadd.f32 %v3513, %v3865
        %v3904 = vadd.f32 %v3514, %v3870
        %vm3905 = vcmask 64512
        %3906 = vst.msk [vmem:[%s302] sm:$0xff] %vm3905, %v3873
        %3907 = vst.msk [vmem:[%s302 + $0x8] sm:$0xff] %vm3905, %v3874
        %3908 = vst.msk [vmem:[%s302 + $0x10] sm:$0xff] %vm3905, %v3875
        %3909 = vst.msk [vmem:[%s302 + $0x18] sm:$0xff] %vm3905, %v3876
        %3910 = vst.msk [vmem:[%s302 + $0x20] sm:$0xff] %vm3905, %v3877
        %3911 = vst.msk [vmem:[%s302 + $0x28] sm:$0xff] %vm3905, %v3878
        %3912 = vst.msk [vmem:[%s302 + $0x30] sm:$0xff] %vm3905, %v3879
        %3913 = vst.msk [vmem:[%s302 + $0x38] sm:$0xff] %vm3905, %v3880
        %3914 = vst.msk [vmem:[%s302 + $0x40] sm:$0xff] %vm3905, %v3881
        %3915 = vst.msk [vmem:[%s302 + $0x48] sm:$0xff] %vm3905, %v3882
        %3916 = vst.msk [vmem:[%s302 + $0x50] sm:$0xff] %vm3905, %v3883
        %3917 = vst.msk [vmem:[%s302 + $0x58] sm:$0xff] %vm3905, %v3884
        %3918 = vst.msk [vmem:[%s302 + $0x60] sm:$0xff] %vm3905, %v3885
        %3919 = vst.msk [vmem:[%s302 + $0x68] sm:$0xff] %vm3905, %v3886
        %3920 = vst.msk [vmem:[%s302 + $0x70] sm:$0xff] %vm3905, %v3887
        %3921 = vst.msk [vmem:[%s302 + $0x78] sm:$0xff] %vm3905, %v3888
        %3922 = vst.msk [vmem:[%s302 + $0x80] sm:$0xff] %vm3905, %v3889
        %3923 = vst.msk [vmem:[%s302 + $0x88] sm:$0xff] %vm3905, %v3890
        %3924 = vst.msk [vmem:[%s302 + $0x90] sm:$0xff] %vm3905, %v3891
        %3925 = vst.msk [vmem:[%s302 + $0x98] sm:$0xff] %vm3905, %v3892
        %3926 = vst.msk [vmem:[%s302 + $0xa0] sm:$0xff] %vm3905, %v3893
        %3927 = vst.msk [vmem:[%s302 + $0xa8] sm:$0xff] %vm3905, %v3894
        %3928 = vst.msk [vmem:[%s302 + $0xb0] sm:$0xff] %vm3905, %v3895
        %3929 = vst.msk [vmem:[%s302 + $0xb8] sm:$0xff] %vm3905, %v3896
        %3930 = vst.msk [vmem:[%s302 + $0xc0] sm:$0xff] %vm3905, %v3897
        %3931 = vst.msk [vmem:[%s302 + $0xc8] sm:$0xff] %vm3905, %v3898
        %3932 = vst.msk [vmem:[%s302 + $0xd0] sm:$0xff] %vm3905, %v3899
        %3933 = vst.msk [vmem:[%s302 + $0xd8] sm:$0xff] %vm3905, %v3900
        %3934 = vst.msk [vmem:[%s302 + $0xe0] sm:$0xff] %vm3905, %v3901
        %3935 = vst.msk [vmem:[%s302 + $0xe8] sm:$0xff] %vm3905, %v3902
        %3936 = vst.msk [vmem:[%s302 + $0xf0] sm:$0xff] %vm3905, %v3903
        %3937 = vst.msk [vmem:[%s302 + $0xf8] sm:$0xff] %vm3905, %v3904
        %v3938 = vsel %vm3905, %v3873, 0.0
        %v3939 = vsel %vm3905, %v3874, 0.0
        %v3940 = vadd.f32 %v3938, %v3939
        %v3941 = vsel %vm3905, %v3875, 0.0
        %v3942 = vadd.f32 %v3940, %v3941
        %v3943 = vsel %vm3905, %v3876, 0.0
        %v3944 = vadd.f32 %v3942, %v3943
        %v3945 = vsel %vm3905, %v3877, 0.0
        %v3946 = vadd.f32 %v3944, %v3945
        %v3947 = vsel %vm3905, %v3878, 0.0
        %v3948 = vadd.f32 %v3946, %v3947
        %v3949 = vsel %vm3905, %v3879, 0.0
        %v3950 = vadd.f32 %v3948, %v3949
        %v3951 = vsel %vm3905, %v3880, 0.0
        %v3952 = vadd.f32 %v3950, %v3951
        %v3953 = vsel %vm3905, %v3881, 0.0
        %v3954 = vadd.f32 %v3952, %v3953
        %v3955 = vsel %vm3905, %v3882, 0.0
        %v3956 = vadd.f32 %v3954, %v3955
        %v3957 = vsel %vm3905, %v3883, 0.0
        %v3958 = vadd.f32 %v3956, %v3957
        %v3959 = vsel %vm3905, %v3884, 0.0
        %v3960 = vadd.f32 %v3958, %v3959
        %v3961 = vsel %vm3905, %v3885, 0.0
        %v3962 = vadd.f32 %v3960, %v3961
        %v3963 = vsel %vm3905, %v3886, 0.0
        %v3964 = vadd.f32 %v3962, %v3963
        %v3965 = vsel %vm3905, %v3887, 0.0
        %v3966 = vadd.f32 %v3964, %v3965
        %v3967 = vsel %vm3905, %v3888, 0.0
        %v3968 = vadd.f32 %v3966, %v3967
        %v3969 = vsel %vm3905, %v3889, 0.0
        %v3970 = vadd.f32 %v3968, %v3969
        %v3971 = vsel %vm3905, %v3890, 0.0
        %v3972 = vadd.f32 %v3970, %v3971
        %v3973 = vsel %vm3905, %v3891, 0.0
        %v3974 = vadd.f32 %v3972, %v3973
        %v3975 = vsel %vm3905, %v3892, 0.0
        %v3976 = vadd.f32 %v3974, %v3975
        %v3977 = vsel %vm3905, %v3893, 0.0
        %v3978 = vadd.f32 %v3976, %v3977
        %v3979 = vsel %vm3905, %v3894, 0.0
        %v3980 = vadd.f32 %v3978, %v3979
        %v3981 = vsel %vm3905, %v3895, 0.0
        %v3982 = vadd.f32 %v3980, %v3981
        %v3983 = vsel %vm3905, %v3896, 0.0
        %v3984 = vadd.f32 %v3982, %v3983
        %v3985 = vsel %vm3905, %v3897, 0.0
        %v3986 = vadd.f32 %v3984, %v3985
        %v3987 = vsel %vm3905, %v3898, 0.0
        %v3988 = vadd.f32 %v3986, %v3987
        %v3989 = vsel %vm3905, %v3899, 0.0
        %v3990 = vadd.f32 %v3988, %v3989
        %v3991 = vsel %vm3905, %v3900, 0.0
        %v3992 = vadd.f32 %v3990, %v3991
        %v3993 = vsel %vm3905, %v3901, 0.0
        %v3994 = vadd.f32 %v3992, %v3993
        %v3995 = vsel %vm3905, %v3902, 0.0
        %v3996 = vadd.f32 %v3994, %v3995
        %v3997 = vsel %vm3905, %v3903, 0.0
        %v3998 = vadd.f32 %v3996, %v3997
        %v3999 = vsel %vm3905, %v3904, 0.0
        %v4000 = vadd.f32 %v3998, %v3999
        %v4001 = vrot.slane %v4000, 4
        %v4002 = vadd.f32 %v4000, %v4001
        %v4003 = vrot.slane %v4002, 2
        %v4004 = vadd.f32 %v4002, %v4003
        %v4005 = vrot.slane %v4004, 1
        %v4006 = vadd.f32 %v4004, %v4005
        %vm4007 = vcmask 57344
        %4008 = vst.msk [vmem:[%s309] sm:$0x1] %vm4007, %v4006
        %v4009 = vmul.f32 %v3873, %v3873
        %v4010 = vmul.f32 %v3874, %v3874
        %v4011 = vmul.f32 %v3875, %v3875
        %v4012 = vmul.f32 %v3876, %v3876
        %v4013 = vmul.f32 %v3877, %v3877
        %v4014 = vmul.f32 %v3878, %v3878
        %v4015 = vmul.f32 %v3879, %v3879
        %v4016 = vmul.f32 %v3880, %v3880
        %v4017 = vmul.f32 %v3881, %v3881
        %v4018 = vmul.f32 %v3882, %v3882
        %v4019 = vmul.f32 %v3883, %v3883
        %v4020 = vmul.f32 %v3884, %v3884
        %v4021 = vmul.f32 %v3885, %v3885
        %v4022 = vmul.f32 %v3886, %v3886
        %v4023 = vmul.f32 %v3887, %v3887
        %v4024 = vmul.f32 %v3888, %v3888
        %v4025 = vmul.f32 %v3889, %v3889
        %v4026 = vmul.f32 %v3890, %v3890
        %v4027 = vmul.f32 %v3891, %v3891
        %v4028 = vmul.f32 %v3892, %v3892
        %v4029 = vmul.f32 %v3893, %v3893
        %v4030 = vmul.f32 %v3894, %v3894
        %v4031 = vmul.f32 %v3895, %v3895
        %v4032 = vmul.f32 %v3896, %v3896
        %v4033 = vmul.f32 %v3897, %v3897
        %v4034 = vmul.f32 %v3898, %v3898
        %v4035 = vmul.f32 %v3899, %v3899
        %v4036 = vmul.f32 %v3900, %v3900
        %v4037 = vmul.f32 %v3901, %v3901
        %v4038 = vmul.f32 %v3902, %v3902
        %v4039 = vmul.f32 %v3903, %v3903
        %v4040 = vmul.f32 %v3904, %v3904
        %v4041 = vsel %vm3905, %v4009, 0.0
        %v4042 = vsel %vm3905, %v4010, 0.0
        %v4043 = vadd.f32 %v4041, %v4042
        %v4044 = vsel %vm3905, %v4011, 0.0
        %v4045 = vadd.f32 %v4043, %v4044
        %v4046 = vsel %vm3905, %v4012, 0.0
        %v4047 = vadd.f32 %v4045, %v4046
        %v4048 = vsel %vm3905, %v4013, 0.0
        %v4049 = vadd.f32 %v4047, %v4048
        %v4050 = vsel %vm3905, %v4014, 0.0
        %v4051 = vadd.f32 %v4049, %v4050
        %v4052 = vsel %vm3905, %v4015, 0.0
        %v4053 = vadd.f32 %v4051, %v4052
        %v4054 = vsel %vm3905, %v4016, 0.0
        %v4055 = vadd.f32 %v4053, %v4054
        %v4056 = vsel %vm3905, %v4017, 0.0
        %v4057 = vadd.f32 %v4055, %v4056
        %v4058 = vsel %vm3905, %v4018, 0.0
        %v4059 = vadd.f32 %v4057, %v4058
        %v4060 = vsel %vm3905, %v4019, 0.0
        %v4061 = vadd.f32 %v4059, %v4060
        %v4062 = vsel %vm3905, %v4020, 0.0
        %v4063 = vadd.f32 %v4061, %v4062
        %v4064 = vsel %vm3905, %v4021, 0.0
        %v4065 = vadd.f32 %v4063, %v4064
        %v4066 = vsel %vm3905, %v4022, 0.0
        %v4067 = vadd.f32 %v4065, %v4066
        %v4068 = vsel %vm3905, %v4023, 0.0
        %v4069 = vadd.f32 %v4067, %v4068
        %v4070 = vsel %vm3905, %v4024, 0.0
        %v4071 = vadd.f32 %v4069, %v4070
        %v4072 = vsel %vm3905, %v4025, 0.0
        %v4073 = vadd.f32 %v4071, %v4072
        %v4074 = vsel %vm3905, %v4026, 0.0
        %v4075 = vadd.f32 %v4073, %v4074
        %v4076 = vsel %vm3905, %v4027, 0.0
        %v4077 = vadd.f32 %v4075, %v4076
        %v4078 = vsel %vm3905, %v4028, 0.0
        %v4079 = vadd.f32 %v4077, %v4078
        %v4080 = vsel %vm3905, %v4029, 0.0
        %v4081 = vadd.f32 %v4079, %v4080
        %v4082 = vsel %vm3905, %v4030, 0.0
        %v4083 = vadd.f32 %v4081, %v4082
        %v4084 = vsel %vm3905, %v4031, 0.0
        %v4085 = vadd.f32 %v4083, %v4084
        %v4086 = vsel %vm3905, %v4032, 0.0
        %v4087 = vadd.f32 %v4085, %v4086
        %v4088 = vsel %vm3905, %v4033, 0.0
        %v4089 = vadd.f32 %v4087, %v4088
        %v4090 = vsel %vm3905, %v4034, 0.0
        %v4091 = vadd.f32 %v4089, %v4090
        %v4092 = vsel %vm3905, %v4035, 0.0
        %v4093 = vadd.f32 %v4091, %v4092
        %v4094 = vsel %vm3905, %v4036, 0.0
        %v4095 = vadd.f32 %v4093, %v4094
        %v4096 = vsel %vm3905, %v4037, 0.0
        %v4097 = vadd.f32 %v4095, %v4096
        %v4098 = vsel %vm3905, %v4038, 0.0
        %v4099 = vadd.f32 %v4097, %v4098
        %v4100 = vsel %vm3905, %v4039, 0.0
        %v4101 = vadd.f32 %v4099, %v4100
        %v4102 = vsel %vm3905, %v4040, 0.0
        %v4103 = vadd.f32 %v4101, %v4102
        %v4104 = vrot.slane %v4103, 4
        %v4105 = vadd.f32 %v4103, %v4104
        %v4106 = vrot.slane %v4105, 2
        %v4107 = vadd.f32 %v4105, %v4106
        %v4108 = vrot.slane %v4107, 1
        %v4109 = vadd.f32 %v4107, %v4108
        %4110 = vst.msk [vmem:[%s309 + $0x1] sm:$0x1] %vm4007, %v4109
        %s4111 = sand.u32 %s139, 1
        %s4112 = scalar_lea.sflag [#allocation5], %s4111
        %s4113 = sand.u32 %s139, 1
        %s4114 = smul.addr %s4113, 256
        %s4115 = scalar_lea.vmem [#allocation11], %s4114
        %s4116 = sand.u32 %s167, 1
        %s4117 = scalar_lea.sflag [#allocation13], %s4116
        %s4118 = sand.u32 %s167, 1
        %s4119 = smul.addr %s4118, 2
        %s4120 = scalar_lea.vmem [#allocation12], %s4119
        // Predicated region
        $region61: #{double_conv_forward.3} parent=35 // pred_check
          %p4121 = pneg %p149
        $region62: #{double_conv_forward.3} parent=35 // pred_check_branch
          %4123 = sbr.rel (%p4121) target = $region64
        $region63: #{double_conv_forward.3} parent=35 // pred_region
          %s4124 = smul.u32 16, %s33
          %s4126 = ssub.s32 4096, 4096
          %4127 = vsyncadd %s4112, %s4126
          %s4128 = smul.addr %s4124, 2
          %s4129 = smul.addr %s32, 32
          %s4130 = sadd.s32 %s4128, %s4129
          %s4131 = smul.addr %s4130, 128
          %s4132 = scalar_lea.hbm %s4, %s4131
          %s4133 = sshll.u32 %s4115, 4
          %s4134 = int_to_ptr.vmem [resolvable:$true] %s4133
          %4139 = dma.vmem_to_hbm [thread:$0]  %s4134, 4096, %s4132, %s4112, 128, 128, 8
        $region64: #{double_conv_forward.3} parent=35 // pred_fallthru
          _
        // Predicated region
        $region65: #{double_conv_forward.3} parent=35 // pred_check
          %p4140 = pneg %p177
        $region66: #{double_conv_forward.3} parent=35 // pred_check_branch
          %4142 = sbr.rel (%p4140) target = $region68
        $region67: #{double_conv_forward.3} parent=35 // pred_region
          %s4144 = ssub.s32 32, 32
          %4145 = vsyncadd %s4117, %s4144
          %s4146 = sadd.s32 %s33, %s32
          %s4147 = smul.addr %s4146, 32
          %s4148 = scalar_lea.hbm %s5, %s4147
          %s4150 = sshll.u32 %s4120, 4
          %s4151 = int_to_ptr.vmem [resolvable:$true] %s4150
          %4153 = dma.vmem_to_hbm [thread:$0]  %s4151, 32, %s4148, %s4117
        $region68: #{double_conv_forward.3} parent=35 // pred_fallthru
          _
      $region36: #{double_conv_forward.3} parent=5 // pred_fallthru
        _
      %p4154 = scmp.le.s32.totalorder 2, %s23
      // Predicated region
      $region69: #{double_conv_forward.3} parent=5 // pred_check
        %p4155 = pneg %p4154
      $region70: #{double_conv_forward.3} parent=5 // pred_check_branch
        %4157 = sbr.rel (%p4155) target = $region72
      $region71: #{double_conv_forward.3} parent=5 // pred_region
        %s4158 = ssub.s32 %s23, 2
        // Predicated region
        $region73: #{double_conv_forward.3} parent=71 // pred_check
          %p4159 = pneg %p155
        $region74: #{double_conv_forward.3} parent=71 // pred_check_branch
          %4161 = sbr.rel (%p4159) target = $region76
        $region75: #{double_conv_forward.3} parent=71 // pred_region
          %s4162 = sand.u32 %s140, 1
          %s4163 = scalar_lea.sflag [#allocation5], %s4162
          %s4164 = sand.u32 %s140, 1
          %s4165 = smul.addr %s4164, 256
          %s4166 = scalar_lea.vmem [#allocation11], %s4165
          %4167 = dma.done %s4163, 4096
        $region76: #{double_conv_forward.3} parent=71 // pred_fallthru
          _
        // Predicated region
        $region77: #{double_conv_forward.3} parent=71 // pred_check
          %p4168 = pneg %p183
        $region78: #{double_conv_forward.3} parent=71 // pred_check_branch
          %4170 = sbr.rel (%p4168) target = $region80
        $region79: #{double_conv_forward.3} parent=71 // pred_region
          %s4171 = sand.u32 %s168, 1
          %s4172 = scalar_lea.sflag [#allocation13], %s4171
          %s4173 = sand.u32 %s168, 1
          %s4174 = smul.addr %s4173, 2
          %s4175 = scalar_lea.vmem [#allocation12], %s4174
          %4176 = dma.done %s4172, 32
        $region80: #{double_conv_forward.3} parent=71 // pred_fallthru
          _
      $region72: #{double_conv_forward.3} parent=5 // pred_fallthru
        _
    $region6: #{double_conv_forward.3} parent=1 // loop_footer
      %s27 = sadd.s32 1, %s23
    $region7: #{double_conv_forward.3} parent=1 // loop_footer_branch
      %22 = sbr.rel target = $region3
    $region8: #{double_conv_forward.3} parent=1 // loop_exit
      _
    %4177 = vsyncpa [#allocation4], 1
    %s4178 = scalar_lea.sflag [#allocation4], 1
    %4179 = vsyncpa %s4178, 1
    %4180 = vsyncpa [#allocation7], 1
    %4181 = vsyncpa [#allocation10], 1
    %4182 = vsyncpa [#allocation5], 1
    %s4183 = scalar_lea.sflag [#allocation5], 1
    %4184 = vsyncpa %s4183, 1
    %4185 = vsyncpa [#allocation13], 1
    %s4186 = scalar_lea.sflag [#allocation13], 1
    %4187 = vsyncpa %s4186, 1

// kernel: double_conv_forward.4
$region0: #{double_conv_forward.4}
  #allocation0 [shape = 'u32[]', space=smem, size = 0x4, offset = 0x4, fixed_abs, tag = 'smem constant byte address 0x4 - core index']
  #allocation1 [shape = 'u32[144,128]{1,0:T(1,128)}', space=vmem, size = 0x12000, scoped, tag = 'internal scratch']
  #allocation2 [shape = 'f32[18,18,8]{2,1,0:T(8,128)}', space=vmem, size = 0x36000, scoped, tag = 'scratch operand']
  %s0 = inlined_call_operand.hbm [shape: f32[2,16,16,8], index: 0, kind: input, shape index: {}]
  %s1 = inlined_call_operand.hbm [shape: f32[1,8], index: 1, kind: input, shape index: {}]
  %s2 = inlined_call_operand.hbm [shape: f32[1,8], index: 2, kind: input, shape index: {}]
  %s3 = inlined_call_operand.hbm [shape: f32[9,8,8], index: 3, kind: input, shape index: {}]
  %s4 = inlined_call_operand.hbm [shape: f32[2,16,16,8], index: 4, kind: output, shape index: {0}]
  %s5 = inlined_call_operand.hbm [shape: f32[2,1,2,8], index: 5, kind: output, shape index: {1}]
  %6 = xla_tuple %s4, %s5
  %s7 = sld [smem:[#allocation0]]
  $region81: #{double_conv_forward.4} parent=0
    _
  %s9 = ssub.s32 1, %s7
  %s10 = scalar_select 0, %s9, %s7
  $region1: #{double_conv_forward.4} parent=0
    #allocation3 [shape = 'u8[262144]{0}', space=vmem, size = 0x40000, scoped, tag = 'input window, operand 0']
    #allocation4 [shape = 's32[2]{0}', space=sflag, size = 0x8, scoped, tag = 'scoped memory for double_conv_forward.4']
    #allocation5 [shape = 's32[2]{0}', space=sflag, size = 0x8, scoped, tag = 'scoped memory for double_conv_forward.4']
    #allocation6 [shape = 'u8[512]{0}', space=vmem, size = 0x400, scoped, tag = 'input window, operand 1, single buffered']
    #allocation7 [shape = 's32[1]{0}', space=sflag, size = 0x4, scoped, tag = 'scoped memory for double_conv_forward.4']
    #allocation8 [shape = 'u8[512]{0}', space=vmem, size = 0x400, scoped, tag = 'input window, operand 2, single buffered']
    #allocation9 [shape = 'u8[36864]{0}', space=vmem, size = 0x9000, scoped, tag = 'input window, operand 3, single buffered']
    #allocation10 [shape = 's32[1]{0}', space=sflag, size = 0x4, scoped, tag = 'scoped memory for double_conv_forward.4']
    #allocation11 [shape = 'u8[262144]{0}', space=vmem, size = 0x40000, scoped, tag = 'output window, operand 0']
    #allocation12 [shape = 'u8[2048]{0}', space=vmem, size = 0x800, scoped, tag = 'output window, operand 1']
    #allocation13 [shape = 's32[2]{0}', space=sflag, size = 0x8, scoped, tag = 'scoped memory for double_conv_forward.4']
    %11 = vsyncpa [#allocation4], 0
    %s12 = scalar_lea.sflag [#allocation4], 1
    %13 = vsyncpa %s12, 0
    %14 = vsyncpa [#allocation7], 0
    %15 = vsyncpa [#allocation10], 0
    %16 = vsyncpa [#allocation5], 0
    %s17 = scalar_lea.sflag [#allocation5], 1
    %18 = vsyncpa %s17, 0
    %19 = vsyncpa [#allocation13], 0
    %s20 = scalar_lea.sflag [#allocation13], 1
    %21 = vsyncpa %s20, 0
    loop: start=0, step=1, limit=4
    $region2: #{double_conv_forward.4} parent=1 // loop_pre_header
      _
    $region3: #{double_conv_forward.4} parent=1 // loop_header
      %s23 = sphi 0, %s27
      %p24 = scmp.ge.s32.totalorder %s23, 4
      %s30 = sphi 0, %s42
      %s31 = sphi 0, %s38
      %s32 = sphi 0, %s30
      %s33 = sphi 0, %s31
      %s34 = sphi 0, %s32
      %s35 = sphi 0, %s33
      %s45 = sphi 0, %s47
      %s48 = sphi 0, %s45
      %s49 = sphi 0, %s48
      %s65 = sphi 0, %s49
      %s69 = sphi 0, %s69
      %s71 = sphi 0, %s69
      %s72 = sphi 0, %s71
      %s86 = sphi 0, %s72
      %s90 = sphi 0, %s90
      %s92 = sphi 0, %s90
      %s93 = sphi 0, %s92
      %s107 = sphi 0, %s93
      %s111 = sphi 0, %s111
      %s113 = sphi 0, %s111
      %s114 = sphi 0, %s113
      %s128 = sphi 0, %s114
      %s136 = sphi 0, %s138
      %s139 = sphi 0, %s136
      %s140 = sphi 0, %s139
      %s156 = sphi 0, %s140
      %s164 = sphi 0, %s166
      %s167 = sphi 0, %s164
      %s168 = sphi 0, %s167
      %s184 = sphi 0, %s168
    $region4: #{double_conv_forward.4} parent=1 // loop_header_branch
      %26 = sbr.rel (%p24) target = $region8
    $region5: #{double_conv_forward.4} parent=1 // loop_body
      %s28 = ssub.s32 %s23, 1
      %s29 = ssub.s32 %s23, 2
      %s36 = sadd.s32 1, %s31
      %p37 = scmp.ge.s32.totalorder %s36, 1
      %s38 = scalar_select %p37, 0, %s36
      %s39 = sadd.s32 1, %s30
      %s40 = scalar_select %p37, %s39, %s30
      %p41 = scmp.ge.s32.totalorder %s40, 2
      %s42 = scalar_select %p41, 0, %s40
      %s43 = ssub.s32 %s30, %s42
      %p44 = scmp.eq.s32.totalorder %s43, 0
      %s46 = sadd.s32 %s45, 1
      %s47 = scalar_select %p44, %s45, %s46
      %p50 = pneg %p44
      %p51 = scmp.eq.s32.totalorder %s23, 1
      %p52 = por %p50, %p51
      %p53 = scmp.ne.s32.totalorder %s45, %s48
      %p54 = scmp.eq.s32.totalorder %s23, 0
      %p55 = por %p53, %p54
      %p56 = scmp.ne.s32.totalorder %s45, %s48
      %p57 = scmp.eq.s32.totalorder %s28, 1
      %p58 = por %p56, %p57
      %p59 = scmp.ne.s32.totalorder %s48, %s49
      %p60 = scmp.eq.s32.totalorder %s28, 0
      %p61 = por %p59, %p60
      %p62 = scmp.ne.s32.totalorder %s48, %s49
      %p63 = scmp.eq.s32.totalorder %s29, 1
      %p64 = por %p62, %p63
      %p66 = scmp.ne.s32.totalorder %s49, %s65
      %p67 = scmp.eq.s32.totalorder %s29, 0
      %p68 = por %p66, %p67
      %s70 = sadd.s32 %s69, 1
      %p73 = scmp.eq.s32.totalorder %s23, 1
      %p74 = scmp.ne.s32.totalorder %s69, %s71
      %p75 = scmp.eq.s32.totalorder %s23, 0
      %p76 = por %p74, %p75
      %p77 = scmp.ne.s32.totalorder %s69, %s71
      %p78 = scmp.eq.s32.totalorder %s28, 1
      %p79 = por %p77, %p78
      %p80 = scmp.ne.s32.totalorder %s71, %s72
      %p81 = scmp.eq.s32.totalorder %s28, 0
      %p82 = por %p80, %p81
      %p83 = scmp.ne.s32.totalorder %s71, %s72
      %p84 = scmp.eq.s32.totalorder %s29, 1
      %p85 = por %p83, %p84
      %p87 = scmp.ne.s32.totalorder %s72, %s86
      %p88 = scmp.eq.s32.totalorder %s29, 0
      %p89 = por %p87, %p88
      %s91 = sadd.s32 %s90, 1
      %p94 = scmp.eq.s32.totalorder %s23, 1
      %p95 = scmp.ne.s32.totalorder %s90, %s92
      %p96 = scmp.eq.s32.totalorder %s23, 0
      %p97 = por %p95, %p96
      %p98 = scmp.ne.s32.totalorder %s90, %s92
      %p99 = scmp.eq.s32.totalorder %s28, 1
      %p100 = por %p98, %p99
      %p101 = scmp.ne.s32.totalorder %s92, %s93
      %p102 = scmp.eq.s32.totalorder %s28, 0
      %p103 = por %p101, %p102
      %p104 = scmp.ne.s32.totalorder %s92, %s93
      %p105 = scmp.eq.s32.totalorder %s29, 1
      %p106 = por %p104, %p105
      %p108 = scmp.ne.s32.totalorder %s93, %s107
      %p109 = scmp.eq.s32.totalorder %s29, 0
      %p110 = por %p108, %p109
      %s112 = sadd.s32 %s111, 1
      %p115 = scmp.eq.s32.totalorder %s23, 1
      %p116 = scmp.ne.s32.totalorder %s111, %s113
      %p117 = scmp.eq.s32.totalorder %s23, 0
      %p118 = por %p116, %p117
      %p119 = scmp.ne.s32.totalorder %s111, %s113
      %p120 = scmp.eq.s32.totalorder %s28, 1
      %p121 = por %p119, %p120
      %p122 = scmp.ne.s32.totalorder %s113, %s114
      %p123 = scmp.eq.s32.totalorder %s28, 0
      %p124 = por %p122, %p123
      %p125 = scmp.ne.s32.totalorder %s113, %s114
      %p126 = scmp.eq.s32.totalorder %s29, 1
      %p127 = por %p125, %p126
      %p129 = scmp.ne.s32.totalorder %s114, %s128
      %p130 = scmp.eq.s32.totalorder %s29, 0
      %p131 = por %p129, %p130
      %s132 = ssub.s32 %s30, %s42
      %s133 = ssub.s32 %s31, %s38
      %s134 = sor.u32 %s132, %s133
      %p135 = scmp.eq.s32.totalorder %s134, 0
      %s137 = sadd.s32 %s136, 1
      %s138 = scalar_select %p135, %s136, %s137
      %p141 = pneg %p135
      %p142 = scmp.eq.s32.totalorder %s23, 1
      %p143 = por %p141, %p142
      %p144 = scmp.ne.s32.totalorder %s136, %s139
      %p145 = scmp.eq.s32.totalorder %s23, 0
      %p146 = por %p144, %p145
      %p147 = scmp.ne.s32.totalorder %s136, %s139
      %p148 = scmp.eq.s32.totalorder %s28, 1
      %p149 = por %p147, %p148
      %p150 = scmp.ne.s32.totalorder %s139, %s140
      %p151 = scmp.eq.s32.totalorder %s28, 0
      %p152 = por %p150, %p151
      %p153 = scmp.ne.s32.totalorder %s139, %s140
      %p154 = scmp.eq.s32.totalorder %s29, 1
      %p155 = por %p153, %p154
      %p157 = scmp.ne.s32.totalorder %s140, %s156
      %p158 = scmp.eq.s32.totalorder %s29, 0
      %p159 = por %p157, %p158
      %s160 = ssub.s32 %s30, %s42
      %s161 = ssub.s32 %s31, %s38
      %s162 = sor.u32 %s160, %s161
      %p163 = scmp.eq.s32.totalorder %s162, 0
      %s165 = sadd.s32 %s164, 1
      %s166 = scalar_select %p163, %s164, %s165
      %p169 = pneg %p163
      %p170 = scmp.eq.s32.totalorder %s23, 1
      %p171 = por %p169, %p170
      %p172 = scmp.ne.s32.totalorder %s164, %s167
      %p173 = scmp.eq.s32.totalorder %s23, 0
      %p174 = por %p172, %p173
      %p175 = scmp.ne.s32.totalorder %s164, %s167
      %p176 = scmp.eq.s32.totalorder %s28, 1
      %p177 = por %p175, %p176
      %p178 = scmp.ne.s32.totalorder %s167, %s168
      %p179 = scmp.eq.s32.totalorder %s28, 0
      %p180 = por %p178, %p179
      %p181 = scmp.ne.s32.totalorder %s167, %s168
      %p182 = scmp.eq.s32.totalorder %s29, 1
      %p183 = por %p181, %p182
      %p185 = scmp.ne.s32.totalorder %s168, %s184
      %p186 = scmp.eq.s32.totalorder %s29, 0
      %p187 = por %p185, %p186
      %p188 = scmp.le.s32.totalorder 1, %s23
      %p189 = scmp.lt.s32.totalorder %s23, 3
      %p190 = pnand %p188, %p189
      %p191 = pneg %p190
      // Predicated region
      $region9: #{double_conv_forward.4} parent=5 // pred_check
        _
      $region10: #{double_conv_forward.4} parent=5 // pred_check_branch
        %193 = sbr.rel (%p190) target = $region12
      $region11: #{double_conv_forward.4} parent=5 // pred_region
        %s194 = ssub.s32 %s23, 1
        // Predicated region
        $region13: #{double_conv_forward.4} parent=11 // pred_check
          %p195 = pneg %p82
        $region14: #{double_conv_forward.4} parent=11 // pred_check_branch
          %197 = sbr.rel (%p195) target = $region16
        $region15: #{double_conv_forward.4} parent=11 // pred_region
          %s199 = ssub.s32 16, 16
          %200 = vsyncadd [#allocation7], %s199
          %s202 = sshll.u32 [#allocation6], 4
          %s203 = int_to_ptr.vmem [resolvable:$true] %s202
          %205 = dma.hbm_to_vmem [thread:$0]  %s1, 16, %s203, [#allocation7]
        $region16: #{double_conv_forward.4} parent=11 // pred_fallthru
          _
        // Predicated region
        $region17: #{double_conv_forward.4} parent=11 // pred_check
          %p206 = pneg %p103
        $region18: #{double_conv_forward.4} parent=11 // pred_check_branch
          %208 = sbr.rel (%p206) target = $region20
        $region19: #{double_conv_forward.4} parent=11 // pred_region
          %s210 = ssub.s32 16, 16
          %211 = vsyncadd [#allocation7], %s210
          %s213 = sshll.u32 [#allocation8], 4
          %s214 = int_to_ptr.vmem [resolvable:$true] %s213
          %216 = dma.hbm_to_vmem [thread:$0]  %s2, 16, %s214, [#allocation7]
        $region20: #{double_conv_forward.4} parent=11 // pred_fallthru
          _
        // Predicated region
        $region21: #{double_conv_forward.4} parent=11 // pred_check
          %p217 = pneg %p124
        $region22: #{double_conv_forward.4} parent=11 // pred_check_branch
          %219 = sbr.rel (%p217) target = $region24
        $region23: #{double_conv_forward.4} parent=11 // pred_region
          %s221 = ssub.s32 1152, 1152
          %222 = vsyncadd [#allocation10], %s221
          %s223 = sshll.u32 [#allocation9], 4
          %s224 = int_to_ptr.vmem [resolvable:$true] %s223
          %229 = dma.hbm_to_vmem [thread:$0]  %s3, 1152, %s224, [#allocation10], 128, 128, 8
        $region24: #{double_conv_forward.4} parent=11 // pred_fallthru
          _
      $region12: #{double_conv_forward.4} parent=5 // pred_fallthru
        _
      %p230 = scmp.lt.s32.totalorder %s23, 2
      // Predicated region
      $region25: #{double_conv_forward.4} parent=5 // pred_check
        %p231 = pneg %p230
      $region26: #{double_conv_forward.4} parent=5 // pred_check_branch
        %233 = sbr.rel (%p231) target = $region28
      $region27: #{double_conv_forward.4} parent=5 // pred_region
        // Predicated region
        $region29: #{double_conv_forward.4} parent=27 // pred_check
          %p234 = pneg %p55
        $region30: #{double_conv_forward.4} parent=27 // pred_check_branch
          %236 = sbr.rel (%p234) target = $region32
        $region31: #{double_conv_forward.4} parent=27 // pred_region
          %s237 = sand.u32 %s45, 1
          %s238 = scalar_lea.sflag [#allocation4], %s237
          %s239 = sand.u32 %s45, 1
          %s240 = smul.addr %s239, 256
          %s241 = scalar_lea.vmem [#allocation3], %s240
          %s243 = ssub.s32 4096, 4096
          %244 = vsyncadd %s238, %s243
          %s245 = smul.addr %s30, 32
          %s246 = smul.addr %s245, 128
          %s247 = scalar_lea.hbm %s0, %s246
          %s248 = sshll.u32 %s241, 4
          %s249 = int_to_ptr.vmem [resolvable:$true] %s248
          %254 = dma.hbm_to_vmem [thread:$0]  %s247, 4096, %s249, %s238, 128, 128, 8
        $region32: #{double_conv_forward.4} parent=27 // pred_fallthru
          _
      $region28: #{double_conv_forward.4} parent=5 // pred_fallthru
        _
      %p255 = scmp.le.s32.totalorder 1, %s23
      %p256 = scmp.lt.s32.totalorder %s23, 3
      %p257 = pnand %p255, %p256
      %p258 = pneg %p257
      // Predicated region
      $region33: #{double_conv_forward.4} parent=5 // pred_check
        _
      $region34: #{double_conv_forward.4} parent=5 // pred_check_branch
        %260 = sbr.rel (%p257) target = $region36
      $region35: #{double_conv_forward.4} parent=5 // pred_region
        %s261 = ssub.s32 %s23, 1
        %s262 = sand.u32 %s48, 1
        %s263 = scalar_lea.sflag [#allocation4], %s262
        %s264 = sand.u32 %s48, 1
        %s265 = smul.addr %s264, 256
        %s266 = scalar_lea.vmem [#allocation3], %s265
        // Predicated region
        $region37: #{double_conv_forward.4} parent=35 // pred_check
          %p267 = pneg %p61
        $region38: #{double_conv_forward.4} parent=35 // pred_check_branch
          %269 = sbr.rel (%p267) target = $region40
        $region39: #{double_conv_forward.4} parent=35 // pred_region
          %270 = dma.done %s263, 4096
        $region40: #{double_conv_forward.4} parent=35 // pred_fallthru
          _
        // Predicated region
        $region41: #{double_conv_forward.4} parent=35 // pred_check
          %p271 = pneg %p82
        $region42: #{double_conv_forward.4} parent=35 // pred_check_branch
          %273 = sbr.rel (%p271) target = $region44
        $region43: #{double_conv_forward.4} parent=35 // pred_region
          %274 = dma.done [#allocation7], 16
        $region44: #{double_conv_forward.4} parent=35 // pred_fallthru
          _
        // Predicated region
        $region45: #{double_conv_forward.4} parent=35 // pred_check
          %p275 = pneg %p103
        $region46: #{double_conv_forward.4} parent=35 // pred_check_branch
          %277 = sbr.rel (%p275) target = $region48
        $region47: #{double_conv_forward.4} parent=35 // pred_region
          %278 = dma.done [#allocation7], 16
        $region48: #{double_conv_forward.4} parent=35 // pred_fallthru
          _
        // Predicated region
        $region49: #{double_conv_forward.4} parent=35 // pred_check
          %p279 = pneg %p124
        $region50: #{double_conv_forward.4} parent=35 // pred_check_branch
          %281 = sbr.rel (%p279) target = $region52
        $region51: #{double_conv_forward.4} parent=35 // pred_region
          %282 = dma.done [#allocation10], 1152
        $region52: #{double_conv_forward.4} parent=35 // pred_fallthru
          _
        %s283 = sand.u32 %s48, 1
        %s284 = scalar_lea.sflag [#allocation4], %s283
        %s285 = sand.u32 %s48, 1
        %s286 = smul.addr %s285, 256
        %s287 = scalar_lea.vmem [#allocation3], %s286
        %p288 = pneg %p61
        %p289 = pneg %p58
        %p290 = pneg %p82
        %p291 = pneg %p79
        %p292 = pneg %p103
        %p293 = pneg %p100
        %p294 = pneg %p124
        %p295 = pneg %p121
        %p296 = pneg %p152
        %p297 = pneg %p149
        %s298 = sand.u32 %s139, 1
        %s299 = scalar_lea.sflag [#allocation5], %s298
        %s300 = sand.u32 %s139, 1
        %s301 = smul.addr %s300, 256
        %s302 = scalar_lea.vmem [#allocation11], %s301
        %p303 = pneg %p180
        %p304 = pneg %p177
        %s305 = sand.u32 %s167, 1
        %s306 = scalar_lea.sflag [#allocation13], %s305
        %s307 = sand.u32 %s167, 1
        %s308 = smul.addr %s307, 2
        %s309 = scalar_lea.vmem [#allocation12], %s308
        %s310 = smul.u32 16, %s33
        %s311 = smul.u32 %s33, 16
        %vm312 = vcmask 64512
        %313 = vst.msk [vmem:[#allocation2] sm:$0xff] %vm312, 0.0
        %314 = vst.msk [vmem:[#allocation2 + $0x8] sm:$0xff] %vm312, 0.0
        %vm315 = vcmask 58368
        %316 = vst.msk [vmem:[#allocation2 + $0x10] sm:$0x3] %vm315, 0.0
        %317 = vst.msk [vmem:[#allocation2 + $0x18] sm:$0xff] %vm312, 0.0
        %318 = vst.msk [vmem:[#allocation2 + $0x20] sm:$0xff] %vm312, 0.0
        %319 = vst.msk [vmem:[#allocation2 + $0x28] sm:$0x3] %vm315, 0.0
        %320 = vst.msk [vmem:[#allocation2 + $0x30] sm:$0xff] %vm312, 0.0
        %321 = vst.msk [vmem:[#allocation2 + $0x38] sm:$0xff] %vm312, 0.0
        %322 = vst.msk [vmem:[#allocation2 + $0x40] sm:$0x3] %vm315, 0.0
        %323 = vst.msk [vmem:[#allocation2 + $0x48] sm:$0xff] %vm312, 0.0
        %324 = vst.msk [vmem:[#allocation2 + $0x50] sm:$0xff] %vm312, 0.0
        %325 = vst.msk [vmem:[#allocation2 + $0x58] sm:$0x3] %vm315, 0.0
        %326 = vst.msk [vmem:[#allocation2 + $0x60] sm:$0xff] %vm312, 0.0
        %327 = vst.msk [vmem:[#allocation2 + $0x68] sm:$0xff] %vm312, 0.0
        %328 = vst.msk [vmem:[#allocation2 + $0x70] sm:$0x3] %vm315, 0.0
        %329 = vst.msk [vmem:[#allocation2 + $0x78] sm:$0xff] %vm312, 0.0
        %330 = vst.msk [vmem:[#allocation2 + $0x80] sm:$0xff] %vm312, 0.0
        %331 = vst.msk [vmem:[#allocation2 + $0x88] sm:$0x3] %vm315, 0.0
        %332 = vst.msk [vmem:[#allocation2 + $0x90] sm:$0xff] %vm312, 0.0
        %333 = vst.msk [vmem:[#allocation2 + $0x98] sm:$0xff] %vm312, 0.0
        %334 = vst.msk [vmem:[#allocation2 + $0xa0] sm:$0x3] %vm315, 0.0
        %335 = vst.msk [vmem:[#allocation2 + $0xa8] sm:$0xff] %vm312, 0.0
        %336 = vst.msk [vmem:[#allocation2 + $0xb0] sm:$0xff] %vm312, 0.0
        %337 = vst.msk [vmem:[#allocation2 + $0xb8] sm:$0x3] %vm315, 0.0
        %338 = vst.msk [vmem:[#allocation2 + $0xc0] sm:$0xff] %vm312, 0.0
        %339 = vst.msk [vmem:[#allocation2 + $0xc8] sm:$0xff] %vm312, 0.0
        %340 = vst.msk [vmem:[#allocation2 + $0xd0] sm:$0x3] %vm315, 0.0
        %341 = vst.msk [vmem:[#allocation2 + $0xd8] sm:$0xff] %vm312, 0.0
        %342 = vst.msk [vmem:[#allocation2 + $0xe0] sm:$0xff] %vm312, 0.0
        %343 = vst.msk [vmem:[#allocation2 + $0xe8] sm:$0x3] %vm315, 0.0
        %344 = vst.msk [vmem:[#allocation2 + $0xf0] sm:$0xff] %vm312, 0.0
        %345 = vst.msk [vmem:[#allocation2 + $0xf8] sm:$0xff] %vm312, 0.0
        %346 = vst.msk [vmem:[#allocation2 + $0x100] sm:$0x3] %vm315, 0.0
        %347 = vst.msk [vmem:[#allocation2 + $0x108] sm:$0xff] %vm312, 0.0
        %348 = vst.msk [vmem:[#allocation2 + $0x110] sm:$0xff] %vm312, 0.0
        %349 = vst.msk [vmem:[#allocation2 + $0x118] sm:$0x3] %vm315, 0.0
        %350 = vst.msk [vmem:[#allocation2 + $0x120] sm:$0xff] %vm312, 0.0
        %351 = vst.msk [vmem:[#allocation2 + $0x128] sm:$0xff] %vm312, 0.0
        %352 = vst.msk [vmem:[#allocation2 + $0x130] sm:$0x3] %vm315, 0.0
        %353 = vst.msk [vmem:[#allocation2 + $0x138] sm:$0xff] %vm312, 0.0
        %354 = vst.msk [vmem:[#allocation2 + $0x140] sm:$0xff] %vm312, 0.0
        %355 = vst.msk [vmem:[#allocation2 + $0x148] sm:$0x3] %vm315, 0.0
        %356 = vst.msk [vmem:[#allocation2 + $0x150] sm:$0xff] %vm312, 0.0
        %357 = vst.msk [vmem:[#allocation2 + $0x158] sm:$0xff] %vm312, 0.0
        %358 = vst.msk [vmem:[#allocation2 + $0x160] sm:$0x3] %vm315, 0.0
        %359 = vst.msk [vmem:[#allocation2 + $0x168] sm:$0xff] %vm312, 0.0
        %360 = vst.msk [vmem:[#allocation2 + $0x170] sm:$0xff] %vm312, 0.0
        %361 = vst.msk [vmem:[#allocation2 + $0x178] sm:$0x3] %vm315, 0.0
        %362 = vst.msk [vmem:[#allocation2 + $0x180] sm:$0xff] %vm312, 0.0
        %363 = vst.msk [vmem:[#allocation2 + $0x188] sm:$0xff] %vm312, 0.0
        %364 = vst.msk [vmem:[#allocation2 + $0x190] sm:$0x3] %vm315, 0.0
        %365 = vst.msk [vmem:[#allocation2 + $0x198] sm:$0xff] %vm312, 0.0
        %366 = vst.msk [vmem:[#allocation2 + $0x1a0] sm:$0xff] %vm312, 0.0
        %367 = vst.msk [vmem:[#allocation2 + $0x1a8] sm:$0x3] %vm315, 0.0
        %s368 = smul.u32 %s311, 16
        %s369 = scalar_lea.vmem %s266, %s368 [#allocation3]
        %v370 = vld [vmem:[%s369] sm:$0xff]
        %v371 = vld [vmem:[%s369 + $0x8] sm:$0xff]
        %v372 = vld [vmem:[%s369 + $0x10] sm:$0xff]
        %v373 = vld [vmem:[%s369 + $0x18] sm:$0xff]
        %v374 = vld [vmem:[%s369 + $0x20] sm:$0xff]
        %v375 = vld [vmem:[%s369 + $0x28] sm:$0xff]
        %v376 = vld [vmem:[%s369 + $0x30] sm:$0xff]
        %v377 = vld [vmem:[%s369 + $0x38] sm:$0xff]
        %v378 = vld [vmem:[%s369 + $0x40] sm:$0xff]
        %v379 = vld [vmem:[%s369 + $0x48] sm:$0xff]
        %v380 = vld [vmem:[%s369 + $0x50] sm:$0xff]
        %v381 = vld [vmem:[%s369 + $0x58] sm:$0xff]
        %v382 = vld [vmem:[%s369 + $0x60] sm:$0xff]
        %v383 = vld [vmem:[%s369 + $0x68] sm:$0xff]
        %v384 = vld [vmem:[%s369 + $0x70] sm:$0xff]
        %v385 = vld [vmem:[%s369 + $0x78] sm:$0xff]
        %v386 = vld [vmem:[%s369 + $0x80] sm:$0xff]
        %v387 = vld [vmem:[%s369 + $0x88] sm:$0xff]
        %v388 = vld [vmem:[%s369 + $0x90] sm:$0xff]
        %v389 = vld [vmem:[%s369 + $0x98] sm:$0xff]
        %v390 = vld [vmem:[%s369 + $0xa0] sm:$0xff]
        %v391 = vld [vmem:[%s369 + $0xa8] sm:$0xff]
        %v392 = vld [vmem:[%s369 + $0xb0] sm:$0xff]
        %v393 = vld [vmem:[%s369 + $0xb8] sm:$0xff]
        %v394 = vld [vmem:[%s369 + $0xc0] sm:$0xff]
        %v395 = vld [vmem:[%s369 + $0xc8] sm:$0xff]
        %v396 = vld [vmem:[%s369 + $0xd0] sm:$0xff]
        %v397 = vld [vmem:[%s369 + $0xd8] sm:$0xff]
        %v398 = vld [vmem:[%s369 + $0xe0] sm:$0xff]
        %v399 = vld [vmem:[%s369 + $0xe8] sm:$0xff]
        %v400 = vld [vmem:[%s369 + $0xf0] sm:$0xff]
        %v401 = vld [vmem:[%s369 + $0xf8] sm:$0xff]
        %v402 = vld [vmem:[#allocation6] sm:$0x1]
        %v404 = vlaneseq
        %v405 = vshrl.u32 %v404, 7
        %v406 = vsub.s32 0, %v405
        %v407 = vrot.slane %v402, %v406
        %v409 = vmul.f32 %v370, %v407
        %v410 = vmul.f32 %v371, %v407
        %v411 = vmul.f32 %v372, %v407
        %v412 = vmul.f32 %v373, %v407
        %v413 = vmul.f32 %v374, %v407
        %v414 = vmul.f32 %v375, %v407
        %v415 = vmul.f32 %v376, %v407
        %v416 = vmul.f32 %v377, %v407
        %v417 = vmul.f32 %v378, %v407
        %v418 = vmul.f32 %v379, %v407
        %v419 = vmul.f32 %v380, %v407
        %v420 = vmul.f32 %v381, %v407
        %v421 = vmul.f32 %v382, %v407
        %v422 = vmul.f32 %v383, %v407
        %v423 = vmul.f32 %v384, %v407
        %v424 = vmul.f32 %v385, %v407
        %v425 = vmul.f32 %v386, %v407
        %v426 = vmul.f32 %v387, %v407
        %v427 = vmul.f32 %v388, %v407
        %v428 = vmul.f32 %v389, %v407
        %v429 = vmul.f32 %v390, %v407
        %v430 = vmul.f32 %v391, %v407
        %v431 = vmul.f32 %v392, %v407
        %v432 = vmul.f32 %v393, %v407
        %v433 = vmul.f32 %v394, %v407
        %v434 = vmul.f32 %v395, %v407
        %v435 = vmul.f32 %v396, %v407
        %v436 = vmul.f32 %v397, %v407
        %v437 = vmul.f32 %v398, %v407
        %v438 = vmul.f32 %v399, %v407
        %v439 = vmul.f32 %v400, %v407
        %v440 = vmul.f32 %v401, %v407
        %v441 = vld [vmem:[#allocation8] sm:$0x1]
        %v443 = vlaneseq
        %v444 = vshrl.u32 %v443, 7
        %v445 = vsub.s32 0, %v444
        %v446 = vrot.slane %v441, %v445
        %v448 = vadd.f32 %v409, %v446
        %v449 = vadd.f32 %v410, %v446
        %v450 = vadd.f32 %v411, %v446
        %v451 = vadd.f32 %v412, %v446
        %v452 = vadd.f32 %v413, %v446
        %v453 = vadd.f32 %v414, %v446
        %v454 = vadd.f32 %v415, %v446
        %v455 = vadd.f32 %v416, %v446
        %v456 = vadd.f32 %v417, %v446
        %v457 = vadd.f32 %v418, %v446
        %v458 = vadd.f32 %v419, %v446
        %v459 = vadd.f32 %v420, %v446
        %v460 = vadd.f32 %v421, %v446
        %v461 = vadd.f32 %v422, %v446
        %v462 = vadd.f32 %v423, %v446
        %v463 = vadd.f32 %v424, %v446
        %v464 = vadd.f32 %v425, %v446
        %v465 = vadd.f32 %v426, %v446
        %v466 = vadd.f32 %v427, %v446
        %v467 = vadd.f32 %v428, %v446
        %v468 = vadd.f32 %v429, %v446
        %v469 = vadd.f32 %v430, %v446
        %v470 = vadd.f32 %v431, %v446
        %v471 = vadd.f32 %v432, %v446
        %v472 = vadd.f32 %v433, %v446
        %v473 = vadd.f32 %v434, %v446
        %v474 = vadd.f32 %v435, %v446
        %v475 = vadd.f32 %v436, %v446
        %v476 = vadd.f32 %v437, %v446
        %v477 = vadd.f32 %v438, %v446
        %v478 = vadd.f32 %v439, %v446
        %v479 = vadd.f32 %v440, %v446
        %vm480 = vcmp.gt.f32.partialorder %v448, 0.0
        %vm481 = vcmp.gt.f32.partialorder %v449, 0.0
        %vm482 = vcmp.gt.f32.partialorder %v450, 0.0
        %vm483 = vcmp.gt.f32.partialorder %v451, 0.0
        %vm484 = vcmp.gt.f32.partialorder %v452, 0.0
        %vm485 = vcmp.gt.f32.partialorder %v453, 0.0
        %vm486 = vcmp.gt.f32.partialorder %v454, 0.0
        %vm487 = vcmp.gt.f32.partialorder %v455, 0.0
        %vm488 = vcmp.gt.f32.partialorder %v456, 0.0
        %vm489 = vcmp.gt.f32.partialorder %v457, 0.0
        %vm490 = vcmp.gt.f32.partialorder %v458, 0.0
        %vm491 = vcmp.gt.f32.partialorder %v459, 0.0
        %vm492 = vcmp.gt.f32.partialorder %v460, 0.0
        %vm493 = vcmp.gt.f32.partialorder %v461, 0.0
        %vm494 = vcmp.gt.f32.partialorder %v462, 0.0
        %vm495 = vcmp.gt.f32.partialorder %v463, 0.0
        %vm496 = vcmp.gt.f32.partialorder %v464, 0.0
        %vm497 = vcmp.gt.f32.partialorder %v465, 0.0
        %vm498 = vcmp.gt.f32.partialorder %v466, 0.0
        %vm499 = vcmp.gt.f32.partialorder %v467, 0.0
        %vm500 = vcmp.gt.f32.partialorder %v468, 0.0
        %vm501 = vcmp.gt.f32.partialorder %v469, 0.0
        %vm502 = vcmp.gt.f32.partialorder %v470, 0.0
        %vm503 = vcmp.gt.f32.partialorder %v471, 0.0
        %vm504 = vcmp.gt.f32.partialorder %v472, 0.0
        %vm505 = vcmp.gt.f32.partialorder %v473, 0.0
        %vm506 = vcmp.gt.f32.partialorder %v474, 0.0
        %vm507 = vcmp.gt.f32.partialorder %v475, 0.0
        %vm508 = vcmp.gt.f32.partialorder %v476, 0.0
        %vm509 = vcmp.gt.f32.partialorder %v477, 0.0
        %vm510 = vcmp.gt.f32.partialorder %v478, 0.0
        %vm511 = vcmp.gt.f32.partialorder %v479, 0.0
        %v512 = vmul.f32 %v448, 0.2
        %v513 = vmul.f32 %v449, 0.2
        %v514 = vmul.f32 %v450, 0.2
        %v515 = vmul.f32 %v451, 0.2
        %v516 = vmul.f32 %v452, 0.2
        %v517 = vmul.f32 %v453, 0.2
        %v518 = vmul.f32 %v454, 0.2
        %v519 = vmul.f32 %v455, 0.2
        %v520 = vmul.f32 %v456, 0.2
        %v521 = vmul.f32 %v457, 0.2
        %v522 = vmul.f32 %v458, 0.2
        %v523 = vmul.f32 %v459, 0.2
        %v524 = vmul.f32 %v460, 0.2
        %v525 = vmul.f32 %v461, 0.2
        %v526 = vmul.f32 %v462, 0.2
        %v527 = vmul.f32 %v463, 0.2
        %v528 = vmul.f32 %v464, 0.2
        %v529 = vmul.f32 %v465, 0.2
        %v530 = vmul.f32 %v466, 0.2
        %v531 = vmul.f32 %v467, 0.2
        %v532 = vmul.f32 %v468, 0.2
        %v533 = vmul.f32 %v469, 0.2
        %v534 = vmul.f32 %v470, 0.2
        %v535 = vmul.f32 %v471, 0.2
        %v536 = vmul.f32 %v472, 0.2
        %v537 = vmul.f32 %v473, 0.2
        %v538 = vmul.f32 %v474, 0.2
        %v539 = vmul.f32 %v475, 0.2
        %v540 = vmul.f32 %v476, 0.2
        %v541 = vmul.f32 %v477, 0.2
        %v542 = vmul.f32 %v478, 0.2
        %v543 = vmul.f32 %v479, 0.2
        %v544 = vsel %vm480, %v448, %v512
        %v545 = vsel %vm481, %v449, %v513
        %v546 = vsel %vm482, %v450, %v514
        %v547 = vsel %vm483, %v451, %v515
        %v548 = vsel %vm484, %v452, %v516
        %v549 = vsel %vm485, %v453, %v517
        %v550 = vsel %vm486, %v454, %v518
        %v551 = vsel %vm487, %v455, %v519
        %v552 = vsel %vm488, %v456, %v520
        %v553 = vsel %vm489, %v457, %v521
        %v554 = vsel %vm490, %v458, %v522
        %v555 = vsel %vm491, %v459, %v523
        %v556 = vsel %vm492, %v460, %v524
        %v557 = vsel %vm493, %v461, %v525
        %v558 = vsel %vm494, %v462, %v526
        %v559 = vsel %vm495, %v463, %v527
        %v560 = vsel %vm496, %v464, %v528
        %v561 = vsel %vm497, %v465, %v529
        %v562 = vsel %vm498, %v466, %v530
        %v563 = vsel %vm499, %v467, %v531
        %v564 = vsel %vm500, %v468, %v532
        %v565 = vsel %vm501, %v469, %v533
        %v566 = vsel %vm502, %v470, %v534
        %v567 = vsel %vm503, %v471, %v535
        %v568 = vsel %vm504, %v472, %v536
        %v569 = vsel %vm505, %v473, %v537
        %v570 = vsel %vm506, %v474, %v538
        %v571 = vsel %vm507, %v475, %v539
        %v572 = vsel %vm508, %v476, %v540
        %v573 = vsel %vm509, %v477, %v541
        %v574 = vsel %vm510, %v478, %v542
        %v575 = vsel %vm511, %v479, %v543
        %s576 = scalar_lea.vmem [#allocation2], 24
        %577 = vst.msk [vmem:[%s576 + $0x1] sm:$0xff] %vm312, %v544
        %578 = vst.msk [vmem:[%s576 + $0x9] sm:$0xff] %vm312, %v545
        %579 = vst.msk [vmem:[%s576 + $0x19] sm:$0xff] %vm312, %v546
        %580 = vst.msk [vmem:[%s576 + $0x21] sm:$0xff] %vm312, %v547
        %581 = vst.msk [vmem:[%s576 + $0x31] sm:$0xff] %vm312, %v548
        %582 = vst.msk [vmem:[%s576 + $0x39] sm:$0xff] %vm312, %v549
        %583 = vst.msk [vmem:[%s576 + $0x49] sm:$0xff] %vm312, %v550
        %584 = vst.msk [vmem:[%s576 + $0x51] sm:$0xff] %vm312, %v551
        %585 = vst.msk [vmem:[%s576 + $0x61] sm:$0xff] %vm312, %v552
        %586 = vst.msk [vmem:[%s576 + $0x69] sm:$0xff] %vm312, %v553
        %587 = vst.msk [vmem:[%s576 + $0x79] sm:$0xff] %vm312, %v554
        %588 = vst.msk [vmem:[%s576 + $0x81] sm:$0xff] %vm312, %v555
        %589 = vst.msk [vmem:[%s576 + $0x91] sm:$0xff] %vm312, %v556
        %590 = vst.msk [vmem:[%s576 + $0x99] sm:$0xff] %vm312, %v557
        %591 = vst.msk [vmem:[%s576 + $0xa9] sm:$0xff] %vm312, %v558
        %592 = vst.msk [vmem:[%s576 + $0xb1] sm:$0xff] %vm312, %v559
        %593 = vst.msk [vmem:[%s576 + $0xc1] sm:$0xff] %vm312, %v560
        %594 = vst.msk [vmem:[%s576 + $0xc9] sm:$0xff] %vm312, %v561
        %595 = vst.msk [vmem:[%s576 + $0xd9] sm:$0xff] %vm312, %v562
        %596 = vst.msk [vmem:[%s576 + $0xe1] sm:$0xff] %vm312, %v563
        %597 = vst.msk [vmem:[%s576 + $0xf1] sm:$0xff] %vm312, %v564
        %598 = vst.msk [vmem:[%s576 + $0xf9] sm:$0xff] %vm312, %v565
        %599 = vst.msk [vmem:[%s576 + $0x109] sm:$0xff] %vm312, %v566
        %600 = vst.msk [vmem:[%s576 + $0x111] sm:$0xff] %vm312, %v567
        %601 = vst.msk [vmem:[%s576 + $0x121] sm:$0xff] %vm312, %v568
        %602 = vst.msk [vmem:[%s576 + $0x129] sm:$0xff] %vm312, %v569
        %603 = vst.msk [vmem:[%s576 + $0x139] sm:$0xff] %vm312, %v570
        %604 = vst.msk [vmem:[%s576 + $0x141] sm:$0xff] %vm312, %v571
        %605 = vst.msk [vmem:[%s576 + $0x151] sm:$0xff] %vm312, %v572
        %606 = vst.msk [vmem:[%s576 + $0x159] sm:$0xff] %vm312, %v573
        %607 = vst.msk [vmem:[%s576 + $0x169] sm:$0xff] %vm312, %v574
        %608 = vst.msk [vmem:[%s576 + $0x171] sm:$0xff] %vm312, %v575
        %p609 = scmp.gt.s32.totalorder %s33, 0
        // Predicated region
        $region53: #{double_conv_forward.4} parent=35 // pred_check
          %p610 = pneg %p609
        $region54: #{double_conv_forward.4} parent=35 // pred_check_branch
          %612 = sbr.rel (%p610) target = $region56
        $region55: #{double_conv_forward.4} parent=35 // pred_region
          %s613 = ssub.s32 %s311, 1
          %s614 = smul.u32 %s613, 16
          %s615 = scalar_lea.vmem %s266, %s614 [#allocation3]
          %v616 = vld [vmem:[%s615] sm:$0xff]
          %v617 = vld [vmem:[%s615 + $0x8] sm:$0xff]
          %v618 = vld [vmem:[#allocation6] sm:$0x1]
          %v620 = vlaneseq
          %v621 = vshrl.u32 %v620, 7
          %v622 = vsub.s32 0, %v621
          %v623 = vrot.slane %v618, %v622
          %v625 = vmul.f32 %v616, %v623
          %v626 = vmul.f32 %v617, %v623
          %v627 = vld [vmem:[#allocation8] sm:$0x1]
          %v629 = vlaneseq
          %v630 = vshrl.u32 %v629, 7
          %v631 = vsub.s32 0, %v630
          %v632 = vrot.slane %v627, %v631
          %v634 = vadd.f32 %v625, %v632
          %v635 = vadd.f32 %v626, %v632
          %vm636 = vcmp.gt.f32.partialorder %v634, 0.0
          %vm637 = vcmp.gt.f32.partialorder %v635, 0.0
          %v638 = vmul.f32 %v634, 0.2
          %v639 = vmul.f32 %v635, 0.2
          %v640 = vsel %vm636, %v634, %v638
          %v641 = vsel %vm637, %v635, %v639
          %642 = vst.msk [vmem:[#allocation2 + $0x1] sm:$0xff] %vm312, %v640
          %643 = vst.msk [vmem:[#allocation2 + $0x9] sm:$0xff] %vm312, %v641
        $region56: #{double_conv_forward.4} parent=35 // pred_fallthru
          _
        %p644 = scmp.lt.s32.totalorder %s33, 0
        // Predicated region
        $region57: #{double_conv_forward.4} parent=35 // pred_check
          %p645 = pneg %p644
        $region58: #{double_conv_forward.4} parent=35 // pred_check_branch
          %647 = sbr.rel (%p645) target = $region60
        $region59: #{double_conv_forward.4} parent=35 // pred_region
          %s648 = sadd.s32 %s311, 16
          %s649 = smul.u32 %s648, 16
          %s650 = scalar_lea.vmem %s266, %s649 [#allocation3]
          %v651 = vld [vmem:[%s650] sm:$0xff]
          %v652 = vld [vmem:[%s650 + $0x8] sm:$0xff]
          %v653 = vld [vmem:[#allocation6] sm:$0x1]
          %v655 = vlaneseq
          %v656 = vshrl.u32 %v655, 7
          %v657 = vsub.s32 0, %v656
          %v658 = vrot.slane %v653, %v657
          %v660 = vmul.f32 %v651, %v658
          %v661 = vmul.f32 %v652, %v658
          %v662 = vld [vmem:[#allocation8] sm:$0x1]
          %v664 = vlaneseq
          %v665 = vshrl.u32 %v664, 7
          %v666 = vsub.s32 0, %v665
          %v667 = vrot.slane %v662, %v666
          %v669 = vadd.f32 %v660, %v667
          %v670 = vadd.f32 %v661, %v667
          %vm671 = vcmp.gt.f32.partialorder %v669, 0.0
          %vm672 = vcmp.gt.f32.partialorder %v670, 0.0
          %v673 = vmul.f32 %v669, 0.2
          %v674 = vmul.f32 %v670, 0.2
          %v675 = vsel %vm671, %v669, %v673
          %v676 = vsel %vm672, %v670, %v674
          %s677 = scalar_lea.vmem [#allocation2], 408
          %678 = vst.msk [vmem:[%s677 + $0x1] sm:$0xff] %vm312, %v675
          %679 = vst.msk [vmem:[%s677 + $0x9] sm:$0xff] %vm312, %v676
        $region60: #{double_conv_forward.4} parent=35 // pred_fallthru
          _
        %v680 = vld [vmem:[#allocation2] sm:$0xff]
        %v681 = vld [vmem:[#allocation2 + $0x8] sm:$0xff]
        %v682 = vld [vmem:[#allocation2 + $0x18] sm:$0xff]
        %v683 = vld [vmem:[#allocation2 + $0x20] sm:$0xff]
        %v684 = vld [vmem:[#allocation2 + $0x30] sm:$0xff]
        %v685 = vld [vmem:[#allocation2 + $0x38] sm:$0xff]
        %v686 = vld [vmem:[#allocation2 + $0x48] sm:$0xff]
        %v687 = vld [vmem:[#allocation2 + $0x50] sm:$0xff]
        %v688 = vld [vmem:[#allocation2 + $0x60] sm:$0xff]
        %v689 = vld [vmem:[#allocation2 + $0x68] sm:$0xff]
        %v690 = vld [vmem:[#allocation2 + $0x78] sm:$0xff]
        %v691 = vld [vmem:[#allocation2 + $0x80] sm:$0xff]
        %v692 = vld [vmem:[#allocation2 + $0x90] sm:$0xff]
        %v693 = vld [vmem:[#allocation2 + $0x98] sm:$0xff]
        %v694 = vld [vmem:[#allocation2 + $0xa8] sm:$0xff]
        %v695 = vld [vmem:[#allocation2 + $0xb0] sm:$0xff]
        %v696 = vld [vmem:[#allocation2 + $0xc0] sm:$0xff]
        %v697 = vld [vmem:[#allocation2 + $0xc8] sm:$0xff]
        %v698 = vld [vmem:[#allocation2 + $0xd8] sm:$0xff]
        %v699 = vld [vmem:[#allocation2 + $0xe0] sm:$0xff]
        %v700 = vld [vmem:[#allocation2 + $0xf0] sm:$0xff]
        %v701 = vld [vmem:[#allocation2 + $0xf8] sm:$0xff]
        %v702 = vld [vmem:[#allocation2 + $0x108] sm:$0xff]
        %v703 = vld [vmem:[#allocation2 + $0x110] sm:$0xff]
        %v704 = vld [vmem:[#allocation2 + $0x120] sm:$0xff]
        %v705 = vld [vmem:[#allocation2 + $0x128] sm:$0xff]
        %v706 = vld [vmem:[#allocation2 + $0x138] sm:$0xff]
        %v707 = vld [vmem:[#allocation2 + $0x140] sm:$0xff]
        %v708 = vld [vmem:[#allocation2 + $0x150] sm:$0xff]
        %v709 = vld [vmem:[#allocation2 + $0x158] sm:$0xff]
        %v710 = vld [vmem:[#allocation2 + $0x168] sm:$0xff]
        %v711 = vld [vmem:[#allocation2 + $0x170] sm:$0xff]
        %v712 = vld [vmem:[#allocation9] sm:$0xff]
        %v713 = vld [vmem:[#allocation2 + $0x1] sm:$0xff]
        %v714 = vld [vmem:[#allocation2 + $0x9] sm:$0xff]
        %v715 = vld [vmem:[#allocation2 + $0x19] sm:$0xff]
        %v716 = vld [vmem:[#allocation2 + $0x21] sm:$0xff]
        %v717 = vld [vmem:[#allocation2 + $0x31] sm:$0xff]
        %v718 = vld [vmem:[#allocation2 + $0x39] sm:$0xff]
        %v719 = vld [vmem:[#allocation2 + $0x49] sm:$0xff]
        %v720 = vld [vmem:[#allocation2 + $0x51] sm:$0xff]
        %v721 = vld [vmem:[#allocation2 + $0x61] sm:$0xff]
        %v722 = vld [vmem:[#allocation2 + $0x69] sm:$0xff]
        %v723 = vld [vmem:[#allocation2 + $0x79] sm:$0xff]
        %v724 = vld [vmem:[#allocation2 + $0x81] sm:$0xff]
        %v725 = vld [vmem:[#allocation2 + $0x91] sm:$0xff]
        %v726 = vld [vmem:[#allocation2 + $0x99] sm:$0xff]
        %v727 = vld [vmem:[#allocation2 + $0xa9] sm:$0xff]
        %v728 = vld [vmem:[#allocation2 + $0xb1] sm:$0xff]
        %v729 = vld [vmem:[#allocation2 + $0xc1] sm:$0xff]
        %v730 = vld [vmem:[#allocation2 + $0xc9] sm:$0xff]
        %v731 = vld [vmem:[#allocation2 + $0xd9] sm:$0xff]
        %v732 = vld [vmem:[#allocation2 + $0xe1] sm:$0xff]
        %v733 = vld [vmem:[#allocation2 + $0xf1] sm:$0xff]
        %v734 = vld [vmem:[#allocation2 + $0xf9] sm:$0xff]
        %v735 = vld [vmem:[#allocation2 + $0x109] sm:$0xff]
        %v736 = vld [vmem:[#allocation2 + $0x111] sm:$0xff]
        %v737 = vld [vmem:[#allocation2 + $0x121] sm:$0xff]
        %v738 = vld [vmem:[#allocation2 + $0x129] sm:$0xff]
        %v739 = vld [vmem:[#allocation2 + $0x139] sm:$0xff]
        %v740 = vld [vmem:[#allocation2 + $0x141] sm:$0xff]
        %v741 = vld [vmem:[#allocation2 + $0x151] sm:$0xff]
        %v742 = vld [vmem:[#allocation2 + $0x159] sm:$0xff]
        %v743 = vld [vmem:[#allocation2 + $0x169] sm:$0xff]
        %v744 = vld [vmem:[#allocation2 + $0x171] sm:$0xff]
        %s745 = scalar_lea.vmem [#allocation9], 8
        %v746 = vld [vmem:[%s745] sm:$0xff]
        %v748 = vsel %vm312, %v713, 0
        %v751 = vsel %vm312, %v714, 0
        %v754 = vsel %vm312, %v715, 0
        %v757 = vsel %vm312, %v716, 0
        %v760 = vsel %vm312, %v717, 0
        %v763 = vsel %vm312, %v718, 0
        %v766 = vsel %vm312, %v719, 0
        %v769 = vsel %vm312, %v720, 0
        %v772 = vsel %vm312, %v721, 0
        %v775 = vsel %vm312, %v722, 0
        %v778 = vsel %vm312, %v723, 0
        %v781 = vsel %vm312, %v724, 0
        %v784 = vsel %vm312, %v725, 0
        %v787 = vsel %vm312, %v726, 0
        %v790 = vsel %vm312, %v727, 0
        %v793 = vsel %vm312, %v728, 0
        %v796 = vsel %vm312, %v729, 0
        %v799 = vsel %vm312, %v730, 0
        %v802 = vsel %vm312, %v731, 0
        %v805 = vsel %vm312, %v732, 0
        %v808 = vsel %vm312, %v733, 0
        %v811 = vsel %vm312, %v734, 0
        %v814 = vsel %vm312, %v735, 0
        %v817 = vsel %vm312, %v736, 0
        %v820 = vsel %vm312, %v737, 0
        %v823 = vsel %vm312, %v738, 0
        %v826 = vsel %vm312, %v739, 0
        %v829 = vsel %vm312, %v740, 0
        %v832 = vsel %vm312, %v741, 0
        %v835 = vsel %vm312, %v742, 0
        %v838 = vsel %vm312, %v743, 0
        %v841 = vsel %vm312, %v744, 0
        %843 = vmatprep.subr.mxu0 0.0
        %844 = vmatpush1.msra.mxu0 %v746
        %845 = vmatprep.subr.mxu0 0.0
        %846 = vmatpush1.msra.mxu0 0.0
        %847 = vmatprep.subr.mxu0 0.0
        %848 = vmatpush1.msra.mxu0 0.0
        %849 = vmatprep.subr.mxu0 0.0
        %850 = vmatpush1.msra.mxu0 0.0
        %851 = vmatprep.subr.mxu0 0.0
        %852 = vmatpush1.msra.mxu0 0.0
        %853 = vmatprep.subr.mxu0 0.0
        %854 = vmatpush1.msra.mxu0 0.0
        %855 = vmatprep.subr.mxu0 0.0
        %856 = vmatpush1.msra.mxu0 0.0
        %857 = vmatprep.subr.mxu0 0.0
        %858 = vmatpush1.msra.mxu0 0.0
        %859 = vmatprep.subr.mxu0 0.0
        %860 = vmatpush1.msra.mxu0 0.0
        %861 = vmatprep.subr.mxu0 0.0
        %862 = vmatpush1.msra.mxu0 0.0
        %863 = vmatprep.subr.mxu0 0.0
        %864 = vmatpush1.msra.mxu0 0.0
        %865 = vmatprep.subr.mxu0 0.0
        %866 = vmatpush1.msra.mxu0 0.0
        %867 = vmatprep.subr.mxu0 0.0
        %868 = vmatpush1.msra.mxu0 0.0
        %869 = vmatprep.subr.mxu0 0.0
        %870 = vmatpush1.msra.mxu0 0.0
        %871 = vmatprep.subr.mxu0 0.0
        %872 = vmatpush1.msra.mxu0 0.0
        %873 = vmatprep.subr.mxu0 0.0
        %874 = vmatpush1.msra.mxu0 0.0
        %875 = vmatprep.subr.mxu0 0.0
        %876 = vmatpush1.msra.mxu0 0.0
        %877 = vmatprep.subr.mxu0 0.0
        %878 = vmatpush1.msra.mxu0 0.0
        %879 = vmatprep.subr.mxu0 0.0
        %880 = vmatpush1.msra.mxu0 0.0
        %881 = vmatprep.subr.mxu0 0.0
        %882 = vmatpush1.msra.mxu0 0.0
        %883 = vmatprep.subr.mxu0 0.0
        %884 = vmatpush1.msra.mxu0 0.0
        %885 = vmatprep.subr.mxu0 0.0
        %886 = vmatpush1.msra.mxu0 0.0
        %887 = vmatprep.subr.mxu0 0.0
        %888 = vmatpush1.msra.mxu0 0.0
        %889 = vmatprep.subr.mxu0 0.0
        %890 = vmatpush1.msra.mxu0 0.0
        %891 = vmatprep.subr.mxu0 0.0
        %892 = vmatpush1.msra.mxu0 0.0
        %893 = vmatprep.subr.mxu0 0.0
        %894 = vmatpush1.msra.mxu0 0.0
        %895 = vmatprep.subr.mxu0 0.0
        %896 = vmatpush1.msra.mxu0 0.0
        %897 = vmatprep.subr.mxu0 0.0
        %898 = vmatpush1.msra.mxu0 0.0
        %899 = vmatprep.subr.mxu0 0.0
        %900 = vmatpush1.msra.mxu0 0.0
        %901 = vmatprep.subr.mxu0 0.0
        %902 = vmatpush1.msra.mxu0 0.0
        %903 = vmatprep.subr.mxu0 0.0
        %904 = vmatpush1.msra.mxu0 0.0
        %905 = vmatprep.subr.mxu0 0.0
        %906 = vmatpush1.msra.mxu0 0.0
        %907 = vmatprep.mubr.f32.mxu0 0.0
        %908 = vmatmul.mubr.f32.gmra.mrb[0].mxu0 %v748
        %v909 = vpop.f32.mrb[0].mxu0
        %v910 = vadd.f32 0.0, %v909
        %v911 = vpop.f32.mrb[0].mxu0
        %912 = vmatprep.mubr.f32.mxu0 0.0
        %913 = vmatmul.mubr.f32.gmra.mrb[0].mxu0 %v751
        %v914 = vpop.f32.mrb[0].mxu0
        %v915 = vadd.f32 0.0, %v914
        %v916 = vpop.f32.mrb[0].mxu0
        %917 = vmatprep.mubr.f32.mxu0 0.0
        %918 = vmatmul.mubr.f32.gmra.mrb[0].mxu0 %v754
        %v919 = vpop.f32.mrb[0].mxu0
        %v920 = vadd.f32 0.0, %v919
        %v921 = vpop.f32.mrb[0].mxu0
        %922 = vmatprep.mubr.f32.mxu0 0.0
        %923 = vmatmul.mubr.f32.gmra.mrb[0].mxu0 %v757
        %v924 = vpop.f32.mrb[0].mxu0
        %v925 = vadd.f32 0.0, %v924
        %v926 = vpop.f32.mrb[0].mxu0
        %927 = vmatprep.mubr.f32.mxu0 0.0
        %928 = vmatmul.mubr.f32.gmra.mrb[0].mxu0 %v760
        %v929 = vpop.f32.mrb[0].mxu0
        %v930 = vadd.f32 0.0, %v929
        %v931 = vpop.f32.mrb[0].mxu0
        %932 = vmatprep.mubr.f32.mxu0 0.0
        %933 = vmatmul.mubr.f32.gmra.mrb[0].mxu0 %v763
        %v934 = vpop.f32.mrb[0].mxu0
        %v935 = vadd.f32 0.0, %v934
        %v936 = vpop.f32.mrb[0].mxu0
        %937 = vmatprep.mubr.f32.mxu0 0.0
        %938 = vmatmul.mubr.f32.gmra.mrb[0].mxu0 %v766
        %v939 = vpop.f32.mrb[0].mxu0
        %v940 = vadd.f32 0.0, %v939
        %v941 = vpop.f32.mrb[0].mxu0
        %942 = vmatprep.mubr.f32.mxu0 0.0
        %943 = vmatmul.mubr.f32.gmra.mrb[0].mxu0 %v769
        %v944 = vpop.f32.mrb[0].mxu0
        %v945 = vadd.f32 0.0, %v944
        %v946 = vpop.f32.mrb[0].mxu0
        %947 = vmatprep.mubr.f32.mxu0 0.0
        %948 = vmatmul.mubr.f32.gmra.mrb[0].mxu0 %v772
        %v949 = vpop.f32.mrb[0].mxu0
        %v950 = vadd.f32 0.0, %v949
        %v951 = vpop.f32.mrb[0].mxu0
        %952 = vmatprep.mubr.f32.mxu0 0.0
        %953 = vmatmul.mubr.f32.gmra.mrb[0].mxu0 %v775
        %v954 = vpop.f32.mrb[0].mxu0
        %v955 = vadd.f32 0.0, %v954
        %v956 = vpop.f32.mrb[0].mxu0
        %957 = vmatprep.mubr.f32.mxu0 0.0
        %958 = vmatmul.mubr.f32.gmra.mrb[0].mxu0 %v778
        %v959 = vpop.f32.mrb[0].mxu0
        %v960 = vadd.f32 0.0, %v959
        %v961 = vpop.f32.mrb[0].mxu0
        %962 = vmatprep.mubr.f32.mxu0 0.0
        %963 = vmatmul.mubr.f32.gmra.mrb[0].mxu0 %v781
        %v964 = vpop.f32.mrb[0].mxu0
        %v965 = vadd.f32 0.0, %v964
        %v966 = vpop.f32.mrb[0].mxu0
        %967 = vmatprep.mubr.f32.mxu0 0.0
        %968 = vmatmul.mubr.f32.gmra.mrb[0].mxu0 %v784
        %v969 = vpop.f32.mrb[0].mxu0
        %v970 = vadd.f32 0.0, %v969
        %v971 = vpop.f32.mrb[0].mxu0
        %972 = vmatprep.mubr.f32.mxu0 0.0
        %973 = vmatmul.mubr.f32.gmra.mrb[0].mxu0 %v787
        %v974 = vpop.f32.mrb[0].mxu0
        %v975 = vadd.f32 0.0, %v974
        %v976 = vpop.f32.mrb[0].mxu0
        %977 = vmatprep.mubr.f32.mxu0 0.0
        %978 = vmatmul.mubr.f32.gmra.mrb[0].mxu0 %v790
        %v979 = vpop.f32.mrb[0].mxu0
        %v980 = vadd.f32 0.0, %v979
        %v981 = vpop.f32.mrb[0].mxu0
        %982 = vmatprep.mubr.f32.mxu0 0.0
        %983 = vmatmul.mubr.f32.gmra.mrb[0].mxu0 %v793
        %v984 = vpop.f32.mrb[0].mxu0
        %v985 = vadd.f32 0.0, %v984
        %v986 = vpop.f32.mrb[0].mxu0
        %987 = vmatprep.mubr.f32.mxu0 0.0
        %988 = vmatmul.mubr.f32.gmra.mrb[0].mxu0 %v796
        %v989 = vpop.f32.mrb[0].mxu0
        %v990 = vadd.f32 0.0, %v989
        %v991 = vpop.f32.mrb[0].mxu0
        %992 = vmatprep.mubr.f32.mxu0 0.0
        %993 = vmatmul.mubr.f32.gmra.mrb[0].mxu0 %v799
        %v994 = vpop.f32.mrb[0].mxu0
        %v995 = vadd.f32 0.0, %v994
        %v996 = vpop.f32.mrb[0].mxu0
        %997 = vmatprep.mubr.f32.mxu0 0.0
        %998 = vmatmul.mubr.f32.gmra.mrb[0].mxu0 %v802
        %v999 = vpop.f32.mrb[0].mxu0
        %v1000 = vadd.f32 0.0, %v999
        %v1001 = vpop.f32.mrb[0].mxu0
        %1002 = vmatprep.mubr.f32.mxu0 0.0
        %1003 = vmatmul.mubr.f32.gmra.mrb[0].mxu0 %v805
        %v1004 = vpop.f32.mrb[0].mxu0
        %v1005 = vadd.f32 0.0, %v1004
        %v1006 = vpop.f32.mrb[0].mxu0
        %1007 = vmatprep.mubr.f32.mxu0 0.0
        %1008 = vmatmul.mubr.f32.gmra.mrb[0].mxu0 %v808
        %v1009 = vpop.f32.mrb[0].mxu0
        %v1010 = vadd.f32 0.0, %v1009
        %v1011 = vpop.f32.mrb[0].mxu0
        %1012 = vmatprep.mubr.f32.mxu0 0.0
        %1013 = vmatmul.mubr.f32.gmra.mrb[0].mxu0 %v811
        %v1014 = vpop.f32.mrb[0].mxu0
        %v1015 = vadd.f32 0.0, %v1014
        %v1016 = vpop.f32.mrb[0].mxu0
        %1017 = vmatprep.mubr.f32.mxu0 0.0
        %1018 = vmatmul.mubr.f32.gmra.mrb[0].mxu0 %v814
        %v1019 = vpop.f32.mrb[0].mxu0
        %v1020 = vadd.f32 0.0, %v1019
        %v1021 = vpop.f32.mrb[0].mxu0
        %1022 = vmatprep.mubr.f32.mxu0 0.0
        %1023 = vmatmul.mubr.f32.gmra.mrb[0].mxu0 %v817
        %v1024 = vpop.f32.mrb[0].mxu0
        %v1025 = vadd.f32 0.0, %v1024
        %v1026 = vpop.f32.mrb[0].mxu0
        %1027 = vmatprep.mubr.f32.mxu0 0.0
        %1028 = vmatmul.mubr.f32.gmra.mrb[0].mxu0 %v820
        %v1029 = vpop.f32.mrb[0].mxu0
        %v1030 = vadd.f32 0.0, %v1029
        %v1031 = vpop.f32.mrb[0].mxu0
        %1032 = vmatprep.mubr.f32.mxu0 0.0
        %1033 = vmatmul.mubr.f32.gmra.mrb[0].mxu0 %v823
        %v1034 = vpop.f32.mrb[0].mxu0
        %v1035 = vadd.f32 0.0, %v1034
        %v1036 = vpop.f32.mrb[0].mxu0
        %1037 = vmatprep.mubr.f32.mxu0 0.0
        %1038 = vmatmul.mubr.f32.gmra.mrb[0].mxu0 %v826
        %v1039 = vpop.f32.mrb[0].mxu0
        %v1040 = vadd.f32 0.0, %v1039
        %v1041 = vpop.f32.mrb[0].mxu0
        %1042 = vmatprep.mubr.f32.mxu0 0.0
        %1043 = vmatmul.mubr.f32.gmra.mrb[0].mxu0 %v829
        %v1044 = vpop.f32.mrb[0].mxu0
        %v1045 = vadd.f32 0.0, %v1044
        %v1046 = vpop.f32.mrb[0].mxu0
        %1047 = vmatprep.mubr.f32.mxu0 0.0
        %1048 = vmatmul.mubr.f32.gmra.mrb[0].mxu0 %v832
        %v1049 = vpop.f32.mrb[0].mxu0
        %v1050 = vadd.f32 0.0, %v1049
        %v1051 = vpop.f32.mrb[0].mxu0
        %1052 = vmatprep.mubr.f32.mxu0 0.0
        %1053 = vmatmul.mubr.f32.gmra.mrb[0].mxu0 %v835
        %v1054 = vpop.f32.mrb[0].mxu0
        %v1055 = vadd.f32 0.0, %v1054
        %v1056 = vpop.f32.mrb[0].mxu0
        %1057 = vmatprep.mubr.f32.mxu0 0.0
        %1058 = vmatmul.mubr.f32.gmra.mrb[0].mxu0 %v838
        %v1059 = vpop.f32.mrb[0].mxu0
        %v1060 = vadd.f32 0.0, %v1059
        %v1061 = vpop.f32.mrb[0].mxu0
        %1062 = vmatprep.mubr.f32.mxu0 0.0
        %1063 = vmatmul.mubr.f32.gmra.mrb[0].mxu0 %v841
        %v1064 = vpop.f32.mrb[0].mxu0
        %v1065 = vadd.f32 0.0, %v1064
        %v1066 = vpop.f32.mrb[0].mxu0
        %1067 = vdwg.mxu0
        %v1069 = vsel %vm312, %v680, 0
        %v1072 = vsel %vm312, %v681, 0
        %v1075 = vsel %vm312, %v682, 0
        %v1078 = vsel %vm312, %v683, 0
        %v1081 = vsel %vm312, %v684, 0
        %v1084 = vsel %vm312, %v685, 0
        %v1087 = vsel %vm312, %v686, 0
        %v1090 = vsel %vm312, %v687, 0
        %v1093 = vsel %vm312, %v688, 0
        %v1096 = vsel %vm312, %v689, 0
        %v1099 = vsel %vm312, %v690, 0
        %v1102 = vsel %vm312, %v691, 0
        %v1105 = vsel %vm312, %v692, 0
        %v1108 = vsel %vm312, %v693, 0
        %v1111 = vsel %vm312, %v694, 0
        %v1114 = vsel %vm312, %v695, 0
        %v1117 = vsel %vm312, %v696, 0
        %v1120 = vsel %vm312, %v697, 0
        %v1123 = vsel %vm312, %v698, 0
        %v1126 = vsel %vm312, %v699, 0
        %v1129 = vsel %vm312, %v700, 0
        %v1132 = vsel %vm312, %v701, 0
        %v1135 = vsel %vm312, %v702, 0
        %v1138 = vsel %vm312, %v703, 0
        %v1141 = vsel %vm312, %v704, 0
        %v1144 = vsel %vm312, %v705, 0
        %v1147 = vsel %vm312, %v706, 0
        %v1150 = vsel %vm312, %v707, 0
        %v1153 = vsel %vm312, %v708, 0
        %v1156 = vsel %vm312, %v709, 0
        %v1159 = vsel %vm312, %v710, 0
        %v1162 = vsel %vm312, %v711, 0
        %1164 = vmatprep.subr.mxu0 0.0
        %1165 = vmatpush1.msra.mxu0 %v712
        %1166 = vmatprep.subr.mxu0 0.0
        %1167 = vmatpush1.msra.mxu0 0.0
        %1168 = vmatprep.subr.mxu0 0.0
        %1169 = vmatpush1.msra.mxu0 0.0
        %1170 = vmatprep.subr.mxu0 0.0
        %1171 = vmatpush1.msra.mxu0 0.0
        %1172 = vmatprep.subr.mxu0 0.0
        %1173 = vmatpush1.msra.mxu0 0.0
        %1174 = vmatprep.subr.mxu0 0.0
        %1175 = vmatpush1.msra.mxu0 0.0
        %1176 = vmatprep.subr.mxu0 0.0
        %1177 = vmatpush1.msra.mxu0 0.0
        %1178 = vmatprep.subr.mxu0 0.0
        %1179 = vmatpush1.msra.mxu0 0.0
        %1180 = vmatprep.subr.mxu0 0.0
        %1181 = vmatpush1.msra.mxu0 0.0
        %1182 = vmatprep.subr.mxu0 0.0
        %1183 = vmatpush1.msra.mxu0 0.0
        %1184 = vmatprep.subr.mxu0 0.0
        %1185 = vmatpush1.msra.mxu0 0.0
        %1186 = vmatprep.subr.mxu0 0.0
        %1187 = vmatpush1.msra.mxu0 0.0
        %1188 = vmatprep.subr.mxu0 0.0
        %1189 = vmatpush1.msra.mxu0 0.0
        %1190 = vmatprep.subr.mxu0 0.0
        %1191 = vmatpush1.msra.mxu0 0.0
        %1192 = vmatprep.subr.mxu0 0.0
        %1193 = vmatpush1.msra.mxu0 0.0
        %1194 = vmatprep.subr.mxu0 0.0
        %1195 = vmatpush1.msra.mxu0 0.0
        %1196 = vmatprep.subr.mxu0 0.0
        %1197 = vmatpush1.msra.mxu0 0.0
        %1198 = vmatprep.subr.mxu0 0.0
        %1199 = vmatpush1.msra.mxu0 0.0
        %1200 = vmatprep.subr.mxu0 0.0
        %1201 = vmatpush1.msra.mxu0 0.0
        %1202 = vmatprep.subr.mxu0 0.0
        %1203 = vmatpush1.msra.mxu0 0.0
        %1204 = vmatprep.subr.mxu0 0.0
        %1205 = vmatpush1.msra.mxu0 0.0
        %1206 = vmatprep.subr.mxu0 0.0
        %1207 = vmatpush1.msra.mxu0 0.0
        %1208 = vmatprep.subr.mxu0 0.0
        %1209 = vmatpush1.msra.mxu0 0.0
        %1210 = vmatprep.subr.mxu0 0.0
        %1211 = vmatpush1.msra.mxu0 0.0
        %1212 = vmatprep.subr.mxu0 0.0
        %1213 = vmatpush1.msra.mxu0 0.0
        %1214 = vmatprep.subr.mxu0 0.0
        %1215 = vmatpush1.msra.mxu0 0.0
        %1216 = vmatprep.subr.mxu0 0.0
        %1217 = vmatpush1.msra.mxu0 0.0
        %1218 = vmatprep.subr.mxu0 0.0
        %1219 = vmatpush1.msra.mxu0 0.0
        %1220 = vmatprep.subr.mxu0 0.0
        %1221 = vmatpush1.msra.mxu0 0.0
        %1222 = vmatprep.subr.mxu0 0.0
        %1223 = vmatpush1.msra.mxu0 0.0
        %1224 = vmatprep.subr.mxu0 0.0
        %1225 = vmatpush1.msra.mxu0 0.0
        %1226 = vmatprep.subr.mxu0 0.0
        %1227 = vmatpush1.msra.mxu0 0.0
        %1228 = vmatprep.mubr.f32.mxu0 0.0
        %1229 = vmatmul.mubr.f32.gmra.mrb[0].mxu0 %v1069
        %v1230 = vpop.f32.mrb[0].mxu0
        %v1231 = vadd.f32 %v910, %v1230
        %v1232 = vpop.f32.mrb[0].mxu0
        %1233 = vmatprep.mubr.f32.mxu0 0.0
        %1234 = vmatmul.mubr.f32.gmra.mrb[0].mxu0 %v1072
        %v1235 = vpop.f32.mrb[0].mxu0
        %v1236 = vadd.f32 %v915, %v1235
        %v1237 = vpop.f32.mrb[0].mxu0
        %1238 = vmatprep.mubr.f32.mxu0 0.0
        %1239 = vmatmul.mubr.f32.gmra.mrb[0].mxu0 %v1075
        %v1240 = vpop.f32.mrb[0].mxu0
        %v1241 = vadd.f32 %v920, %v1240
        %v1242 = vpop.f32.mrb[0].mxu0
        %1243 = vmatprep.mubr.f32.mxu0 0.0
        %1244 = vmatmul.mubr.f32.gmra.mrb[0].mxu0 %v1078
        %v1245 = vpop.f32.mrb[0].mxu0
        %v1246 = vadd.f32 %v925, %v1245
        %v1247 = vpop.f32.mrb[0].mxu0
        %1248 = vmatprep.mubr.f32.mxu0 0.0
        %1249 = vmatmul.mubr.f32.gmra.mrb[0].mxu0 %v1081
        %v1250 = vpop.f32.mrb[0].mxu0
        %v1251 = vadd.f32 %v930, %v1250
        %v1252 = vpop.f32.mrb[0].mxu0
        %1253 = vmatprep.mubr.f32.mxu0 0.0
        %1254 = vmatmul.mubr.f32.gmra.mrb[0].mxu0 %v1084
        %v1255 = vpop.f32.mrb[0].mxu0
        %v1256 = vadd.f32 %v935, %v1255
        %v1257 = vpop.f32.mrb[0].mxu0
        %1258 = vmatprep.mubr.f32.mxu0 0.0
        %1259 = vmatmul.mubr.f32.gmra.mrb[0].mxu0 %v1087
        %v1260 = vpop.f32.mrb[0].mxu0
        %v1261 = vadd.f32 %v940, %v1260
        %v1262 = vpop.f32.mrb[0].mxu0
        %1263 = vmatprep.mubr.f32.mxu0 0.0
        %1264 = vmatmul.mubr.f32.gmra.mrb[0].mxu0 %v1090
        %v1265 = vpop.f32.mrb[0].mxu0
        %v1266 = vadd.f32 %v945, %v1265
        %v1267 = vpop.f32.mrb[0].mxu0
        %1268 = vmatprep.mubr.f32.mxu0 0.0
        %1269 = vmatmul.mubr.f32.gmra.mrb[0].mxu0 %v1093
        %v1270 = vpop.f32.mrb[0].mxu0
        %v1271 = vadd.f32 %v950, %v1270
        %v1272 = vpop.f32.mrb[0].mxu0
        %1273 = vmatprep.mubr.f32.mxu0 0.0
        %1274 = vmatmul.mubr.f32.gmra.mrb[0].mxu0 %v1096
        %v1275 = vpop.f32.mrb[0].mxu0
        %v1276 = vadd.f32 %v955, %v1275
        %v1277 = vpop.f32.mrb[0].mxu0
        %1278 = vmatprep.mubr.f32.mxu0 0.0
        %1279 = vmatmul.mubr.f32.gmra.mrb[0].mxu0 %v1099
        %v1280 = vpop.f32.mrb[0].mxu0
        %v1281 = vadd.f32 %v960, %v1280
        %v1282 = vpop.f32.mrb[0].mxu0
        %1283 = vmatprep.mubr.f32.mxu0 0.0
        %1284 = vmatmul.mubr.f32.gmra.mrb[0].mxu0 %v1102
        %v1285 = vpop.f32.mrb[0].mxu0
        %v1286 = vadd.f32 %v965, %v1285
        %v1287 = vpop.f32.mrb[0].mxu0
        %1288 = vmatprep.mubr.f32.mxu0 0.0
        %1289 = vmatmul.mubr.f32.gmra.mrb[0].mxu0 %v1105
        %v1290 = vpop.f32.mrb[0].mxu0
        %v1291 = vadd.f32 %v970, %v1290
        %v1292 = vpop.f32.mrb[0].mxu0
        %1293 = vmatprep.mubr.f32.mxu0 0.0
        %1294 = vmatmul.mubr.f32.gmra.mrb[0].mxu0 %v1108
        %v1295 = vpop.f32.mrb[0].mxu0
        %v1296 = vadd.f32 %v975, %v1295
        %v1297 = vpop.f32.mrb[0].mxu0
        %1298 = vmatprep.mubr.f32.mxu0 0.0
        %1299 = vmatmul.mubr.f32.gmra.mrb[0].mxu0 %v1111
        %v1300 = vpop.f32.mrb[0].mxu0
        %v1301 = vadd.f32 %v980, %v1300
        %v1302 = vpop.f32.mrb[0].mxu0
        %1303 = vmatprep.mubr.f32.mxu0 0.0
        %1304 = vmatmul.mubr.f32.gmra.mrb[0].mxu0 %v1114
        %v1305 = vpop.f32.mrb[0].mxu0
        %v1306 = vadd.f32 %v985, %v1305
        %v1307 = vpop.f32.mrb[0].mxu0
        %1308 = vmatprep.mubr.f32.mxu0 0.0
        %1309 = vmatmul.mubr.f32.gmra.mrb[0].mxu0 %v1117
        %v1310 = vpop.f32.mrb[0].mxu0
        %v1311 = vadd.f32 %v990, %v1310
        %v1312 = vpop.f32.mrb[0].mxu0
        %1313 = vmatprep.mubr.f32.mxu0 0.0
        %1314 = vmatmul.mubr.f32.gmra.mrb[0].mxu0 %v1120
        %v1315 = vpop.f32.mrb[0].mxu0
        %v1316 = vadd.f32 %v995, %v1315
        %v1317 = vpop.f32.mrb[0].mxu0
        %1318 = vmatprep.mubr.f32.mxu0 0.0
        %1319 = vmatmul.mubr.f32.gmra.mrb[0].mxu0 %v1123
        %v1320 = vpop.f32.mrb[0].mxu0
        %v1321 = vadd.f32 %v1000, %v1320
        %v1322 = vpop.f32.mrb[0].mxu0
        %1323 = vmatprep.mubr.f32.mxu0 0.0
        %1324 = vmatmul.mubr.f32.gmra.mrb[0].mxu0 %v1126
        %v1325 = vpop.f32.mrb[0].mxu0
        %v1326 = vadd.f32 %v1005, %v1325
        %v1327 = vpop.f32.mrb[0].mxu0
        %1328 = vmatprep.mubr.f32.mxu0 0.0
        %1329 = vmatmul.mubr.f32.gmra.mrb[0].mxu0 %v1129
        %v1330 = vpop.f32.mrb[0].mxu0
        %v1331 = vadd.f32 %v1010, %v1330
        %v1332 = vpop.f32.mrb[0].mxu0
        %1333 = vmatprep.mubr.f32.mxu0 0.0
        %1334 = vmatmul.mubr.f32.gmra.mrb[0].mxu0 %v1132
        %v1335 = vpop.f32.mrb[0].mxu0
        %v1336 = vadd.f32 %v1015, %v1335
        %v1337 = vpop.f32.mrb[0].mxu0
        %1338 = vmatprep.mubr.f32.mxu0 0.0
        %1339 = vmatmul.mubr.f32.gmra.mrb[0].mxu0 %v1135
        %v1340 = vpop.f32.mrb[0].mxu0
        %v1341 = vadd.f32 %v1020, %v1340
        %v1342 = vpop.f32.mrb[0].mxu0
        %1343 = vmatprep.mubr.f32.mxu0 0.0
        %1344 = vmatmul.mubr.f32.gmra.mrb[0].mxu0 %v1138
        %v1345 = vpop.f32.mrb[0].mxu0
        %v1346 = vadd.f32 %v1025, %v1345
        %v1347 = vpop.f32.mrb[0].mxu0
        %1348 = vmatprep.mubr.f32.mxu0 0.0
        %1349 = vmatmul.mubr.f32.gmra.mrb[0].mxu0 %v1141
        %v1350 = vpop.f32.mrb[0].mxu0
        %v1351 = vadd.f32 %v1030, %v1350
        %v1352 = vpop.f32.mrb[0].mxu0
        %1353 = vmatprep.mubr.f32.mxu0 0.0
        %1354 = vmatmul.mubr.f32.gmra.mrb[0].mxu0 %v1144
        %v1355 = vpop.f32.mrb[0].mxu0
        %v1356 = vadd.f32 %v1035, %v1355
        %v1357 = vpop.f32.mrb[0].mxu0
        %1358 = vmatprep.mubr.f32.mxu0 0.0
        %1359 = vmatmul.mubr.f32.gmra.mrb[0].mxu0 %v1147
        %v1360 = vpop.f32.mrb[0].mxu0
        %v1361 = vadd.f32 %v1040, %v1360
        %v1362 = vpop.f32.mrb[0].mxu0
        %1363 = vmatprep.mubr.f32.mxu0 0.0
        %1364 = vmatmul.mubr.f32.gmra.mrb[0].mxu0 %v1150
        %v1365 = vpop.f32.mrb[0].mxu0
        %v1366 = vadd.f32 %v1045, %v1365
        %v1367 = vpop.f32.mrb[0].mxu0
        %1368 = vmatprep.mubr.f32.mxu0 0.0
        %1369 = vmatmul.mubr.f32.gmra.mrb[0].mxu0 %v1153
        %v1370 = vpop.f32.mrb[0].mxu0
        %v1371 = vadd.f32 %v1050, %v1370
        %v1372 = vpop.f32.mrb[0].mxu0
        %1373 = vmatprep.mubr.f32.mxu0 0.0
        %1374 = vmatmul.mubr.f32.gmra.mrb[0].mxu0 %v1156
        %v1375 = vpop.f32.mrb[0].mxu0
        %v1376 = vadd.f32 %v1055, %v1375
        %v1377 = vpop.f32.mrb[0].mxu0
        %1378 = vmatprep.mubr.f32.mxu0 0.0
        %1379 = vmatmul.mubr.f32.gmra.mrb[0].mxu0 %v1159
        %v1380 = vpop.f32.mrb[0].mxu0
        %v1381 = vadd.f32 %v1060, %v1380
        %v1382 = vpop.f32.mrb[0].mxu0
        %1383 = vmatprep.mubr.f32.mxu0 0.0
        %1384 = vmatmul.mubr.f32.gmra.mrb[0].mxu0 %v1162
        %v1385 = vpop.f32.mrb[0].mxu0
        %v1386 = vadd.f32 %v1065, %v1385
        %v1387 = vpop.f32.mrb[0].mxu0
        %1388 = vdwg.mxu0
        %v1389 = vld [vmem:[#allocation2 + $0x2] sm:$0xff]
        %v1390 = vld [vmem:[#allocation2 + $0xa] sm:$0xff]
        %v1391 = vld [vmem:[#allocation2 + $0x1a] sm:$0xff]
        %v1392 = vld [vmem:[#allocation2 + $0x22] sm:$0xff]
        %v1393 = vld [vmem:[#allocation2 + $0x32] sm:$0xff]
        %v1394 = vld [vmem:[#allocation2 + $0x3a] sm:$0xff]
        %v1395 = vld [vmem:[#allocation2 + $0x4a] sm:$0xff]
        %v1396 = vld [vmem:[#allocation2 + $0x52] sm:$0xff]
        %v1397 = vld [vmem:[#allocation2 + $0x62] sm:$0xff]
        %v1398 = vld [vmem:[#allocation2 + $0x6a] sm:$0xff]
        %v1399 = vld [vmem:[#allocation2 + $0x7a] sm:$0xff]
        %v1400 = vld [vmem:[#allocation2 + $0x82] sm:$0xff]
        %v1401 = vld [vmem:[#allocation2 + $0x92] sm:$0xff]
        %v1402 = vld [vmem:[#allocation2 + $0x9a] sm:$0xff]
        %v1403 = vld [vmem:[#allocation2 + $0xaa] sm:$0xff]
        %v1404 = vld [vmem:[#allocation2 + $0xb2] sm:$0xff]
        %v1405 = vld [vmem:[#allocation2 + $0xc2] sm:$0xff]
        %v1406 = vld [vmem:[#allocation2 + $0xca] sm:$0xff]
        %v1407 = vld [vmem:[#allocation2 + $0xda] sm:$0xff]
        %v1408 = vld [vmem:[#allocation2 + $0xe2] sm:$0xff]
        %v1409 = vld [vmem:[#allocation2 + $0xf2] sm:$0xff]
        %v1410 = vld [vmem:[#allocation2 + $0xfa] sm:$0xff]
        %v1411 = vld [vmem:[#allocation2 + $0x10a] sm:$0xff]
        %v1412 = vld [vmem:[#allocation2 + $0x112] sm:$0xff]
        %v1413 = vld [vmem:[#allocation2 + $0x122] sm:$0xff]
        %v1414 = vld [vmem:[#allocation2 + $0x12a] sm:$0xff]
        %v1415 = vld [vmem:[#allocation2 + $0x13a] sm:$0xff]
        %v1416 = vld [vmem:[#allocation2 + $0x142] sm:$0xff]
        %v1417 = vld [vmem:[#allocation2 + $0x152] sm:$0xff]
        %v1418 = vld [vmem:[#allocation2 + $0x15a] sm:$0xff]
        %v1419 = vld [vmem:[#allocation2 + $0x16a] sm:$0xff]
        %v1420 = vld [vmem:[#allocation2 + $0x172] sm:$0xff]
        %s1421 = scalar_lea.vmem [#allocation9], 16
        %v1422 = vld [vmem:[%s1421] sm:$0xff]
        %v1424 = vsel %vm312, %v1389, 0
        %v1427 = vsel %vm312, %v1390, 0
        %v1430 = vsel %vm312, %v1391, 0
        %v1433 = vsel %vm312, %v1392, 0
        %v1436 = vsel %vm312, %v1393, 0
        %v1439 = vsel %vm312, %v1394, 0
        %v1442 = vsel %vm312, %v1395, 0
        %v1445 = vsel %vm312, %v1396, 0
        %v1448 = vsel %vm312, %v1397, 0
        %v1451 = vsel %vm312, %v1398, 0
        %v1454 = vsel %vm312, %v1399, 0
        %v1457 = vsel %vm312, %v1400, 0
        %v1460 = vsel %vm312, %v1401, 0
        %v1463 = vsel %vm312, %v1402, 0
        %v1466 = vsel %vm312, %v1403, 0
        %v1469 = vsel %vm312, %v1404, 0
        %v1472 = vsel %vm312, %v1405, 0
        %v1475 = vsel %vm312, %v1406, 0
        %v1478 = vsel %vm312, %v1407, 0
        %v1481 = vsel %vm312, %v1408, 0
        %v1484 = vsel %vm312, %v1409, 0
        %v1487 = vsel %vm312, %v1410, 0
        %v1490 = vsel %vm312, %v1411, 0
        %v1493 = vsel %vm312, %v1412, 0
        %v1496 = vsel %vm312, %v1413, 0
        %v1499 = vsel %vm312, %v1414, 0
        %v1502 = vsel %vm312, %v1415, 0
        %v1505 = vsel %vm312, %v1416, 0
        %v1508 = vsel %vm312, %v1417, 0
        %v1511 = vsel %vm312, %v1418, 0
        %v1514 = vsel %vm312, %v1419, 0
        %v1517 = vsel %vm312, %v1420, 0
        %1519 = vmatprep.subr.mxu0 0.0
        %1520 = vmatpush1.msra.mxu0 %v1422
        %1521 = vmatprep.subr.mxu0 0.0
        %1522 = vmatpush1.msra.mxu0 0.0
        %1523 = vmatprep.subr.mxu0 0.0
        %1524 = vmatpush1.msra.mxu0 0.0
        %1525 = vmatprep.subr.mxu0 0.0
        %1526 = vmatpush1.msra.mxu0 0.0
        %1527 = vmatprep.subr.mxu0 0.0
        %1528 = vmatpush1.msra.mxu0 0.0
        %1529 = vmatprep.subr.mxu0 0.0
        %1530 = vmatpush1.msra.mxu0 0.0
        %1531 = vmatprep.subr.mxu0 0.0
        %1532 = vmatpush1.msra.mxu0 0.0
        %1533 = vmatprep.subr.mxu0 0.0
        %1534 = vmatpush1.msra.mxu0 0.0
        %1535 = vmatprep.subr.mxu0 0.0
        %1536 = vmatpush1.msra.mxu0 0.0
        %1537 = vmatprep.subr.mxu0 0.0
        %1538 = vmatpush1.msra.mxu0 0.0
        %1539 = vmatprep.subr.mxu0 0.0
        %1540 = vmatpush1.msra.mxu0 0.0
        %1541 = vmatprep.subr.mxu0 0.0
        %1542 = vmatpush1.msra.mxu0 0.0
        %1543 = vmatprep.subr.mxu0 0.0
        %1544 = vmatpush1.msra.mxu0 0.0
        %1545 = vmatprep.subr.mxu0 0.0
        %1546 = vmatpush1.msra.mxu0 0.0
        %1547 = vmatprep.subr.mxu0 0.0
        %1548 = vmatpush1.msra.mxu0 0.0
        %1549 = vmatprep.subr.mxu0 0.0
        %1550 = vmatpush1.msra.mxu0 0.0
        %1551 = vmatprep.subr.mxu0 0.0
        %1552 = vmatpush1.msra.mxu0 0.0
        %1553 = vmatprep.subr.mxu0 0.0
        %1554 = vmatpush1.msra.mxu0 0.0
        %1555 = vmatprep.subr.mxu0 0.0
        %1556 = vmatpush1.msra.mxu0 0.0
        %1557 = vmatprep.subr.mxu0 0.0
        %1558 = vmatpush1.msra.mxu0 0.0
        %1559 = vmatprep.subr.mxu0 0.0
        %1560 = vmatpush1.msra.mxu0 0.0
        %1561 = vmatprep.subr.mxu0 0.0
        %1562 = vmatpush1.msra.mxu0 0.0
        %1563 = vmatprep.subr.mxu0 0.0
        %1564 = vmatpush1.msra.mxu0 0.0
        %1565 = vmatprep.subr.mxu0 0.0
        %1566 = vmatpush1.msra.mxu0 0.0
        %1567 = vmatprep.subr.mxu0 0.0
        %1568 = vmatpush1.msra.mxu0 0.0
        %1569 = vmatprep.subr.mxu0 0.0
        %1570 = vmatpush1.msra.mxu0 0.0
        %1571 = vmatprep.subr.mxu0 0.0
        %1572 = vmatpush1.msra.mxu0 0.0
        %1573 = vmatprep.subr.mxu0 0.0
        %1574 = vmatpush1.msra.mxu0 0.0
        %1575 = vmatprep.subr.mxu0 0.0
        %1576 = vmatpush1.msra.mxu0 0.0
        %1577 = vmatprep.subr.mxu0 0.0
        %1578 = vmatpush1.msra.mxu0 0.0
        %1579 = vmatprep.subr.mxu0 0.0
        %1580 = vmatpush1.msra.mxu0 0.0
        %1581 = vmatprep.subr.mxu0 0.0
        %1582 = vmatpush1.msra.mxu0 0.0
        %1583 = vmatprep.mubr.f32.mxu0 0.0
        %1584 = vmatmul.mubr.f32.gmra.mrb[0].mxu0 %v1424
        %v1585 = vpop.f32.mrb[0].mxu0
        %v1586 = vadd.f32 0.0, %v1585
        %v1587 = vpop.f32.mrb[0].mxu0
        %1588 = vmatprep.mubr.f32.mxu0 0.0
        %1589 = vmatmul.mubr.f32.gmra.mrb[0].mxu0 %v1427
        %v1590 = vpop.f32.mrb[0].mxu0
        %v1591 = vadd.f32 0.0, %v1590
        %v1592 = vpop.f32.mrb[0].mxu0
        %1593 = vmatprep.mubr.f32.mxu0 0.0
        %1594 = vmatmul.mubr.f32.gmra.mrb[0].mxu0 %v1430
        %v1595 = vpop.f32.mrb[0].mxu0
        %v1596 = vadd.f32 0.0, %v1595
        %v1597 = vpop.f32.mrb[0].mxu0
        %1598 = vmatprep.mubr.f32.mxu0 0.0
        %1599 = vmatmul.mubr.f32.gmra.mrb[0].mxu0 %v1433
        %v1600 = vpop.f32.mrb[0].mxu0
        %v1601 = vadd.f32 0.0, %v1600
        %v1602 = vpop.f32.mrb[0].mxu0
        %1603 = vmatprep.mubr.f32.mxu0 0.0
        %1604 = vmatmul.mubr.f32.gmra.mrb[0].mxu0 %v1436
        %v1605 = vpop.f32.mrb[0].mxu0
        %v1606 = vadd.f32 0.0, %v1605
        %v1607 = vpop.f32.mrb[0].mxu0
        %1608 = vmatprep.mubr.f32.mxu0 0.0
        %1609 = vmatmul.mubr.f32.gmra.mrb[0].mxu0 %v1439
        %v1610 = vpop.f32.mrb[0].mxu0
        %v1611 = vadd.f32 0.0, %v1610
        %v1612 = vpop.f32.mrb[0].mxu0
        %1613 = vmatprep.mubr.f32.mxu0 0.0
        %1614 = vmatmul.mubr.f32.gmra.mrb[0].mxu0 %v1442
        %v1615 = vpop.f32.mrb[0].mxu0
        %v1616 = vadd.f32 0.0, %v1615
        %v1617 = vpop.f32.mrb[0].mxu0
        %1618 = vmatprep.mubr.f32.mxu0 0.0
        %1619 = vmatmul.mubr.f32.gmra.mrb[0].mxu0 %v1445
        %v1620 = vpop.f32.mrb[0].mxu0
        %v1621 = vadd.f32 0.0, %v1620
        %v1622 = vpop.f32.mrb[0].mxu0
        %1623 = vmatprep.mubr.f32.mxu0 0.0
        %1624 = vmatmul.mubr.f32.gmra.mrb[0].mxu0 %v1448
        %v1625 = vpop.f32.mrb[0].mxu0
        %v1626 = vadd.f32 0.0, %v1625
        %v1627 = vpop.f32.mrb[0].mxu0
        %1628 = vmatprep.mubr.f32.mxu0 0.0
        %1629 = vmatmul.mubr.f32.gmra.mrb[0].mxu0 %v1451
        %v1630 = vpop.f32.mrb[0].mxu0
        %v1631 = vadd.f32 0.0, %v1630
        %v1632 = vpop.f32.mrb[0].mxu0
        %1633 = vmatprep.mubr.f32.mxu0 0.0
        %1634 = vmatmul.mubr.f32.gmra.mrb[0].mxu0 %v1454
        %v1635 = vpop.f32.mrb[0].mxu0
        %v1636 = vadd.f32 0.0, %v1635
        %v1637 = vpop.f32.mrb[0].mxu0
        %1638 = vmatprep.mubr.f32.mxu0 0.0
        %1639 = vmatmul.mubr.f32.gmra.mrb[0].mxu0 %v1457
        %v1640 = vpop.f32.mrb[0].mxu0
        %v1641 = vadd.f32 0.0, %v1640
        %v1642 = vpop.f32.mrb[0].mxu0
        %1643 = vmatprep.mubr.f32.mxu0 0.0
        %1644 = vmatmul.mubr.f32.gmra.mrb[0].mxu0 %v1460
        %v1645 = vpop.f32.mrb[0].mxu0
        %v1646 = vadd.f32 0.0, %v1645
        %v1647 = vpop.f32.mrb[0].mxu0
        %1648 = vmatprep.mubr.f32.mxu0 0.0
        %1649 = vmatmul.mubr.f32.gmra.mrb[0].mxu0 %v1463
        %v1650 = vpop.f32.mrb[0].mxu0
        %v1651 = vadd.f32 0.0, %v1650
        %v1652 = vpop.f32.mrb[0].mxu0
        %1653 = vmatprep.mubr.f32.mxu0 0.0
        %1654 = vmatmul.mubr.f32.gmra.mrb[0].mxu0 %v1466
        %v1655 = vpop.f32.mrb[0].mxu0
        %v1656 = vadd.f32 0.0, %v1655
        %v1657 = vpop.f32.mrb[0].mxu0
        %1658 = vmatprep.mubr.f32.mxu0 0.0
        %1659 = vmatmul.mubr.f32.gmra.mrb[0].mxu0 %v1469
        %v1660 = vpop.f32.mrb[0].mxu0
        %v1661 = vadd.f32 0.0, %v1660
        %v1662 = vpop.f32.mrb[0].mxu0
        %1663 = vmatprep.mubr.f32.mxu0 0.0
        %1664 = vmatmul.mubr.f32.gmra.mrb[0].mxu0 %v1472
        %v1665 = vpop.f32.mrb[0].mxu0
        %v1666 = vadd.f32 0.0, %v1665
        %v1667 = vpop.f32.mrb[0].mxu0
        %1668 = vmatprep.mubr.f32.mxu0 0.0
        %1669 = vmatmul.mubr.f32.gmra.mrb[0].mxu0 %v1475
        %v1670 = vpop.f32.mrb[0].mxu0
        %v1671 = vadd.f32 0.0, %v1670
        %v1672 = vpop.f32.mrb[0].mxu0
        %1673 = vmatprep.mubr.f32.mxu0 0.0
        %1674 = vmatmul.mubr.f32.gmra.mrb[0].mxu0 %v1478
        %v1675 = vpop.f32.mrb[0].mxu0
        %v1676 = vadd.f32 0.0, %v1675
        %v1677 = vpop.f32.mrb[0].mxu0
        %1678 = vmatprep.mubr.f32.mxu0 0.0
        %1679 = vmatmul.mubr.f32.gmra.mrb[0].mxu0 %v1481
        %v1680 = vpop.f32.mrb[0].mxu0
        %v1681 = vadd.f32 0.0, %v1680
        %v1682 = vpop.f32.mrb[0].mxu0
        %1683 = vmatprep.mubr.f32.mxu0 0.0
        %1684 = vmatmul.mubr.f32.gmra.mrb[0].mxu0 %v1484
        %v1685 = vpop.f32.mrb[0].mxu0
        %v1686 = vadd.f32 0.0, %v1685
        %v1687 = vpop.f32.mrb[0].mxu0
        %1688 = vmatprep.mubr.f32.mxu0 0.0
        %1689 = vmatmul.mubr.f32.gmra.mrb[0].mxu0 %v1487
        %v1690 = vpop.f32.mrb[0].mxu0
        %v1691 = vadd.f32 0.0, %v1690
        %v1692 = vpop.f32.mrb[0].mxu0
        %1693 = vmatprep.mubr.f32.mxu0 0.0
        %1694 = vmatmul.mubr.f32.gmra.mrb[0].mxu0 %v1490
        %v1695 = vpop.f32.mrb[0].mxu0
        %v1696 = vadd.f32 0.0, %v1695
        %v1697 = vpop.f32.mrb[0].mxu0
        %1698 = vmatprep.mubr.f32.mxu0 0.0
        %1699 = vmatmul.mubr.f32.gmra.mrb[0].mxu0 %v1493
        %v1700 = vpop.f32.mrb[0].mxu0
        %v1701 = vadd.f32 0.0, %v1700
        %v1702 = vpop.f32.mrb[0].mxu0
        %1703 = vmatprep.mubr.f32.mxu0 0.0
        %1704 = vmatmul.mubr.f32.gmra.mrb[0].mxu0 %v1496
        %v1705 = vpop.f32.mrb[0].mxu0
        %v1706 = vadd.f32 0.0, %v1705
        %v1707 = vpop.f32.mrb[0].mxu0
        %1708 = vmatprep.mubr.f32.mxu0 0.0
        %1709 = vmatmul.mubr.f32.gmra.mrb[0].mxu0 %v1499
        %v1710 = vpop.f32.mrb[0].mxu0
        %v1711 = vadd.f32 0.0, %v1710
        %v1712 = vpop.f32.mrb[0].mxu0
        %1713 = vmatprep.mubr.f32.mxu0 0.0
        %1714 = vmatmul.mubr.f32.gmra.mrb[0].mxu0 %v1502
        %v1715 = vpop.f32.mrb[0].mxu0
        %v1716 = vadd.f32 0.0, %v1715
        %v1717 = vpop.f32.mrb[0].mxu0
        %1718 = vmatprep.mubr.f32.mxu0 0.0
        %1719 = vmatmul.mubr.f32.gmra.mrb[0].mxu0 %v1505
        %v1720 = vpop.f32.mrb[0].mxu0
        %v1721 = vadd.f32 0.0, %v1720
        %v1722 = vpop.f32.mrb[0].mxu0
        %1723 = vmatprep.mubr.f32.mxu0 0.0
        %1724 = vmatmul.mubr.f32.gmra.mrb[0].mxu0 %v1508
        %v1725 = vpop.f32.mrb[0].mxu0
        %v1726 = vadd.f32 0.0, %v1725
        %v1727 = vpop.f32.mrb[0].mxu0
        %1728 = vmatprep.mubr.f32.mxu0 0.0
        %1729 = vmatmul.mubr.f32.gmra.mrb[0].mxu0 %v1511
        %v1730 = vpop.f32.mrb[0].mxu0
        %v1731 = vadd.f32 0.0, %v1730
        %v1732 = vpop.f32.mrb[0].mxu0
        %1733 = vmatprep.mubr.f32.mxu0 0.0
        %1734 = vmatmul.mubr.f32.gmra.mrb[0].mxu0 %v1514
        %v1735 = vpop.f32.mrb[0].mxu0
        %v1736 = vadd.f32 0.0, %v1735
        %v1737 = vpop.f32.mrb[0].mxu0
        %1738 = vmatprep.mubr.f32.mxu0 0.0
        %1739 = vmatmul.mubr.f32.gmra.mrb[0].mxu0 %v1517
        %v1740 = vpop.f32.mrb[0].mxu0
        %v1741 = vadd.f32 0.0, %v1740
        %v1742 = vpop.f32.mrb[0].mxu0
        %1743 = vdwg.mxu0
        %v1744 = vadd.f32 %v1231, %v1586
        %v1745 = vadd.f32 %v1236, %v1591
        %v1746 = vadd.f32 %v1241, %v1596
        %v1747 = vadd.f32 %v1246, %v1601
        %v1748 = vadd.f32 %v1251, %v1606
        %v1749 = vadd.f32 %v1256, %v1611
        %v1750 = vadd.f32 %v1261, %v1616
        %v1751 = vadd.f32 %v1266, %v1621
        %v1752 = vadd.f32 %v1271, %v1626
        %v1753 = vadd.f32 %v1276, %v1631
        %v1754 = vadd.f32 %v1281, %v1636
        %v1755 = vadd.f32 %v1286, %v1641
        %v1756 = vadd.f32 %v1291, %v1646
        %v1757 = vadd.f32 %v1296, %v1651
        %v1758 = vadd.f32 %v1301, %v1656
        %v1759 = vadd.f32 %v1306, %v1661
        %v1760 = vadd.f32 %v1311, %v1666
        %v1761 = vadd.f32 %v1316, %v1671
        %v1762 = vadd.f32 %v1321, %v1676
        %v1763 = vadd.f32 %v1326, %v1681
        %v1764 = vadd.f32 %v1331, %v1686
        %v1765 = vadd.f32 %v1336, %v1691
        %v1766 = vadd.f32 %v1341, %v1696
        %v1767 = vadd.f32 %v1346, %v1701
        %v1768 = vadd.f32 %v1351, %v1706
        %v1769 = vadd.f32 %v1356, %v1711
        %v1770 = vadd.f32 %v1361, %v1716
        %v1771 = vadd.f32 %v1366, %v1721
        %v1772 = vadd.f32 %v1371, %v1726
        %v1773 = vadd.f32 %v1376, %v1731
        %v1774 = vadd.f32 %v1381, %v1736
        %v1775 = vadd.f32 %v1386, %v1741
        %v1776 = vld [vmem:[%s576] sm:$0xff]
        %v1777 = vld [vmem:[%s576 + $0x8] sm:$0xff]
        %v1778 = vld [vmem:[%s576 + $0x18] sm:$0xff]
        %v1779 = vld [vmem:[%s576 + $0x20] sm:$0xff]
        %v1780 = vld [vmem:[%s576 + $0x30] sm:$0xff]
        %v1781 = vld [vmem:[%s576 + $0x38] sm:$0xff]
        %v1782 = vld [vmem:[%s576 + $0x48] sm:$0xff]
        %v1783 = vld [vmem:[%s576 + $0x50] sm:$0xff]
        %v1784 = vld [vmem:[%s576 + $0x60] sm:$0xff]
        %v1785 = vld [vmem:[%s576 + $0x68] sm:$0xff]
        %v1786 = vld [vmem:[%s576 + $0x78] sm:$0xff]
        %v1787 = vld [vmem:[%s576 + $0x80] sm:$0xff]
        %v1788 = vld [vmem:[%s576 + $0x90] sm:$0xff]
        %v1789 = vld [vmem:[%s576 + $0x98] sm:$0xff]
        %v1790 = vld [vmem:[%s576 + $0xa8] sm:$0xff]
        %v1791 = vld [vmem:[%s576 + $0xb0] sm:$0xff]
        %v1792 = vld [vmem:[%s576 + $0xc0] sm:$0xff]
        %v1793 = vld [vmem:[%s576 + $0xc8] sm:$0xff]
        %v1794 = vld [vmem:[%s576 + $0xd8] sm:$0xff]
        %v1795 = vld [vmem:[%s576 + $0xe0] sm:$0xff]
        %v1796 = vld [vmem:[%s576 + $0xf0] sm:$0xff]
        %v1797 = vld [vmem:[%s576 + $0xf8] sm:$0xff]
        %v1798 = vld [vmem:[%s576 + $0x108] sm:$0xff]
        %v1799 = vld [vmem:[%s576 + $0x110] sm:$0xff]
        %v1800 = vld [vmem:[%s576 + $0x120] sm:$0xff]
        %v1801 = vld [vmem:[%s576 + $0x128] sm:$0xff]
        %v1802 = vld [vmem:[%s576 + $0x138] sm:$0xff]
        %v1803 = vld [vmem:[%s576 + $0x140] sm:$0xff]
        %v1804 = vld [vmem:[%s576 + $0x150] sm:$0xff]
        %v1805 = vld [vmem:[%s576 + $0x158] sm:$0xff]
        %v1806 = vld [vmem:[%s576 + $0x168] sm:$0xff]
        %v1807 = vld [vmem:[%s576 + $0x170] sm:$0xff]
        %s1808 = scalar_lea.vmem [#allocation9], 24
        %v1809 = vld [vmem:[%s1808] sm:$0xff]
        %v1811 = vsel %vm312, %v1776, 0
        %v1814 = vsel %vm312, %v1777, 0
        %v1817 = vsel %vm312, %v1778, 0
        %v1820 = vsel %vm312, %v1779, 0
        %v1823 = vsel %vm312, %v1780, 0
        %v1826 = vsel %vm312, %v1781, 0
        %v1829 = vsel %vm312, %v1782, 0
        %v1832 = vsel %vm312, %v1783, 0
        %v1835 = vsel %vm312, %v1784, 0
        %v1838 = vsel %vm312, %v1785, 0
        %v1841 = vsel %vm312, %v1786, 0
        %v1844 = vsel %vm312, %v1787, 0
        %v1847 = vsel %vm312, %v1788, 0
        %v1850 = vsel %vm312, %v1789, 0
        %v1853 = vsel %vm312, %v1790, 0
        %v1856 = vsel %vm312, %v1791, 0
        %v1859 = vsel %vm312, %v1792, 0
        %v1862 = vsel %vm312, %v1793, 0
        %v1865 = vsel %vm312, %v1794, 0
        %v1868 = vsel %vm312, %v1795, 0
        %v1871 = vsel %vm312, %v1796, 0
        %v1874 = vsel %vm312, %v1797, 0
        %v1877 = vsel %vm312, %v1798, 0
        %v1880 = vsel %vm312, %v1799, 0
        %v1883 = vsel %vm312, %v1800, 0
        %v1886 = vsel %vm312, %v1801, 0
        %v1889 = vsel %vm312, %v1802, 0
        %v1892 = vsel %vm312, %v1803, 0
        %v1895 = vsel %vm312, %v1804, 0
        %v1898 = vsel %vm312, %v1805, 0
        %v1901 = vsel %vm312, %v1806, 0
        %v1904 = vsel %vm312, %v1807, 0
        %1906 = vmatprep.subr.mxu0 0.0
        %1907 = vmatpush1.msra.mxu0 %v1809
        %1908 = vmatprep.subr.mxu0 0.0
        %1909 = vmatpush1.msra.mxu0 0.0
        %1910 = vmatprep.subr.mxu0 0.0
        %1911 = vmatpush1.msra.mxu0 0.0
        %1912 = vmatprep.subr.mxu0 0.0
        %1913 = vmatpush1.msra.mxu0 0.0
        %1914 = vmatprep.subr.mxu0 0.0
        %1915 = vmatpush1.msra.mxu0 0.0
        %1916 = vmatprep.subr.mxu0 0.0
        %1917 = vmatpush1.msra.mxu0 0.0
        %1918 = vmatprep.subr.mxu0 0.0
        %1919 = vmatpush1.msra.mxu0 0.0
        %1920 = vmatprep.subr.mxu0 0.0
        %1921 = vmatpush1.msra.mxu0 0.0
        %1922 = vmatprep.subr.mxu0 0.0
        %1923 = vmatpush1.msra.mxu0 0.0
        %1924 = vmatprep.subr.mxu0 0.0
        %1925 = vmatpush1.msra.mxu0 0.0
        %1926 = vmatprep.subr.mxu0 0.0
        %1927 = vmatpush1.msra.mxu0 0.0
        %1928 = vmatprep.subr.mxu0 0.0
        %1929 = vmatpush1.msra.mxu0 0.0
        %1930 = vmatprep.subr.mxu0 0.0
        %1931 = vmatpush1.msra.mxu0 0.0
        %1932 = vmatprep.subr.mxu0 0.0
        %1933 = vmatpush1.msra.mxu0 0.0
        %1934 = vmatprep.subr.mxu0 0.0
        %1935 = vmatpush1.msra.mxu0 0.0
        %1936 = vmatprep.subr.mxu0 0.0
        %1937 = vmatpush1.msra.mxu0 0.0
        %1938 = vmatprep.subr.mxu0 0.0
        %1939 = vmatpush1.msra.mxu0 0.0
        %1940 = vmatprep.subr.mxu0 0.0
        %1941 = vmatpush1.msra.mxu0 0.0
        %1942 = vmatprep.subr.mxu0 0.0
        %1943 = vmatpush1.msra.mxu0 0.0
        %1944 = vmatprep.subr.mxu0 0.0
        %1945 = vmatpush1.msra.mxu0 0.0
        %1946 = vmatprep.subr.mxu0 0.0
        %1947 = vmatpush1.msra.mxu0 0.0
        %1948 = vmatprep.subr.mxu0 0.0
        %1949 = vmatpush1.msra.mxu0 0.0
        %1950 = vmatprep.subr.mxu0 0.0
        %1951 = vmatpush1.msra.mxu0 0.0
        %1952 = vmatprep.subr.mxu0 0.0
        %1953 = vmatpush1.msra.mxu0 0.0
        %1954 = vmatprep.subr.mxu0 0.0
        %1955 = vmatpush1.msra.mxu0 0.0
        %1956 = vmatprep.subr.mxu0 0.0
        %1957 = vmatpush1.msra.mxu0 0.0
        %1958 = vmatprep.subr.mxu0 0.0
        %1959 = vmatpush1.msra.mxu0 0.0
        %1960 = vmatprep.subr.mxu0 0.0
        %1961 = vmatpush1.msra.mxu0 0.0
        %1962 = vmatprep.subr.mxu0 0.0
        %1963 = vmatpush1.msra.mxu0 0.0
        %1964 = vmatprep.subr.mxu0 0.0
        %1965 = vmatpush1.msra.mxu0 0.0
        %1966 = vmatprep.subr.mxu0 0.0
        %1967 = vmatpush1.msra.mxu0 0.0
        %1968 = vmatprep.subr.mxu0 0.0
        %1969 = vmatpush1.msra.mxu0 0.0
        %1970 = vmatprep.mubr.f32.mxu0 0.0
        %1971 = vmatmul.mubr.f32.gmra.mrb[0].mxu0 %v1811
        %v1972 = vpop.f32.mrb[0].mxu0
        %v1973 = vadd.f32 0.0, %v1972
        %v1974 = vpop.f32.mrb[0].mxu0
        %1975 = vmatprep.mubr.f32.mxu0 0.0
        %1976 = vmatmul.mubr.f32.gmra.mrb[0].mxu0 %v1814
        %v1977 = vpop.f32.mrb[0].mxu0
        %v1978 = vadd.f32 0.0, %v1977
        %v1979 = vpop.f32.mrb[0].mxu0
        %1980 = vmatprep.mubr.f32.mxu0 0.0
        %1981 = vmatmul.mubr.f32.gmra.mrb[0].mxu0 %v1817
        %v1982 = vpop.f32.mrb[0].mxu0
        %v1983 = vadd.f32 0.0, %v1982
        %v1984 = vpop.f32.mrb[0].mxu0
        %1985 = vmatprep.mubr.f32.mxu0 0.0
        %1986 = vmatmul.mubr.f32.gmra.mrb[0].mxu0 %v1820
        %v1987 = vpop.f32.mrb[0].mxu0
        %v1988 = vadd.f32 0.0, %v1987
        %v1989 = vpop.f32.mrb[0].mxu0
        %1990 = vmatprep.mubr.f32.mxu0 0.0
        %1991 = vmatmul.mubr.f32.gmra.mrb[0].mxu0 %v1823
        %v1992 = vpop.f32.mrb[0].mxu0
        %v1993 = vadd.f32 0.0, %v1992
        %v1994 = vpop.f32.mrb[0].mxu0
        %1995 = vmatprep.mubr.f32.mxu0 0.0
        %1996 = vmatmul.mubr.f32.gmra.mrb[0].mxu0 %v1826
        %v1997 = vpop.f32.mrb[0].mxu0
        %v1998 = vadd.f32 0.0, %v1997
        %v1999 = vpop.f32.mrb[0].mxu0
        %2000 = vmatprep.mubr.f32.mxu0 0.0
        %2001 = vmatmul.mubr.f32.gmra.mrb[0].mxu0 %v1829
        %v2002 = vpop.f32.mrb[0].mxu0
        %v2003 = vadd.f32 0.0, %v2002
        %v2004 = vpop.f32.mrb[0].mxu0
        %2005 = vmatprep.mubr.f32.mxu0 0.0
        %2006 = vmatmul.mubr.f32.gmra.mrb[0].mxu0 %v1832
        %v2007 = vpop.f32.mrb[0].mxu0
        %v2008 = vadd.f32 0.0, %v2007
        %v2009 = vpop.f32.mrb[0].mxu0
        %2010 = vmatprep.mubr.f32.mxu0 0.0
        %2011 = vmatmul.mubr.f32.gmra.mrb[0].mxu0 %v1835
        %v2012 = vpop.f32.mrb[0].mxu0
        %v2013 = vadd.f32 0.0, %v2012
        %v2014 = vpop.f32.mrb[0].mxu0
        %2015 = vmatprep.mubr.f32.mxu0 0.0
        %2016 = vmatmul.mubr.f32.gmra.mrb[0].mxu0 %v1838
        %v2017 = vpop.f32.mrb[0].mxu0
        %v2018 = vadd.f32 0.0, %v2017
        %v2019 = vpop.f32.mrb[0].mxu0
        %2020 = vmatprep.mubr.f32.mxu0 0.0
        %2021 = vmatmul.mubr.f32.gmra.mrb[0].mxu0 %v1841
        %v2022 = vpop.f32.mrb[0].mxu0
        %v2023 = vadd.f32 0.0, %v2022
        %v2024 = vpop.f32.mrb[0].mxu0
        %2025 = vmatprep.mubr.f32.mxu0 0.0
        %2026 = vmatmul.mubr.f32.gmra.mrb[0].mxu0 %v1844
        %v2027 = vpop.f32.mrb[0].mxu0
        %v2028 = vadd.f32 0.0, %v2027
        %v2029 = vpop.f32.mrb[0].mxu0
        %2030 = vmatprep.mubr.f32.mxu0 0.0
        %2031 = vmatmul.mubr.f32.gmra.mrb[0].mxu0 %v1847
        %v2032 = vpop.f32.mrb[0].mxu0
        %v2033 = vadd.f32 0.0, %v2032
        %v2034 = vpop.f32.mrb[0].mxu0
        %2035 = vmatprep.mubr.f32.mxu0 0.0
        %2036 = vmatmul.mubr.f32.gmra.mrb[0].mxu0 %v1850
        %v2037 = vpop.f32.mrb[0].mxu0
        %v2038 = vadd.f32 0.0, %v2037
        %v2039 = vpop.f32.mrb[0].mxu0
        %2040 = vmatprep.mubr.f32.mxu0 0.0
        %2041 = vmatmul.mubr.f32.gmra.mrb[0].mxu0 %v1853
        %v2042 = vpop.f32.mrb[0].mxu0
        %v2043 = vadd.f32 0.0, %v2042
        %v2044 = vpop.f32.mrb[0].mxu0
        %2045 = vmatprep.mubr.f32.mxu0 0.0
        %2046 = vmatmul.mubr.f32.gmra.mrb[0].mxu0 %v1856
        %v2047 = vpop.f32.mrb[0].mxu0
        %v2048 = vadd.f32 0.0, %v2047
        %v2049 = vpop.f32.mrb[0].mxu0
        %2050 = vmatprep.mubr.f32.mxu0 0.0
        %2051 = vmatmul.mubr.f32.gmra.mrb[0].mxu0 %v1859
        %v2052 = vpop.f32.mrb[0].mxu0
        %v2053 = vadd.f32 0.0, %v2052
        %v2054 = vpop.f32.mrb[0].mxu0
        %2055 = vmatprep.mubr.f32.mxu0 0.0
        %2056 = vmatmul.mubr.f32.gmra.mrb[0].mxu0 %v1862
        %v2057 = vpop.f32.mrb[0].mxu0
        %v2058 = vadd.f32 0.0, %v2057
        %v2059 = vpop.f32.mrb[0].mxu0
        %2060 = vmatprep.mubr.f32.mxu0 0.0
        %2061 = vmatmul.mubr.f32.gmra.mrb[0].mxu0 %v1865
        %v2062 = vpop.f32.mrb[0].mxu0
        %v2063 = vadd.f32 0.0, %v2062
        %v2064 = vpop.f32.mrb[0].mxu0
        %2065 = vmatprep.mubr.f32.mxu0 0.0
        %2066 = vmatmul.mubr.f32.gmra.mrb[0].mxu0 %v1868
        %v2067 = vpop.f32.mrb[0].mxu0
        %v2068 = vadd.f32 0.0, %v2067
        %v2069 = vpop.f32.mrb[0].mxu0
        %2070 = vmatprep.mubr.f32.mxu0 0.0
        %2071 = vmatmul.mubr.f32.gmra.mrb[0].mxu0 %v1871
        %v2072 = vpop.f32.mrb[0].mxu0
        %v2073 = vadd.f32 0.0, %v2072
        %v2074 = vpop.f32.mrb[0].mxu0
        %2075 = vmatprep.mubr.f32.mxu0 0.0
        %2076 = vmatmul.mubr.f32.gmra.mrb[0].mxu0 %v1874
        %v2077 = vpop.f32.mrb[0].mxu0
        %v2078 = vadd.f32 0.0, %v2077
        %v2079 = vpop.f32.mrb[0].mxu0
        %2080 = vmatprep.mubr.f32.mxu0 0.0
        %2081 = vmatmul.mubr.f32.gmra.mrb[0].mxu0 %v1877
        %v2082 = vpop.f32.mrb[0].mxu0
        %v2083 = vadd.f32 0.0, %v2082
        %v2084 = vpop.f32.mrb[0].mxu0
        %2085 = vmatprep.mubr.f32.mxu0 0.0
        %2086 = vmatmul.mubr.f32.gmra.mrb[0].mxu0 %v1880
        %v2087 = vpop.f32.mrb[0].mxu0
        %v2088 = vadd.f32 0.0, %v2087
        %v2089 = vpop.f32.mrb[0].mxu0
        %2090 = vmatprep.mubr.f32.mxu0 0.0
        %2091 = vmatmul.mubr.f32.gmra.mrb[0].mxu0 %v1883
        %v2092 = vpop.f32.mrb[0].mxu0
        %v2093 = vadd.f32 0.0, %v2092
        %v2094 = vpop.f32.mrb[0].mxu0
        %2095 = vmatprep.mubr.f32.mxu0 0.0
        %2096 = vmatmul.mubr.f32.gmra.mrb[0].mxu0 %v1886
        %v2097 = vpop.f32.mrb[0].mxu0
        %v2098 = vadd.f32 0.0, %v2097
        %v2099 = vpop.f32.mrb[0].mxu0
        %2100 = vmatprep.mubr.f32.mxu0 0.0
        %2101 = vmatmul.mubr.f32.gmra.mrb[0].mxu0 %v1889
        %v2102 = vpop.f32.mrb[0].mxu0
        %v2103 = vadd.f32 0.0, %v2102
        %v2104 = vpop.f32.mrb[0].mxu0
        %2105 = vmatprep.mubr.f32.mxu0 0.0
        %2106 = vmatmul.mubr.f32.gmra.mrb[0].mxu0 %v1892
        %v2107 = vpop.f32.mrb[0].mxu0
        %v2108 = vadd.f32 0.0, %v2107
        %v2109 = vpop.f32.mrb[0].mxu0
        %2110 = vmatprep.mubr.f32.mxu0 0.0
        %2111 = vmatmul.mubr.f32.gmra.mrb[0].mxu0 %v1895
        %v2112 = vpop.f32.mrb[0].mxu0
        %v2113 = vadd.f32 0.0, %v2112
        %v2114 = vpop.f32.mrb[0].mxu0
        %2115 = vmatprep.mubr.f32.mxu0 0.0
        %2116 = vmatmul.mubr.f32.gmra.mrb[0].mxu0 %v1898
        %v2117 = vpop.f32.mrb[0].mxu0
        %v2118 = vadd.f32 0.0, %v2117
        %v2119 = vpop.f32.mrb[0].mxu0
        %2120 = vmatprep.mubr.f32.mxu0 0.0
        %2121 = vmatmul.mubr.f32.gmra.mrb[0].mxu0 %v1901
        %v2122 = vpop.f32.mrb[0].mxu0
        %v2123 = vadd.f32 0.0, %v2122
        %v2124 = vpop.f32.mrb[0].mxu0
        %2125 = vmatprep.mubr.f32.mxu0 0.0
        %2126 = vmatmul.mubr.f32.gmra.mrb[0].mxu0 %v1904
        %v2127 = vpop.f32.mrb[0].mxu0
        %v2128 = vadd.f32 0.0, %v2127
        %v2129 = vpop.f32.mrb[0].mxu0
        %2130 = vdwg.mxu0
        %v2131 = vadd.f32 %v1744, %v1973
        %v2132 = vadd.f32 %v1745, %v1978
        %v2133 = vadd.f32 %v1746, %v1983
        %v2134 = vadd.f32 %v1747, %v1988
        %v2135 = vadd.f32 %v1748, %v1993
        %v2136 = vadd.f32 %v1749, %v1998
        %v2137 = vadd.f32 %v1750, %v2003
        %v2138 = vadd.f32 %v1751, %v2008
        %v2139 = vadd.f32 %v1752, %v2013
        %v2140 = vadd.f32 %v1753, %v2018
        %v2141 = vadd.f32 %v1754, %v2023
        %v2142 = vadd.f32 %v1755, %v2028
        %v2143 = vadd.f32 %v1756, %v2033
        %v2144 = vadd.f32 %v1757, %v2038
        %v2145 = vadd.f32 %v1758, %v2043
        %v2146 = vadd.f32 %v1759, %v2048
        %v2147 = vadd.f32 %v1760, %v2053
        %v2148 = vadd.f32 %v1761, %v2058
        %v2149 = vadd.f32 %v1762, %v2063
        %v2150 = vadd.f32 %v1763, %v2068
        %v2151 = vadd.f32 %v1764, %v2073
        %v2152 = vadd.f32 %v1765, %v2078
        %v2153 = vadd.f32 %v1766, %v2083
        %v2154 = vadd.f32 %v1767, %v2088
        %v2155 = vadd.f32 %v1768, %v2093
        %v2156 = vadd.f32 %v1769, %v2098
        %v2157 = vadd.f32 %v1770, %v2103
        %v2158 = vadd.f32 %v1771, %v2108
        %v2159 = vadd.f32 %v1772, %v2113
        %v2160 = vadd.f32 %v1773, %v2118
        %v2161 = vadd.f32 %v1774, %v2123
        %v2162 = vadd.f32 %v1775, %v2128
        %v2163 = vld [vmem:[%s576 + $0x1] sm:$0xff]
        %v2164 = vld [vmem:[%s576 + $0x9] sm:$0xff]
        %v2165 = vld [vmem:[%s576 + $0x19] sm:$0xff]
        %v2166 = vld [vmem:[%s576 + $0x21] sm:$0xff]
        %v2167 = vld [vmem:[%s576 + $0x31] sm:$0xff]
        %v2168 = vld [vmem:[%s576 + $0x39] sm:$0xff]
        %v2169 = vld [vmem:[%s576 + $0x49] sm:$0xff]
        %v2170 = vld [vmem:[%s576 + $0x51] sm:$0xff]
        %v2171 = vld [vmem:[%s576 + $0x61] sm:$0xff]
        %v2172 = vld [vmem:[%s576 + $0x69] sm:$0xff]
        %v2173 = vld [vmem:[%s576 + $0x79] sm:$0xff]
        %v2174 = vld [vmem:[%s576 + $0x81] sm:$0xff]
        %v2175 = vld [vmem:[%s576 + $0x91] sm:$0xff]
        %v2176 = vld [vmem:[%s576 + $0x99] sm:$0xff]
        %v2177 = vld [vmem:[%s576 + $0xa9] sm:$0xff]
        %v2178 = vld [vmem:[%s576 + $0xb1] sm:$0xff]
        %v2179 = vld [vmem:[%s576 + $0xc1] sm:$0xff]
        %v2180 = vld [vmem:[%s576 + $0xc9] sm:$0xff]
        %v2181 = vld [vmem:[%s576 + $0xd9] sm:$0xff]
        %v2182 = vld [vmem:[%s576 + $0xe1] sm:$0xff]
        %v2183 = vld [vmem:[%s576 + $0xf1] sm:$0xff]
        %v2184 = vld [vmem:[%s576 + $0xf9] sm:$0xff]
        %v2185 = vld [vmem:[%s576 + $0x109] sm:$0xff]
        %v2186 = vld [vmem:[%s576 + $0x111] sm:$0xff]
        %v2187 = vld [vmem:[%s576 + $0x121] sm:$0xff]
        %v2188 = vld [vmem:[%s576 + $0x129] sm:$0xff]
        %v2189 = vld [vmem:[%s576 + $0x139] sm:$0xff]
        %v2190 = vld [vmem:[%s576 + $0x141] sm:$0xff]
        %v2191 = vld [vmem:[%s576 + $0x151] sm:$0xff]
        %v2192 = vld [vmem:[%s576 + $0x159] sm:$0xff]
        %v2193 = vld [vmem:[%s576 + $0x169] sm:$0xff]
        %v2194 = vld [vmem:[%s576 + $0x171] sm:$0xff]
        %s2195 = scalar_lea.vmem [#allocation9], 32
        %v2196 = vld [vmem:[%s2195] sm:$0xff]
        %v2198 = vsel %vm312, %v2163, 0
        %v2201 = vsel %vm312, %v2164, 0
        %v2204 = vsel %vm312, %v2165, 0
        %v2207 = vsel %vm312, %v2166, 0
        %v2210 = vsel %vm312, %v2167, 0
        %v2213 = vsel %vm312, %v2168, 0
        %v2216 = vsel %vm312, %v2169, 0
        %v2219 = vsel %vm312, %v2170, 0
        %v2222 = vsel %vm312, %v2171, 0
        %v2225 = vsel %vm312, %v2172, 0
        %v2228 = vsel %vm312, %v2173, 0
        %v2231 = vsel %vm312, %v2174, 0
        %v2234 = vsel %vm312, %v2175, 0
        %v2237 = vsel %vm312, %v2176, 0
        %v2240 = vsel %vm312, %v2177, 0
        %v2243 = vsel %vm312, %v2178, 0
        %v2246 = vsel %vm312, %v2179, 0
        %v2249 = vsel %vm312, %v2180, 0
        %v2252 = vsel %vm312, %v2181, 0
        %v2255 = vsel %vm312, %v2182, 0
        %v2258 = vsel %vm312, %v2183, 0
        %v2261 = vsel %vm312, %v2184, 0
        %v2264 = vsel %vm312, %v2185, 0
        %v2267 = vsel %vm312, %v2186, 0
        %v2270 = vsel %vm312, %v2187, 0
        %v2273 = vsel %vm312, %v2188, 0
        %v2276 = vsel %vm312, %v2189, 0
        %v2279 = vsel %vm312, %v2190, 0
        %v2282 = vsel %vm312, %v2191, 0
        %v2285 = vsel %vm312, %v2192, 0
        %v2288 = vsel %vm312, %v2193, 0
        %v2291 = vsel %vm312, %v2194, 0
        %2293 = vmatprep.subr.mxu0 0.0
        %2294 = vmatpush1.msra.mxu0 %v2196
        %2295 = vmatprep.subr.mxu0 0.0
        %2296 = vmatpush1.msra.mxu0 0.0
        %2297 = vmatprep.subr.mxu0 0.0
        %2298 = vmatpush1.msra.mxu0 0.0
        %2299 = vmatprep.subr.mxu0 0.0
        %2300 = vmatpush1.msra.mxu0 0.0
        %2301 = vmatprep.subr.mxu0 0.0
        %2302 = vmatpush1.msra.mxu0 0.0
        %2303 = vmatprep.subr.mxu0 0.0
        %2304 = vmatpush1.msra.mxu0 0.0
        %2305 = vmatprep.subr.mxu0 0.0
        %2306 = vmatpush1.msra.mxu0 0.0
        %2307 = vmatprep.subr.mxu0 0.0
        %2308 = vmatpush1.msra.mxu0 0.0
        %2309 = vmatprep.subr.mxu0 0.0
        %2310 = vmatpush1.msra.mxu0 0.0
        %2311 = vmatprep.subr.mxu0 0.0
        %2312 = vmatpush1.msra.mxu0 0.0
        %2313 = vmatprep.subr.mxu0 0.0
        %2314 = vmatpush1.msra.mxu0 0.0
        %2315 = vmatprep.subr.mxu0 0.0
        %2316 = vmatpush1.msra.mxu0 0.0
        %2317 = vmatprep.subr.mxu0 0.0
        %2318 = vmatpush1.msra.mxu0 0.0
        %2319 = vmatprep.subr.mxu0 0.0
        %2320 = vmatpush1.msra.mxu0 0.0
        %2321 = vmatprep.subr.mxu0 0.0
        %2322 = vmatpush1.msra.mxu0 0.0
        %2323 = vmatprep.subr.mxu0 0.0
        %2324 = vmatpush1.msra.mxu0 0.0
        %2325 = vmatprep.subr.mxu0 0.0
        %2326 = vmatpush1.msra.mxu0 0.0
        %2327 = vmatprep.subr.mxu0 0.0
        %2328 = vmatpush1.msra.mxu0 0.0
        %2329 = vmatprep.subr.mxu0 0.0
        %2330 = vmatpush1.msra.mxu0 0.0
        %2331 = vmatprep.subr.mxu0 0.0
        %2332 = vmatpush1.msra.mxu0 0.0
        %2333 = vmatprep.subr.mxu0 0.0
        %2334 = vmatpush1.msra.mxu0 0.0
        %2335 = vmatprep.subr.mxu0 0.0
        %2336 = vmatpush1.msra.mxu0 0.0
        %2337 = vmatprep.subr.mxu0 0.0
        %2338 = vmatpush1.msra.mxu0 0.0
        %2339 = vmatprep.subr.mxu0 0.0
        %2340 = vmatpush1.msra.mxu0 0.0
        %2341 = vmatprep.subr.mxu0 0.0
        %2342 = vmatpush1.msra.mxu0 0.0
        %2343 = vmatprep.subr.mxu0 0.0
        %2344 = vmatpush1.msra.mxu0 0.0
        %2345 = vmatprep.subr.mxu0 0.0
        %2346 = vmatpush1.msra.mxu0 0.0
        %2347 = vmatprep.subr.mxu0 0.0
        %2348 = vmatpush1.msra.mxu0 0.0
        %2349 = vmatprep.subr.mxu0 0.0
        %2350 = vmatpush1.msra.mxu0 0.0
        %2351 = vmatprep.subr.mxu0 0.0
        %2352 = vmatpush1.msra.mxu0 0.0
        %2353 = vmatprep.subr.mxu0 0.0
        %2354 = vmatpush1.msra.mxu0 0.0
        %2355 = vmatprep.subr.mxu0 0.0
        %2356 = vmatpush1.msra.mxu0 0.0
        %2357 = vmatprep.mubr.f32.mxu0 0.0
        %2358 = vmatmul.mubr.f32.gmra.mrb[0].mxu0 %v2198
        %v2359 = vpop.f32.mrb[0].mxu0
        %v2360 = vadd.f32 0.0, %v2359
        %v2361 = vpop.f32.mrb[0].mxu0
        %2362 = vmatprep.mubr.f32.mxu0 0.0
        %2363 = vmatmul.mubr.f32.gmra.mrb[0].mxu0 %v2201
        %v2364 = vpop.f32.mrb[0].mxu0
        %v2365 = vadd.f32 0.0, %v2364
        %v2366 = vpop.f32.mrb[0].mxu0
        %2367 = vmatprep.mubr.f32.mxu0 0.0
        %2368 = vmatmul.mubr.f32.gmra.mrb[0].mxu0 %v2204
        %v2369 = vpop.f32.mrb[0].mxu0
        %v2370 = vadd.f32 0.0, %v2369
        %v2371 = vpop.f32.mrb[0].mxu0
        %2372 = vmatprep.mubr.f32.mxu0 0.0
        %2373 = vmatmul.mubr.f32.gmra.mrb[0].mxu0 %v2207
        %v2374 = vpop.f32.mrb[0].mxu0
        %v2375 = vadd.f32 0.0, %v2374
        %v2376 = vpop.f32.mrb[0].mxu0
        %2377 = vmatprep.mubr.f32.mxu0 0.0
        %2378 = vmatmul.mubr.f32.gmra.mrb[0].mxu0 %v2210
        %v2379 = vpop.f32.mrb[0].mxu0
        %v2380 = vadd.f32 0.0, %v2379
        %v2381 = vpop.f32.mrb[0].mxu0
        %2382 = vmatprep.mubr.f32.mxu0 0.0
        %2383 = vmatmul.mubr.f32.gmra.mrb[0].mxu0 %v2213
        %v2384 = vpop.f32.mrb[0].mxu0
        %v2385 = vadd.f32 0.0, %v2384
        %v2386 = vpop.f32.mrb[0].mxu0
        %2387 = vmatprep.mubr.f32.mxu0 0.0
        %2388 = vmatmul.mubr.f32.gmra.mrb[0].mxu0 %v2216
        %v2389 = vpop.f32.mrb[0].mxu0
        %v2390 = vadd.f32 0.0, %v2389
        %v2391 = vpop.f32.mrb[0].mxu0
        %2392 = vmatprep.mubr.f32.mxu0 0.0
        %2393 = vmatmul.mubr.f32.gmra.mrb[0].mxu0 %v2219
        %v2394 = vpop.f32.mrb[0].mxu0
        %v2395 = vadd.f32 0.0, %v2394
        %v2396 = vpop.f32.mrb[0].mxu0
        %2397 = vmatprep.mubr.f32.mxu0 0.0
        %2398 = vmatmul.mubr.f32.gmra.mrb[0].mxu0 %v2222
        %v2399 = vpop.f32.mrb[0].mxu0
        %v2400 = vadd.f32 0.0, %v2399
        %v2401 = vpop.f32.mrb[0].mxu0
        %2402 = vmatprep.mubr.f32.mxu0 0.0
        %2403 = vmatmul.mubr.f32.gmra.mrb[0].mxu0 %v2225
        %v2404 = vpop.f32.mrb[0].mxu0
        %v2405 = vadd.f32 0.0, %v2404
        %v2406 = vpop.f32.mrb[0].mxu0
        %2407 = vmatprep.mubr.f32.mxu0 0.0
        %2408 = vmatmul.mubr.f32.gmra.mrb[0].mxu0 %v2228
        %v2409 = vpop.f32.mrb[0].mxu0
        %v2410 = vadd.f32 0.0, %v2409
        %v2411 = vpop.f32.mrb[0].mxu0
        %2412 = vmatprep.mubr.f32.mxu0 0.0
        %2413 = vmatmul.mubr.f32.gmra.mrb[0].mxu0 %v2231
        %v2414 = vpop.f32.mrb[0].mxu0
        %v2415 = vadd.f32 0.0, %v2414
        %v2416 = vpop.f32.mrb[0].mxu0
        %2417 = vmatprep.mubr.f32.mxu0 0.0
        %2418 = vmatmul.mubr.f32.gmra.mrb[0].mxu0 %v2234
        %v2419 = vpop.f32.mrb[0].mxu0
        %v2420 = vadd.f32 0.0, %v2419
        %v2421 = vpop.f32.mrb[0].mxu0
        %2422 = vmatprep.mubr.f32.mxu0 0.0
        %2423 = vmatmul.mubr.f32.gmra.mrb[0].mxu0 %v2237
        %v2424 = vpop.f32.mrb[0].mxu0
        %v2425 = vadd.f32 0.0, %v2424
        %v2426 = vpop.f32.mrb[0].mxu0
        %2427 = vmatprep.mubr.f32.mxu0 0.0
        %2428 = vmatmul.mubr.f32.gmra.mrb[0].mxu0 %v2240
        %v2429 = vpop.f32.mrb[0].mxu0
        %v2430 = vadd.f32 0.0, %v2429
        %v2431 = vpop.f32.mrb[0].mxu0
        %2432 = vmatprep.mubr.f32.mxu0 0.0
        %2433 = vmatmul.mubr.f32.gmra.mrb[0].mxu0 %v2243
        %v2434 = vpop.f32.mrb[0].mxu0
        %v2435 = vadd.f32 0.0, %v2434
        %v2436 = vpop.f32.mrb[0].mxu0
        %2437 = vmatprep.mubr.f32.mxu0 0.0
        %2438 = vmatmul.mubr.f32.gmra.mrb[0].mxu0 %v2246
        %v2439 = vpop.f32.mrb[0].mxu0
        %v2440 = vadd.f32 0.0, %v2439
        %v2441 = vpop.f32.mrb[0].mxu0
        %2442 = vmatprep.mubr.f32.mxu0 0.0
        %2443 = vmatmul.mubr.f32.gmra.mrb[0].mxu0 %v2249
        %v2444 = vpop.f32.mrb[0].mxu0
        %v2445 = vadd.f32 0.0, %v2444
        %v2446 = vpop.f32.mrb[0].mxu0
        %2447 = vmatprep.mubr.f32.mxu0 0.0
        %2448 = vmatmul.mubr.f32.gmra.mrb[0].mxu0 %v2252
        %v2449 = vpop.f32.mrb[0].mxu0
        %v2450 = vadd.f32 0.0, %v2449
        %v2451 = vpop.f32.mrb[0].mxu0
        %2452 = vmatprep.mubr.f32.mxu0 0.0
        %2453 = vmatmul.mubr.f32.gmra.mrb[0].mxu0 %v2255
        %v2454 = vpop.f32.mrb[0].mxu0
        %v2455 = vadd.f32 0.0, %v2454
        %v2456 = vpop.f32.mrb[0].mxu0
        %2457 = vmatprep.mubr.f32.mxu0 0.0
        %2458 = vmatmul.mubr.f32.gmra.mrb[0].mxu0 %v2258
        %v2459 = vpop.f32.mrb[0].mxu0
        %v2460 = vadd.f32 0.0, %v2459
        %v2461 = vpop.f32.mrb[0].mxu0
        %2462 = vmatprep.mubr.f32.mxu0 0.0
        %2463 = vmatmul.mubr.f32.gmra.mrb[0].mxu0 %v2261
        %v2464 = vpop.f32.mrb[0].mxu0
        %v2465 = vadd.f32 0.0, %v2464
        %v2466 = vpop.f32.mrb[0].mxu0
        %2467 = vmatprep.mubr.f32.mxu0 0.0
        %2468 = vmatmul.mubr.f32.gmra.mrb[0].mxu0 %v2264
        %v2469 = vpop.f32.mrb[0].mxu0
        %v2470 = vadd.f32 0.0, %v2469
        %v2471 = vpop.f32.mrb[0].mxu0
        %2472 = vmatprep.mubr.f32.mxu0 0.0
        %2473 = vmatmul.mubr.f32.gmra.mrb[0].mxu0 %v2267
        %v2474 = vpop.f32.mrb[0].mxu0
        %v2475 = vadd.f32 0.0, %v2474
        %v2476 = vpop.f32.mrb[0].mxu0
        %2477 = vmatprep.mubr.f32.mxu0 0.0
        %2478 = vmatmul.mubr.f32.gmra.mrb[0].mxu0 %v2270
        %v2479 = vpop.f32.mrb[0].mxu0
        %v2480 = vadd.f32 0.0, %v2479
        %v2481 = vpop.f32.mrb[0].mxu0
        %2482 = vmatprep.mubr.f32.mxu0 0.0
        %2483 = vmatmul.mubr.f32.gmra.mrb[0].mxu0 %v2273
        %v2484 = vpop.f32.mrb[0].mxu0
        %v2485 = vadd.f32 0.0, %v2484
        %v2486 = vpop.f32.mrb[0].mxu0
        %2487 = vmatprep.mubr.f32.mxu0 0.0
        %2488 = vmatmul.mubr.f32.gmra.mrb[0].mxu0 %v2276
        %v2489 = vpop.f32.mrb[0].mxu0
        %v2490 = vadd.f32 0.0, %v2489
        %v2491 = vpop.f32.mrb[0].mxu0
        %2492 = vmatprep.mubr.f32.mxu0 0.0
        %2493 = vmatmul.mubr.f32.gmra.mrb[0].mxu0 %v2279
        %v2494 = vpop.f32.mrb[0].mxu0
        %v2495 = vadd.f32 0.0, %v2494
        %v2496 = vpop.f32.mrb[0].mxu0
        %2497 = vmatprep.mubr.f32.mxu0 0.0
        %2498 = vmatmul.mubr.f32.gmra.mrb[0].mxu0 %v2282
        %v2499 = vpop.f32.mrb[0].mxu0
        %v2500 = vadd.f32 0.0, %v2499
        %v2501 = vpop.f32.mrb[0].mxu0
        %2502 = vmatprep.mubr.f32.mxu0 0.0
        %2503 = vmatmul.mubr.f32.gmra.mrb[0].mxu0 %v2285
        %v2504 = vpop.f32.mrb[0].mxu0
        %v2505 = vadd.f32 0.0, %v2504
        %v2506 = vpop.f32.mrb[0].mxu0
        %2507 = vmatprep.mubr.f32.mxu0 0.0
        %2508 = vmatmul.mubr.f32.gmra.mrb[0].mxu0 %v2288
        %v2509 = vpop.f32.mrb[0].mxu0
        %v2510 = vadd.f32 0.0, %v2509
        %v2511 = vpop.f32.mrb[0].mxu0
        %2512 = vmatprep.mubr.f32.mxu0 0.0
        %2513 = vmatmul.mubr.f32.gmra.mrb[0].mxu0 %v2291
        %v2514 = vpop.f32.mrb[0].mxu0
        %v2515 = vadd.f32 0.0, %v2514
        %v2516 = vpop.f32.mrb[0].mxu0
        %2517 = vdwg.mxu0
        %v2518 = vadd.f32 %v2131, %v2360
        %v2519 = vadd.f32 %v2132, %v2365
        %v2520 = vadd.f32 %v2133, %v2370
        %v2521 = vadd.f32 %v2134, %v2375
        %v2522 = vadd.f32 %v2135, %v2380
        %v2523 = vadd.f32 %v2136, %v2385
        %v2524 = vadd.f32 %v2137, %v2390
        %v2525 = vadd.f32 %v2138, %v2395
        %v2526 = vadd.f32 %v2139, %v2400
        %v2527 = vadd.f32 %v2140, %v2405
        %v2528 = vadd.f32 %v2141, %v2410
        %v2529 = vadd.f32 %v2142, %v2415
        %v2530 = vadd.f32 %v2143, %v2420
        %v2531 = vadd.f32 %v2144, %v2425
        %v2532 = vadd.f32 %v2145, %v2430
        %v2533 = vadd.f32 %v2146, %v2435
        %v2534 = vadd.f32 %v2147, %v2440
        %v2535 = vadd.f32 %v2148, %v2445
        %v2536 = vadd.f32 %v2149, %v2450
        %v2537 = vadd.f32 %v2150, %v2455
        %v2538 = vadd.f32 %v2151, %v2460
        %v2539 = vadd.f32 %v2152, %v2465
        %v2540 = vadd.f32 %v2153, %v2470
        %v2541 = vadd.f32 %v2154, %v2475
        %v2542 = vadd.f32 %v2155, %v2480
        %v2543 = vadd.f32 %v2156, %v2485
        %v2544 = vadd.f32 %v2157, %v2490
        %v2545 = vadd.f32 %v2158, %v2495
        %v2546 = vadd.f32 %v2159, %v2500
        %v2547 = vadd.f32 %v2160, %v2505
        %v2548 = vadd.f32 %v2161, %v2510
        %v2549 = vadd.f32 %v2162, %v2515
        %v2550 = vld [vmem:[%s576 + $0x2] sm:$0xff]
        %v2551 = vld [vmem:[%s576 + $0xa] sm:$0xff]
        %v2552 = vld [vmem:[%s576 + $0x1a] sm:$0xff]
        %v2553 = vld [vmem:[%s576 + $0x22] sm:$0xff]
        %v2554 = vld [vmem:[%s576 + $0x32] sm:$0xff]
        %v2555 = vld [vmem:[%s576 + $0x3a] sm:$0xff]
        %v2556 = vld [vmem:[%s576 + $0x4a] sm:$0xff]
        %v2557 = vld [vmem:[%s576 + $0x52] sm:$0xff]
        %v2558 = vld [vmem:[%s576 + $0x62] sm:$0xff]
        %v2559 = vld [vmem:[%s576 + $0x6a] sm:$0xff]
        %v2560 = vld [vmem:[%s576 + $0x7a] sm:$0xff]
        %v2561 = vld [vmem:[%s576 + $0x82] sm:$0xff]
        %v2562 = vld [vmem:[%s576 + $0x92] sm:$0xff]
        %v2563 = vld [vmem:[%s576 + $0x9a] sm:$0xff]
        %v2564 = vld [vmem:[%s576 + $0xaa] sm:$0xff]
        %v2565 = vld [vmem:[%s576 + $0xb2] sm:$0xff]
        %v2566 = vld [vmem:[%s576 + $0xc2] sm:$0xff]
        %v2567 = vld [vmem:[%s576 + $0xca] sm:$0xff]
        %v2568 = vld [vmem:[%s576 + $0xda] sm:$0xff]
        %v2569 = vld [vmem:[%s576 + $0xe2] sm:$0xff]
        %v2570 = vld [vmem:[%s576 + $0xf2] sm:$0xff]
        %v2571 = vld [vmem:[%s576 + $0xfa] sm:$0xff]
        %v2572 = vld [vmem:[%s576 + $0x10a] sm:$0xff]
        %v2573 = vld [vmem:[%s576 + $0x112] sm:$0xff]
        %v2574 = vld [vmem:[%s576 + $0x122] sm:$0xff]
        %v2575 = vld [vmem:[%s576 + $0x12a] sm:$0xff]
        %v2576 = vld [vmem:[%s576 + $0x13a] sm:$0xff]
        %v2577 = vld [vmem:[%s576 + $0x142] sm:$0xff]
        %v2578 = vld [vmem:[%s576 + $0x152] sm:$0xff]
        %v2579 = vld [vmem:[%s576 + $0x15a] sm:$0xff]
        %v2580 = vld [vmem:[%s576 + $0x16a] sm:$0xff]
        %v2581 = vld [vmem:[%s576 + $0x172] sm:$0xff]
        %s2582 = scalar_lea.vmem [#allocation9], 40
        %v2583 = vld [vmem:[%s2582] sm:$0xff]
        %v2585 = vsel %vm312, %v2550, 0
        %v2588 = vsel %vm312, %v2551, 0
        %v2591 = vsel %vm312, %v2552, 0
        %v2594 = vsel %vm312, %v2553, 0
        %v2597 = vsel %vm312, %v2554, 0
        %v2600 = vsel %vm312, %v2555, 0
        %v2603 = vsel %vm312, %v2556, 0
        %v2606 = vsel %vm312, %v2557, 0
        %v2609 = vsel %vm312, %v2558, 0
        %v2612 = vsel %vm312, %v2559, 0
        %v2615 = vsel %vm312, %v2560, 0
        %v2618 = vsel %vm312, %v2561, 0
        %v2621 = vsel %vm312, %v2562, 0
        %v2624 = vsel %vm312, %v2563, 0
        %v2627 = vsel %vm312, %v2564, 0
        %v2630 = vsel %vm312, %v2565, 0
        %v2633 = vsel %vm312, %v2566, 0
        %v2636 = vsel %vm312, %v2567, 0
        %v2639 = vsel %vm312, %v2568, 0
        %v2642 = vsel %vm312, %v2569, 0
        %v2645 = vsel %vm312, %v2570, 0
        %v2648 = vsel %vm312, %v2571, 0
        %v2651 = vsel %vm312, %v2572, 0
        %v2654 = vsel %vm312, %v2573, 0
        %v2657 = vsel %vm312, %v2574, 0
        %v2660 = vsel %vm312, %v2575, 0
        %v2663 = vsel %vm312, %v2576, 0
        %v2666 = vsel %vm312, %v2577, 0
        %v2669 = vsel %vm312, %v2578, 0
        %v2672 = vsel %vm312, %v2579, 0
        %v2675 = vsel %vm312, %v2580, 0
        %v2678 = vsel %vm312, %v2581, 0
        %2680 = vmatprep.subr.mxu0 0.0
        %2681 = vmatpush1.msra.mxu0 %v2583
        %2682 = vmatprep.subr.mxu0 0.0
        %2683 = vmatpush1.msra.mxu0 0.0
        %2684 = vmatprep.subr.mxu0 0.0
        %2685 = vmatpush1.msra.mxu0 0.0
        %2686 = vmatprep.subr.mxu0 0.0
        %2687 = vmatpush1.msra.mxu0 0.0
        %2688 = vmatprep.subr.mxu0 0.0
        %2689 = vmatpush1.msra.mxu0 0.0
        %2690 = vmatprep.subr.mxu0 0.0
        %2691 = vmatpush1.msra.mxu0 0.0
        %2692 = vmatprep.subr.mxu0 0.0
        %2693 = vmatpush1.msra.mxu0 0.0
        %2694 = vmatprep.subr.mxu0 0.0
        %2695 = vmatpush1.msra.mxu0 0.0
        %2696 = vmatprep.subr.mxu0 0.0
        %2697 = vmatpush1.msra.mxu0 0.0
        %2698 = vmatprep.subr.mxu0 0.0
        %2699 = vmatpush1.msra.mxu0 0.0
        %2700 = vmatprep.subr.mxu0 0.0
        %2701 = vmatpush1.msra.mxu0 0.0
        %2702 = vmatprep.subr.mxu0 0.0
        %2703 = vmatpush1.msra.mxu0 0.0
        %2704 = vmatprep.subr.mxu0 0.0
        %2705 = vmatpush1.msra.mxu0 0.0
        %2706 = vmatprep.subr.mxu0 0.0
        %2707 = vmatpush1.msra.mxu0 0.0
        %2708 = vmatprep.subr.mxu0 0.0
        %2709 = vmatpush1.msra.mxu0 0.0
        %2710 = vmatprep.subr.mxu0 0.0
        %2711 = vmatpush1.msra.mxu0 0.0
        %2712 = vmatprep.subr.mxu0 0.0
        %2713 = vmatpush1.msra.mxu0 0.0
        %2714 = vmatprep.subr.mxu0 0.0
        %2715 = vmatpush1.msra.mxu0 0.0
        %2716 = vmatprep.subr.mxu0 0.0
        %2717 = vmatpush1.msra.mxu0 0.0
        %2718 = vmatprep.subr.mxu0 0.0
        %2719 = vmatpush1.msra.mxu0 0.0
        %2720 = vmatprep.subr.mxu0 0.0
        %2721 = vmatpush1.msra.mxu0 0.0
        %2722 = vmatprep.subr.mxu0 0.0
        %2723 = vmatpush1.msra.mxu0 0.0
        %2724 = vmatprep.subr.mxu0 0.0
        %2725 = vmatpush1.msra.mxu0 0.0
        %2726 = vmatprep.subr.mxu0 0.0
        %2727 = vmatpush1.msra.mxu0 0.0
        %2728 = vmatprep.subr.mxu0 0.0
        %2729 = vmatpush1.msra.mxu0 0.0
        %2730 = vmatprep.subr.mxu0 0.0
        %2731 = vmatpush1.msra.mxu0 0.0
        %2732 = vmatprep.subr.mxu0 0.0
        %2733 = vmatpush1.msra.mxu0 0.0
        %2734 = vmatprep.subr.mxu0 0.0
        %2735 = vmatpush1.msra.mxu0 0.0
        %2736 = vmatprep.subr.mxu0 0.0
        %2737 = vmatpush1.msra.mxu0 0.0
        %2738 = vmatprep.subr.mxu0 0.0
        %2739 = vmatpush1.msra.mxu0 0.0
        %2740 = vmatprep.subr.mxu0 0.0
        %2741 = vmatpush1.msra.mxu0 0.0
        %2742 = vmatprep.subr.mxu0 0.0
        %2743 = vmatpush1.msra.mxu0 0.0
        %2744 = vmatprep.mubr.f32.mxu0 0.0
        %2745 = vmatmul.mubr.f32.gmra.mrb[0].mxu0 %v2585
        %v2746 = vpop.f32.mrb[0].mxu0
        %v2747 = vadd.f32 0.0, %v2746
        %v2748 = vpop.f32.mrb[0].mxu0
        %2749 = vmatprep.mubr.f32.mxu0 0.0
        %2750 = vmatmul.mubr.f32.gmra.mrb[0].mxu0 %v2588
        %v2751 = vpop.f32.mrb[0].mxu0
        %v2752 = vadd.f32 0.0, %v2751
        %v2753 = vpop.f32.mrb[0].mxu0
        %2754 = vmatprep.mubr.f32.mxu0 0.0
        %2755 = vmatmul.mubr.f32.gmra.mrb[0].mxu0 %v2591
        %v2756 = vpop.f32.mrb[0].mxu0
        %v2757 = vadd.f32 0.0, %v2756
        %v2758 = vpop.f32.mrb[0].mxu0
        %2759 = vmatprep.mubr.f32.mxu0 0.0
        %2760 = vmatmul.mubr.f32.gmra.mrb[0].mxu0 %v2594
        %v2761 = vpop.f32.mrb[0].mxu0
        %v2762 = vadd.f32 0.0, %v2761
        %v2763 = vpop.f32.mrb[0].mxu0
        %2764 = vmatprep.mubr.f32.mxu0 0.0
        %2765 = vmatmul.mubr.f32.gmra.mrb[0].mxu0 %v2597
        %v2766 = vpop.f32.mrb[0].mxu0
        %v2767 = vadd.f32 0.0, %v2766
        %v2768 = vpop.f32.mrb[0].mxu0
        %2769 = vmatprep.mubr.f32.mxu0 0.0
        %2770 = vmatmul.mubr.f32.gmra.mrb[0].mxu0 %v2600
        %v2771 = vpop.f32.mrb[0].mxu0
        %v2772 = vadd.f32 0.0, %v2771
        %v2773 = vpop.f32.mrb[0].mxu0
        %2774 = vmatprep.mubr.f32.mxu0 0.0
        %2775 = vmatmul.mubr.f32.gmra.mrb[0].mxu0 %v2603
        %v2776 = vpop.f32.mrb[0].mxu0
        %v2777 = vadd.f32 0.0, %v2776
        %v2778 = vpop.f32.mrb[0].mxu0
        %2779 = vmatprep.mubr.f32.mxu0 0.0
        %2780 = vmatmul.mubr.f32.gmra.mrb[0].mxu0 %v2606
        %v2781 = vpop.f32.mrb[0].mxu0
        %v2782 = vadd.f32 0.0, %v2781
        %v2783 = vpop.f32.mrb[0].mxu0
        %2784 = vmatprep.mubr.f32.mxu0 0.0
        %2785 = vmatmul.mubr.f32.gmra.mrb[0].mxu0 %v2609
        %v2786 = vpop.f32.mrb[0].mxu0
        %v2787 = vadd.f32 0.0, %v2786
        %v2788 = vpop.f32.mrb[0].mxu0
        %2789 = vmatprep.mubr.f32.mxu0 0.0
        %2790 = vmatmul.mubr.f32.gmra.mrb[0].mxu0 %v2612
        %v2791 = vpop.f32.mrb[0].mxu0
        %v2792 = vadd.f32 0.0, %v2791
        %v2793 = vpop.f32.mrb[0].mxu0
        %2794 = vmatprep.mubr.f32.mxu0 0.0
        %2795 = vmatmul.mubr.f32.gmra.mrb[0].mxu0 %v2615
        %v2796 = vpop.f32.mrb[0].mxu0
        %v2797 = vadd.f32 0.0, %v2796
        %v2798 = vpop.f32.mrb[0].mxu0
        %2799 = vmatprep.mubr.f32.mxu0 0.0
        %2800 = vmatmul.mubr.f32.gmra.mrb[0].mxu0 %v2618
        %v2801 = vpop.f32.mrb[0].mxu0
        %v2802 = vadd.f32 0.0, %v2801
        %v2803 = vpop.f32.mrb[0].mxu0
        %2804 = vmatprep.mubr.f32.mxu0 0.0
        %2805 = vmatmul.mubr.f32.gmra.mrb[0].mxu0 %v2621
        %v2806 = vpop.f32.mrb[0].mxu0
        %v2807 = vadd.f32 0.0, %v2806
        %v2808 = vpop.f32.mrb[0].mxu0
        %2809 = vmatprep.mubr.f32.mxu0 0.0
        %2810 = vmatmul.mubr.f32.gmra.mrb[0].mxu0 %v2624
        %v2811 = vpop.f32.mrb[0].mxu0
        %v2812 = vadd.f32 0.0, %v2811
        %v2813 = vpop.f32.mrb[0].mxu0
        %2814 = vmatprep.mubr.f32.mxu0 0.0
        %2815 = vmatmul.mubr.f32.gmra.mrb[0].mxu0 %v2627
        %v2816 = vpop.f32.mrb[0].mxu0
        %v2817 = vadd.f32 0.0, %v2816
        %v2818 = vpop.f32.mrb[0].mxu0
        %2819 = vmatprep.mubr.f32.mxu0 0.0
        %2820 = vmatmul.mubr.f32.gmra.mrb[0].mxu0 %v2630
        %v2821 = vpop.f32.mrb[0].mxu0
        %v2822 = vadd.f32 0.0, %v2821
        %v2823 = vpop.f32.mrb[0].mxu0
        %2824 = vmatprep.mubr.f32.mxu0 0.0
        %2825 = vmatmul.mubr.f32.gmra.mrb[0].mxu0 %v2633
        %v2826 = vpop.f32.mrb[0].mxu0
        %v2827 = vadd.f32 0.0, %v2826
        %v2828 = vpop.f32.mrb[0].mxu0
        %2829 = vmatprep.mubr.f32.mxu0 0.0
        %2830 = vmatmul.mubr.f32.gmra.mrb[0].mxu0 %v2636
        %v2831 = vpop.f32.mrb[0].mxu0
        %v2832 = vadd.f32 0.0, %v2831
        %v2833 = vpop.f32.mrb[0].mxu0
        %2834 = vmatprep.mubr.f32.mxu0 0.0
        %2835 = vmatmul.mubr.f32.gmra.mrb[0].mxu0 %v2639
        %v2836 = vpop.f32.mrb[0].mxu0
        %v2837 = vadd.f32 0.0, %v2836
        %v2838 = vpop.f32.mrb[0].mxu0
        %2839 = vmatprep.mubr.f32.mxu0 0.0
        %2840 = vmatmul.mubr.f32.gmra.mrb[0].mxu0 %v2642
        %v2841 = vpop.f32.mrb[0].mxu0
        %v2842 = vadd.f32 0.0, %v2841
        %v2843 = vpop.f32.mrb[0].mxu0
        %2844 = vmatprep.mubr.f32.mxu0 0.0
        %2845 = vmatmul.mubr.f32.gmra.mrb[0].mxu0 %v2645
        %v2846 = vpop.f32.mrb[0].mxu0
        %v2847 = vadd.f32 0.0, %v2846
        %v2848 = vpop.f32.mrb[0].mxu0
        %2849 = vmatprep.mubr.f32.mxu0 0.0
        %2850 = vmatmul.mubr.f32.gmra.mrb[0].mxu0 %v2648
        %v2851 = vpop.f32.mrb[0].mxu0
        %v2852 = vadd.f32 0.0, %v2851
        %v2853 = vpop.f32.mrb[0].mxu0
        %2854 = vmatprep.mubr.f32.mxu0 0.0
        %2855 = vmatmul.mubr.f32.gmra.mrb[0].mxu0 %v2651
        %v2856 = vpop.f32.mrb[0].mxu0
        %v2857 = vadd.f32 0.0, %v2856
        %v2858 = vpop.f32.mrb[0].mxu0
        %2859 = vmatprep.mubr.f32.mxu0 0.0
        %2860 = vmatmul.mubr.f32.gmra.mrb[0].mxu0 %v2654
        %v2861 = vpop.f32.mrb[0].mxu0
        %v2862 = vadd.f32 0.0, %v2861
        %v2863 = vpop.f32.mrb[0].mxu0
        %2864 = vmatprep.mubr.f32.mxu0 0.0
        %2865 = vmatmul.mubr.f32.gmra.mrb[0].mxu0 %v2657
        %v2866 = vpop.f32.mrb[0].mxu0
        %v2867 = vadd.f32 0.0, %v2866
        %v2868 = vpop.f32.mrb[0].mxu0
        %2869 = vmatprep.mubr.f32.mxu0 0.0
        %2870 = vmatmul.mubr.f32.gmra.mrb[0].mxu0 %v2660
        %v2871 = vpop.f32.mrb[0].mxu0
        %v2872 = vadd.f32 0.0, %v2871
        %v2873 = vpop.f32.mrb[0].mxu0
        %2874 = vmatprep.mubr.f32.mxu0 0.0
        %2875 = vmatmul.mubr.f32.gmra.mrb[0].mxu0 %v2663
        %v2876 = vpop.f32.mrb[0].mxu0
        %v2877 = vadd.f32 0.0, %v2876
        %v2878 = vpop.f32.mrb[0].mxu0
        %2879 = vmatprep.mubr.f32.mxu0 0.0
        %2880 = vmatmul.mubr.f32.gmra.mrb[0].mxu0 %v2666
        %v2881 = vpop.f32.mrb[0].mxu0
        %v2882 = vadd.f32 0.0, %v2881
        %v2883 = vpop.f32.mrb[0].mxu0
        %2884 = vmatprep.mubr.f32.mxu0 0.0
        %2885 = vmatmul.mubr.f32.gmra.mrb[0].mxu0 %v2669
        %v2886 = vpop.f32.mrb[0].mxu0
        %v2887 = vadd.f32 0.0, %v2886
        %v2888 = vpop.f32.mrb[0].mxu0
        %2889 = vmatprep.mubr.f32.mxu0 0.0
        %2890 = vmatmul.mubr.f32.gmra.mrb[0].mxu0 %v2672
        %v2891 = vpop.f32.mrb[0].mxu0
        %v2892 = vadd.f32 0.0, %v2891
        %v2893 = vpop.f32.mrb[0].mxu0
        %2894 = vmatprep.mubr.f32.mxu0 0.0
        %2895 = vmatmul.mubr.f32.gmra.mrb[0].mxu0 %v2675
        %v2896 = vpop.f32.mrb[0].mxu0
        %v2897 = vadd.f32 0.0, %v2896
        %v2898 = vpop.f32.mrb[0].mxu0
        %2899 = vmatprep.mubr.f32.mxu0 0.0
        %2900 = vmatmul.mubr.f32.gmra.mrb[0].mxu0 %v2678
        %v2901 = vpop.f32.mrb[0].mxu0
        %v2902 = vadd.f32 0.0, %v2901
        %v2903 = vpop.f32.mrb[0].mxu0
        %2904 = vdwg.mxu0
        %v2905 = vadd.f32 %v2518, %v2747
        %v2906 = vadd.f32 %v2519, %v2752
        %v2907 = vadd.f32 %v2520, %v2757
        %v2908 = vadd.f32 %v2521, %v2762
        %v2909 = vadd.f32 %v2522, %v2767
        %v2910 = vadd.f32 %v2523, %v2772
        %v2911 = vadd.f32 %v2524, %v2777
        %v2912 = vadd.f32 %v2525, %v2782
        %v2913 = vadd.f32 %v2526, %v2787
        %v2914 = vadd.f32 %v2527, %v2792
        %v2915 = vadd.f32 %v2528, %v2797
        %v2916 = vadd.f32 %v2529, %v2802
        %v2917 = vadd.f32 %v2530, %v2807
        %v2918 = vadd.f32 %v2531, %v2812
        %v2919 = vadd.f32 %v2532, %v2817
        %v2920 = vadd.f32 %v2533, %v2822
        %v2921 = vadd.f32 %v2534, %v2827
        %v2922 = vadd.f32 %v2535, %v2832
        %v2923 = vadd.f32 %v2536, %v2837
        %v2924 = vadd.f32 %v2537, %v2842
        %v2925 = vadd.f32 %v2538, %v2847
        %v2926 = vadd.f32 %v2539, %v2852
        %v2927 = vadd.f32 %v2540, %v2857
        %v2928 = vadd.f32 %v2541, %v2862
        %v2929 = vadd.f32 %v2542, %v2867
        %v2930 = vadd.f32 %v2543, %v2872
        %v2931 = vadd.f32 %v2544, %v2877
        %v2932 = vadd.f32 %v2545, %v2882
        %v2933 = vadd.f32 %v2546, %v2887
        %v2934 = vadd.f32 %v2547, %v2892
        %v2935 = vadd.f32 %v2548, %v2897
        %v2936 = vadd.f32 %v2549, %v2902
        %s2937 = scalar_lea.vmem [#allocation2], 48
        %v2938 = vld [vmem:[%s2937] sm:$0xff]
        %v2939 = vld [vmem:[%s2937 + $0x8] sm:$0xff]
        %v2940 = vld [vmem:[%s2937 + $0x18] sm:$0xff]
        %v2941 = vld [vmem:[%s2937 + $0x20] sm:$0xff]
        %v2942 = vld [vmem:[%s2937 + $0x30] sm:$0xff]
        %v2943 = vld [vmem:[%s2937 + $0x38] sm:$0xff]
        %v2944 = vld [vmem:[%s2937 + $0x48] sm:$0xff]
        %v2945 = vld [vmem:[%s2937 + $0x50] sm:$0xff]
        %v2946 = vld [vmem:[%s2937 + $0x60] sm:$0xff]
        %v2947 = vld [vmem:[%s2937 + $0x68] sm:$0xff]
        %v2948 = vld [vmem:[%s2937 + $0x78] sm:$0xff]
        %v2949 = vld [vmem:[%s2937 + $0x80] sm:$0xff]
        %v2950 = vld [vmem:[%s2937 + $0x90] sm:$0xff]
        %v2951 = vld [vmem:[%s2937 + $0x98] sm:$0xff]
        %v2952 = vld [vmem:[%s2937 + $0xa8] sm:$0xff]
        %v2953 = vld [vmem:[%s2937 + $0xb0] sm:$0xff]
        %v2954 = vld [vmem:[%s2937 + $0xc0] sm:$0xff]
        %v2955 = vld [vmem:[%s2937 + $0xc8] sm:$0xff]
        %v2956 = vld [vmem:[%s2937 + $0xd8] sm:$0xff]
        %v2957 = vld [vmem:[%s2937 + $0xe0] sm:$0xff]
        %v2958 = vld [vmem:[%s2937 + $0xf0] sm:$0xff]
        %v2959 = vld [vmem:[%s2937 + $0xf8] sm:$0xff]
        %v2960 = vld [vmem:[%s2937 + $0x108] sm:$0xff]
        %v2961 = vld [vmem:[%s2937 + $0x110] sm:$0xff]
        %v2962 = vld [vmem:[%s2937 + $0x120] sm:$0xff]
        %v2963 = vld [vmem:[%s2937 + $0x128] sm:$0xff]
        %v2964 = vld [vmem:[%s2937 + $0x138] sm:$0xff]
        %v2965 = vld [vmem:[%s2937 + $0x140] sm:$0xff]
        %v2966 = vld [vmem:[%s2937 + $0x150] sm:$0xff]
        %v2967 = vld [vmem:[%s2937 + $0x158] sm:$0xff]
        %v2968 = vld [vmem:[%s2937 + $0x168] sm:$0xff]
        %v2969 = vld [vmem:[%s2937 + $0x170] sm:$0xff]
        %s2970 = scalar_lea.vmem [#allocation9], 48
        %v2971 = vld [vmem:[%s2970] sm:$0xff]
        %v2973 = vsel %vm312, %v2938, 0
        %v2976 = vsel %vm312, %v2939, 0
        %v2979 = vsel %vm312, %v2940, 0
        %v2982 = vsel %vm312, %v2941, 0
        %v2985 = vsel %vm312, %v2942, 0
        %v2988 = vsel %vm312, %v2943, 0
        %v2991 = vsel %vm312, %v2944, 0
        %v2994 = vsel %vm312, %v2945, 0
        %v2997 = vsel %vm312, %v2946, 0
        %v3000 = vsel %vm312, %v2947, 0
        %v3003 = vsel %vm312, %v2948, 0
        %v3006 = vsel %vm312, %v2949, 0
        %v3009 = vsel %vm312, %v2950, 0
        %v3012 = vsel %vm312, %v2951, 0
        %v3015 = vsel %vm312, %v2952, 0
        %v3018 = vsel %vm312, %v2953, 0
        %v3021 = vsel %vm312, %v2954, 0
        %v3024 = vsel %vm312, %v2955, 0
        %v3027 = vsel %vm312, %v2956, 0
        %v3030 = vsel %vm312, %v2957, 0
        %v3033 = vsel %vm312, %v2958, 0
        %v3036 = vsel %vm312, %v2959, 0
        %v3039 = vsel %vm312, %v2960, 0
        %v3042 = vsel %vm312, %v2961, 0
        %v3045 = vsel %vm312, %v2962, 0
        %v3048 = vsel %vm312, %v2963, 0
        %v3051 = vsel %vm312, %v2964, 0
        %v3054 = vsel %vm312, %v2965, 0
        %v3057 = vsel %vm312, %v2966, 0
        %v3060 = vsel %vm312, %v2967, 0
        %v3063 = vsel %vm312, %v2968, 0
        %v3066 = vsel %vm312, %v2969, 0
        %3068 = vmatprep.subr.mxu0 0.0
        %3069 = vmatpush1.msra.mxu0 %v2971
        %3070 = vmatprep.subr.mxu0 0.0
        %3071 = vmatpush1.msra.mxu0 0.0
        %3072 = vmatprep.subr.mxu0 0.0
        %3073 = vmatpush1.msra.mxu0 0.0
        %3074 = vmatprep.subr.mxu0 0.0
        %3075 = vmatpush1.msra.mxu0 0.0
        %3076 = vmatprep.subr.mxu0 0.0
        %3077 = vmatpush1.msra.mxu0 0.0
        %3078 = vmatprep.subr.mxu0 0.0
        %3079 = vmatpush1.msra.mxu0 0.0
        %3080 = vmatprep.subr.mxu0 0.0
        %3081 = vmatpush1.msra.mxu0 0.0
        %3082 = vmatprep.subr.mxu0 0.0
        %3083 = vmatpush1.msra.mxu0 0.0
        %3084 = vmatprep.subr.mxu0 0.0
        %3085 = vmatpush1.msra.mxu0 0.0
        %3086 = vmatprep.subr.mxu0 0.0
        %3087 = vmatpush1.msra.mxu0 0.0
        %3088 = vmatprep.subr.mxu0 0.0
        %3089 = vmatpush1.msra.mxu0 0.0
        %3090 = vmatprep.subr.mxu0 0.0
        %3091 = vmatpush1.msra.mxu0 0.0
        %3092 = vmatprep.subr.mxu0 0.0
        %3093 = vmatpush1.msra.mxu0 0.0
        %3094 = vmatprep.subr.mxu0 0.0
        %3095 = vmatpush1.msra.mxu0 0.0
        %3096 = vmatprep.subr.mxu0 0.0
        %3097 = vmatpush1.msra.mxu0 0.0
        %3098 = vmatprep.subr.mxu0 0.0
        %3099 = vmatpush1.msra.mxu0 0.0
        %3100 = vmatprep.subr.mxu0 0.0
        %3101 = vmatpush1.msra.mxu0 0.0
        %3102 = vmatprep.subr.mxu0 0.0
        %3103 = vmatpush1.msra.mxu0 0.0
        %3104 = vmatprep.subr.mxu0 0.0
        %3105 = vmatpush1.msra.mxu0 0.0
        %3106 = vmatprep.subr.mxu0 0.0
        %3107 = vmatpush1.msra.mxu0 0.0
        %3108 = vmatprep.subr.mxu0 0.0
        %3109 = vmatpush1.msra.mxu0 0.0
        %3110 = vmatprep.subr.mxu0 0.0
        %3111 = vmatpush1.msra.mxu0 0.0
        %3112 = vmatprep.subr.mxu0 0.0
        %3113 = vmatpush1.msra.mxu0 0.0
        %3114 = vmatprep.subr.mxu0 0.0
        %3115 = vmatpush1.msra.mxu0 0.0
        %3116 = vmatprep.subr.mxu0 0.0
        %3117 = vmatpush1.msra.mxu0 0.0
        %3118 = vmatprep.subr.mxu0 0.0
        %3119 = vmatpush1.msra.mxu0 0.0
        %3120 = vmatprep.subr.mxu0 0.0
        %3121 = vmatpush1.msra.mxu0 0.0
        %3122 = vmatprep.subr.mxu0 0.0
        %3123 = vmatpush1.msra.mxu0 0.0
        %3124 = vmatprep.subr.mxu0 0.0
        %3125 = vmatpush1.msra.mxu0 0.0
        %3126 = vmatprep.subr.mxu0 0.0
        %3127 = vmatpush1.msra.mxu0 0.0
        %3128 = vmatprep.subr.mxu0 0.0
        %3129 = vmatpush1.msra.mxu0 0.0
        %3130 = vmatprep.subr.mxu0 0.0
        %3131 = vmatpush1.msra.mxu0 0.0
        %3132 = vmatprep.mubr.f32.mxu0 0.0
        %3133 = vmatmul.mubr.f32.gmra.mrb[0].mxu0 %v2973
        %v3134 = vpop.f32.mrb[0].mxu0
        %v3135 = vadd.f32 0.0, %v3134
        %v3136 = vpop.f32.mrb[0].mxu0
        %3137 = vmatprep.mubr.f32.mxu0 0.0
        %3138 = vmatmul.mubr.f32.gmra.mrb[0].mxu0 %v2976
        %v3139 = vpop.f32.mrb[0].mxu0
        %v3140 = vadd.f32 0.0, %v3139
        %v3141 = vpop.f32.mrb[0].mxu0
        %3142 = vmatprep.mubr.f32.mxu0 0.0
        %3143 = vmatmul.mubr.f32.gmra.mrb[0].mxu0 %v2979
        %v3144 = vpop.f32.mrb[0].mxu0
        %v3145 = vadd.f32 0.0, %v3144
        %v3146 = vpop.f32.mrb[0].mxu0
        %3147 = vmatprep.mubr.f32.mxu0 0.0
        %3148 = vmatmul.mubr.f32.gmra.mrb[0].mxu0 %v2982
        %v3149 = vpop.f32.mrb[0].mxu0
        %v3150 = vadd.f32 0.0, %v3149
        %v3151 = vpop.f32.mrb[0].mxu0
        %3152 = vmatprep.mubr.f32.mxu0 0.0
        %3153 = vmatmul.mubr.f32.gmra.mrb[0].mxu0 %v2985
        %v3154 = vpop.f32.mrb[0].mxu0
        %v3155 = vadd.f32 0.0, %v3154
        %v3156 = vpop.f32.mrb[0].mxu0
        %3157 = vmatprep.mubr.f32.mxu0 0.0
        %3158 = vmatmul.mubr.f32.gmra.mrb[0].mxu0 %v2988
        %v3159 = vpop.f32.mrb[0].mxu0
        %v3160 = vadd.f32 0.0, %v3159
        %v3161 = vpop.f32.mrb[0].mxu0
        %3162 = vmatprep.mubr.f32.mxu0 0.0
        %3163 = vmatmul.mubr.f32.gmra.mrb[0].mxu0 %v2991
        %v3164 = vpop.f32.mrb[0].mxu0
        %v3165 = vadd.f32 0.0, %v3164
        %v3166 = vpop.f32.mrb[0].mxu0
        %3167 = vmatprep.mubr.f32.mxu0 0.0
        %3168 = vmatmul.mubr.f32.gmra.mrb[0].mxu0 %v2994
        %v3169 = vpop.f32.mrb[0].mxu0
        %v3170 = vadd.f32 0.0, %v3169
        %v3171 = vpop.f32.mrb[0].mxu0
        %3172 = vmatprep.mubr.f32.mxu0 0.0
        %3173 = vmatmul.mubr.f32.gmra.mrb[0].mxu0 %v2997
        %v3174 = vpop.f32.mrb[0].mxu0
        %v3175 = vadd.f32 0.0, %v3174
        %v3176 = vpop.f32.mrb[0].mxu0
        %3177 = vmatprep.mubr.f32.mxu0 0.0
        %3178 = vmatmul.mubr.f32.gmra.mrb[0].mxu0 %v3000
        %v3179 = vpop.f32.mrb[0].mxu0
        %v3180 = vadd.f32 0.0, %v3179
        %v3181 = vpop.f32.mrb[0].mxu0
        %3182 = vmatprep.mubr.f32.mxu0 0.0
        %3183 = vmatmul.mubr.f32.gmra.mrb[0].mxu0 %v3003
        %v3184 = vpop.f32.mrb[0].mxu0
        %v3185 = vadd.f32 0.0, %v3184
        %v3186 = vpop.f32.mrb[0].mxu0
        %3187 = vmatprep.mubr.f32.mxu0 0.0
        %3188 = vmatmul.mubr.f32.gmra.mrb[0].mxu0 %v3006
        %v3189 = vpop.f32.mrb[0].mxu0
        %v3190 = vadd.f32 0.0, %v3189
        %v3191 = vpop.f32.mrb[0].mxu0
        %3192 = vmatprep.mubr.f32.mxu0 0.0
        %3193 = vmatmul.mubr.f32.gmra.mrb[0].mxu0 %v3009
        %v3194 = vpop.f32.mrb[0].mxu0
        %v3195 = vadd.f32 0.0, %v3194
        %v3196 = vpop.f32.mrb[0].mxu0
        %3197 = vmatprep.mubr.f32.mxu0 0.0
        %3198 = vmatmul.mubr.f32.gmra.mrb[0].mxu0 %v3012
        %v3199 = vpop.f32.mrb[0].mxu0
        %v3200 = vadd.f32 0.0, %v3199
        %v3201 = vpop.f32.mrb[0].mxu0
        %3202 = vmatprep.mubr.f32.mxu0 0.0
        %3203 = vmatmul.mubr.f32.gmra.mrb[0].mxu0 %v3015
        %v3204 = vpop.f32.mrb[0].mxu0
        %v3205 = vadd.f32 0.0, %v3204
        %v3206 = vpop.f32.mrb[0].mxu0
        %3207 = vmatprep.mubr.f32.mxu0 0.0
        %3208 = vmatmul.mubr.f32.gmra.mrb[0].mxu0 %v3018
        %v3209 = vpop.f32.mrb[0].mxu0
        %v3210 = vadd.f32 0.0, %v3209
        %v3211 = vpop.f32.mrb[0].mxu0
        %3212 = vmatprep.mubr.f32.mxu0 0.0
        %3213 = vmatmul.mubr.f32.gmra.mrb[0].mxu0 %v3021
        %v3214 = vpop.f32.mrb[0].mxu0
        %v3215 = vadd.f32 0.0, %v3214
        %v3216 = vpop.f32.mrb[0].mxu0
        %3217 = vmatprep.mubr.f32.mxu0 0.0
        %3218 = vmatmul.mubr.f32.gmra.mrb[0].mxu0 %v3024
        %v3219 = vpop.f32.mrb[0].mxu0
        %v3220 = vadd.f32 0.0, %v3219
        %v3221 = vpop.f32.mrb[0].mxu0
        %3222 = vmatprep.mubr.f32.mxu0 0.0
        %3223 = vmatmul.mubr.f32.gmra.mrb[0].mxu0 %v3027
        %v3224 = vpop.f32.mrb[0].mxu0
        %v3225 = vadd.f32 0.0, %v3224
        %v3226 = vpop.f32.mrb[0].mxu0
        %3227 = vmatprep.mubr.f32.mxu0 0.0
        %3228 = vmatmul.mubr.f32.gmra.mrb[0].mxu0 %v3030
        %v3229 = vpop.f32.mrb[0].mxu0
        %v3230 = vadd.f32 0.0, %v3229
        %v3231 = vpop.f32.mrb[0].mxu0
        %3232 = vmatprep.mubr.f32.mxu0 0.0
        %3233 = vmatmul.mubr.f32.gmra.mrb[0].mxu0 %v3033
        %v3234 = vpop.f32.mrb[0].mxu0
        %v3235 = vadd.f32 0.0, %v3234
        %v3236 = vpop.f32.mrb[0].mxu0
        %3237 = vmatprep.mubr.f32.mxu0 0.0
        %3238 = vmatmul.mubr.f32.gmra.mrb[0].mxu0 %v3036
        %v3239 = vpop.f32.mrb[0].mxu0
        %v3240 = vadd.f32 0.0, %v3239
        %v3241 = vpop.f32.mrb[0].mxu0
        %3242 = vmatprep.mubr.f32.mxu0 0.0
        %3243 = vmatmul.mubr.f32.gmra.mrb[0].mxu0 %v3039
        %v3244 = vpop.f32.mrb[0].mxu0
        %v3245 = vadd.f32 0.0, %v3244
        %v3246 = vpop.f32.mrb[0].mxu0
        %3247 = vmatprep.mubr.f32.mxu0 0.0
        %3248 = vmatmul.mubr.f32.gmra.mrb[0].mxu0 %v3042
        %v3249 = vpop.f32.mrb[0].mxu0
        %v3250 = vadd.f32 0.0, %v3249
        %v3251 = vpop.f32.mrb[0].mxu0
        %3252 = vmatprep.mubr.f32.mxu0 0.0
        %3253 = vmatmul.mubr.f32.gmra.mrb[0].mxu0 %v3045
        %v3254 = vpop.f32.mrb[0].mxu0
        %v3255 = vadd.f32 0.0, %v3254
        %v3256 = vpop.f32.mrb[0].mxu0
        %3257 = vmatprep.mubr.f32.mxu0 0.0
        %3258 = vmatmul.mubr.f32.gmra.mrb[0].mxu0 %v3048
        %v3259 = vpop.f32.mrb[0].mxu0
        %v3260 = vadd.f32 0.0, %v3259
        %v3261 = vpop.f32.mrb[0].mxu0
        %3262 = vmatprep.mubr.f32.mxu0 0.0
        %3263 = vmatmul.mubr.f32.gmra.mrb[0].mxu0 %v3051
        %v3264 = vpop.f32.mrb[0].mxu0
        %v3265 = vadd.f32 0.0, %v3264
        %v3266 = vpop.f32.mrb[0].mxu0
        %3267 = vmatprep.mubr.f32.mxu0 0.0
        %3268 = vmatmul.mubr.f32.gmra.mrb[0].mxu0 %v3054
        %v3269 = vpop.f32.mrb[0].mxu0
        %v3270 = vadd.f32 0.0, %v3269
        %v3271 = vpop.f32.mrb[0].mxu0
        %3272 = vmatprep.mubr.f32.mxu0 0.0
        %3273 = vmatmul.mubr.f32.gmra.mrb[0].mxu0 %v3057
        %v3274 = vpop.f32.mrb[0].mxu0
        %v3275 = vadd.f32 0.0, %v3274
        %v3276 = vpop.f32.mrb[0].mxu0
        %3277 = vmatprep.mubr.f32.mxu0 0.0
        %3278 = vmatmul.mubr.f32.gmra.mrb[0].mxu0 %v3060
        %v3279 = vpop.f32.mrb[0].mxu0
        %v3280 = vadd.f32 0.0, %v3279
        %v3281 = vpop.f32.mrb[0].mxu0
        %3282 = vmatprep.mubr.f32.mxu0 0.0
        %3283 = vmatmul.mubr.f32.gmra.mrb[0].mxu0 %v3063
        %v3284 = vpop.f32.mrb[0].mxu0
        %v3285 = vadd.f32 0.0, %v3284
        %v3286 = vpop.f32.mrb[0].mxu0
        %3287 = vmatprep.mubr.f32.mxu0 0.0
        %3288 = vmatmul.mubr.f32.gmra.mrb[0].mxu0 %v3066
        %v3289 = vpop.f32.mrb[0].mxu0
        %v3290 = vadd.f32 0.0, %v3289
        %v3291 = vpop.f32.mrb[0].mxu0
        %3292 = vdwg.mxu0
        %v3293 = vadd.f32 %v2905, %v3135
        %v3294 = vadd.f32 %v2906, %v3140
        %v3295 = vadd.f32 %v2907, %v3145
        %v3296 = vadd.f32 %v2908, %v3150
        %v3297 = vadd.f32 %v2909, %v3155
        %v3298 = vadd.f32 %v2910, %v3160
        %v3299 = vadd.f32 %v2911, %v3165
        %v3300 = vadd.f32 %v2912, %v3170
        %v3301 = vadd.f32 %v2913, %v3175
        %v3302 = vadd.f32 %v2914, %v3180
        %v3303 = vadd.f32 %v2915, %v3185
        %v3304 = vadd.f32 %v2916, %v3190
        %v3305 = vadd.f32 %v2917, %v3195
        %v3306 = vadd.f32 %v2918, %v3200
        %v3307 = vadd.f32 %v2919, %v3205
        %v3308 = vadd.f32 %v2920, %v3210
        %v3309 = vadd.f32 %v2921, %v3215
        %v3310 = vadd.f32 %v2922, %v3220
        %v3311 = vadd.f32 %v2923, %v3225
        %v3312 = vadd.f32 %v2924, %v3230
        %v3313 = vadd.f32 %v2925, %v3235
        %v3314 = vadd.f32 %v2926, %v3240
        %v3315 = vadd.f32 %v2927, %v3245
        %v3316 = vadd.f32 %v2928, %v3250
        %v3317 = vadd.f32 %v2929, %v3255
        %v3318 = vadd.f32 %v2930, %v3260
        %v3319 = vadd.f32 %v2931, %v3265
        %v3320 = vadd.f32 %v2932, %v3270
        %v3321 = vadd.f32 %v2933, %v3275
        %v3322 = vadd.f32 %v2934, %v3280
        %v3323 = vadd.f32 %v2935, %v3285
        %v3324 = vadd.f32 %v2936, %v3290
        %v3325 = vld [vmem:[%s2937 + $0x1] sm:$0xff]
        %v3326 = vld [vmem:[%s2937 + $0x9] sm:$0xff]
        %v3327 = vld [vmem:[%s2937 + $0x19] sm:$0xff]
        %v3328 = vld [vmem:[%s2937 + $0x21] sm:$0xff]
        %v3329 = vld [vmem:[%s2937 + $0x31] sm:$0xff]
        %v3330 = vld [vmem:[%s2937 + $0x39] sm:$0xff]
        %v3331 = vld [vmem:[%s2937 + $0x49] sm:$0xff]
        %v3332 = vld [vmem:[%s2937 + $0x51] sm:$0xff]
        %v3333 = vld [vmem:[%s2937 + $0x61] sm:$0xff]
        %v3334 = vld [vmem:[%s2937 + $0x69] sm:$0xff]
        %v3335 = vld [vmem:[%s2937 + $0x79] sm:$0xff]
        %v3336 = vld [vmem:[%s2937 + $0x81] sm:$0xff]
        %v3337 = vld [vmem:[%s2937 + $0x91] sm:$0xff]
        %v3338 = vld [vmem:[%s2937 + $0x99] sm:$0xff]
        %v3339 = vld [vmem:[%s2937 + $0xa9] sm:$0xff]
        %v3340 = vld [vmem:[%s2937 + $0xb1] sm:$0xff]
        %v3341 = vld [vmem:[%s2937 + $0xc1] sm:$0xff]
        %v3342 = vld [vmem:[%s2937 + $0xc9] sm:$0xff]
        %v3343 = vld [vmem:[%s2937 + $0xd9] sm:$0xff]
        %v3344 = vld [vmem:[%s2937 + $0xe1] sm:$0xff]
        %v3345 = vld [vmem:[%s2937 + $0xf1] sm:$0xff]
        %v3346 = vld [vmem:[%s2937 + $0xf9] sm:$0xff]
        %v3347 = vld [vmem:[%s2937 + $0x109] sm:$0xff]
        %v3348 = vld [vmem:[%s2937 + $0x111] sm:$0xff]
        %v3349 = vld [vmem:[%s2937 + $0x121] sm:$0xff]
        %v3350 = vld [vmem:[%s2937 + $0x129] sm:$0xff]
        %v3351 = vld [vmem:[%s2937 + $0x139] sm:$0xff]
        %v3352 = vld [vmem:[%s2937 + $0x141] sm:$0xff]
        %v3353 = vld [vmem:[%s2937 + $0x151] sm:$0xff]
        %v3354 = vld [vmem:[%s2937 + $0x159] sm:$0xff]
        %v3355 = vld [vmem:[%s2937 + $0x169] sm:$0xff]
        %v3356 = vld [vmem:[%s2937 + $0x171] sm:$0xff]
        %s3357 = scalar_lea.vmem [#allocation9], 56
        %v3358 = vld [vmem:[%s3357] sm:$0xff]
        %v3360 = vsel %vm312, %v3325, 0
        %v3363 = vsel %vm312, %v3326, 0
        %v3366 = vsel %vm312, %v3327, 0
        %v3369 = vsel %vm312, %v3328, 0
        %v3372 = vsel %vm312, %v3329, 0
        %v3375 = vsel %vm312, %v3330, 0
        %v3378 = vsel %vm312, %v3331, 0
        %v3381 = vsel %vm312, %v3332, 0
        %v3384 = vsel %vm312, %v3333, 0
        %v3387 = vsel %vm312, %v3334, 0
        %v3390 = vsel %vm312, %v3335, 0
        %v3393 = vsel %vm312, %v3336, 0
        %v3396 = vsel %vm312, %v3337, 0
        %v3399 = vsel %vm312, %v3338, 0
        %v3402 = vsel %vm312, %v3339, 0
        %v3405 = vsel %vm312, %v3340, 0
        %v3408 = vsel %vm312, %v3341, 0
        %v3411 = vsel %vm312, %v3342, 0
        %v3414 = vsel %vm312, %v3343, 0
        %v3417 = vsel %vm312, %v3344, 0
        %v3420 = vsel %vm312, %v3345, 0
        %v3423 = vsel %vm312, %v3346, 0
        %v3426 = vsel %vm312, %v3347, 0
        %v3429 = vsel %vm312, %v3348, 0
        %v3432 = vsel %vm312, %v3349, 0
        %v3435 = vsel %vm312, %v3350, 0
        %v3438 = vsel %vm312, %v3351, 0
        %v3441 = vsel %vm312, %v3352, 0
        %v3444 = vsel %vm312, %v3353, 0
        %v3447 = vsel %vm312, %v3354, 0
        %v3450 = vsel %vm312, %v3355, 0
        %v3453 = vsel %vm312, %v3356, 0
        %3455 = vmatprep.subr.mxu0 0.0
        %3456 = vmatpush1.msra.mxu0 %v3358
        %3457 = vmatprep.subr.mxu0 0.0
        %3458 = vmatpush1.msra.mxu0 0.0
        %3459 = vmatprep.subr.mxu0 0.0
        %3460 = vmatpush1.msra.mxu0 0.0
        %3461 = vmatprep.subr.mxu0 0.0
        %3462 = vmatpush1.msra.mxu0 0.0
        %3463 = vmatprep.subr.mxu0 0.0
        %3464 = vmatpush1.msra.mxu0 0.0
        %3465 = vmatprep.subr.mxu0 0.0
        %3466 = vmatpush1.msra.mxu0 0.0
        %3467 = vmatprep.subr.mxu0 0.0
        %3468 = vmatpush1.msra.mxu0 0.0
        %3469 = vmatprep.subr.mxu0 0.0
        %3470 = vmatpush1.msra.mxu0 0.0
        %3471 = vmatprep.subr.mxu0 0.0
        %3472 = vmatpush1.msra.mxu0 0.0
        %3473 = vmatprep.subr.mxu0 0.0
        %3474 = vmatpush1.msra.mxu0 0.0
        %3475 = vmatprep.subr.mxu0 0.0
        %3476 = vmatpush1.msra.mxu0 0.0
        %3477 = vmatprep.subr.mxu0 0.0
        %3478 = vmatpush1.msra.mxu0 0.0
        %3479 = vmatprep.subr.mxu0 0.0
        %3480 = vmatpush1.msra.mxu0 0.0
        %3481 = vmatprep.subr.mxu0 0.0
        %3482 = vmatpush1.msra.mxu0 0.0
        %3483 = vmatprep.subr.mxu0 0.0
        %3484 = vmatpush1.msra.mxu0 0.0
        %3485 = vmatprep.subr.mxu0 0.0
        %3486 = vmatpush1.msra.mxu0 0.0
        %3487 = vmatprep.subr.mxu0 0.0
        %3488 = vmatpush1.msra.mxu0 0.0
        %3489 = vmatprep.subr.mxu0 0.0
        %3490 = vmatpush1.msra.mxu0 0.0
        %3491 = vmatprep.subr.mxu0 0.0
        %3492 = vmatpush1.msra.mxu0 0.0
        %3493 = vmatprep.subr.mxu0 0.0
        %3494 = vmatpush1.msra.mxu0 0.0
        %3495 = vmatprep.subr.mxu0 0.0
        %3496 = vmatpush1.msra.mxu0 0.0
        %3497 = vmatprep.subr.mxu0 0.0
        %3498 = vmatpush1.msra.mxu0 0.0
        %3499 = vmatprep.subr.mxu0 0.0
        %3500 = vmatpush1.msra.mxu0 0.0
        %3501 = vmatprep.subr.mxu0 0.0
        %3502 = vmatpush1.msra.mxu0 0.0
        %3503 = vmatprep.subr.mxu0 0.0
        %3504 = vmatpush1.msra.mxu0 0.0
        %3505 = vmatprep.subr.mxu0 0.0
        %3506 = vmatpush1.msra.mxu0 0.0
        %3507 = vmatprep.subr.mxu0 0.0
        %3508 = vmatpush1.msra.mxu0 0.0
        %3509 = vmatprep.subr.mxu0 0.0
        %3510 = vmatpush1.msra.mxu0 0.0
        %3511 = vmatprep.subr.mxu0 0.0
        %3512 = vmatpush1.msra.mxu0 0.0
        %3513 = vmatprep.subr.mxu0 0.0
        %3514 = vmatpush1.msra.mxu0 0.0
        %3515 = vmatprep.subr.mxu0 0.0
        %3516 = vmatpush1.msra.mxu0 0.0
        %3517 = vmatprep.subr.mxu0 0.0
        %3518 = vmatpush1.msra.mxu0 0.0
        %3519 = vmatprep.mubr.f32.mxu0 0.0
        %3520 = vmatmul.mubr.f32.gmra.mrb[0].mxu0 %v3360
        %v3521 = vpop.f32.mrb[0].mxu0
        %v3522 = vadd.f32 0.0, %v3521
        %v3523 = vpop.f32.mrb[0].mxu0
        %3524 = vmatprep.mubr.f32.mxu0 0.0
        %3525 = vmatmul.mubr.f32.gmra.mrb[0].mxu0 %v3363
        %v3526 = vpop.f32.mrb[0].mxu0
        %v3527 = vadd.f32 0.0, %v3526
        %v3528 = vpop.f32.mrb[0].mxu0
        %3529 = vmatprep.mubr.f32.mxu0 0.0
        %3530 = vmatmul.mubr.f32.gmra.mrb[0].mxu0 %v3366
        %v3531 = vpop.f32.mrb[0].mxu0
        %v3532 = vadd.f32 0.0, %v3531
        %v3533 = vpop.f32.mrb[0].mxu0
        %3534 = vmatprep.mubr.f32.mxu0 0.0
        %3535 = vmatmul.mubr.f32.gmra.mrb[0].mxu0 %v3369
        %v3536 = vpop.f32.mrb[0].mxu0
        %v3537 = vadd.f32 0.0, %v3536
        %v3538 = vpop.f32.mrb[0].mxu0
        %3539 = vmatprep.mubr.f32.mxu0 0.0
        %3540 = vmatmul.mubr.f32.gmra.mrb[0].mxu0 %v3372
        %v3541 = vpop.f32.mrb[0].mxu0
        %v3542 = vadd.f32 0.0, %v3541
        %v3543 = vpop.f32.mrb[0].mxu0
        %3544 = vmatprep.mubr.f32.mxu0 0.0
        %3545 = vmatmul.mubr.f32.gmra.mrb[0].mxu0 %v3375
        %v3546 = vpop.f32.mrb[0].mxu0
        %v3547 = vadd.f32 0.0, %v3546
        %v3548 = vpop.f32.mrb[0].mxu0
        %3549 = vmatprep.mubr.f32.mxu0 0.0
        %3550 = vmatmul.mubr.f32.gmra.mrb[0].mxu0 %v3378
        %v3551 = vpop.f32.mrb[0].mxu0
        %v3552 = vadd.f32 0.0, %v3551
        %v3553 = vpop.f32.mrb[0].mxu0
        %3554 = vmatprep.mubr.f32.mxu0 0.0
        %3555 = vmatmul.mubr.f32.gmra.mrb[0].mxu0 %v3381
        %v3556 = vpop.f32.mrb[0].mxu0
        %v3557 = vadd.f32 0.0, %v3556
        %v3558 = vpop.f32.mrb[0].mxu0
        %3559 = vmatprep.mubr.f32.mxu0 0.0
        %3560 = vmatmul.mubr.f32.gmra.mrb[0].mxu0 %v3384
        %v3561 = vpop.f32.mrb[0].mxu0
        %v3562 = vadd.f32 0.0, %v3561
        %v3563 = vpop.f32.mrb[0].mxu0
        %3564 = vmatprep.mubr.f32.mxu0 0.0
        %3565 = vmatmul.mubr.f32.gmra.mrb[0].mxu0 %v3387
        %v3566 = vpop.f32.mrb[0].mxu0
        %v3567 = vadd.f32 0.0, %v3566
        %v3568 = vpop.f32.mrb[0].mxu0
        %3569 = vmatprep.mubr.f32.mxu0 0.0
        %3570 = vmatmul.mubr.f32.gmra.mrb[0].mxu0 %v3390
        %v3571 = vpop.f32.mrb[0].mxu0
        %v3572 = vadd.f32 0.0, %v3571
        %v3573 = vpop.f32.mrb[0].mxu0
        %3574 = vmatprep.mubr.f32.mxu0 0.0
        %3575 = vmatmul.mubr.f32.gmra.mrb[0].mxu0 %v3393
        %v3576 = vpop.f32.mrb[0].mxu0
        %v3577 = vadd.f32 0.0, %v3576
        %v3578 = vpop.f32.mrb[0].mxu0
        %3579 = vmatprep.mubr.f32.mxu0 0.0
        %3580 = vmatmul.mubr.f32.gmra.mrb[0].mxu0 %v3396
        %v3581 = vpop.f32.mrb[0].mxu0
        %v3582 = vadd.f32 0.0, %v3581
        %v3583 = vpop.f32.mrb[0].mxu0
        %3584 = vmatprep.mubr.f32.mxu0 0.0
        %3585 = vmatmul.mubr.f32.gmra.mrb[0].mxu0 %v3399
        %v3586 = vpop.f32.mrb[0].mxu0
        %v3587 = vadd.f32 0.0, %v3586
        %v3588 = vpop.f32.mrb[0].mxu0
        %3589 = vmatprep.mubr.f32.mxu0 0.0
        %3590 = vmatmul.mubr.f32.gmra.mrb[0].mxu0 %v3402
        %v3591 = vpop.f32.mrb[0].mxu0
        %v3592 = vadd.f32 0.0, %v3591
        %v3593 = vpop.f32.mrb[0].mxu0
        %3594 = vmatprep.mubr.f32.mxu0 0.0
        %3595 = vmatmul.mubr.f32.gmra.mrb[0].mxu0 %v3405
        %v3596 = vpop.f32.mrb[0].mxu0
        %v3597 = vadd.f32 0.0, %v3596
        %v3598 = vpop.f32.mrb[0].mxu0
        %3599 = vmatprep.mubr.f32.mxu0 0.0
        %3600 = vmatmul.mubr.f32.gmra.mrb[0].mxu0 %v3408
        %v3601 = vpop.f32.mrb[0].mxu0
        %v3602 = vadd.f32 0.0, %v3601
        %v3603 = vpop.f32.mrb[0].mxu0
        %3604 = vmatprep.mubr.f32.mxu0 0.0
        %3605 = vmatmul.mubr.f32.gmra.mrb[0].mxu0 %v3411
        %v3606 = vpop.f32.mrb[0].mxu0
        %v3607 = vadd.f32 0.0, %v3606
        %v3608 = vpop.f32.mrb[0].mxu0
        %3609 = vmatprep.mubr.f32.mxu0 0.0
        %3610 = vmatmul.mubr.f32.gmra.mrb[0].mxu0 %v3414
        %v3611 = vpop.f32.mrb[0].mxu0
        %v3612 = vadd.f32 0.0, %v3611
        %v3613 = vpop.f32.mrb[0].mxu0
        %3614 = vmatprep.mubr.f32.mxu0 0.0
        %3615 = vmatmul.mubr.f32.gmra.mrb[0].mxu0 %v3417
        %v3616 = vpop.f32.mrb[0].mxu0
        %v3617 = vadd.f32 0.0, %v3616
        %v3618 = vpop.f32.mrb[0].mxu0
        %3619 = vmatprep.mubr.f32.mxu0 0.0
        %3620 = vmatmul.mubr.f32.gmra.mrb[0].mxu0 %v3420
        %v3621 = vpop.f32.mrb[0].mxu0
        %v3622 = vadd.f32 0.0, %v3621
        %v3623 = vpop.f32.mrb[0].mxu0
        %3624 = vmatprep.mubr.f32.mxu0 0.0
        %3625 = vmatmul.mubr.f32.gmra.mrb[0].mxu0 %v3423
        %v3626 = vpop.f32.mrb[0].mxu0
        %v3627 = vadd.f32 0.0, %v3626
        %v3628 = vpop.f32.mrb[0].mxu0
        %3629 = vmatprep.mubr.f32.mxu0 0.0
        %3630 = vmatmul.mubr.f32.gmra.mrb[0].mxu0 %v3426
        %v3631 = vpop.f32.mrb[0].mxu0
        %v3632 = vadd.f32 0.0, %v3631
        %v3633 = vpop.f32.mrb[0].mxu0
        %3634 = vmatprep.mubr.f32.mxu0 0.0
        %3635 = vmatmul.mubr.f32.gmra.mrb[0].mxu0 %v3429
        %v3636 = vpop.f32.mrb[0].mxu0
        %v3637 = vadd.f32 0.0, %v3636
        %v3638 = vpop.f32.mrb[0].mxu0
        %3639 = vmatprep.mubr.f32.mxu0 0.0
        %3640 = vmatmul.mubr.f32.gmra.mrb[0].mxu0 %v3432
        %v3641 = vpop.f32.mrb[0].mxu0
        %v3642 = vadd.f32 0.0, %v3641
        %v3643 = vpop.f32.mrb[0].mxu0
        %3644 = vmatprep.mubr.f32.mxu0 0.0
        %3645 = vmatmul.mubr.f32.gmra.mrb[0].mxu0 %v3435
        %v3646 = vpop.f32.mrb[0].mxu0
        %v3647 = vadd.f32 0.0, %v3646
        %v3648 = vpop.f32.mrb[0].mxu0
        %3649 = vmatprep.mubr.f32.mxu0 0.0
        %3650 = vmatmul.mubr.f32.gmra.mrb[0].mxu0 %v3438
        %v3651 = vpop.f32.mrb[0].mxu0
        %v3652 = vadd.f32 0.0, %v3651
        %v3653 = vpop.f32.mrb[0].mxu0
        %3654 = vmatprep.mubr.f32.mxu0 0.0
        %3655 = vmatmul.mubr.f32.gmra.mrb[0].mxu0 %v3441
        %v3656 = vpop.f32.mrb[0].mxu0
        %v3657 = vadd.f32 0.0, %v3656
        %v3658 = vpop.f32.mrb[0].mxu0
        %3659 = vmatprep.mubr.f32.mxu0 0.0
        %3660 = vmatmul.mubr.f32.gmra.mrb[0].mxu0 %v3444
        %v3661 = vpop.f32.mrb[0].mxu0
        %v3662 = vadd.f32 0.0, %v3661
        %v3663 = vpop.f32.mrb[0].mxu0
        %3664 = vmatprep.mubr.f32.mxu0 0.0
        %3665 = vmatmul.mubr.f32.gmra.mrb[0].mxu0 %v3447
        %v3666 = vpop.f32.mrb[0].mxu0
        %v3667 = vadd.f32 0.0, %v3666
        %v3668 = vpop.f32.mrb[0].mxu0
        %3669 = vmatprep.mubr.f32.mxu0 0.0
        %3670 = vmatmul.mubr.f32.gmra.mrb[0].mxu0 %v3450
        %v3671 = vpop.f32.mrb[0].mxu0
        %v3672 = vadd.f32 0.0, %v3671
        %v3673 = vpop.f32.mrb[0].mxu0
        %3674 = vmatprep.mubr.f32.mxu0 0.0
        %3675 = vmatmul.mubr.f32.gmra.mrb[0].mxu0 %v3453
        %v3676 = vpop.f32.mrb[0].mxu0
        %v3677 = vadd.f32 0.0, %v3676
        %v3678 = vpop.f32.mrb[0].mxu0
        %3679 = vdwg.mxu0
        %v3680 = vadd.f32 %v3293, %v3522
        %v3681 = vadd.f32 %v3294, %v3527
        %v3682 = vadd.f32 %v3295, %v3532
        %v3683 = vadd.f32 %v3296, %v3537
        %v3684 = vadd.f32 %v3297, %v3542
        %v3685 = vadd.f32 %v3298, %v3547
        %v3686 = vadd.f32 %v3299, %v3552
        %v3687 = vadd.f32 %v3300, %v3557
        %v3688 = vadd.f32 %v3301, %v3562
        %v3689 = vadd.f32 %v3302, %v3567
        %v3690 = vadd.f32 %v3303, %v3572
        %v3691 = vadd.f32 %v3304, %v3577
        %v3692 = vadd.f32 %v3305, %v3582
        %v3693 = vadd.f32 %v3306, %v3587
        %v3694 = vadd.f32 %v3307, %v3592
        %v3695 = vadd.f32 %v3308, %v3597
        %v3696 = vadd.f32 %v3309, %v3602
        %v3697 = vadd.f32 %v3310, %v3607
        %v3698 = vadd.f32 %v3311, %v3612
        %v3699 = vadd.f32 %v3312, %v3617
        %v3700 = vadd.f32 %v3313, %v3622
        %v3701 = vadd.f32 %v3314, %v3627
        %v3702 = vadd.f32 %v3315, %v3632
        %v3703 = vadd.f32 %v3316, %v3637
        %v3704 = vadd.f32 %v3317, %v3642
        %v3705 = vadd.f32 %v3318, %v3647
        %v3706 = vadd.f32 %v3319, %v3652
        %v3707 = vadd.f32 %v3320, %v3657
        %v3708 = vadd.f32 %v3321, %v3662
        %v3709 = vadd.f32 %v3322, %v3667
        %v3710 = vadd.f32 %v3323, %v3672
        %v3711 = vadd.f32 %v3324, %v3677
        %v3712 = vld [vmem:[%s2937 + $0x2] sm:$0xff]
        %v3713 = vld [vmem:[%s2937 + $0xa] sm:$0xff]
        %v3714 = vld [vmem:[%s2937 + $0x1a] sm:$0xff]
        %v3715 = vld [vmem:[%s2937 + $0x22] sm:$0xff]
        %v3716 = vld [vmem:[%s2937 + $0x32] sm:$0xff]
        %v3717 = vld [vmem:[%s2937 + $0x3a] sm:$0xff]
        %v3718 = vld [vmem:[%s2937 + $0x4a] sm:$0xff]
        %v3719 = vld [vmem:[%s2937 + $0x52] sm:$0xff]
        %v3720 = vld [vmem:[%s2937 + $0x62] sm:$0xff]
        %v3721 = vld [vmem:[%s2937 + $0x6a] sm:$0xff]
        %v3722 = vld [vmem:[%s2937 + $0x7a] sm:$0xff]
        %v3723 = vld [vmem:[%s2937 + $0x82] sm:$0xff]
        %v3724 = vld [vmem:[%s2937 + $0x92] sm:$0xff]
        %v3725 = vld [vmem:[%s2937 + $0x9a] sm:$0xff]
        %v3726 = vld [vmem:[%s2937 + $0xaa] sm:$0xff]
        %v3727 = vld [vmem:[%s2937 + $0xb2] sm:$0xff]
        %v3728 = vld [vmem:[%s2937 + $0xc2] sm:$0xff]
        %v3729 = vld [vmem:[%s2937 + $0xca] sm:$0xff]
        %v3730 = vld [vmem:[%s2937 + $0xda] sm:$0xff]
        %v3731 = vld [vmem:[%s2937 + $0xe2] sm:$0xff]
        %v3732 = vld [vmem:[%s2937 + $0xf2] sm:$0xff]
        %v3733 = vld [vmem:[%s2937 + $0xfa] sm:$0xff]
        %v3734 = vld [vmem:[%s2937 + $0x10a] sm:$0xff]
        %v3735 = vld [vmem:[%s2937 + $0x112] sm:$0xff]
        %v3736 = vld [vmem:[%s2937 + $0x122] sm:$0xff]
        %v3737 = vld [vmem:[%s2937 + $0x12a] sm:$0xff]
        %v3738 = vld [vmem:[%s2937 + $0x13a] sm:$0xff]
        %v3739 = vld [vmem:[%s2937 + $0x142] sm:$0xff]
        %v3740 = vld [vmem:[%s2937 + $0x152] sm:$0xff]
        %v3741 = vld [vmem:[%s2937 + $0x15a] sm:$0xff]
        %v3742 = vld [vmem:[%s2937 + $0x16a] sm:$0xff]
        %v3743 = vld [vmem:[%s2937 + $0x172] sm:$0xff]
        %s3744 = scalar_lea.vmem [#allocation9], 64
        %v3745 = vld [vmem:[%s3744] sm:$0xff]
        %v3747 = vsel %vm312, %v3712, 0
        %v3750 = vsel %vm312, %v3713, 0
        %v3753 = vsel %vm312, %v3714, 0
        %v3756 = vsel %vm312, %v3715, 0
        %v3759 = vsel %vm312, %v3716, 0
        %v3762 = vsel %vm312, %v3717, 0
        %v3765 = vsel %vm312, %v3718, 0
        %v3768 = vsel %vm312, %v3719, 0
        %v3771 = vsel %vm312, %v3720, 0
        %v3774 = vsel %vm312, %v3721, 0
        %v3777 = vsel %vm312, %v3722, 0
        %v3780 = vsel %vm312, %v3723, 0
        %v3783 = vsel %vm312, %v3724, 0
        %v3786 = vsel %vm312, %v3725, 0
        %v3789 = vsel %vm312, %v3726, 0
        %v3792 = vsel %vm312, %v3727, 0
        %v3795 = vsel %vm312, %v3728, 0
        %v3798 = vsel %vm312, %v3729, 0
        %v3801 = vsel %vm312, %v3730, 0
        %v3804 = vsel %vm312, %v3731, 0
        %v3807 = vsel %vm312, %v3732, 0
        %v3810 = vsel %vm312, %v3733, 0
        %v3813 = vsel %vm312, %v3734, 0
        %v3816 = vsel %vm312, %v3735, 0
        %v3819 = vsel %vm312, %v3736, 0
        %v3822 = vsel %vm312, %v3737, 0
        %v3825 = vsel %vm312, %v3738, 0
        %v3828 = vsel %vm312, %v3739, 0
        %v3831 = vsel %vm312, %v3740, 0
        %v3834 = vsel %vm312, %v3741, 0
        %v3837 = vsel %vm312, %v3742, 0
        %v3840 = vsel %vm312, %v3743, 0
        %3842 = vmatprep.subr.mxu0 0.0
        %3843 = vmatpush1.msra.mxu0 %v3745
        %3844 = vmatprep.subr.mxu0 0.0
        %3845 = vmatpush1.msra.mxu0 0.0
        %3846 = vmatprep.subr.mxu0 0.0
        %3847 = vmatpush1.msra.mxu0 0.0
        %3848 = vmatprep.subr.mxu0 0.0
        %3849 = vmatpush1.msra.mxu0 0.0
        %3850 = vmatprep.subr.mxu0 0.0
        %3851 = vmatpush1.msra.mxu0 0.0
        %3852 = vmatprep.subr.mxu0 0.0
        %3853 = vmatpush1.msra.mxu0 0.0
        %3854 = vmatprep.subr.mxu0 0.0
        %3855 = vmatpush1.msra.mxu0 0.0
        %3856 = vmatprep.subr.mxu0 0.0
        %3857 = vmatpush1.msra.mxu0 0.0
        %3858 = vmatprep.subr.mxu0 0.0
        %3859 = vmatpush1.msra.mxu0 0.0
        %3860 = vmatprep.subr.mxu0 0.0
        %3861 = vmatpush1.msra.mxu0 0.0
        %3862 = vmatprep.subr.mxu0 0.0
        %3863 = vmatpush1.msra.mxu0 0.0
        %3864 = vmatprep.subr.mxu0 0.0
        %3865 = vmatpush1.msra.mxu0 0.0
        %3866 = vmatprep.subr.mxu0 0.0
        %3867 = vmatpush1.msra.mxu0 0.0
        %3868 = vmatprep.subr.mxu0 0.0
        %3869 = vmatpush1.msra.mxu0 0.0
        %3870 = vmatprep.subr.mxu0 0.0
        %3871 = vmatpush1.msra.mxu0 0.0
        %3872 = vmatprep.subr.mxu0 0.0
        %3873 = vmatpush1.msra.mxu0 0.0
        %3874 = vmatprep.subr.mxu0 0.0
        %3875 = vmatpush1.msra.mxu0 0.0
        %3876 = vmatprep.subr.mxu0 0.0
        %3877 = vmatpush1.msra.mxu0 0.0
        %3878 = vmatprep.subr.mxu0 0.0
        %3879 = vmatpush1.msra.mxu0 0.0
        %3880 = vmatprep.subr.mxu0 0.0
        %3881 = vmatpush1.msra.mxu0 0.0
        %3882 = vmatprep.subr.mxu0 0.0
        %3883 = vmatpush1.msra.mxu0 0.0
        %3884 = vmatprep.subr.mxu0 0.0
        %3885 = vmatpush1.msra.mxu0 0.0
        %3886 = vmatprep.subr.mxu0 0.0
        %3887 = vmatpush1.msra.mxu0 0.0
        %3888 = vmatprep.subr.mxu0 0.0
        %3889 = vmatpush1.msra.mxu0 0.0
        %3890 = vmatprep.subr.mxu0 0.0
        %3891 = vmatpush1.msra.mxu0 0.0
        %3892 = vmatprep.subr.mxu0 0.0
        %3893 = vmatpush1.msra.mxu0 0.0
        %3894 = vmatprep.subr.mxu0 0.0
        %3895 = vmatpush1.msra.mxu0 0.0
        %3896 = vmatprep.subr.mxu0 0.0
        %3897 = vmatpush1.msra.mxu0 0.0
        %3898 = vmatprep.subr.mxu0 0.0
        %3899 = vmatpush1.msra.mxu0 0.0
        %3900 = vmatprep.subr.mxu0 0.0
        %3901 = vmatpush1.msra.mxu0 0.0
        %3902 = vmatprep.subr.mxu0 0.0
        %3903 = vmatpush1.msra.mxu0 0.0
        %3904 = vmatprep.subr.mxu0 0.0
        %3905 = vmatpush1.msra.mxu0 0.0
        %3906 = vmatprep.mubr.f32.mxu0 0.0
        %3907 = vmatmul.mubr.f32.gmra.mrb[0].mxu0 %v3747
        %v3908 = vpop.f32.mrb[0].mxu0
        %v3909 = vadd.f32 0.0, %v3908
        %v3910 = vpop.f32.mrb[0].mxu0
        %3911 = vmatprep.mubr.f32.mxu0 0.0
        %3912 = vmatmul.mubr.f32.gmra.mrb[0].mxu0 %v3750
        %v3913 = vpop.f32.mrb[0].mxu0
        %v3914 = vadd.f32 0.0, %v3913
        %v3915 = vpop.f32.mrb[0].mxu0
        %3916 = vmatprep.mubr.f32.mxu0 0.0
        %3917 = vmatmul.mubr.f32.gmra.mrb[0].mxu0 %v3753
        %v3918 = vpop.f32.mrb[0].mxu0
        %v3919 = vadd.f32 0.0, %v3918
        %v3920 = vpop.f32.mrb[0].mxu0
        %3921 = vmatprep.mubr.f32.mxu0 0.0
        %3922 = vmatmul.mubr.f32.gmra.mrb[0].mxu0 %v3756
        %v3923 = vpop.f32.mrb[0].mxu0
        %v3924 = vadd.f32 0.0, %v3923
        %v3925 = vpop.f32.mrb[0].mxu0
        %3926 = vmatprep.mubr.f32.mxu0 0.0
        %3927 = vmatmul.mubr.f32.gmra.mrb[0].mxu0 %v3759
        %v3928 = vpop.f32.mrb[0].mxu0
        %v3929 = vadd.f32 0.0, %v3928
        %v3930 = vpop.f32.mrb[0].mxu0
        %3931 = vmatprep.mubr.f32.mxu0 0.0
        %3932 = vmatmul.mubr.f32.gmra.mrb[0].mxu0 %v3762
        %v3933 = vpop.f32.mrb[0].mxu0
        %v3934 = vadd.f32 0.0, %v3933
        %v3935 = vpop.f32.mrb[0].mxu0
        %3936 = vmatprep.mubr.f32.mxu0 0.0
        %3937 = vmatmul.mubr.f32.gmra.mrb[0].mxu0 %v3765
        %v3938 = vpop.f32.mrb[0].mxu0
        %v3939 = vadd.f32 0.0, %v3938
        %v3940 = vpop.f32.mrb[0].mxu0
        %3941 = vmatprep.mubr.f32.mxu0 0.0
        %3942 = vmatmul.mubr.f32.gmra.mrb[0].mxu0 %v3768
        %v3943 = vpop.f32.mrb[0].mxu0
        %v3944 = vadd.f32 0.0, %v3943
        %v3945 = vpop.f32.mrb[0].mxu0
        %3946 = vmatprep.mubr.f32.mxu0 0.0
        %3947 = vmatmul.mubr.f32.gmra.mrb[0].mxu0 %v3771
        %v3948 = vpop.f32.mrb[0].mxu0
        %v3949 = vadd.f32 0.0, %v3948
        %v3950 = vpop.f32.mrb[0].mxu0
        %3951 = vmatprep.mubr.f32.mxu0 0.0
        %3952 = vmatmul.mubr.f32.gmra.mrb[0].mxu0 %v3774
        %v3953 = vpop.f32.mrb[0].mxu0
        %v3954 = vadd.f32 0.0, %v3953
        %v3955 = vpop.f32.mrb[0].mxu0
        %3956 = vmatprep.mubr.f32.mxu0 0.0
        %3957 = vmatmul.mubr.f32.gmra.mrb[0].mxu0 %v3777
        %v3958 = vpop.f32.mrb[0].mxu0
        %v3959 = vadd.f32 0.0, %v3958
        %v3960 = vpop.f32.mrb[0].mxu0
        %3961 = vmatprep.mubr.f32.mxu0 0.0
        %3962 = vmatmul.mubr.f32.gmra.mrb[0].mxu0 %v3780
        %v3963 = vpop.f32.mrb[0].mxu0
        %v3964 = vadd.f32 0.0, %v3963
        %v3965 = vpop.f32.mrb[0].mxu0
        %3966 = vmatprep.mubr.f32.mxu0 0.0
        %3967 = vmatmul.mubr.f32.gmra.mrb[0].mxu0 %v3783
        %v3968 = vpop.f32.mrb[0].mxu0
        %v3969 = vadd.f32 0.0, %v3968
        %v3970 = vpop.f32.mrb[0].mxu0
        %3971 = vmatprep.mubr.f32.mxu0 0.0
        %3972 = vmatmul.mubr.f32.gmra.mrb[0].mxu0 %v3786
        %v3973 = vpop.f32.mrb[0].mxu0
        %v3974 = vadd.f32 0.0, %v3973
        %v3975 = vpop.f32.mrb[0].mxu0
        %3976 = vmatprep.mubr.f32.mxu0 0.0
        %3977 = vmatmul.mubr.f32.gmra.mrb[0].mxu0 %v3789
        %v3978 = vpop.f32.mrb[0].mxu0
        %v3979 = vadd.f32 0.0, %v3978
        %v3980 = vpop.f32.mrb[0].mxu0
        %3981 = vmatprep.mubr.f32.mxu0 0.0
        %3982 = vmatmul.mubr.f32.gmra.mrb[0].mxu0 %v3792
        %v3983 = vpop.f32.mrb[0].mxu0
        %v3984 = vadd.f32 0.0, %v3983
        %v3985 = vpop.f32.mrb[0].mxu0
        %3986 = vmatprep.mubr.f32.mxu0 0.0
        %3987 = vmatmul.mubr.f32.gmra.mrb[0].mxu0 %v3795
        %v3988 = vpop.f32.mrb[0].mxu0
        %v3989 = vadd.f32 0.0, %v3988
        %v3990 = vpop.f32.mrb[0].mxu0
        %3991 = vmatprep.mubr.f32.mxu0 0.0
        %3992 = vmatmul.mubr.f32.gmra.mrb[0].mxu0 %v3798
        %v3993 = vpop.f32.mrb[0].mxu0
        %v3994 = vadd.f32 0.0, %v3993
        %v3995 = vpop.f32.mrb[0].mxu0
        %3996 = vmatprep.mubr.f32.mxu0 0.0
        %3997 = vmatmul.mubr.f32.gmra.mrb[0].mxu0 %v3801
        %v3998 = vpop.f32.mrb[0].mxu0
        %v3999 = vadd.f32 0.0, %v3998
        %v4000 = vpop.f32.mrb[0].mxu0
        %4001 = vmatprep.mubr.f32.mxu0 0.0
        %4002 = vmatmul.mubr.f32.gmra.mrb[0].mxu0 %v3804
        %v4003 = vpop.f32.mrb[0].mxu0
        %v4004 = vadd.f32 0.0, %v4003
        %v4005 = vpop.f32.mrb[0].mxu0
        %4006 = vmatprep.mubr.f32.mxu0 0.0
        %4007 = vmatmul.mubr.f32.gmra.mrb[0].mxu0 %v3807
        %v4008 = vpop.f32.mrb[0].mxu0
        %v4009 = vadd.f32 0.0, %v4008
        %v4010 = vpop.f32.mrb[0].mxu0
        %4011 = vmatprep.mubr.f32.mxu0 0.0
        %4012 = vmatmul.mubr.f32.gmra.mrb[0].mxu0 %v3810
        %v4013 = vpop.f32.mrb[0].mxu0
        %v4014 = vadd.f32 0.0, %v4013
        %v4015 = vpop.f32.mrb[0].mxu0
        %4016 = vmatprep.mubr.f32.mxu0 0.0
        %4017 = vmatmul.mubr.f32.gmra.mrb[0].mxu0 %v3813
        %v4018 = vpop.f32.mrb[0].mxu0
        %v4019 = vadd.f32 0.0, %v4018
        %v4020 = vpop.f32.mrb[0].mxu0
        %4021 = vmatprep.mubr.f32.mxu0 0.0
        %4022 = vmatmul.mubr.f32.gmra.mrb[0].mxu0 %v3816
        %v4023 = vpop.f32.mrb[0].mxu0
        %v4024 = vadd.f32 0.0, %v4023
        %v4025 = vpop.f32.mrb[0].mxu0
        %4026 = vmatprep.mubr.f32.mxu0 0.0
        %4027 = vmatmul.mubr.f32.gmra.mrb[0].mxu0 %v3819
        %v4028 = vpop.f32.mrb[0].mxu0
        %v4029 = vadd.f32 0.0, %v4028
        %v4030 = vpop.f32.mrb[0].mxu0
        %4031 = vmatprep.mubr.f32.mxu0 0.0
        %4032 = vmatmul.mubr.f32.gmra.mrb[0].mxu0 %v3822
        %v4033 = vpop.f32.mrb[0].mxu0
        %v4034 = vadd.f32 0.0, %v4033
        %v4035 = vpop.f32.mrb[0].mxu0
        %4036 = vmatprep.mubr.f32.mxu0 0.0
        %4037 = vmatmul.mubr.f32.gmra.mrb[0].mxu0 %v3825
        %v4038 = vpop.f32.mrb[0].mxu0
        %v4039 = vadd.f32 0.0, %v4038
        %v4040 = vpop.f32.mrb[0].mxu0
        %4041 = vmatprep.mubr.f32.mxu0 0.0
        %4042 = vmatmul.mubr.f32.gmra.mrb[0].mxu0 %v3828
        %v4043 = vpop.f32.mrb[0].mxu0
        %v4044 = vadd.f32 0.0, %v4043
        %v4045 = vpop.f32.mrb[0].mxu0
        %4046 = vmatprep.mubr.f32.mxu0 0.0
        %4047 = vmatmul.mubr.f32.gmra.mrb[0].mxu0 %v3831
        %v4048 = vpop.f32.mrb[0].mxu0
        %v4049 = vadd.f32 0.0, %v4048
        %v4050 = vpop.f32.mrb[0].mxu0
        %4051 = vmatprep.mubr.f32.mxu0 0.0
        %4052 = vmatmul.mubr.f32.gmra.mrb[0].mxu0 %v3834
        %v4053 = vpop.f32.mrb[0].mxu0
        %v4054 = vadd.f32 0.0, %v4053
        %v4055 = vpop.f32.mrb[0].mxu0
        %4056 = vmatprep.mubr.f32.mxu0 0.0
        %4057 = vmatmul.mubr.f32.gmra.mrb[0].mxu0 %v3837
        %v4058 = vpop.f32.mrb[0].mxu0
        %v4059 = vadd.f32 0.0, %v4058
        %v4060 = vpop.f32.mrb[0].mxu0
        %4061 = vmatprep.mubr.f32.mxu0 0.0
        %4062 = vmatmul.mubr.f32.gmra.mrb[0].mxu0 %v3840
        %v4063 = vpop.f32.mrb[0].mxu0
        %v4064 = vadd.f32 0.0, %v4063
        %v4065 = vpop.f32.mrb[0].mxu0
        %4066 = vdwg.mxu0
        %v4067 = vadd.f32 %v3680, %v3909
        %v4068 = vadd.f32 %v3681, %v3914
        %v4069 = vadd.f32 %v3682, %v3919
        %v4070 = vadd.f32 %v3683, %v3924
        %v4071 = vadd.f32 %v3684, %v3929
        %v4072 = vadd.f32 %v3685, %v3934
        %v4073 = vadd.f32 %v3686, %v3939
        %v4074 = vadd.f32 %v3687, %v3944
        %v4075 = vadd.f32 %v3688, %v3949
        %v4076 = vadd.f32 %v3689, %v3954
        %v4077 = vadd.f32 %v3690, %v3959
        %v4078 = vadd.f32 %v3691, %v3964
        %v4079 = vadd.f32 %v3692, %v3969
        %v4080 = vadd.f32 %v3693, %v3974
        %v4081 = vadd.f32 %v3694, %v3979
        %v4082 = vadd.f32 %v3695, %v3984
        %v4083 = vadd.f32 %v3696, %v3989
        %v4084 = vadd.f32 %v3697, %v3994
        %v4085 = vadd.f32 %v3698, %v3999
        %v4086 = vadd.f32 %v3699, %v4004
        %v4087 = vadd.f32 %v3700, %v4009
        %v4088 = vadd.f32 %v3701, %v4014
        %v4089 = vadd.f32 %v3702, %v4019
        %v4090 = vadd.f32 %v3703, %v4024
        %v4091 = vadd.f32 %v3704, %v4029
        %v4092 = vadd.f32 %v3705, %v4034
        %v4093 = vadd.f32 %v3706, %v4039
        %v4094 = vadd.f32 %v3707, %v4044
        %v4095 = vadd.f32 %v3708, %v4049
        %v4096 = vadd.f32 %v3709, %v4054
        %v4097 = vadd.f32 %v3710, %v4059
        %v4098 = vadd.f32 %v3711, %v4064
        %4099 = vst.msk [vmem:[%s302] sm:$0xff] %vm312, %v4067
        %4100 = vst.msk [vmem:[%s302 + $0x8] sm:$0xff] %vm312, %v4068
        %4101 = vst.msk [vmem:[%s302 + $0x10] sm:$0xff] %vm312, %v4069
        %4102 = vst.msk [vmem:[%s302 + $0x18] sm:$0xff] %vm312, %v4070
        %4103 = vst.msk [vmem:[%s302 + $0x20] sm:$0xff] %vm312, %v4071
        %4104 = vst.msk [vmem:[%s302 + $0x28] sm:$0xff] %vm312, %v4072
        %4105 = vst.msk [vmem:[%s302 + $0x30] sm:$0xff] %vm312, %v4073
        %4106 = vst.msk [vmem:[%s302 + $0x38] sm:$0xff] %vm312, %v4074
        %4107 = vst.msk [vmem:[%s302 + $0x40] sm:$0xff] %vm312, %v4075
        %4108 = vst.msk [vmem:[%s302 + $0x48] sm:$0xff] %vm312, %v4076
        %4109 = vst.msk [vmem:[%s302 + $0x50] sm:$0xff] %vm312, %v4077
        %4110 = vst.msk [vmem:[%s302 + $0x58] sm:$0xff] %vm312, %v4078
        %4111 = vst.msk [vmem:[%s302 + $0x60] sm:$0xff] %vm312, %v4079
        %4112 = vst.msk [vmem:[%s302 + $0x68] sm:$0xff] %vm312, %v4080
        %4113 = vst.msk [vmem:[%s302 + $0x70] sm:$0xff] %vm312, %v4081
        %4114 = vst.msk [vmem:[%s302 + $0x78] sm:$0xff] %vm312, %v4082
        %4115 = vst.msk [vmem:[%s302 + $0x80] sm:$0xff] %vm312, %v4083
        %4116 = vst.msk [vmem:[%s302 + $0x88] sm:$0xff] %vm312, %v4084
        %4117 = vst.msk [vmem:[%s302 + $0x90] sm:$0xff] %vm312, %v4085
        %4118 = vst.msk [vmem:[%s302 + $0x98] sm:$0xff] %vm312, %v4086
        %4119 = vst.msk [vmem:[%s302 + $0xa0] sm:$0xff] %vm312, %v4087
        %4120 = vst.msk [vmem:[%s302 + $0xa8] sm:$0xff] %vm312, %v4088
        %4121 = vst.msk [vmem:[%s302 + $0xb0] sm:$0xff] %vm312, %v4089
        %4122 = vst.msk [vmem:[%s302 + $0xb8] sm:$0xff] %vm312, %v4090
        %4123 = vst.msk [vmem:[%s302 + $0xc0] sm:$0xff] %vm312, %v4091
        %4124 = vst.msk [vmem:[%s302 + $0xc8] sm:$0xff] %vm312, %v4092
        %4125 = vst.msk [vmem:[%s302 + $0xd0] sm:$0xff] %vm312, %v4093
        %4126 = vst.msk [vmem:[%s302 + $0xd8] sm:$0xff] %vm312, %v4094
        %4127 = vst.msk [vmem:[%s302 + $0xe0] sm:$0xff] %vm312, %v4095
        %4128 = vst.msk [vmem:[%s302 + $0xe8] sm:$0xff] %vm312, %v4096
        %4129 = vst.msk [vmem:[%s302 + $0xf0] sm:$0xff] %vm312, %v4097
        %4130 = vst.msk [vmem:[%s302 + $0xf8] sm:$0xff] %vm312, %v4098
        %v4131 = vsel %vm312, %v4067, 0.0
        %v4132 = vsel %vm312, %v4068, 0.0
        %v4133 = vadd.f32 %v4131, %v4132
        %v4134 = vsel %vm312, %v4069, 0.0
        %v4135 = vadd.f32 %v4133, %v4134
        %v4136 = vsel %vm312, %v4070, 0.0
        %v4137 = vadd.f32 %v4135, %v4136
        %v4138 = vsel %vm312, %v4071, 0.0
        %v4139 = vadd.f32 %v4137, %v4138
        %v4140 = vsel %vm312, %v4072, 0.0
        %v4141 = vadd.f32 %v4139, %v4140
        %v4142 = vsel %vm312, %v4073, 0.0
        %v4143 = vadd.f32 %v4141, %v4142
        %v4144 = vsel %vm312, %v4074, 0.0
        %v4145 = vadd.f32 %v4143, %v4144
        %v4146 = vsel %vm312, %v4075, 0.0
        %v4147 = vadd.f32 %v4145, %v4146
        %v4148 = vsel %vm312, %v4076, 0.0
        %v4149 = vadd.f32 %v4147, %v4148
        %v4150 = vsel %vm312, %v4077, 0.0
        %v4151 = vadd.f32 %v4149, %v4150
        %v4152 = vsel %vm312, %v4078, 0.0
        %v4153 = vadd.f32 %v4151, %v4152
        %v4154 = vsel %vm312, %v4079, 0.0
        %v4155 = vadd.f32 %v4153, %v4154
        %v4156 = vsel %vm312, %v4080, 0.0
        %v4157 = vadd.f32 %v4155, %v4156
        %v4158 = vsel %vm312, %v4081, 0.0
        %v4159 = vadd.f32 %v4157, %v4158
        %v4160 = vsel %vm312, %v4082, 0.0
        %v4161 = vadd.f32 %v4159, %v4160
        %v4162 = vsel %vm312, %v4083, 0.0
        %v4163 = vadd.f32 %v4161, %v4162
        %v4164 = vsel %vm312, %v4084, 0.0
        %v4165 = vadd.f32 %v4163, %v4164
        %v4166 = vsel %vm312, %v4085, 0.0
        %v4167 = vadd.f32 %v4165, %v4166
        %v4168 = vsel %vm312, %v4086, 0.0
        %v4169 = vadd.f32 %v4167, %v4168
        %v4170 = vsel %vm312, %v4087, 0.0
        %v4171 = vadd.f32 %v4169, %v4170
        %v4172 = vsel %vm312, %v4088, 0.0
        %v4173 = vadd.f32 %v4171, %v4172
        %v4174 = vsel %vm312, %v4089, 0.0
        %v4175 = vadd.f32 %v4173, %v4174
        %v4176 = vsel %vm312, %v4090, 0.0
        %v4177 = vadd.f32 %v4175, %v4176
        %v4178 = vsel %vm312, %v4091, 0.0
        %v4179 = vadd.f32 %v4177, %v4178
        %v4180 = vsel %vm312, %v4092, 0.0
        %v4181 = vadd.f32 %v4179, %v4180
        %v4182 = vsel %vm312, %v4093, 0.0
        %v4183 = vadd.f32 %v4181, %v4182
        %v4184 = vsel %vm312, %v4094, 0.0
        %v4185 = vadd.f32 %v4183, %v4184
        %v4186 = vsel %vm312, %v4095, 0.0
        %v4187 = vadd.f32 %v4185, %v4186
        %v4188 = vsel %vm312, %v4096, 0.0
        %v4189 = vadd.f32 %v4187, %v4188
        %v4190 = vsel %vm312, %v4097, 0.0
        %v4191 = vadd.f32 %v4189, %v4190
        %v4192 = vsel %vm312, %v4098, 0.0
        %v4193 = vadd.f32 %v4191, %v4192
        %v4194 = vrot.slane %v4193, 4
        %v4195 = vadd.f32 %v4193, %v4194
        %v4196 = vrot.slane %v4195, 2
        %v4197 = vadd.f32 %v4195, %v4196
        %v4198 = vrot.slane %v4197, 1
        %v4199 = vadd.f32 %v4197, %v4198
        %vm4200 = vcmask 57344
        %4201 = vst.msk [vmem:[%s309] sm:$0x1] %vm4200, %v4199
        %v4202 = vmul.f32 %v4067, %v4067
        %v4203 = vmul.f32 %v4068, %v4068
        %v4204 = vmul.f32 %v4069, %v4069
        %v4205 = vmul.f32 %v4070, %v4070
        %v4206 = vmul.f32 %v4071, %v4071
        %v4207 = vmul.f32 %v4072, %v4072
        %v4208 = vmul.f32 %v4073, %v4073
        %v4209 = vmul.f32 %v4074, %v4074
        %v4210 = vmul.f32 %v4075, %v4075
        %v4211 = vmul.f32 %v4076, %v4076
        %v4212 = vmul.f32 %v4077, %v4077
        %v4213 = vmul.f32 %v4078, %v4078
        %v4214 = vmul.f32 %v4079, %v4079
        %v4215 = vmul.f32 %v4080, %v4080
        %v4216 = vmul.f32 %v4081, %v4081
        %v4217 = vmul.f32 %v4082, %v4082
        %v4218 = vmul.f32 %v4083, %v4083
        %v4219 = vmul.f32 %v4084, %v4084
        %v4220 = vmul.f32 %v4085, %v4085
        %v4221 = vmul.f32 %v4086, %v4086
        %v4222 = vmul.f32 %v4087, %v4087
        %v4223 = vmul.f32 %v4088, %v4088
        %v4224 = vmul.f32 %v4089, %v4089
        %v4225 = vmul.f32 %v4090, %v4090
        %v4226 = vmul.f32 %v4091, %v4091
        %v4227 = vmul.f32 %v4092, %v4092
        %v4228 = vmul.f32 %v4093, %v4093
        %v4229 = vmul.f32 %v4094, %v4094
        %v4230 = vmul.f32 %v4095, %v4095
        %v4231 = vmul.f32 %v4096, %v4096
        %v4232 = vmul.f32 %v4097, %v4097
        %v4233 = vmul.f32 %v4098, %v4098
        %v4234 = vsel %vm312, %v4202, 0.0
        %v4235 = vsel %vm312, %v4203, 0.0
        %v4236 = vadd.f32 %v4234, %v4235
        %v4237 = vsel %vm312, %v4204, 0.0
        %v4238 = vadd.f32 %v4236, %v4237
        %v4239 = vsel %vm312, %v4205, 0.0
        %v4240 = vadd.f32 %v4238, %v4239
        %v4241 = vsel %vm312, %v4206, 0.0
        %v4242 = vadd.f32 %v4240, %v4241
        %v4243 = vsel %vm312, %v4207, 0.0
        %v4244 = vadd.f32 %v4242, %v4243
        %v4245 = vsel %vm312, %v4208, 0.0
        %v4246 = vadd.f32 %v4244, %v4245
        %v4247 = vsel %vm312, %v4209, 0.0
        %v4248 = vadd.f32 %v4246, %v4247
        %v4249 = vsel %vm312, %v4210, 0.0
        %v4250 = vadd.f32 %v4248, %v4249
        %v4251 = vsel %vm312, %v4211, 0.0
        %v4252 = vadd.f32 %v4250, %v4251
        %v4253 = vsel %vm312, %v4212, 0.0
        %v4254 = vadd.f32 %v4252, %v4253
        %v4255 = vsel %vm312, %v4213, 0.0
        %v4256 = vadd.f32 %v4254, %v4255
        %v4257 = vsel %vm312, %v4214, 0.0
        %v4258 = vadd.f32 %v4256, %v4257
        %v4259 = vsel %vm312, %v4215, 0.0
        %v4260 = vadd.f32 %v4258, %v4259
        %v4261 = vsel %vm312, %v4216, 0.0
        %v4262 = vadd.f32 %v4260, %v4261
        %v4263 = vsel %vm312, %v4217, 0.0
        %v4264 = vadd.f32 %v4262, %v4263
        %v4265 = vsel %vm312, %v4218, 0.0
        %v4266 = vadd.f32 %v4264, %v4265
        %v4267 = vsel %vm312, %v4219, 0.0
        %v4268 = vadd.f32 %v4266, %v4267
        %v4269 = vsel %vm312, %v4220, 0.0
        %v4270 = vadd.f32 %v4268, %v4269
        %v4271 = vsel %vm312, %v4221, 0.0
        %v4272 = vadd.f32 %v4270, %v4271
        %v4273 = vsel %vm312, %v4222, 0.0
        %v4274 = vadd.f32 %v4272, %v4273
        %v4275 = vsel %vm312, %v4223, 0.0
        %v4276 = vadd.f32 %v4274, %v4275
        %v4277 = vsel %vm312, %v4224, 0.0
        %v4278 = vadd.f32 %v4276, %v4277
        %v4279 = vsel %vm312, %v4225, 0.0
        %v4280 = vadd.f32 %v4278, %v4279
        %v4281 = vsel %vm312, %v4226, 0.0
        %v4282 = vadd.f32 %v4280, %v4281
        %v4283 = vsel %vm312, %v4227, 0.0
        %v4284 = vadd.f32 %v4282, %v4283
        %v4285 = vsel %vm312, %v4228, 0.0
        %v4286 = vadd.f32 %v4284, %v4285
        %v4287 = vsel %vm312, %v4229, 0.0
        %v4288 = vadd.f32 %v4286, %v4287
        %v4289 = vsel %vm312, %v4230, 0.0
        %v4290 = vadd.f32 %v4288, %v4289
        %v4291 = vsel %vm312, %v4231, 0.0
        %v4292 = vadd.f32 %v4290, %v4291
        %v4293 = vsel %vm312, %v4232, 0.0
        %v4294 = vadd.f32 %v4292, %v4293
        %v4295 = vsel %vm312, %v4233, 0.0
        %v4296 = vadd.f32 %v4294, %v4295
        %v4297 = vrot.slane %v4296, 4
        %v4298 = vadd.f32 %v4296, %v4297
        %v4299 = vrot.slane %v4298, 2
        %v4300 = vadd.f32 %v4298, %v4299
        %v4301 = vrot.slane %v4300, 1
        %v4302 = vadd.f32 %v4300, %v4301
        %4303 = vst.msk [vmem:[%s309 + $0x1] sm:$0x1] %vm4200, %v4302
        %s4304 = sand.u32 %s139, 1
        %s4305 = scalar_lea.sflag [#allocation5], %s4304
        %s4306 = sand.u32 %s139, 1
        %s4307 = smul.addr %s4306, 256
        %s4308 = scalar_lea.vmem [#allocation11], %s4307
        %s4309 = sand.u32 %s167, 1
        %s4310 = scalar_lea.sflag [#allocation13], %s4309
        %s4311 = sand.u32 %s167, 1
        %s4312 = smul.addr %s4311, 2
        %s4313 = scalar_lea.vmem [#allocation12], %s4312
        // Predicated region
        $region61: #{double_conv_forward.4} parent=35 // pred_check
          %p4314 = pneg %p149
        $region62: #{double_conv_forward.4} parent=35 // pred_check_branch
          %4316 = sbr.rel (%p4314) target = $region64
        $region63: #{double_conv_forward.4} parent=35 // pred_region
          %s4317 = smul.u32 16, %s33
          %s4319 = ssub.s32 4096, 4096
          %4320 = vsyncadd %s4305, %s4319
          %s4321 = smul.addr %s4317, 2
          %s4322 = smul.addr %s32, 32
          %s4323 = sadd.s32 %s4321, %s4322
          %s4324 = smul.addr %s4323, 128
          %s4325 = scalar_lea.hbm %s4, %s4324
          %s4326 = sshll.u32 %s4308, 4
          %s4327 = int_to_ptr.vmem [resolvable:$true] %s4326
          %4332 = dma.vmem_to_hbm [thread:$0]  %s4327, 4096, %s4325, %s4305, 128, 128, 8
        $region64: #{double_conv_forward.4} parent=35 // pred_fallthru
          _
        // Predicated region
        $region65: #{double_conv_forward.4} parent=35 // pred_check
          %p4333 = pneg %p177
        $region66: #{double_conv_forward.4} parent=35 // pred_check_branch
          %4335 = sbr.rel (%p4333) target = $region68
        $region67: #{double_conv_forward.4} parent=35 // pred_region
          %s4337 = ssub.s32 32, 32
          %4338 = vsyncadd %s4310, %s4337
          %s4339 = sadd.s32 %s33, %s32
          %s4340 = smul.addr %s4339, 32
          %s4341 = scalar_lea.hbm %s5, %s4340
          %s4343 = sshll.u32 %s4313, 4
          %s4344 = int_to_ptr.vmem [resolvable:$true] %s4343
          %4346 = dma.vmem_to_hbm [thread:$0]  %s4344, 32, %s4341, %s4310
        $region68: #{double_conv_forward.4} parent=35 // pred_fallthru
          _
      $region36: #{double_conv_forward.4} parent=5 // pred_fallthru
        _
      %p4347 = scmp.le.s32.totalorder 2, %s23
      // Predicated region
      $region69: #{double_conv_forward.4} parent=5 // pred_check
        %p4348 = pneg %p4347
      $region70: #{double_conv_forward.4} parent=5 // pred_check_branch
        %4350 = sbr.rel (%p4348) target = $region72
      $region71: #{double_conv_forward.4} parent=5 // pred_region
        %s4351 = ssub.s32 %s23, 2
        // Predicated region
        $region73: #{double_conv_forward.4} parent=71 // pred_check
          %p4352 = pneg %p155
        $region74: #{double_conv_forward.4} parent=71 // pred_check_branch
          %4354 = sbr.rel (%p4352) target = $region76
        $region75: #{double_conv_forward.4} parent=71 // pred_region
          %s4355 = sand.u32 %s140, 1
          %s4356 = scalar_lea.sflag [#allocation5], %s4355
          %s4357 = sand.u32 %s140, 1
          %s4358 = smul.addr %s4357, 256
          %s4359 = scalar_lea.vmem [#allocation11], %s4358
          %4360 = dma.done %s4356, 4096
        $region76: #{double_conv_forward.4} parent=71 // pred_fallthru
          _
        // Predicated region
        $region77: #{double_conv_forward.4} parent=71 // pred_check
          %p4361 = pneg %p183
        $region78: #{double_conv_forward.4} parent=71 // pred_check_branch
          %4363 = sbr.rel (%p4361) target = $region80
        $region79: #{double_conv_forward.4} parent=71 // pred_region
          %s4364 = sand.u32 %s168, 1
          %s4365 = scalar_lea.sflag [#allocation13], %s4364
          %s4366 = sand.u32 %s168, 1
          %s4367 = smul.addr %s4366, 2
          %s4368 = scalar_lea.vmem [#allocation12], %s4367
          %4369 = dma.done %s4365, 32
        $region80: #{double_conv_forward.4} parent=71 // pred_fallthru
          _
      $region72: #{double_conv_forward.4} parent=5 // pred_fallthru
        _
    $region6: #{double_conv_forward.4} parent=1 // loop_footer
      %s27 = sadd.s32 1, %s23
    $region7: #{double_conv_forward.4} parent=1 // loop_footer_branch
      %22 = sbr.rel target = $region3
    $region8: #{double_conv_forward.4} parent=1 // loop_exit
      _
    %4370 = vsyncpa [#allocation4], 1
    %s4371 = scalar_lea.sflag [#allocation4], 1
    %4372 = vsyncpa %s4371, 1
    %4373 = vsyncpa [#allocation7], 1
    %4374 = vsyncpa [#allocation10], 1
    %4375 = vsyncpa [#allocation5], 1
    %s4376 = scalar_lea.sflag [#allocation5], 1
    %4377 = vsyncpa %s4376, 1
    %4378 = vsyncpa [#allocation13], 1
    %s4379 = scalar_lea.sflag [#allocation13], 1
    %4380 = vsyncpa %s4379, 1

</llo_original>
